<compile_context>
chip_gen: v7x
topology: tpu7x:2x2x1
jax: 0.10.0
libtpu: 0.0.40
codegen_flags: <defaults>
</compile_context>

<pallas_src>
import functools

import jax
import jax.numpy as jnp
from jax import lax
from jax.experimental import pallas as pl
from jax.experimental.pallas import tpu as pltpu

_BN_EPS = 1e-5


# ---------------------------------------------------------------------------
# Fused BasicRFB kernel
# ---------------------------------------------------------------------------

def _rfb_kernel(x_ref, mask_ref,
                w1_ref, sh1_ref,
                w_b01, sh_b01,
                w_b11, sh_b11,
                w_b12, sh_b12,
                w_b21, sh_b21,
                w_b22, sh_b22,
                w_b23, sh_b23,
                w_cl, sh_cl,
                o_ref,
                buf_b0a, buf_b1a, buf_b1b, buf_b2a, buf_b2b, buf_b2c,
                *, Wp, p_max, N, visual, rfb_scale, splits):
    """One batch element of BasicRFB, fully fused in VMEM.

    Layout convention ("pad-flat"): every intermediate that feeds a 3x3 conv is
    stored in a VMEM scratch buffer of shape (C, L) holding a zero-padded
    (H+2*p_max, Wp=W+2*p_max) image flattened row-major; the first valid pixel
    sits at flat offset `org`.  A dilated 3x3 same-conv tap is then just a
    static slice of length N = H*Wp at offset org + (ky*Wp + kx)*dil.  Columns
    x in [W, Wp) of any conv output are garbage and are masked to zero before
    being written back into a pad-flat buffer (so padding stays zero); the
    wrapper crops them from the final output.
    """
    org = p_max * Wp + p_max                 # flat offset of first valid pixel
    valid = mask_ref[...] != 0.0             # (1, N), True on real columns

    def to_buf(buf, val):
        """Embed a conv output into a zeroed pad-flat scratch buffer."""
        buf[...] = jnp.zeros_like(buf)
        buf[:, pl.ds(org, N)] = jnp.where(valid, val, 0.0)

    def conv3x3(buf, w9, sh, dil, relu):
        """3x3 conv (padding == dilation == dil) + folded BN (+ ReLU)."""
        cout = w9.shape[1]
        acc = jnp.zeros((cout, N), jnp.float32)
        k = 0
        for ky in (-1, 0, 1):
            for kx in (-1, 0, 1):
                tap = buf[:, pl.ds(org + (ky * Wp + kx) * dil, N)]
                acc = acc + jnp.dot(w9[k], tap,
                                    preferred_element_type=jnp.float32)
                k += 1
        acc = acc + sh[...]
        return jnp.maximum(acc, 0.0) if relu else acc

    # ---- four 1x1 convs reading x (b0_0, b1_0, b2_0, shortcut): one matmul.
    xv = x_ref[0]                                                   # (Cin, N)
    stacked = jnp.dot(w1_ref[...], xv, preferred_element_type=jnp.float32)
    stacked = stacked + sh1_ref[...]
    c0, c1, c2 = splits
    b0a = jnp.maximum(stacked[:c0], 0.0)                            # ReLU
    b1a = jnp.maximum(stacked[c0:c0 + c1], 0.0)                     # ReLU
    b2a = jnp.maximum(stacked[c0 + c1:c0 + c1 + c2], 0.0)           # ReLU
    short = stacked[c0 + c1 + c2:]                                  # no ReLU

    # ---- branch0: 1x1 -> 3x3(dil=visual), no ReLU on the last conv.
    to_buf(buf_b0a, b0a)
    b0v = conv3x3(buf_b0a, w_b01, sh_b01, visual, relu=False)

    # ---- branch1: 1x1 -> 3x3 -> 3x3(dil=visual+1).
    to_buf(buf_b1a, b1a)
    to_buf(buf_b1b, conv3x3(buf_b1a, w_b11, sh_b11, 1, relu=True))
    b1v = conv3x3(buf_b1b, w_b12, sh_b12, visual + 1, relu=False)

    # ---- branch2: 1x1 -> 3x3 -> 3x3 -> 3x3(dil=2*visual+1).
    to_buf(buf_b2a, b2a)
    to_buf(buf_b2b, conv3x3(buf_b2a, w_b21, sh_b21, 1, relu=True))
    to_buf(buf_b2c, conv3x3(buf_b2b, w_b22, sh_b22, 1, relu=True))
    b2v = conv3x3(buf_b2c, w_b23, sh_b23, 2 * visual + 1, relu=False)

    # ---- ConvLinear on the implicit concat (no jnp.concatenate), + tail.
    wcl = w_cl[...]
    n0, n1 = b0v.shape[0], b1v.shape[0]
    lin = jnp.dot(wcl[:, :n0], b0v, preferred_element_type=jnp.float32)
    lin = lin + jnp.dot(wcl[:, n0:n0 + n1], b1v,
                        preferred_element_type=jnp.float32)
    lin = lin + jnp.dot(wcl[:, n0 + n1:], b2v,
                        preferred_element_type=jnp.float32)
    lin = lin + sh_cl[...]
    o_ref[0] = jnp.maximum(lin * rfb_scale + short, 0.0).astype(o_ref.dtype)


# ---------------------------------------------------------------------------
# Wrapper: BN folding, weight re-layout, pallas_call plumbing
# ---------------------------------------------------------------------------

def _fold_bn(p):
    sc = p["gamma"] / jnp.sqrt(p["var"] + _BN_EPS)
    sh = p["beta"] - p["mean"] * sc
    return sc, sh


def _prep_1x1(p):
    """Fold BN scale into a 1x1 conv weight -> ((Cout, Cin), (Cout, 1))."""
    sc, sh = _fold_bn(p)
    w = p["w"][:, :, 0, 0] * sc[:, None]
    return w.astype(jnp.float32), sh[:, None].astype(jnp.float32)


def _prep_3x3(p):
    """Fold BN scale; reorder to (9, Cout, Cin) for per-tap leading-dim loads."""
    sc, sh = _fold_bn(p)
    w = p["w"] * sc[:, None, None, None]                     # (Cout, Cin, 3, 3)
    w9 = jnp.transpose(w, (2, 3, 0, 1)).reshape(9, w.shape[0], w.shape[1])
    return w9.astype(jnp.float32), sh[:, None].astype(jnp.float32)


def basic_rfb_forward(x, params, *, stride=1, scale=0.1, visual=1):
    if stride != 1:
        # TODO(synk): stride>1 changes spatial geometry mid-branch; not fused.
        raise NotImplementedError("fused BasicRFB kernel supports stride=1 only")
    x = x.astype(jnp.float32)
    B, cin, H, W = x.shape

    p_max = 2 * visual + 1              # largest padding/dilation of any 3x3
    Wp = W + 2 * p_max                  # shared padded row width
    N = H * Wp                          # flattened spatial extent for matmuls
    L = (H + 2 * p_max + 1) * Wp        # pad-flat scratch length (+1 row slack)

    # Input in "row-major, Wp-wide" layout (zeros in the pad columns).
    x_flat = jnp.pad(x, ((0, 0), (0, 0), (0, 0), (0, Wp - W))).reshape(B, cin, N)
    colmask = (jnp.arange(N, dtype=jnp.int32) % Wp < W).astype(jnp.float32)[None, :]

    # Four 1x1 convs reading x, stacked into one matmul (BN scale folded in).
    w_b00, sh_b00 = _prep_1x1(params["b0_0"])
    w_b10, sh_b10 = _prep_1x1(params["b1_0"])
    w_b20, sh_b20 = _prep_1x1(params["b2_0"])
    w_sc, sh_sc = _prep_1x1(params["shortcut"])
    w1 = jnp.concatenate([w_b00, w_b10, w_b20, w_sc], axis=0)
    sh1 = jnp.concatenate([sh_b00, sh_b10, sh_b20, sh_sc], axis=0)
    splits = (w_b00.shape[0], w_b10.shape[0], w_b20.shape[0])

    w_b01, sh_b01 = _prep_3x3(params["b0_1"])
    w_b11, sh_b11 = _prep_3x3(params["b1_1"])
    w_b12, sh_b12 = _prep_3x3(params["b1_2"])
    w_b21, sh_b21 = _prep_3x3(params["b2_1"])
    w_b22, sh_b22 = _prep_3x3(params["b2_2"])
    w_b23, sh_b23 = _prep_3x3(params["b2_3"])
    w_cl, sh_cl = _prep_1x1(params["convlinear"])

    cout = w_sc.shape[0]                # out_planes

    weights = [w1, sh1, w_b01, sh_b01, w_b11, sh_b11, w_b12, sh_b12,
               w_b21, sh_b21, w_b22, sh_b22, w_b23, sh_b23, w_cl, sh_cl]

    def const_spec(a):
        zeros = (0,) * a.ndim
        return pl.BlockSpec(a.shape, lambda b, _z=zeros: _z)

    scratch = [
        pltpu.VMEM((w_b00.shape[0], L), jnp.float32),   # branch0: 1x1 output
        pltpu.VMEM((w_b10.shape[0], L), jnp.float32),   # branch1: 1x1 output
        pltpu.VMEM((w_b11.shape[1], L), jnp.float32),   # branch1: mid output
        pltpu.VMEM((w_b20.shape[0], L), jnp.float32),   # branch2: 1x1 output
        pltpu.VMEM((w_b21.shape[1], L), jnp.float32),   # branch2: mid-1 output
        pltpu.VMEM((w_b22.shape[1], L), jnp.float32),   # branch2: mid-2 output
    ]

    out = pl.pallas_call(
        functools.partial(_rfb_kernel, Wp=Wp, p_max=p_max, N=N, visual=visual,
                          rfb_scale=float(scale), splits=splits),
        out_shape=jax.ShapeDtypeStruct((B, cout, N), jnp.float32),
        grid=(B,),
        in_specs=[pl.BlockSpec((1, cin, N), lambda b: (b, 0, 0)),
                  const_spec(colmask)] + [const_spec(w) for w in weights],
        out_specs=pl.BlockSpec((1, cout, N), lambda b: (b, 0, 0)),
        scratch_shapes=scratch,
        compiler_params=pltpu.CompilerParams(
            dimension_semantics=("parallel",)),
    )(x_flat, colmask, *weights)

    # Crop the padded columns and restore NCHW.
    return out.reshape(B, cout, H, Wp)[:, :, :, :W]


# ---------------------------------------------------------------------------
# Pure-JAX reference (lax.conv) for validation
# ---------------------------------------------------------------------------

def _conv_bn_ref(x, p, *, stride=1, padding=0, dilation=1, relu=True):
    y = lax.conv_general_dilated(
        x, p["w"], window_strides=(stride, stride),
        padding=((padding, padding), (padding, padding)),
        rhs_dilation=(dilation, dilation),
        dimension_numbers=("NCHW", "OIHW", "NCHW"),
        precision=lax.Precision.HIGHEST)
    sc = p["gamma"] / jnp.sqrt(p["var"] + _BN_EPS)
    sh = p["beta"] - p["mean"] * sc
    y = y * sc[None, :, None, None] + sh[None, :, None, None]
    if relu:
        y = jnp.maximum(y, 0.0)
    return y


def basic_rfb_reference(x, params, *, stride=1, scale=0.1, visual=1):
    b0 = _conv_bn_ref(x, params["b0_0"], stride=stride)
    b0 = _conv_bn_ref(b0, params["b0_1"], padding=visual, dilation=visual,
                      relu=False)
    b1 = _conv_bn_ref(x, params["b1_0"])
    b1 = _conv_bn_ref(b1, params["b1_1"], stride=stride, padding=1)
    b1 = _conv_bn_ref(b1, params["b1_2"], padding=visual + 1,
                      dilation=visual + 1, relu=False)
    b2 = _conv_bn_ref(x, params["b2_0"])
    b2 = _conv_bn_ref(b2, params["b2_1"], padding=1)
    b2 = _conv_bn_ref(b2, params["b2_2"], stride=stride, padding=1)
    b2 = _conv_bn_ref(b2, params["b2_3"], padding=2 * visual + 1,
                      dilation=2 * visual + 1, relu=False)
    cat = jnp.concatenate([b0, b1, b2], axis=1)
    out = _conv_bn_ref(cat, params["convlinear"], relu=False)
    short = _conv_bn_ref(x, params["shortcut"], stride=stride, relu=False)
    return jnp.maximum(out * scale + short, 0.0)


# ---------------------------------------------------------------------------
# Demo / self-test
# ---------------------------------------------------------------------------

def _make_conv_params(key, cin, cout, k):
    kw_, kg, kb, km, kv = jax.random.split(key, 5)
    fan_in = cin * k * k
    return dict(
        w=jax.random.normal(kw_, (cout, cin, k, k), jnp.float32) / (fan_in ** 0.5),
        gamma=jax.random.uniform(kg, (cout,), jnp.float32, 0.5, 1.5),
        beta=jax.random.normal(kb, (cout,), jnp.float32) * 0.1,
        mean=jax.random.normal(km, (cout,), jnp.float32) * 0.1,
        var=jax.random.uniform(kv, (cout,), jnp.float32, 0.5, 1.5),
    )


if __name__ == "__main__":
    # Small shapes consistent with the module (in_planes multiple of 8).
    B, in_planes, H, W = 2, 32, 16, 16
    out_planes = 32
    stride, rfb_scale, visual = 1, 0.1, 1
    inter = in_planes // 8

    key = jax.random.PRNGKey(0)
    keys = jax.random.split(key, 12)
    x = jax.random.normal(keys[0], (B, in_planes, H, W), jnp.float32)

    params = {
        "b0_0": _make_conv_params(keys[1], in_planes, 2 * inter, 1),
        "b0_1": _make_conv_params(keys[2], 2 * inter, 2 * inter, 3),
        "b1_0": _make_conv_params(keys[3], in_planes, inter, 1),
        "b1_1": _make_conv_params(keys[4], inter, 2 * inter, 3),
        "b1_2": _make_conv_params(keys[5], 2 * inter, 2 * inter, 3),
        "b2_0": _make_conv_params(keys[6], in_planes, inter, 1),
        "b2_1": _make_conv_params(keys[7], inter, inter // 2 * 3, 3),
        "b2_2": _make_conv_params(keys[8], inter // 2 * 3, 2 * inter, 3),
        "b2_3": _make_conv_params(keys[9], 2 * inter, 2 * inter, 3),
        "convlinear": _make_conv_params(keys[10], 6 * inter, out_planes, 1),
        "shortcut": _make_conv_params(keys[11], in_planes, out_planes, 1),
    }

    fwd = jax.jit(functools.partial(basic_rfb_forward, stride=stride,
                                    scale=rfb_scale, visual=visual))
    out = jax.block_until_ready(fwd(x, params))

    ref = basic_rfb_reference(x, params, stride=stride, scale=rfb_scale,
                              visual=visual)
    assert out.shape == (B, out_planes, H, W)
    assert jnp.allclose(out, ref, atol=2e-3, rtol=2e-3), float(
        jnp.max(jnp.abs(out - ref)))

    print("KERNEL_OK")
</pallas_src>

<mosaic_0001>
module attributes {stable_mosaic.version = 11 : i64} {
  func.func @_rfb_kernel(%arg0: i32, %arg1: memref<1x32x352xf32, #tpu.memory_space<vmem>>, %arg2: memref<1x352xf32, #tpu.memory_space<vmem>>, %arg3: memref<48x32xf32, #tpu.memory_space<vmem>>, %arg4: memref<48x1xf32, #tpu.memory_space<vmem>>, %arg5: memref<9x8x8xf32, #tpu.memory_space<vmem>>, %arg6: memref<8x1xf32, #tpu.memory_space<vmem>>, %arg7: memref<9x8x4xf32, #tpu.memory_space<vmem>>, %arg8: memref<8x1xf32, #tpu.memory_space<vmem>>, %arg9: memref<9x8x8xf32, #tpu.memory_space<vmem>>, %arg10: memref<8x1xf32, #tpu.memory_space<vmem>>, %arg11: memref<9x6x4xf32, #tpu.memory_space<vmem>>, %arg12: memref<6x1xf32, #tpu.memory_space<vmem>>, %arg13: memref<9x8x6xf32, #tpu.memory_space<vmem>>, %arg14: memref<8x1xf32, #tpu.memory_space<vmem>>, %arg15: memref<9x8x8xf32, #tpu.memory_space<vmem>>, %arg16: memref<8x1xf32, #tpu.memory_space<vmem>>, %arg17: memref<32x24xf32, #tpu.memory_space<vmem>>, %arg18: memref<32x1xf32, #tpu.memory_space<vmem>>, %arg19: memref<1x32x352xf32, #tpu.memory_space<vmem>>, %arg20: memref<8x506xf32, #tpu.memory_space<vmem>>, %arg21: memref<4x506xf32, #tpu.memory_space<vmem>>, %arg22: memref<8x506xf32, #tpu.memory_space<vmem>>, %arg23: memref<4x506xf32, #tpu.memory_space<vmem>>, %arg24: memref<6x506xf32, #tpu.memory_space<vmem>>, %arg25: memref<8x506xf32, #tpu.memory_space<vmem>>) attributes {dimension_semantics = [#tpu.dimension_semantics<parallel>], iteration_bounds = array<i64: 2>, scalar_prefetch = 0 : i64, scratch_operands = 6 : i64, tpu.core_type = #tpu.core_type<tc>, window_params = [{transform_indices = @transform_0, window_bounds = array<i64: 1, 32, 352>}, {pipeline_mode = #tpu.pipeline_mode<synchronous>, transform_indices = @transform_1, window_bounds = array<i64: 1, 352>}, {pipeline_mode = #tpu.pipeline_mode<synchronous>, transform_indices = @transform_2, window_bounds = array<i64: 48, 32>}, {pipeline_mode = #tpu.pipeline_mode<synchronous>, transform_indices = @transform_3, window_bounds = array<i64: 48, 1>}, {pipeline_mode = #tpu.pipeline_mode<synchronous>, transform_indices = @transform_4, window_bounds = array<i64: 9, 8, 8>}, {pipeline_mode = #tpu.pipeline_mode<synchronous>, transform_indices = @transform_5, window_bounds = array<i64: 8, 1>}, {pipeline_mode = #tpu.pipeline_mode<synchronous>, transform_indices = @transform_6, window_bounds = array<i64: 9, 8, 4>}, {pipeline_mode = #tpu.pipeline_mode<synchronous>, transform_indices = @transform_7, window_bounds = array<i64: 8, 1>}, {pipeline_mode = #tpu.pipeline_mode<synchronous>, transform_indices = @transform_8, window_bounds = array<i64: 9, 8, 8>}, {pipeline_mode = #tpu.pipeline_mode<synchronous>, transform_indices = @transform_9, window_bounds = array<i64: 8, 1>}, {pipeline_mode = #tpu.pipeline_mode<synchronous>, transform_indices = @transform_10, window_bounds = array<i64: 9, 6, 4>}, {pipeline_mode = #tpu.pipeline_mode<synchronous>, transform_indices = @transform_11, window_bounds = array<i64: 6, 1>}, {pipeline_mode = #tpu.pipeline_mode<synchronous>, transform_indices = @transform_12, window_bounds = array<i64: 9, 8, 6>}, {pipeline_mode = #tpu.pipeline_mode<synchronous>, transform_indices = @transform_13, window_bounds = array<i64: 8, 1>}, {pipeline_mode = #tpu.pipeline_mode<synchronous>, transform_indices = @transform_14, window_bounds = array<i64: 9, 8, 8>}, {pipeline_mode = #tpu.pipeline_mode<synchronous>, transform_indices = @transform_15, window_bounds = array<i64: 8, 1>}, {pipeline_mode = #tpu.pipeline_mode<synchronous>, transform_indices = @transform_16, window_bounds = array<i64: 32, 24>}, {pipeline_mode = #tpu.pipeline_mode<synchronous>, transform_indices = @transform_17, window_bounds = array<i64: 32, 1>}, {transform_indices = @transform_18, window_bounds = array<i64: 1, 32, 352>}]} {
    %c0 = arith.constant 0 : index
    %c0_0 = arith.constant 0 : index
    %0 = vector.load %arg2[%c0, %c0_0] : memref<1x352xf32, #tpu.memory_space<vmem>>, vector<1x352xf32>
    %cst = arith.constant 0.000000e+00 : f32
    %1 = vector.broadcast %cst : f32 to vector<1x352xf32>
    %2 = arith.cmpf one, %0, %1 : vector<1x352xf32>
    %c0_1 = arith.constant 0 : index
    %c0_2 = arith.constant 0 : index
    %c0_3 = arith.constant 0 : index
    %3 = vector.load %arg1[%c0_1, %c0_2, %c0_3] : memref<1x32x352xf32, #tpu.memory_space<vmem>>, vector<1x32x352xf32>
    %4 = vector.shape_cast %3 : vector<1x32x352xf32> to vector<32x352xf32>
    %c0_4 = arith.constant 0 : index
    %c0_5 = arith.constant 0 : index
    %5 = vector.load %arg3[%c0_4, %c0_5] : memref<48x32xf32, #tpu.memory_space<vmem>>, vector<48x32xf32>
    %cst_6 = arith.constant dense<0.000000e+00> : vector<48x352xf32>
    %6 = tpu.matmul %5, %4, %cst_6 {dimension_numbers = #tpu.dot_dimension_numbers<[1], [0], [0], [1], [0, 0, 1, 1], [], []>} : vector<48x32xf32>, vector<32x352xf32>, vector<48x352xf32> -> vector<48x352xf32>
    %c0_7 = arith.constant 0 : index
    %c0_8 = arith.constant 0 : index
    %7 = vector.load %arg4[%c0_7, %c0_8] : memref<48x1xf32, #tpu.memory_space<vmem>>, vector<48x1xf32>
    %8 = vector.broadcast %7 : vector<48x1xf32> to vector<48x352xf32>
    %9 = arith.addf %6, %8 : vector<48x352xf32>
    %10 = vector.extract_strided_slice %9 {offsets = [0, 0], sizes = [8, 352], strides = [1, 1]} : vector<48x352xf32> to vector<8x352xf32>
    %cst_9 = arith.constant 0.000000e+00 : f32
    %11 = vector.broadcast %cst_9 : f32 to vector<8x352xf32>
    %12 = arith.maximumf %10, %11 : vector<8x352xf32>
    %13 = vector.extract_strided_slice %9 {offsets = [8, 0], sizes = [4, 352], strides = [1, 1]} : vector<48x352xf32> to vector<4x352xf32>
    %cst_10 = arith.constant 0.000000e+00 : f32
    %14 = vector.broadcast %cst_10 : f32 to vector<4x352xf32>
    %15 = arith.maximumf %13, %14 : vector<4x352xf32>
    %16 = vector.extract_strided_slice %9 {offsets = [12, 0], sizes = [4, 352], strides = [1, 1]} : vector<48x352xf32> to vector<4x352xf32>
    %cst_11 = arith.constant 0.000000e+00 : f32
    %17 = vector.broadcast %cst_11 : f32 to vector<4x352xf32>
    %18 = arith.maximumf %16, %17 : vector<4x352xf32>
    %19 = vector.extract_strided_slice %9 {offsets = [16, 0], sizes = [32, 352], strides = [1, 1]} : vector<48x352xf32> to vector<32x352xf32>
    %cst_12 = arith.constant 0.000000e+00 : f32
    %20 = vector.broadcast %cst_12 : f32 to vector<8x506xf32>
    %c0_13 = arith.constant 0 : index
    %c0_14 = arith.constant 0 : index
    %21 = vector.load %arg20[%c0_13, %c0_14] : memref<8x506xf32, #tpu.memory_space<vmem>>, vector<8x506xf32>
    tpu.vector_store %arg20[%c0_13, %c0_14], %20 {strides = array<i32>} : memref<8x506xf32, #tpu.memory_space<vmem>>, vector<8x506xf32>,
    %cst_15 = arith.constant 0.000000e+00 : f32
    %22 = vector.shape_cast %2 : vector<1x352xi1> to vector<1x352xi1>
    %23 = vector.broadcast %22 : vector<1x352xi1> to vector<8x352xi1>
    %24 = vector.broadcast %cst_15 : f32 to vector<8x352xf32>
    %25 = arith.select %23, %12, %24 : vector<8x352xi1>, vector<8x352xf32>
    %c0_16 = arith.constant 0 : index
    %c69 = arith.constant 69 : index
    %26 = vector.load %arg20[%c0_16, %c69] : memref<8x506xf32, #tpu.memory_space<vmem>>, vector<8x352xf32>
    tpu.vector_store %arg20[%c0_16, %c69], %25 {strides = array<i32>} : memref<8x506xf32, #tpu.memory_space<vmem>>, vector<8x352xf32>,
    %cst_17 = arith.constant 0.000000e+00 : f32
    %27 = vector.broadcast %cst_17 : f32 to vector<8x352xf32>
    %c0_18 = arith.constant 0 : index
    %c46 = arith.constant 46 : index
    %28 = vector.load %arg20[%c0_18, %c46] : memref<8x506xf32, #tpu.memory_space<vmem>>, vector<8x352xf32>
    %c0_19 = arith.constant 0 : index
    %c0_20 = arith.constant 0 : index
    %c0_21 = arith.constant 0 : index
    %29 = vector.load %arg5[%c0_19, %c0_20, %c0_21] : memref<9x8x8xf32, #tpu.memory_space<vmem>>, vector<1x8x8xf32>
    %30 = vector.shape_cast %29 : vector<1x8x8xf32> to vector<8x8xf32>
    %cst_22 = arith.constant dense<0.000000e+00> : vector<8x352xf32>
    %31 = tpu.matmul %30, %28, %cst_22 {dimension_numbers = #tpu.dot_dimension_numbers<[1], [0], [0], [1], [0, 0, 1, 1], [], []>} : vector<8x8xf32>, vector<8x352xf32>, vector<8x352xf32> -> vector<8x352xf32>
    %32 = arith.addf %27, %31 : vector<8x352xf32>
    %c0_23 = arith.constant 0 : index
    %c47 = arith.constant 47 : index
    %33 = vector.load %arg20[%c0_23, %c47] : memref<8x506xf32, #tpu.memory_space<vmem>>, vector<8x352xf32>
    %c1 = arith.constant 1 : index
    %c0_24 = arith.constant 0 : index
    %c0_25 = arith.constant 0 : index
    %34 = vector.load %arg5[%c1, %c0_24, %c0_25] : memref<9x8x8xf32, #tpu.memory_space<vmem>>, vector<1x8x8xf32>
    %35 = vector.shape_cast %34 : vector<1x8x8xf32> to vector<8x8xf32>
    %cst_26 = arith.constant dense<0.000000e+00> : vector<8x352xf32>
    %36 = tpu.matmul %35, %33, %cst_26 {dimension_numbers = #tpu.dot_dimension_numbers<[1], [0], [0], [1], [0, 0, 1, 1], [], []>} : vector<8x8xf32>, vector<8x352xf32>, vector<8x352xf32> -> vector<8x352xf32>
    %37 = arith.addf %32, %36 : vector<8x352xf32>
    %c0_27 = arith.constant 0 : index
    %c48 = arith.constant 48 : index
    %38 = vector.load %arg20[%c0_27, %c48] : memref<8x506xf32, #tpu.memory_space<vmem>>, vector<8x352xf32>
    %c2 = arith.constant 2 : index
    %c0_28 = arith.constant 0 : index
    %c0_29 = arith.constant 0 : index
    %39 = vector.load %arg5[%c2, %c0_28, %c0_29] : memref<9x8x8xf32, #tpu.memory_space<vmem>>, vector<1x8x8xf32>
    %40 = vector.shape_cast %39 : vector<1x8x8xf32> to vector<8x8xf32>
    %cst_30 = arith.constant dense<0.000000e+00> : vector<8x352xf32>
    %41 = tpu.matmul %40, %38, %cst_30 {dimension_numbers = #tpu.dot_dimension_numbers<[1], [0], [0], [1], [0, 0, 1, 1], [], []>} : vector<8x8xf32>, vector<8x352xf32>, vector<8x352xf32> -> vector<8x352xf32>
    %42 = arith.addf %37, %41 : vector<8x352xf32>
    %c0_31 = arith.constant 0 : index
    %c68 = arith.constant 68 : index
    %43 = vector.load %arg20[%c0_31, %c68] : memref<8x506xf32, #tpu.memory_space<vmem>>, vector<8x352xf32>
    %c3 = arith.constant 3 : index
    %c0_32 = arith.constant 0 : index
    %c0_33 = arith.constant 0 : index
    %44 = vector.load %arg5[%c3, %c0_32, %c0_33] : memref<9x8x8xf32, #tpu.memory_space<vmem>>, vector<1x8x8xf32>
    %45 = vector.shape_cast %44 : vector<1x8x8xf32> to vector<8x8xf32>
    %cst_34 = arith.constant dense<0.000000e+00> : vector<8x352xf32>
    %46 = tpu.matmul %45, %43, %cst_34 {dimension_numbers = #tpu.dot_dimension_numbers<[1], [0], [0], [1], [0, 0, 1, 1], [], []>} : vector<8x8xf32>, vector<8x352xf32>, vector<8x352xf32> -> vector<8x352xf32>
    %47 = arith.addf %42, %46 : vector<8x352xf32>
    %c0_35 = arith.constant 0 : index
    %c69_36 = arith.constant 69 : index
    %48 = vector.load %arg20[%c0_35, %c69_36] : memref<8x506xf32, #tpu.memory_space<vmem>>, vector<8x352xf32>
    %c4 = arith.constant 4 : index
    %c0_37 = arith.constant 0 : index
    %c0_38 = arith.constant 0 : index
    %49 = vector.load %arg5[%c4, %c0_37, %c0_38] : memref<9x8x8xf32, #tpu.memory_space<vmem>>, vector<1x8x8xf32>
    %50 = vector.shape_cast %49 : vector<1x8x8xf32> to vector<8x8xf32>
    %cst_39 = arith.constant dense<0.000000e+00> : vector<8x352xf32>
    %51 = tpu.matmul %50, %48, %cst_39 {dimension_numbers = #tpu.dot_dimension_numbers<[1], [0], [0], [1], [0, 0, 1, 1], [], []>} : vector<8x8xf32>, vector<8x352xf32>, vector<8x352xf32> -> vector<8x352xf32>
    %52 = arith.addf %47, %51 : vector<8x352xf32>
    %c0_40 = arith.constant 0 : index
    %c70 = arith.constant 70 : index
    %53 = vector.load %arg20[%c0_40, %c70] : memref<8x506xf32, #tpu.memory_space<vmem>>, vector<8x352xf32>
    %c5 = arith.constant 5 : index
    %c0_41 = arith.constant 0 : index
    %c0_42 = arith.constant 0 : index
    %54 = vector.load %arg5[%c5, %c0_41, %c0_42] : memref<9x8x8xf32, #tpu.memory_space<vmem>>, vector<1x8x8xf32>
    %55 = vector.shape_cast %54 : vector<1x8x8xf32> to vector<8x8xf32>
    %cst_43 = arith.constant dense<0.000000e+00> : vector<8x352xf32>
    %56 = tpu.matmul %55, %53, %cst_43 {dimension_numbers = #tpu.dot_dimension_numbers<[1], [0], [0], [1], [0, 0, 1, 1], [], []>} : vector<8x8xf32>, vector<8x352xf32>, vector<8x352xf32> -> vector<8x352xf32>
    %57 = arith.addf %52, %56 : vector<8x352xf32>
    %c0_44 = arith.constant 0 : index
    %c90 = arith.constant 90 : index
    %58 = vector.load %arg20[%c0_44, %c90] : memref<8x506xf32, #tpu.memory_space<vmem>>, vector<8x352xf32>
    %c6 = arith.constant 6 : index
    %c0_45 = arith.constant 0 : index
    %c0_46 = arith.constant 0 : index
    %59 = vector.load %arg5[%c6, %c0_45, %c0_46] : memref<9x8x8xf32, #tpu.memory_space<vmem>>, vector<1x8x8xf32>
    %60 = vector.shape_cast %59 : vector<1x8x8xf32> to vector<8x8xf32>
    %cst_47 = arith.constant dense<0.000000e+00> : vector<8x352xf32>
    %61 = tpu.matmul %60, %58, %cst_47 {dimension_numbers = #tpu.dot_dimension_numbers<[1], [0], [0], [1], [0, 0, 1, 1], [], []>} : vector<8x8xf32>, vector<8x352xf32>, vector<8x352xf32> -> vector<8x352xf32>
    %62 = arith.addf %57, %61 : vector<8x352xf32>
    %c0_48 = arith.constant 0 : index
    %c91 = arith.constant 91 : index
    %63 = vector.load %arg20[%c0_48, %c91] : memref<8x506xf32, #tpu.memory_space<vmem>>, vector<8x352xf32>
    %c7 = arith.constant 7 : index
    %c0_49 = arith.constant 0 : index
    %c0_50 = arith.constant 0 : index
    %64 = vector.load %arg5[%c7, %c0_49, %c0_50] : memref<9x8x8xf32, #tpu.memory_space<vmem>>, vector<1x8x8xf32>
    %65 = vector.shape_cast %64 : vector<1x8x8xf32> to vector<8x8xf32>
    %cst_51 = arith.constant dense<0.000000e+00> : vector<8x352xf32>
    %66 = tpu.matmul %65, %63, %cst_51 {dimension_numbers = #tpu.dot_dimension_numbers<[1], [0], [0], [1], [0, 0, 1, 1], [], []>} : vector<8x8xf32>, vector<8x352xf32>, vector<8x352xf32> -> vector<8x352xf32>
    %67 = arith.addf %62, %66 : vector<8x352xf32>
    %c0_52 = arith.constant 0 : index
    %c92 = arith.constant 92 : index
    %68 = vector.load %arg20[%c0_52, %c92] : memref<8x506xf32, #tpu.memory_space<vmem>>, vector<8x352xf32>
    %c8 = arith.constant 8 : index
    %c0_53 = arith.constant 0 : index
    %c0_54 = arith.constant 0 : index
    %69 = vector.load %arg5[%c8, %c0_53, %c0_54] : memref<9x8x8xf32, #tpu.memory_space<vmem>>, vector<1x8x8xf32>
    %70 = vector.shape_cast %69 : vector<1x8x8xf32> to vector<8x8xf32>
    %cst_55 = arith.constant dense<0.000000e+00> : vector<8x352xf32>
    %71 = tpu.matmul %70, %68, %cst_55 {dimension_numbers = #tpu.dot_dimension_numbers<[1], [0], [0], [1], [0, 0, 1, 1], [], []>} : vector<8x8xf32>, vector<8x352xf32>, vector<8x352xf32> -> vector<8x352xf32>
    %72 = arith.addf %67, %71 : vector<8x352xf32>
    %c0_56 = arith.constant 0 : index
    %c0_57 = arith.constant 0 : index
    %73 = vector.load %arg6[%c0_56, %c0_57] : memref<8x1xf32, #tpu.memory_space<vmem>>, vector<8x1xf32>
    %74 = vector.broadcast %73 : vector<8x1xf32> to vector<8x352xf32>
    %75 = arith.addf %72, %74 : vector<8x352xf32>
    %cst_58 = arith.constant 0.000000e+00 : f32
    %76 = vector.broadcast %cst_58 : f32 to vector<4x506xf32>
    %c0_59 = arith.constant 0 : index
    %c0_60 = arith.constant 0 : index
    %77 = vector.load %arg21[%c0_59, %c0_60] : memref<4x506xf32, #tpu.memory_space<vmem>>, vector<4x506xf32>
    tpu.vector_store %arg21[%c0_59, %c0_60], %76 {strides = array<i32>} : memref<4x506xf32, #tpu.memory_space<vmem>>, vector<4x506xf32>,
    %cst_61 = arith.constant 0.000000e+00 : f32
    %78 = vector.shape_cast %2 : vector<1x352xi1> to vector<1x352xi1>
    %79 = vector.broadcast %78 : vector<1x352xi1> to vector<4x352xi1>
    %80 = vector.broadcast %cst_61 : f32 to vector<4x352xf32>
    %81 = arith.select %79, %15, %80 : vector<4x352xi1>, vector<4x352xf32>
    %c0_62 = arith.constant 0 : index
    %c69_63 = arith.constant 69 : index
    %82 = vector.load %arg21[%c0_62, %c69_63] : memref<4x506xf32, #tpu.memory_space<vmem>>, vector<4x352xf32>
    tpu.vector_store %arg21[%c0_62, %c69_63], %81 {strides = array<i32>} : memref<4x506xf32, #tpu.memory_space<vmem>>, vector<4x352xf32>,
    %cst_64 = arith.constant 0.000000e+00 : f32
    %83 = vector.broadcast %cst_64 : f32 to vector<8x352xf32>
    %c0_65 = arith.constant 0 : index
    %c46_66 = arith.constant 46 : index
    %84 = vector.load %arg21[%c0_65, %c46_66] : memref<4x506xf32, #tpu.memory_space<vmem>>, vector<4x352xf32>
    %c0_67 = arith.constant 0 : index
    %c0_68 = arith.constant 0 : index
    %c0_69 = arith.constant 0 : index
    %85 = vector.load %arg7[%c0_67, %c0_68, %c0_69] : memref<9x8x4xf32, #tpu.memory_space<vmem>>, vector<1x8x4xf32>
    %86 = vector.shape_cast %85 : vector<1x8x4xf32> to vector<8x4xf32>
    %cst_70 = arith.constant dense<0.000000e+00> : vector<8x352xf32>
    %87 = tpu.matmul %86, %84, %cst_70 {dimension_numbers = #tpu.dot_dimension_numbers<[1], [0], [0], [1], [0, 0, 1, 1], [], []>} : vector<8x4xf32>, vector<4x352xf32>, vector<8x352xf32> -> vector<8x352xf32>
    %88 = arith.addf %83, %87 : vector<8x352xf32>
    %c0_71 = arith.constant 0 : index
    %c47_72 = arith.constant 47 : index
    %89 = vector.load %arg21[%c0_71, %c47_72] : memref<4x506xf32, #tpu.memory_space<vmem>>, vector<4x352xf32>
    %c1_73 = arith.constant 1 : index
    %c0_74 = arith.constant 0 : index
    %c0_75 = arith.constant 0 : index
    %90 = vector.load %arg7[%c1_73, %c0_74, %c0_75] : memref<9x8x4xf32, #tpu.memory_space<vmem>>, vector<1x8x4xf32>
    %91 = vector.shape_cast %90 : vector<1x8x4xf32> to vector<8x4xf32>
    %cst_76 = arith.constant dense<0.000000e+00> : vector<8x352xf32>
    %92 = tpu.matmul %91, %89, %cst_76 {dimension_numbers = #tpu.dot_dimension_numbers<[1], [0], [0], [1], [0, 0, 1, 1], [], []>} : vector<8x4xf32>, vector<4x352xf32>, vector<8x352xf32> -> vector<8x352xf32>
    %93 = arith.addf %88, %92 : vector<8x352xf32>
    %c0_77 = arith.constant 0 : index
    %c48_78 = arith.constant 48 : index
    %94 = vector.load %arg21[%c0_77, %c48_78] : memref<4x506xf32, #tpu.memory_space<vmem>>, vector<4x352xf32>
    %c2_79 = arith.constant 2 : index
    %c0_80 = arith.constant 0 : index
    %c0_81 = arith.constant 0 : index
    %95 = vector.load %arg7[%c2_79, %c0_80, %c0_81] : memref<9x8x4xf32, #tpu.memory_space<vmem>>, vector<1x8x4xf32>
    %96 = vector.shape_cast %95 : vector<1x8x4xf32> to vector<8x4xf32>
    %cst_82 = arith.constant dense<0.000000e+00> : vector<8x352xf32>
    %97 = tpu.matmul %96, %94, %cst_82 {dimension_numbers = #tpu.dot_dimension_numbers<[1], [0], [0], [1], [0, 0, 1, 1], [], []>} : vector<8x4xf32>, vector<4x352xf32>, vector<8x352xf32> -> vector<8x352xf32>
    %98 = arith.addf %93, %97 : vector<8x352xf32>
    %c0_83 = arith.constant 0 : index
    %c68_84 = arith.constant 68 : index
    %99 = vector.load %arg21[%c0_83, %c68_84] : memref<4x506xf32, #tpu.memory_space<vmem>>, vector<4x352xf32>
    %c3_85 = arith.constant 3 : index
    %c0_86 = arith.constant 0 : index
    %c0_87 = arith.constant 0 : index
    %100 = vector.load %arg7[%c3_85, %c0_86, %c0_87] : memref<9x8x4xf32, #tpu.memory_space<vmem>>, vector<1x8x4xf32>
    %101 = vector.shape_cast %100 : vector<1x8x4xf32> to vector<8x4xf32>
    %cst_88 = arith.constant dense<0.000000e+00> : vector<8x352xf32>
    %102 = tpu.matmul %101, %99, %cst_88 {dimension_numbers = #tpu.dot_dimension_numbers<[1], [0], [0], [1], [0, 0, 1, 1], [], []>} : vector<8x4xf32>, vector<4x352xf32>, vector<8x352xf32> -> vector<8x352xf32>
    %103 = arith.addf %98, %102 : vector<8x352xf32>
    %c0_89 = arith.constant 0 : index
    %c69_90 = arith.constant 69 : index
    %104 = vector.load %arg21[%c0_89, %c69_90] : memref<4x506xf32, #tpu.memory_space<vmem>>, vector<4x352xf32>
    %c4_91 = arith.constant 4 : index
    %c0_92 = arith.constant 0 : index
    %c0_93 = arith.constant 0 : index
    %105 = vector.load %arg7[%c4_91, %c0_92, %c0_93] : memref<9x8x4xf32, #tpu.memory_space<vmem>>, vector<1x8x4xf32>
    %106 = vector.shape_cast %105 : vector<1x8x4xf32> to vector<8x4xf32>
    %cst_94 = arith.constant dense<0.000000e+00> : vector<8x352xf32>
    %107 = tpu.matmul %106, %104, %cst_94 {dimension_numbers = #tpu.dot_dimension_numbers<[1], [0], [0], [1], [0, 0, 1, 1], [], []>} : vector<8x4xf32>, vector<4x352xf32>, vector<8x352xf32> -> vector<8x352xf32>
    %108 = arith.addf %103, %107 : vector<8x352xf32>
    %c0_95 = arith.constant 0 : index
    %c70_96 = arith.constant 70 : index
    %109 = vector.load %arg21[%c0_95, %c70_96] : memref<4x506xf32, #tpu.memory_space<vmem>>, vector<4x352xf32>
    %c5_97 = arith.constant 5 : index
    %c0_98 = arith.constant 0 : index
    %c0_99 = arith.constant 0 : index
    %110 = vector.load %arg7[%c5_97, %c0_98, %c0_99] : memref<9x8x4xf32, #tpu.memory_space<vmem>>, vector<1x8x4xf32>
    %111 = vector.shape_cast %110 : vector<1x8x4xf32> to vector<8x4xf32>
    %cst_100 = arith.constant dense<0.000000e+00> : vector<8x352xf32>
    %112 = tpu.matmul %111, %109, %cst_100 {dimension_numbers = #tpu.dot_dimension_numbers<[1], [0], [0], [1], [0, 0, 1, 1], [], []>} : vector<8x4xf32>, vector<4x352xf32>, vector<8x352xf32> -> vector<8x352xf32>
    %113 = arith.addf %108, %112 : vector<8x352xf32>
    %c0_101 = arith.constant 0 : index
    %c90_102 = arith.constant 90 : index
    %114 = vector.load %arg21[%c0_101, %c90_102] : memref<4x506xf32, #tpu.memory_space<vmem>>, vector<4x352xf32>
    %c6_103 = arith.constant 6 : index
    %c0_104 = arith.constant 0 : index
    %c0_105 = arith.constant 0 : index
    %115 = vector.load %arg7[%c6_103, %c0_104, %c0_105] : memref<9x8x4xf32, #tpu.memory_space<vmem>>, vector<1x8x4xf32>
    %116 = vector.shape_cast %115 : vector<1x8x4xf32> to vector<8x4xf32>
    %cst_106 = arith.constant dense<0.000000e+00> : vector<8x352xf32>
    %117 = tpu.matmul %116, %114, %cst_106 {dimension_numbers = #tpu.dot_dimension_numbers<[1], [0], [0], [1], [0, 0, 1, 1], [], []>} : vector<8x4xf32>, vector<4x352xf32>, vector<8x352xf32> -> vector<8x352xf32>
    %118 = arith.addf %113, %117 : vector<8x352xf32>
    %c0_107 = arith.constant 0 : index
    %c91_108 = arith.constant 91 : index
    %119 = vector.load %arg21[%c0_107, %c91_108] : memref<4x506xf32, #tpu.memory_space<vmem>>, vector<4x352xf32>
    %c7_109 = arith.constant 7 : index
    %c0_110 = arith.constant 0 : index
    %c0_111 = arith.constant 0 : index
    %120 = vector.load %arg7[%c7_109, %c0_110, %c0_111] : memref<9x8x4xf32, #tpu.memory_space<vmem>>, vector<1x8x4xf32>
    %121 = vector.shape_cast %120 : vector<1x8x4xf32> to vector<8x4xf32>
    %cst_112 = arith.constant dense<0.000000e+00> : vector<8x352xf32>
    %122 = tpu.matmul %121, %119, %cst_112 {dimension_numbers = #tpu.dot_dimension_numbers<[1], [0], [0], [1], [0, 0, 1, 1], [], []>} : vector<8x4xf32>, vector<4x352xf32>, vector<8x352xf32> -> vector<8x352xf32>
    %123 = arith.addf %118, %122 : vector<8x352xf32>
    %c0_113 = arith.constant 0 : index
    %c92_114 = arith.constant 92 : index
    %124 = vector.load %arg21[%c0_113, %c92_114] : memref<4x506xf32, #tpu.memory_space<vmem>>, vector<4x352xf32>
    %c8_115 = arith.constant 8 : index
    %c0_116 = arith.constant 0 : index
    %c0_117 = arith.constant 0 : index
    %125 = vector.load %arg7[%c8_115, %c0_116, %c0_117] : memref<9x8x4xf32, #tpu.memory_space<vmem>>, vector<1x8x4xf32>
    %126 = vector.shape_cast %125 : vector<1x8x4xf32> to vector<8x4xf32>
    %cst_118 = arith.constant dense<0.000000e+00> : vector<8x352xf32>
    %127 = tpu.matmul %126, %124, %cst_118 {dimension_numbers = #tpu.dot_dimension_numbers<[1], [0], [0], [1], [0, 0, 1, 1], [], []>} : vector<8x4xf32>, vector<4x352xf32>, vector<8x352xf32> -> vector<8x352xf32>
    %128 = arith.addf %123, %127 : vector<8x352xf32>
    %c0_119 = arith.constant 0 : index
    %c0_120 = arith.constant 0 : index
    %129 = vector.load %arg8[%c0_119, %c0_120] : memref<8x1xf32, #tpu.memory_space<vmem>>, vector<8x1xf32>
    %130 = vector.broadcast %129 : vector<8x1xf32> to vector<8x352xf32>
    %131 = arith.addf %128, %130 : vector<8x352xf32>
    %cst_121 = arith.constant 0.000000e+00 : f32
    %132 = vector.broadcast %cst_121 : f32 to vector<8x352xf32>
    %133 = arith.maximumf %131, %132 : vector<8x352xf32>
    %cst_122 = arith.constant 0.000000e+00 : f32
    %134 = vector.broadcast %cst_122 : f32 to vector<8x506xf32>
    %c0_123 = arith.constant 0 : index
    %c0_124 = arith.constant 0 : index
    %135 = vector.load %arg22[%c0_123, %c0_124] : memref<8x506xf32, #tpu.memory_space<vmem>>, vector<8x506xf32>
    tpu.vector_store %arg22[%c0_123, %c0_124], %134 {strides = array<i32>} : memref<8x506xf32, #tpu.memory_space<vmem>>, vector<8x506xf32>,
    %cst_125 = arith.constant 0.000000e+00 : f32
    %136 = vector.shape_cast %2 : vector<1x352xi1> to vector<1x352xi1>
    %137 = vector.broadcast %136 : vector<1x352xi1> to vector<8x352xi1>
    %138 = vector.broadcast %cst_125 : f32 to vector<8x352xf32>
    %139 = arith.select %137, %133, %138 : vector<8x352xi1>, vector<8x352xf32>
    %c0_126 = arith.constant 0 : index
    %c69_127 = arith.constant 69 : index
    %140 = vector.load %arg22[%c0_126, %c69_127] : memref<8x506xf32, #tpu.memory_space<vmem>>, vector<8x352xf32>
    tpu.vector_store %arg22[%c0_126, %c69_127], %139 {strides = array<i32>} : memref<8x506xf32, #tpu.memory_space<vmem>>, vector<8x352xf32>,
    %cst_128 = arith.constant 0.000000e+00 : f32
    %141 = vector.broadcast %cst_128 : f32 to vector<8x352xf32>
    %c0_129 = arith.constant 0 : index
    %c23 = arith.constant 23 : index
    %142 = vector.load %arg22[%c0_129, %c23] : memref<8x506xf32, #tpu.memory_space<vmem>>, vector<8x352xf32>
    %c0_130 = arith.constant 0 : index
    %c0_131 = arith.constant 0 : index
    %c0_132 = arith.constant 0 : index
    %143 = vector.load %arg9[%c0_130, %c0_131, %c0_132] : memref<9x8x8xf32, #tpu.memory_space<vmem>>, vector<1x8x8xf32>
    %144 = vector.shape_cast %143 : vector<1x8x8xf32> to vector<8x8xf32>
    %cst_133 = arith.constant dense<0.000000e+00> : vector<8x352xf32>
    %145 = tpu.matmul %144, %142, %cst_133 {dimension_numbers = #tpu.dot_dimension_numbers<[1], [0], [0], [1], [0, 0, 1, 1], [], []>} : vector<8x8xf32>, vector<8x352xf32>, vector<8x352xf32> -> vector<8x352xf32>
    %146 = arith.addf %141, %145 : vector<8x352xf32>
    %c0_134 = arith.constant 0 : index
    %c25 = arith.constant 25 : index
    %147 = vector.load %arg22[%c0_134, %c25] : memref<8x506xf32, #tpu.memory_space<vmem>>, vector<8x352xf32>
    %c1_135 = arith.constant 1 : index
    %c0_136 = arith.constant 0 : index
    %c0_137 = arith.constant 0 : index
    %148 = vector.load %arg9[%c1_135, %c0_136, %c0_137] : memref<9x8x8xf32, #tpu.memory_space<vmem>>, vector<1x8x8xf32>
    %149 = vector.shape_cast %148 : vector<1x8x8xf32> to vector<8x8xf32>
    %cst_138 = arith.constant dense<0.000000e+00> : vector<8x352xf32>
    %150 = tpu.matmul %149, %147, %cst_138 {dimension_numbers = #tpu.dot_dimension_numbers<[1], [0], [0], [1], [0, 0, 1, 1], [], []>} : vector<8x8xf32>, vector<8x352xf32>, vector<8x352xf32> -> vector<8x352xf32>
    %151 = arith.addf %146, %150 : vector<8x352xf32>
    %c0_139 = arith.constant 0 : index
    %c27 = arith.constant 27 : index
    %152 = vector.load %arg22[%c0_139, %c27] : memref<8x506xf32, #tpu.memory_space<vmem>>, vector<8x352xf32>
    %c2_140 = arith.constant 2 : index
    %c0_141 = arith.constant 0 : index
    %c0_142 = arith.constant 0 : index
    %153 = vector.load %arg9[%c2_140, %c0_141, %c0_142] : memref<9x8x8xf32, #tpu.memory_space<vmem>>, vector<1x8x8xf32>
    %154 = vector.shape_cast %153 : vector<1x8x8xf32> to vector<8x8xf32>
    %cst_143 = arith.constant dense<0.000000e+00> : vector<8x352xf32>
    %155 = tpu.matmul %154, %152, %cst_143 {dimension_numbers = #tpu.dot_dimension_numbers<[1], [0], [0], [1], [0, 0, 1, 1], [], []>} : vector<8x8xf32>, vector<8x352xf32>, vector<8x352xf32> -> vector<8x352xf32>
    %156 = arith.addf %151, %155 : vector<8x352xf32>
    %c0_144 = arith.constant 0 : index
    %c67 = arith.constant 67 : index
    %157 = vector.load %arg22[%c0_144, %c67] : memref<8x506xf32, #tpu.memory_space<vmem>>, vector<8x352xf32>
    %c3_145 = arith.constant 3 : index
    %c0_146 = arith.constant 0 : index
    %c0_147 = arith.constant 0 : index
    %158 = vector.load %arg9[%c3_145, %c0_146, %c0_147] : memref<9x8x8xf32, #tpu.memory_space<vmem>>, vector<1x8x8xf32>
    %159 = vector.shape_cast %158 : vector<1x8x8xf32> to vector<8x8xf32>
    %cst_148 = arith.constant dense<0.000000e+00> : vector<8x352xf32>
    %160 = tpu.matmul %159, %157, %cst_148 {dimension_numbers = #tpu.dot_dimension_numbers<[1], [0], [0], [1], [0, 0, 1, 1], [], []>} : vector<8x8xf32>, vector<8x352xf32>, vector<8x352xf32> -> vector<8x352xf32>
    %161 = arith.addf %156, %160 : vector<8x352xf32>
    %c0_149 = arith.constant 0 : index
    %c69_150 = arith.constant 69 : index
    %162 = vector.load %arg22[%c0_149, %c69_150] : memref<8x506xf32, #tpu.memory_space<vmem>>, vector<8x352xf32>
    %c4_151 = arith.constant 4 : index
    %c0_152 = arith.constant 0 : index
    %c0_153 = arith.constant 0 : index
    %163 = vector.load %arg9[%c4_151, %c0_152, %c0_153] : memref<9x8x8xf32, #tpu.memory_space<vmem>>, vector<1x8x8xf32>
    %164 = vector.shape_cast %163 : vector<1x8x8xf32> to vector<8x8xf32>
    %cst_154 = arith.constant dense<0.000000e+00> : vector<8x352xf32>
    %165 = tpu.matmul %164, %162, %cst_154 {dimension_numbers = #tpu.dot_dimension_numbers<[1], [0], [0], [1], [0, 0, 1, 1], [], []>} : vector<8x8xf32>, vector<8x352xf32>, vector<8x352xf32> -> vector<8x352xf32>
    %166 = arith.addf %161, %165 : vector<8x352xf32>
    %c0_155 = arith.constant 0 : index
    %c71 = arith.constant 71 : index
    %167 = vector.load %arg22[%c0_155, %c71] : memref<8x506xf32, #tpu.memory_space<vmem>>, vector<8x352xf32>
    %c5_156 = arith.constant 5 : index
    %c0_157 = arith.constant 0 : index
    %c0_158 = arith.constant 0 : index
    %168 = vector.load %arg9[%c5_156, %c0_157, %c0_158] : memref<9x8x8xf32, #tpu.memory_space<vmem>>, vector<1x8x8xf32>
    %169 = vector.shape_cast %168 : vector<1x8x8xf32> to vector<8x8xf32>
    %cst_159 = arith.constant dense<0.000000e+00> : vector<8x352xf32>
    %170 = tpu.matmul %169, %167, %cst_159 {dimension_numbers = #tpu.dot_dimension_numbers<[1], [0], [0], [1], [0, 0, 1, 1], [], []>} : vector<8x8xf32>, vector<8x352xf32>, vector<8x352xf32> -> vector<8x352xf32>
    %171 = arith.addf %166, %170 : vector<8x352xf32>
    %c0_160 = arith.constant 0 : index
    %c111 = arith.constant 111 : index
    %172 = vector.load %arg22[%c0_160, %c111] : memref<8x506xf32, #tpu.memory_space<vmem>>, vector<8x352xf32>
    %c6_161 = arith.constant 6 : index
    %c0_162 = arith.constant 0 : index
    %c0_163 = arith.constant 0 : index
    %173 = vector.load %arg9[%c6_161, %c0_162, %c0_163] : memref<9x8x8xf32, #tpu.memory_space<vmem>>, vector<1x8x8xf32>
    %174 = vector.shape_cast %173 : vector<1x8x8xf32> to vector<8x8xf32>
    %cst_164 = arith.constant dense<0.000000e+00> : vector<8x352xf32>
    %175 = tpu.matmul %174, %172, %cst_164 {dimension_numbers = #tpu.dot_dimension_numbers<[1], [0], [0], [1], [0, 0, 1, 1], [], []>} : vector<8x8xf32>, vector<8x352xf32>, vector<8x352xf32> -> vector<8x352xf32>
    %176 = arith.addf %171, %175 : vector<8x352xf32>
    %c0_165 = arith.constant 0 : index
    %c113 = arith.constant 113 : index
    %177 = vector.load %arg22[%c0_165, %c113] : memref<8x506xf32, #tpu.memory_space<vmem>>, vector<8x352xf32>
    %c7_166 = arith.constant 7 : index
    %c0_167 = arith.constant 0 : index
    %c0_168 = arith.constant 0 : index
    %178 = vector.load %arg9[%c7_166, %c0_167, %c0_168] : memref<9x8x8xf32, #tpu.memory_space<vmem>>, vector<1x8x8xf32>
    %179 = vector.shape_cast %178 : vector<1x8x8xf32> to vector<8x8xf32>
    %cst_169 = arith.constant dense<0.000000e+00> : vector<8x352xf32>
    %180 = tpu.matmul %179, %177, %cst_169 {dimension_numbers = #tpu.dot_dimension_numbers<[1], [0], [0], [1], [0, 0, 1, 1], [], []>} : vector<8x8xf32>, vector<8x352xf32>, vector<8x352xf32> -> vector<8x352xf32>
    %181 = arith.addf %176, %180 : vector<8x352xf32>
    %c0_170 = arith.constant 0 : index
    %c115 = arith.constant 115 : index
    %182 = vector.load %arg22[%c0_170, %c115] : memref<8x506xf32, #tpu.memory_space<vmem>>, vector<8x352xf32>
    %c8_171 = arith.constant 8 : index
    %c0_172 = arith.constant 0 : index
    %c0_173 = arith.constant 0 : index
    %183 = vector.load %arg9[%c8_171, %c0_172, %c0_173] : memref<9x8x8xf32, #tpu.memory_space<vmem>>, vector<1x8x8xf32>
    %184 = vector.shape_cast %183 : vector<1x8x8xf32> to vector<8x8xf32>
    %cst_174 = arith.constant dense<0.000000e+00> : vector<8x352xf32>
    %185 = tpu.matmul %184, %182, %cst_174 {dimension_numbers = #tpu.dot_dimension_numbers<[1], [0], [0], [1], [0, 0, 1, 1], [], []>} : vector<8x8xf32>, vector<8x352xf32>, vector<8x352xf32> -> vector<8x352xf32>
    %186 = arith.addf %181, %185 : vector<8x352xf32>
    %c0_175 = arith.constant 0 : index
    %c0_176 = arith.constant 0 : index
    %187 = vector.load %arg10[%c0_175, %c0_176] : memref<8x1xf32, #tpu.memory_space<vmem>>, vector<8x1xf32>
    %188 = vector.broadcast %187 : vector<8x1xf32> to vector<8x352xf32>
    %189 = arith.addf %186, %188 : vector<8x352xf32>
    %cst_177 = arith.constant 0.000000e+00 : f32
    %190 = vector.broadcast %cst_177 : f32 to vector<4x506xf32>
    %c0_178 = arith.constant 0 : index
    %c0_179 = arith.constant 0 : index
    %191 = vector.load %arg23[%c0_178, %c0_179] : memref<4x506xf32, #tpu.memory_space<vmem>>, vector<4x506xf32>
    tpu.vector_store %arg23[%c0_178, %c0_179], %190 {strides = array<i32>} : memref<4x506xf32, #tpu.memory_space<vmem>>, vector<4x506xf32>,
    %cst_180 = arith.constant 0.000000e+00 : f32
    %192 = vector.shape_cast %2 : vector<1x352xi1> to vector<1x352xi1>
    %193 = vector.broadcast %192 : vector<1x352xi1> to vector<4x352xi1>
    %194 = vector.broadcast %cst_180 : f32 to vector<4x352xf32>
    %195 = arith.select %193, %18, %194 : vector<4x352xi1>, vector<4x352xf32>
    %c0_181 = arith.constant 0 : index
    %c69_182 = arith.constant 69 : index
    %196 = vector.load %arg23[%c0_181, %c69_182] : memref<4x506xf32, #tpu.memory_space<vmem>>, vector<4x352xf32>
    tpu.vector_store %arg23[%c0_181, %c69_182], %195 {strides = array<i32>} : memref<4x506xf32, #tpu.memory_space<vmem>>, vector<4x352xf32>,
    %cst_183 = arith.constant 0.000000e+00 : f32
    %197 = vector.broadcast %cst_183 : f32 to vector<6x352xf32>
    %c0_184 = arith.constant 0 : index
    %c46_185 = arith.constant 46 : index
    %198 = vector.load %arg23[%c0_184, %c46_185] : memref<4x506xf32, #tpu.memory_space<vmem>>, vector<4x352xf32>
    %c0_186 = arith.constant 0 : index
    %c0_187 = arith.constant 0 : index
    %c0_188 = arith.constant 0 : index
    %199 = vector.load %arg11[%c0_186, %c0_187, %c0_188] : memref<9x6x4xf32, #tpu.memory_space<vmem>>, vector<1x6x4xf32>
    %200 = vector.shape_cast %199 : vector<1x6x4xf32> to vector<6x4xf32>
    %cst_189 = arith.constant dense<0.000000e+00> : vector<6x352xf32>
    %201 = tpu.matmul %200, %198, %cst_189 {dimension_numbers = #tpu.dot_dimension_numbers<[1], [0], [0], [1], [0, 0, 1, 1], [], []>} : vector<6x4xf32>, vector<4x352xf32>, vector<6x352xf32> -> vector<6x352xf32>
    %202 = arith.addf %197, %201 : vector<6x352xf32>
    %c0_190 = arith.constant 0 : index
    %c47_191 = arith.constant 47 : index
    %203 = vector.load %arg23[%c0_190, %c47_191] : memref<4x506xf32, #tpu.memory_space<vmem>>, vector<4x352xf32>
    %c1_192 = arith.constant 1 : index
    %c0_193 = arith.constant 0 : index
    %c0_194 = arith.constant 0 : index
    %204 = vector.load %arg11[%c1_192, %c0_193, %c0_194] : memref<9x6x4xf32, #tpu.memory_space<vmem>>, vector<1x6x4xf32>
    %205 = vector.shape_cast %204 : vector<1x6x4xf32> to vector<6x4xf32>
    %cst_195 = arith.constant dense<0.000000e+00> : vector<6x352xf32>
    %206 = tpu.matmul %205, %203, %cst_195 {dimension_numbers = #tpu.dot_dimension_numbers<[1], [0], [0], [1], [0, 0, 1, 1], [], []>} : vector<6x4xf32>, vector<4x352xf32>, vector<6x352xf32> -> vector<6x352xf32>
    %207 = arith.addf %202, %206 : vector<6x352xf32>
    %c0_196 = arith.constant 0 : index
    %c48_197 = arith.constant 48 : index
    %208 = vector.load %arg23[%c0_196, %c48_197] : memref<4x506xf32, #tpu.memory_space<vmem>>, vector<4x352xf32>
    %c2_198 = arith.constant 2 : index
    %c0_199 = arith.constant 0 : index
    %c0_200 = arith.constant 0 : index
    %209 = vector.load %arg11[%c2_198, %c0_199, %c0_200] : memref<9x6x4xf32, #tpu.memory_space<vmem>>, vector<1x6x4xf32>
    %210 = vector.shape_cast %209 : vector<1x6x4xf32> to vector<6x4xf32>
    %cst_201 = arith.constant dense<0.000000e+00> : vector<6x352xf32>
    %211 = tpu.matmul %210, %208, %cst_201 {dimension_numbers = #tpu.dot_dimension_numbers<[1], [0], [0], [1], [0, 0, 1, 1], [], []>} : vector<6x4xf32>, vector<4x352xf32>, vector<6x352xf32> -> vector<6x352xf32>
    %212 = arith.addf %207, %211 : vector<6x352xf32>
    %c0_202 = arith.constant 0 : index
    %c68_203 = arith.constant 68 : index
    %213 = vector.load %arg23[%c0_202, %c68_203] : memref<4x506xf32, #tpu.memory_space<vmem>>, vector<4x352xf32>
    %c3_204 = arith.constant 3 : index
    %c0_205 = arith.constant 0 : index
    %c0_206 = arith.constant 0 : index
    %214 = vector.load %arg11[%c3_204, %c0_205, %c0_206] : memref<9x6x4xf32, #tpu.memory_space<vmem>>, vector<1x6x4xf32>
    %215 = vector.shape_cast %214 : vector<1x6x4xf32> to vector<6x4xf32>
    %cst_207 = arith.constant dense<0.000000e+00> : vector<6x352xf32>
    %216 = tpu.matmul %215, %213, %cst_207 {dimension_numbers = #tpu.dot_dimension_numbers<[1], [0], [0], [1], [0, 0, 1, 1], [], []>} : vector<6x4xf32>, vector<4x352xf32>, vector<6x352xf32> -> vector<6x352xf32>
    %217 = arith.addf %212, %216 : vector<6x352xf32>
    %c0_208 = arith.constant 0 : index
    %c69_209 = arith.constant 69 : index
    %218 = vector.load %arg23[%c0_208, %c69_209] : memref<4x506xf32, #tpu.memory_space<vmem>>, vector<4x352xf32>
    %c4_210 = arith.constant 4 : index
    %c0_211 = arith.constant 0 : index
    %c0_212 = arith.constant 0 : index
    %219 = vector.load %arg11[%c4_210, %c0_211, %c0_212] : memref<9x6x4xf32, #tpu.memory_space<vmem>>, vector<1x6x4xf32>
    %220 = vector.shape_cast %219 : vector<1x6x4xf32> to vector<6x4xf32>
    %cst_213 = arith.constant dense<0.000000e+00> : vector<6x352xf32>
    %221 = tpu.matmul %220, %218, %cst_213 {dimension_numbers = #tpu.dot_dimension_numbers<[1], [0], [0], [1], [0, 0, 1, 1], [], []>} : vector<6x4xf32>, vector<4x352xf32>, vector<6x352xf32> -> vector<6x352xf32>
    %222 = arith.addf %217, %221 : vector<6x352xf32>
    %c0_214 = arith.constant 0 : index
    %c70_215 = arith.constant 70 : index
    %223 = vector.load %arg23[%c0_214, %c70_215] : memref<4x506xf32, #tpu.memory_space<vmem>>, vector<4x352xf32>
    %c5_216 = arith.constant 5 : index
    %c0_217 = arith.constant 0 : index
    %c0_218 = arith.constant 0 : index
    %224 = vector.load %arg11[%c5_216, %c0_217, %c0_218] : memref<9x6x4xf32, #tpu.memory_space<vmem>>, vector<1x6x4xf32>
    %225 = vector.shape_cast %224 : vector<1x6x4xf32> to vector<6x4xf32>
    %cst_219 = arith.constant dense<0.000000e+00> : vector<6x352xf32>
    %226 = tpu.matmul %225, %223, %cst_219 {dimension_numbers = #tpu.dot_dimension_numbers<[1], [0], [0], [1], [0, 0, 1, 1], [], []>} : vector<6x4xf32>, vector<4x352xf32>, vector<6x352xf32> -> vector<6x352xf32>
    %227 = arith.addf %222, %226 : vector<6x352xf32>
    %c0_220 = arith.constant 0 : index
    %c90_221 = arith.constant 90 : index
    %228 = vector.load %arg23[%c0_220, %c90_221] : memref<4x506xf32, #tpu.memory_space<vmem>>, vector<4x352xf32>
    %c6_222 = arith.constant 6 : index
    %c0_223 = arith.constant 0 : index
    %c0_224 = arith.constant 0 : index
    %229 = vector.load %arg11[%c6_222, %c0_223, %c0_224] : memref<9x6x4xf32, #tpu.memory_space<vmem>>, vector<1x6x4xf32>
    %230 = vector.shape_cast %229 : vector<1x6x4xf32> to vector<6x4xf32>
    %cst_225 = arith.constant dense<0.000000e+00> : vector<6x352xf32>
    %231 = tpu.matmul %230, %228, %cst_225 {dimension_numbers = #tpu.dot_dimension_numbers<[1], [0], [0], [1], [0, 0, 1, 1], [], []>} : vector<6x4xf32>, vector<4x352xf32>, vector<6x352xf32> -> vector<6x352xf32>
    %232 = arith.addf %227, %231 : vector<6x352xf32>
    %c0_226 = arith.constant 0 : index
    %c91_227 = arith.constant 91 : index
    %233 = vector.load %arg23[%c0_226, %c91_227] : memref<4x506xf32, #tpu.memory_space<vmem>>, vector<4x352xf32>
    %c7_228 = arith.constant 7 : index
    %c0_229 = arith.constant 0 : index
    %c0_230 = arith.constant 0 : index
    %234 = vector.load %arg11[%c7_228, %c0_229, %c0_230] : memref<9x6x4xf32, #tpu.memory_space<vmem>>, vector<1x6x4xf32>
    %235 = vector.shape_cast %234 : vector<1x6x4xf32> to vector<6x4xf32>
    %cst_231 = arith.constant dense<0.000000e+00> : vector<6x352xf32>
    %236 = tpu.matmul %235, %233, %cst_231 {dimension_numbers = #tpu.dot_dimension_numbers<[1], [0], [0], [1], [0, 0, 1, 1], [], []>} : vector<6x4xf32>, vector<4x352xf32>, vector<6x352xf32> -> vector<6x352xf32>
    %237 = arith.addf %232, %236 : vector<6x352xf32>
    %c0_232 = arith.constant 0 : index
    %c92_233 = arith.constant 92 : index
    %238 = vector.load %arg23[%c0_232, %c92_233] : memref<4x506xf32, #tpu.memory_space<vmem>>, vector<4x352xf32>
    %c8_234 = arith.constant 8 : index
    %c0_235 = arith.constant 0 : index
    %c0_236 = arith.constant 0 : index
    %239 = vector.load %arg11[%c8_234, %c0_235, %c0_236] : memref<9x6x4xf32, #tpu.memory_space<vmem>>, vector<1x6x4xf32>
    %240 = vector.shape_cast %239 : vector<1x6x4xf32> to vector<6x4xf32>
    %cst_237 = arith.constant dense<0.000000e+00> : vector<6x352xf32>
    %241 = tpu.matmul %240, %238, %cst_237 {dimension_numbers = #tpu.dot_dimension_numbers<[1], [0], [0], [1], [0, 0, 1, 1], [], []>} : vector<6x4xf32>, vector<4x352xf32>, vector<6x352xf32> -> vector<6x352xf32>
    %242 = arith.addf %237, %241 : vector<6x352xf32>
    %c0_238 = arith.constant 0 : index
    %c0_239 = arith.constant 0 : index
    %243 = vector.load %arg12[%c0_238, %c0_239] : memref<6x1xf32, #tpu.memory_space<vmem>>, vector<6x1xf32>
    %244 = vector.broadcast %243 : vector<6x1xf32> to vector<6x352xf32>
    %245 = arith.addf %242, %244 : vector<6x352xf32>
    %cst_240 = arith.constant 0.000000e+00 : f32
    %246 = vector.broadcast %cst_240 : f32 to vector<6x352xf32>
    %247 = arith.maximumf %245, %246 : vector<6x352xf32>
    %cst_241 = arith.constant 0.000000e+00 : f32
    %248 = vector.broadcast %cst_241 : f32 to vector<6x506xf32>
    %c0_242 = arith.constant 0 : index
    %c0_243 = arith.constant 0 : index
    %249 = vector.load %arg24[%c0_242, %c0_243] : memref<6x506xf32, #tpu.memory_space<vmem>>, vector<6x506xf32>
    tpu.vector_store %arg24[%c0_242, %c0_243], %248 {strides = array<i32>} : memref<6x506xf32, #tpu.memory_space<vmem>>, vector<6x506xf32>,
    %cst_244 = arith.constant 0.000000e+00 : f32
    %250 = vector.shape_cast %2 : vector<1x352xi1> to vector<1x352xi1>
    %251 = vector.broadcast %250 : vector<1x352xi1> to vector<6x352xi1>
    %252 = vector.broadcast %cst_244 : f32 to vector<6x352xf32>
    %253 = arith.select %251, %247, %252 : vector<6x352xi1>, vector<6x352xf32>
    %c0_245 = arith.constant 0 : index
    %c69_246 = arith.constant 69 : index
    %254 = vector.load %arg24[%c0_245, %c69_246] : memref<6x506xf32, #tpu.memory_space<vmem>>, vector<6x352xf32>
    tpu.vector_store %arg24[%c0_245, %c69_246], %253 {strides = array<i32>} : memref<6x506xf32, #tpu.memory_space<vmem>>, vector<6x352xf32>,
    %cst_247 = arith.constant 0.000000e+00 : f32
    %255 = vector.broadcast %cst_247 : f32 to vector<8x352xf32>
    %c0_248 = arith.constant 0 : index
    %c46_249 = arith.constant 46 : index
    %256 = vector.load %arg24[%c0_248, %c46_249] : memref<6x506xf32, #tpu.memory_space<vmem>>, vector<6x352xf32>
    %c0_250 = arith.constant 0 : index
    %c0_251 = arith.constant 0 : index
    %c0_252 = arith.constant 0 : index
    %257 = vector.load %arg13[%c0_250, %c0_251, %c0_252] : memref<9x8x6xf32, #tpu.memory_space<vmem>>, vector<1x8x6xf32>
    %258 = vector.shape_cast %257 : vector<1x8x6xf32> to vector<8x6xf32>
    %cst_253 = arith.constant dense<0.000000e+00> : vector<8x352xf32>
    %259 = tpu.matmul %258, %256, %cst_253 {dimension_numbers = #tpu.dot_dimension_numbers<[1], [0], [0], [1], [0, 0, 1, 1], [], []>} : vector<8x6xf32>, vector<6x352xf32>, vector<8x352xf32> -> vector<8x352xf32>
    %260 = arith.addf %255, %259 : vector<8x352xf32>
    %c0_254 = arith.constant 0 : index
    %c47_255 = arith.constant 47 : index
    %261 = vector.load %arg24[%c0_254, %c47_255] : memref<6x506xf32, #tpu.memory_space<vmem>>, vector<6x352xf32>
    %c1_256 = arith.constant 1 : index
    %c0_257 = arith.constant 0 : index
    %c0_258 = arith.constant 0 : index
    %262 = vector.load %arg13[%c1_256, %c0_257, %c0_258] : memref<9x8x6xf32, #tpu.memory_space<vmem>>, vector<1x8x6xf32>
    %263 = vector.shape_cast %262 : vector<1x8x6xf32> to vector<8x6xf32>
    %cst_259 = arith.constant dense<0.000000e+00> : vector<8x352xf32>
    %264 = tpu.matmul %263, %261, %cst_259 {dimension_numbers = #tpu.dot_dimension_numbers<[1], [0], [0], [1], [0, 0, 1, 1], [], []>} : vector<8x6xf32>, vector<6x352xf32>, vector<8x352xf32> -> vector<8x352xf32>
    %265 = arith.addf %260, %264 : vector<8x352xf32>
    %c0_260 = arith.constant 0 : index
    %c48_261 = arith.constant 48 : index
    %266 = vector.load %arg24[%c0_260, %c48_261] : memref<6x506xf32, #tpu.memory_space<vmem>>, vector<6x352xf32>
    %c2_262 = arith.constant 2 : index
    %c0_263 = arith.constant 0 : index
    %c0_264 = arith.constant 0 : index
    %267 = vector.load %arg13[%c2_262, %c0_263, %c0_264] : memref<9x8x6xf32, #tpu.memory_space<vmem>>, vector<1x8x6xf32>
    %268 = vector.shape_cast %267 : vector<1x8x6xf32> to vector<8x6xf32>
    %cst_265 = arith.constant dense<0.000000e+00> : vector<8x352xf32>
    %269 = tpu.matmul %268, %266, %cst_265 {dimension_numbers = #tpu.dot_dimension_numbers<[1], [0], [0], [1], [0, 0, 1, 1], [], []>} : vector<8x6xf32>, vector<6x352xf32>, vector<8x352xf32> -> vector<8x352xf32>
    %270 = arith.addf %265, %269 : vector<8x352xf32>
    %c0_266 = arith.constant 0 : index
    %c68_267 = arith.constant 68 : index
    %271 = vector.load %arg24[%c0_266, %c68_267] : memref<6x506xf32, #tpu.memory_space<vmem>>, vector<6x352xf32>
    %c3_268 = arith.constant 3 : index
    %c0_269 = arith.constant 0 : index
    %c0_270 = arith.constant 0 : index
    %272 = vector.load %arg13[%c3_268, %c0_269, %c0_270] : memref<9x8x6xf32, #tpu.memory_space<vmem>>, vector<1x8x6xf32>
    %273 = vector.shape_cast %272 : vector<1x8x6xf32> to vector<8x6xf32>
    %cst_271 = arith.constant dense<0.000000e+00> : vector<8x352xf32>
    %274 = tpu.matmul %273, %271, %cst_271 {dimension_numbers = #tpu.dot_dimension_numbers<[1], [0], [0], [1], [0, 0, 1, 1], [], []>} : vector<8x6xf32>, vector<6x352xf32>, vector<8x352xf32> -> vector<8x352xf32>
    %275 = arith.addf %270, %274 : vector<8x352xf32>
    %c0_272 = arith.constant 0 : index
    %c69_273 = arith.constant 69 : index
    %276 = vector.load %arg24[%c0_272, %c69_273] : memref<6x506xf32, #tpu.memory_space<vmem>>, vector<6x352xf32>
    %c4_274 = arith.constant 4 : index
    %c0_275 = arith.constant 0 : index
    %c0_276 = arith.constant 0 : index
    %277 = vector.load %arg13[%c4_274, %c0_275, %c0_276] : memref<9x8x6xf32, #tpu.memory_space<vmem>>, vector<1x8x6xf32>
    %278 = vector.shape_cast %277 : vector<1x8x6xf32> to vector<8x6xf32>
    %cst_277 = arith.constant dense<0.000000e+00> : vector<8x352xf32>
    %279 = tpu.matmul %278, %276, %cst_277 {dimension_numbers = #tpu.dot_dimension_numbers<[1], [0], [0], [1], [0, 0, 1, 1], [], []>} : vector<8x6xf32>, vector<6x352xf32>, vector<8x352xf32> -> vector<8x352xf32>
    %280 = arith.addf %275, %279 : vector<8x352xf32>
    %c0_278 = arith.constant 0 : index
    %c70_279 = arith.constant 70 : index
    %281 = vector.load %arg24[%c0_278, %c70_279] : memref<6x506xf32, #tpu.memory_space<vmem>>, vector<6x352xf32>
    %c5_280 = arith.constant 5 : index
    %c0_281 = arith.constant 0 : index
    %c0_282 = arith.constant 0 : index
    %282 = vector.load %arg13[%c5_280, %c0_281, %c0_282] : memref<9x8x6xf32, #tpu.memory_space<vmem>>, vector<1x8x6xf32>
    %283 = vector.shape_cast %282 : vector<1x8x6xf32> to vector<8x6xf32>
    %cst_283 = arith.constant dense<0.000000e+00> : vector<8x352xf32>
    %284 = tpu.matmul %283, %281, %cst_283 {dimension_numbers = #tpu.dot_dimension_numbers<[1], [0], [0], [1], [0, 0, 1, 1], [], []>} : vector<8x6xf32>, vector<6x352xf32>, vector<8x352xf32> -> vector<8x352xf32>
    %285 = arith.addf %280, %284 : vector<8x352xf32>
    %c0_284 = arith.constant 0 : index
    %c90_285 = arith.constant 90 : index
    %286 = vector.load %arg24[%c0_284, %c90_285] : memref<6x506xf32, #tpu.memory_space<vmem>>, vector<6x352xf32>
    %c6_286 = arith.constant 6 : index
    %c0_287 = arith.constant 0 : index
    %c0_288 = arith.constant 0 : index
    %287 = vector.load %arg13[%c6_286, %c0_287, %c0_288] : memref<9x8x6xf32, #tpu.memory_space<vmem>>, vector<1x8x6xf32>
    %288 = vector.shape_cast %287 : vector<1x8x6xf32> to vector<8x6xf32>
    %cst_289 = arith.constant dense<0.000000e+00> : vector<8x352xf32>
    %289 = tpu.matmul %288, %286, %cst_289 {dimension_numbers = #tpu.dot_dimension_numbers<[1], [0], [0], [1], [0, 0, 1, 1], [], []>} : vector<8x6xf32>, vector<6x352xf32>, vector<8x352xf32> -> vector<8x352xf32>
    %290 = arith.addf %285, %289 : vector<8x352xf32>
    %c0_290 = arith.constant 0 : index
    %c91_291 = arith.constant 91 : index
    %291 = vector.load %arg24[%c0_290, %c91_291] : memref<6x506xf32, #tpu.memory_space<vmem>>, vector<6x352xf32>
    %c7_292 = arith.constant 7 : index
    %c0_293 = arith.constant 0 : index
    %c0_294 = arith.constant 0 : index
    %292 = vector.load %arg13[%c7_292, %c0_293, %c0_294] : memref<9x8x6xf32, #tpu.memory_space<vmem>>, vector<1x8x6xf32>
    %293 = vector.shape_cast %292 : vector<1x8x6xf32> to vector<8x6xf32>
    %cst_295 = arith.constant dense<0.000000e+00> : vector<8x352xf32>
    %294 = tpu.matmul %293, %291, %cst_295 {dimension_numbers = #tpu.dot_dimension_numbers<[1], [0], [0], [1], [0, 0, 1, 1], [], []>} : vector<8x6xf32>, vector<6x352xf32>, vector<8x352xf32> -> vector<8x352xf32>
    %295 = arith.addf %290, %294 : vector<8x352xf32>
    %c0_296 = arith.constant 0 : index
    %c92_297 = arith.constant 92 : index
    %296 = vector.load %arg24[%c0_296, %c92_297] : memref<6x506xf32, #tpu.memory_space<vmem>>, vector<6x352xf32>
    %c8_298 = arith.constant 8 : index
    %c0_299 = arith.constant 0 : index
    %c0_300 = arith.constant 0 : index
    %297 = vector.load %arg13[%c8_298, %c0_299, %c0_300] : memref<9x8x6xf32, #tpu.memory_space<vmem>>, vector<1x8x6xf32>
    %298 = vector.shape_cast %297 : vector<1x8x6xf32> to vector<8x6xf32>
    %cst_301 = arith.constant dense<0.000000e+00> : vector<8x352xf32>
    %299 = tpu.matmul %298, %296, %cst_301 {dimension_numbers = #tpu.dot_dimension_numbers<[1], [0], [0], [1], [0, 0, 1, 1], [], []>} : vector<8x6xf32>, vector<6x352xf32>, vector<8x352xf32> -> vector<8x352xf32>
    %300 = arith.addf %295, %299 : vector<8x352xf32>
    %c0_302 = arith.constant 0 : index
    %c0_303 = arith.constant 0 : index
    %301 = vector.load %arg14[%c0_302, %c0_303] : memref<8x1xf32, #tpu.memory_space<vmem>>, vector<8x1xf32>
    %302 = vector.broadcast %301 : vector<8x1xf32> to vector<8x352xf32>
    %303 = arith.addf %300, %302 : vector<8x352xf32>
    %cst_304 = arith.constant 0.000000e+00 : f32
    %304 = vector.broadcast %cst_304 : f32 to vector<8x352xf32>
    %305 = arith.maximumf %303, %304 : vector<8x352xf32>
    %cst_305 = arith.constant 0.000000e+00 : f32
    %306 = vector.broadcast %cst_305 : f32 to vector<8x506xf32>
    %c0_306 = arith.constant 0 : index
    %c0_307 = arith.constant 0 : index
    %307 = vector.load %arg25[%c0_306, %c0_307] : memref<8x506xf32, #tpu.memory_space<vmem>>, vector<8x506xf32>
    tpu.vector_store %arg25[%c0_306, %c0_307], %306 {strides = array<i32>} : memref<8x506xf32, #tpu.memory_space<vmem>>, vector<8x506xf32>,
    %cst_308 = arith.constant 0.000000e+00 : f32
    %308 = vector.shape_cast %2 : vector<1x352xi1> to vector<1x352xi1>
    %309 = vector.broadcast %308 : vector<1x352xi1> to vector<8x352xi1>
    %310 = vector.broadcast %cst_308 : f32 to vector<8x352xf32>
    %311 = arith.select %309, %305, %310 : vector<8x352xi1>, vector<8x352xf32>
    %c0_309 = arith.constant 0 : index
    %c69_310 = arith.constant 69 : index
    %312 = vector.load %arg25[%c0_309, %c69_310] : memref<8x506xf32, #tpu.memory_space<vmem>>, vector<8x352xf32>
    tpu.vector_store %arg25[%c0_309, %c69_310], %311 {strides = array<i32>} : memref<8x506xf32, #tpu.memory_space<vmem>>, vector<8x352xf32>,
    %cst_311 = arith.constant 0.000000e+00 : f32
    %313 = vector.broadcast %cst_311 : f32 to vector<8x352xf32>
    %c0_312 = arith.constant 0 : index
    %c0_313 = arith.constant 0 : index
    %314 = vector.load %arg25[%c0_312, %c0_313] : memref<8x506xf32, #tpu.memory_space<vmem>>, vector<8x352xf32>
    %c0_314 = arith.constant 0 : index
    %c0_315 = arith.constant 0 : index
    %c0_316 = arith.constant 0 : index
    %315 = vector.load %arg15[%c0_314, %c0_315, %c0_316] : memref<9x8x8xf32, #tpu.memory_space<vmem>>, vector<1x8x8xf32>
    %316 = vector.shape_cast %315 : vector<1x8x8xf32> to vector<8x8xf32>
    %cst_317 = arith.constant dense<0.000000e+00> : vector<8x352xf32>
    %317 = tpu.matmul %316, %314, %cst_317 {dimension_numbers = #tpu.dot_dimension_numbers<[1], [0], [0], [1], [0, 0, 1, 1], [], []>} : vector<8x8xf32>, vector<8x352xf32>, vector<8x352xf32> -> vector<8x352xf32>
    %318 = arith.addf %313, %317 : vector<8x352xf32>
    %c0_318 = arith.constant 0 : index
    %c3_319 = arith.constant 3 : index
    %319 = vector.load %arg25[%c0_318, %c3_319] : memref<8x506xf32, #tpu.memory_space<vmem>>, vector<8x352xf32>
    %c1_320 = arith.constant 1 : index
    %c0_321 = arith.constant 0 : index
    %c0_322 = arith.constant 0 : index
    %320 = vector.load %arg15[%c1_320, %c0_321, %c0_322] : memref<9x8x8xf32, #tpu.memory_space<vmem>>, vector<1x8x8xf32>
    %321 = vector.shape_cast %320 : vector<1x8x8xf32> to vector<8x8xf32>
    %cst_323 = arith.constant dense<0.000000e+00> : vector<8x352xf32>
    %322 = tpu.matmul %321, %319, %cst_323 {dimension_numbers = #tpu.dot_dimension_numbers<[1], [0], [0], [1], [0, 0, 1, 1], [], []>} : vector<8x8xf32>, vector<8x352xf32>, vector<8x352xf32> -> vector<8x352xf32>
    %323 = arith.addf %318, %322 : vector<8x352xf32>
    %c0_324 = arith.constant 0 : index
    %c6_325 = arith.constant 6 : index
    %324 = vector.load %arg25[%c0_324, %c6_325] : memref<8x506xf32, #tpu.memory_space<vmem>>, vector<8x352xf32>
    %c2_326 = arith.constant 2 : index
    %c0_327 = arith.constant 0 : index
    %c0_328 = arith.constant 0 : index
    %325 = vector.load %arg15[%c2_326, %c0_327, %c0_328] : memref<9x8x8xf32, #tpu.memory_space<vmem>>, vector<1x8x8xf32>
    %326 = vector.shape_cast %325 : vector<1x8x8xf32> to vector<8x8xf32>
    %cst_329 = arith.constant dense<0.000000e+00> : vector<8x352xf32>
    %327 = tpu.matmul %326, %324, %cst_329 {dimension_numbers = #tpu.dot_dimension_numbers<[1], [0], [0], [1], [0, 0, 1, 1], [], []>} : vector<8x8xf32>, vector<8x352xf32>, vector<8x352xf32> -> vector<8x352xf32>
    %328 = arith.addf %323, %327 : vector<8x352xf32>
    %c0_330 = arith.constant 0 : index
    %c66 = arith.constant 66 : index
    %329 = vector.load %arg25[%c0_330, %c66] : memref<8x506xf32, #tpu.memory_space<vmem>>, vector<8x352xf32>
    %c3_331 = arith.constant 3 : index
    %c0_332 = arith.constant 0 : index
    %c0_333 = arith.constant 0 : index
    %330 = vector.load %arg15[%c3_331, %c0_332, %c0_333] : memref<9x8x8xf32, #tpu.memory_space<vmem>>, vector<1x8x8xf32>
    %331 = vector.shape_cast %330 : vector<1x8x8xf32> to vector<8x8xf32>
    %cst_334 = arith.constant dense<0.000000e+00> : vector<8x352xf32>
    %332 = tpu.matmul %331, %329, %cst_334 {dimension_numbers = #tpu.dot_dimension_numbers<[1], [0], [0], [1], [0, 0, 1, 1], [], []>} : vector<8x8xf32>, vector<8x352xf32>, vector<8x352xf32> -> vector<8x352xf32>
    %333 = arith.addf %328, %332 : vector<8x352xf32>
    %c0_335 = arith.constant 0 : index
    %c69_336 = arith.constant 69 : index
    %334 = vector.load %arg25[%c0_335, %c69_336] : memref<8x506xf32, #tpu.memory_space<vmem>>, vector<8x352xf32>
    %c4_337 = arith.constant 4 : index
    %c0_338 = arith.constant 0 : index
    %c0_339 = arith.constant 0 : index
    %335 = vector.load %arg15[%c4_337, %c0_338, %c0_339] : memref<9x8x8xf32, #tpu.memory_space<vmem>>, vector<1x8x8xf32>
    %336 = vector.shape_cast %335 : vector<1x8x8xf32> to vector<8x8xf32>
    %cst_340 = arith.constant dense<0.000000e+00> : vector<8x352xf32>
    %337 = tpu.matmul %336, %334, %cst_340 {dimension_numbers = #tpu.dot_dimension_numbers<[1], [0], [0], [1], [0, 0, 1, 1], [], []>} : vector<8x8xf32>, vector<8x352xf32>, vector<8x352xf32> -> vector<8x352xf32>
    %338 = arith.addf %333, %337 : vector<8x352xf32>
    %c0_341 = arith.constant 0 : index
    %c72 = arith.constant 72 : index
    %339 = vector.load %arg25[%c0_341, %c72] : memref<8x506xf32, #tpu.memory_space<vmem>>, vector<8x352xf32>
    %c5_342 = arith.constant 5 : index
    %c0_343 = arith.constant 0 : index
    %c0_344 = arith.constant 0 : index
    %340 = vector.load %arg15[%c5_342, %c0_343, %c0_344] : memref<9x8x8xf32, #tpu.memory_space<vmem>>, vector<1x8x8xf32>
    %341 = vector.shape_cast %340 : vector<1x8x8xf32> to vector<8x8xf32>
    %cst_345 = arith.constant dense<0.000000e+00> : vector<8x352xf32>
    %342 = tpu.matmul %341, %339, %cst_345 {dimension_numbers = #tpu.dot_dimension_numbers<[1], [0], [0], [1], [0, 0, 1, 1], [], []>} : vector<8x8xf32>, vector<8x352xf32>, vector<8x352xf32> -> vector<8x352xf32>
    %343 = arith.addf %338, %342 : vector<8x352xf32>
    %c0_346 = arith.constant 0 : index
    %c132 = arith.constant 132 : index
    %344 = vector.load %arg25[%c0_346, %c132] : memref<8x506xf32, #tpu.memory_space<vmem>>, vector<8x352xf32>
    %c6_347 = arith.constant 6 : index
    %c0_348 = arith.constant 0 : index
    %c0_349 = arith.constant 0 : index
    %345 = vector.load %arg15[%c6_347, %c0_348, %c0_349] : memref<9x8x8xf32, #tpu.memory_space<vmem>>, vector<1x8x8xf32>
    %346 = vector.shape_cast %345 : vector<1x8x8xf32> to vector<8x8xf32>
    %cst_350 = arith.constant dense<0.000000e+00> : vector<8x352xf32>
    %347 = tpu.matmul %346, %344, %cst_350 {dimension_numbers = #tpu.dot_dimension_numbers<[1], [0], [0], [1], [0, 0, 1, 1], [], []>} : vector<8x8xf32>, vector<8x352xf32>, vector<8x352xf32> -> vector<8x352xf32>
    %348 = arith.addf %343, %347 : vector<8x352xf32>
    %c0_351 = arith.constant 0 : index
    %c135 = arith.constant 135 : index
    %349 = vector.load %arg25[%c0_351, %c135] : memref<8x506xf32, #tpu.memory_space<vmem>>, vector<8x352xf32>
    %c7_352 = arith.constant 7 : index
    %c0_353 = arith.constant 0 : index
    %c0_354 = arith.constant 0 : index
    %350 = vector.load %arg15[%c7_352, %c0_353, %c0_354] : memref<9x8x8xf32, #tpu.memory_space<vmem>>, vector<1x8x8xf32>
    %351 = vector.shape_cast %350 : vector<1x8x8xf32> to vector<8x8xf32>
    %cst_355 = arith.constant dense<0.000000e+00> : vector<8x352xf32>
    %352 = tpu.matmul %351, %349, %cst_355 {dimension_numbers = #tpu.dot_dimension_numbers<[1], [0], [0], [1], [0, 0, 1, 1], [], []>} : vector<8x8xf32>, vector<8x352xf32>, vector<8x352xf32> -> vector<8x352xf32>
    %353 = arith.addf %348, %352 : vector<8x352xf32>
    %c0_356 = arith.constant 0 : index
    %c138 = arith.constant 138 : index
    %354 = vector.load %arg25[%c0_356, %c138] : memref<8x506xf32, #tpu.memory_space<vmem>>, vector<8x352xf32>
    %c8_357 = arith.constant 8 : index
    %c0_358 = arith.constant 0 : index
    %c0_359 = arith.constant 0 : index
    %355 = vector.load %arg15[%c8_357, %c0_358, %c0_359] : memref<9x8x8xf32, #tpu.memory_space<vmem>>, vector<1x8x8xf32>
    %356 = vector.shape_cast %355 : vector<1x8x8xf32> to vector<8x8xf32>
    %cst_360 = arith.constant dense<0.000000e+00> : vector<8x352xf32>
    %357 = tpu.matmul %356, %354, %cst_360 {dimension_numbers = #tpu.dot_dimension_numbers<[1], [0], [0], [1], [0, 0, 1, 1], [], []>} : vector<8x8xf32>, vector<8x352xf32>, vector<8x352xf32> -> vector<8x352xf32>
    %358 = arith.addf %353, %357 : vector<8x352xf32>
    %c0_361 = arith.constant 0 : index
    %c0_362 = arith.constant 0 : index
    %359 = vector.load %arg16[%c0_361, %c0_362] : memref<8x1xf32, #tpu.memory_space<vmem>>, vector<8x1xf32>
    %360 = vector.broadcast %359 : vector<8x1xf32> to vector<8x352xf32>
    %361 = arith.addf %358, %360 : vector<8x352xf32>
    %c0_363 = arith.constant 0 : index
    %c0_364 = arith.constant 0 : index
    %362 = vector.load %arg17[%c0_363, %c0_364] : memref<32x24xf32, #tpu.memory_space<vmem>>, vector<32x24xf32>
    %363 = vector.extract_strided_slice %362 {offsets = [0, 0], sizes = [32, 8], strides = [1, 1]} : vector<32x24xf32> to vector<32x8xf32>
    %cst_365 = arith.constant dense<0.000000e+00> : vector<32x352xf32>
    %364 = tpu.matmul %363, %75, %cst_365 {dimension_numbers = #tpu.dot_dimension_numbers<[1], [0], [0], [1], [0, 0, 1, 1], [], []>} : vector<32x8xf32>, vector<8x352xf32>, vector<32x352xf32> -> vector<32x352xf32>
    %365 = vector.extract_strided_slice %362 {offsets = [0, 8], sizes = [32, 8], strides = [1, 1]} : vector<32x24xf32> to vector<32x8xf32>
    %cst_366 = arith.constant dense<0.000000e+00> : vector<32x352xf32>
    %366 = tpu.matmul %365, %189, %cst_366 {dimension_numbers = #tpu.dot_dimension_numbers<[1], [0], [0], [1], [0, 0, 1, 1], [], []>} : vector<32x8xf32>, vector<8x352xf32>, vector<32x352xf32> -> vector<32x352xf32>
    %367 = arith.addf %364, %366 : vector<32x352xf32>
    %368 = vector.extract_strided_slice %362 {offsets = [0, 16], sizes = [32, 8], strides = [1, 1]} : vector<32x24xf32> to vector<32x8xf32>
    %cst_367 = arith.constant dense<0.000000e+00> : vector<32x352xf32>
    %369 = tpu.matmul %368, %361, %cst_367 {dimension_numbers = #tpu.dot_dimension_numbers<[1], [0], [0], [1], [0, 0, 1, 1], [], []>} : vector<32x8xf32>, vector<8x352xf32>, vector<32x352xf32> -> vector<32x352xf32>
    %370 = arith.addf %367, %369 : vector<32x352xf32>
    %c0_368 = arith.constant 0 : index
    %c0_369 = arith.constant 0 : index
    %371 = vector.load %arg18[%c0_368, %c0_369] : memref<32x1xf32, #tpu.memory_space<vmem>>, vector<32x1xf32>
    %372 = vector.broadcast %371 : vector<32x1xf32> to vector<32x352xf32>
    %373 = arith.addf %370, %372 : vector<32x352xf32>
    %cst_370 = arith.constant 1.000000e-01 : f32
    %374 = vector.broadcast %cst_370 : f32 to vector<32x352xf32>
    %375 = arith.mulf %373, %374 : vector<32x352xf32>
    %376 = arith.addf %375, %19 : vector<32x352xf32>
    %cst_371 = arith.constant 0.000000e+00 : f32
    %377 = vector.broadcast %cst_371 : f32 to vector<32x352xf32>
    %378 = arith.maximumf %376, %377 : vector<32x352xf32>
    %c0_372 = arith.constant 0 : index
    %c0_373 = arith.constant 0 : index
    %c0_374 = arith.constant 0 : index
    %379 = vector.load %arg19[%c0_372, %c0_373, %c0_374] : memref<1x32x352xf32, #tpu.memory_space<vmem>>, vector<1x32x352xf32>
    %380 = vector.shape_cast %379 : vector<1x32x352xf32> to vector<32x352xf32>
    %381 = vector.shape_cast %378 : vector<32x352xf32> to vector<1x32x352xf32>
    tpu.vector_store %arg19[%c0_372, %c0_373, %c0_374], %381 {strides = array<i32>} : memref<1x32x352xf32, #tpu.memory_space<vmem>>, vector<1x32x352xf32>,
    return
  }
  func.func @transform_0(%arg0: i32) -> (i32, i32, i32) {
    %c0_i32 = arith.constant 0 : i32
    %c0_i32_0 = arith.constant 0 : i32
    %c0_i32_1 = arith.constant 0 : i32
    return %arg0, %c0_i32, %c0_i32_0 : i32, i32, i32
  }
  func.func @transform_1(%arg0: i32) -> (i32, i32) {
    %c0_i32 = arith.constant 0 : i32
    %c0_i32_0 = arith.constant 0 : i32
    %c0_i32_1 = arith.constant 0 : i32
    return %c0_i32, %c0_i32_0 : i32, i32
  }
  func.func @transform_2(%arg0: i32) -> (i32, i32) {
    %c0_i32 = arith.constant 0 : i32
    %c0_i32_0 = arith.constant 0 : i32
    %c0_i32_1 = arith.constant 0 : i32
    return %c0_i32, %c0_i32_0 : i32, i32
  }
  func.func @transform_3(%arg0: i32) -> (i32, i32) {
    %c0_i32 = arith.constant 0 : i32
    %c0_i32_0 = arith.constant 0 : i32
    %c0_i32_1 = arith.constant 0 : i32
    return %c0_i32, %c0_i32_0 : i32, i32
  }
  func.func @transform_4(%arg0: i32) -> (i32, i32, i32) {
    %c0_i32 = arith.constant 0 : i32
    %c0_i32_0 = arith.constant 0 : i32
    %c0_i32_1 = arith.constant 0 : i32
    %c0_i32_2 = arith.constant 0 : i32
    return %c0_i32, %c0_i32_0, %c0_i32_1 : i32, i32, i32
  }
  func.func @transform_5(%arg0: i32) -> (i32, i32) {
    %c0_i32 = arith.constant 0 : i32
    %c0_i32_0 = arith.constant 0 : i32
    %c0_i32_1 = arith.constant 0 : i32
    return %c0_i32, %c0_i32_0 : i32, i32
  }
  func.func @transform_6(%arg0: i32) -> (i32, i32, i32) {
    %c0_i32 = arith.constant 0 : i32
    %c0_i32_0 = arith.constant 0 : i32
    %c0_i32_1 = arith.constant 0 : i32
    %c0_i32_2 = arith.constant 0 : i32
    return %c0_i32, %c0_i32_0, %c0_i32_1 : i32, i32, i32
  }
  func.func @transform_7(%arg0: i32) -> (i32, i32) {
    %c0_i32 = arith.constant 0 : i32
    %c0_i32_0 = arith.constant 0 : i32
    %c0_i32_1 = arith.constant 0 : i32
    return %c0_i32, %c0_i32_0 : i32, i32
  }
  func.func @transform_8(%arg0: i32) -> (i32, i32, i32) {
    %c0_i32 = arith.constant 0 : i32
    %c0_i32_0 = arith.constant 0 : i32
    %c0_i32_1 = arith.constant 0 : i32
    %c0_i32_2 = arith.constant 0 : i32
    return %c0_i32, %c0_i32_0, %c0_i32_1 : i32, i32, i32
  }
  func.func @transform_9(%arg0: i32) -> (i32, i32) {
    %c0_i32 = arith.constant 0 : i32
    %c0_i32_0 = arith.constant 0 : i32
    %c0_i32_1 = arith.constant 0 : i32
    return %c0_i32, %c0_i32_0 : i32, i32
  }
  func.func @transform_10(%arg0: i32) -> (i32, i32, i32) {
    %c0_i32 = arith.constant 0 : i32
    %c0_i32_0 = arith.constant 0 : i32
    %c0_i32_1 = arith.constant 0 : i32
    %c0_i32_2 = arith.constant 0 : i32
    return %c0_i32, %c0_i32_0, %c0_i32_1 : i32, i32, i32
  }
  func.func @transform_11(%arg0: i32) -> (i32, i32) {
    %c0_i32 = arith.constant 0 : i32
    %c0_i32_0 = arith.constant 0 : i32
    %c0_i32_1 = arith.constant 0 : i32
    return %c0_i32, %c0_i32_0 : i32, i32
  }
  func.func @transform_12(%arg0: i32) -> (i32, i32, i32) {
    %c0_i32 = arith.constant 0 : i32
    %c0_i32_0 = arith.constant 0 : i32
    %c0_i32_1 = arith.constant 0 : i32
    %c0_i32_2 = arith.constant 0 : i32
    return %c0_i32, %c0_i32_0, %c0_i32_1 : i32, i32, i32
  }
  func.func @transform_13(%arg0: i32) -> (i32, i32) {
    %c0_i32 = arith.constant 0 : i32
    %c0_i32_0 = arith.constant 0 : i32
    %c0_i32_1 = arith.constant 0 : i32
    return %c0_i32, %c0_i32_0 : i32, i32
  }
  func.func @transform_14(%arg0: i32) -> (i32, i32, i32) {
    %c0_i32 = arith.constant 0 : i32
    %c0_i32_0 = arith.constant 0 : i32
    %c0_i32_1 = arith.constant 0 : i32
    %c0_i32_2 = arith.constant 0 : i32
    return %c0_i32, %c0_i32_0, %c0_i32_1 : i32, i32, i32
  }
  func.func @transform_15(%arg0: i32) -> (i32, i32) {
    %c0_i32 = arith.constant 0 : i32
    %c0_i32_0 = arith.constant 0 : i32
    %c0_i32_1 = arith.constant 0 : i32
    return %c0_i32, %c0_i32_0 : i32, i32
  }
  func.func @transform_16(%arg0: i32) -> (i32, i32) {
    %c0_i32 = arith.constant 0 : i32
    %c0_i32_0 = arith.constant 0 : i32
    %c0_i32_1 = arith.constant 0 : i32
    return %c0_i32, %c0_i32_0 : i32, i32
  }
  func.func @transform_17(%arg0: i32) -> (i32, i32) {
    %c0_i32 = arith.constant 0 : i32
    %c0_i32_0 = arith.constant 0 : i32
    %c0_i32_1 = arith.constant 0 : i32
    return %c0_i32, %c0_i32_0 : i32, i32
  }
  func.func @transform_18(%arg0: i32) -> (i32, i32, i32) {
    %c0_i32 = arith.constant 0 : i32
    %c0_i32_0 = arith.constant 0 : i32
    %c0_i32_1 = arith.constant 0 : i32
    return %arg0, %c0_i32, %c0_i32_0 : i32, i32, i32
  }
}

</mosaic_0001>

<llo_original>
// kernel: basic_rfb_forward.1
$region0: #{basic_rfb_forward.1}
  #allocation0 [shape = 'u32[]', space=smem, size = 0x4, offset = 0x4, fixed_abs, tag = 'smem constant byte address 0x4 - core index']
  #allocation1 [shape = 'u32[144,128]{1,0:T(1,128)}', space=vmem, size = 0x12000, scoped, tag = 'internal scratch']
  #allocation2 [shape = 'f32[8,506]{1,0:T(8,128)}', space=vmem, size = 0x4000, scoped, tag = 'scratch operand']
  #allocation3 [shape = 'f32[4,506]{1,0:T(4,128)}', space=vmem, size = 0x2000, scoped, tag = 'scratch operand']
  #allocation4 [shape = 'f32[8,506]{1,0:T(8,128)}', space=vmem, size = 0x4000, scoped, tag = 'scratch operand']
  #allocation5 [shape = 'f32[4,506]{1,0:T(4,128)}', space=vmem, size = 0x2000, scoped, tag = 'scratch operand']
  #allocation6 [shape = 'f32[6,506]{1,0:T(8,128)}', space=vmem, size = 0x4000, scoped, tag = 'scratch operand']
  #allocation7 [shape = 'f32[8,506]{1,0:T(8,128)}', space=vmem, size = 0x4000, scoped, tag = 'scratch operand']
  %s0 = inlined_call_operand.vmem [shape: f32[2,32,352], index: 0, kind: input, shape index: {}]
  %s1 = inlined_call_operand.vmem [shape: f32[1,352], index: 1, kind: input, shape index: {}]
  %s2 = inlined_call_operand.vmem [shape: f32[48,32], index: 2, kind: input, shape index: {}]
  %s3 = inlined_call_operand.vmem [shape: f32[48,1], index: 3, kind: input, shape index: {}]
  %s4 = inlined_call_operand.vmem [shape: f32[9,8,8], index: 4, kind: input, shape index: {}]
  %s5 = inlined_call_operand.vmem [shape: f32[8,1], index: 5, kind: input, shape index: {}]
  %s6 = inlined_call_operand.vmem [shape: f32[9,8,4], index: 6, kind: input, shape index: {}]
  %s7 = inlined_call_operand.vmem [shape: f32[8,1], index: 7, kind: input, shape index: {}]
  %s8 = inlined_call_operand.vmem [shape: f32[9,8,8], index: 8, kind: input, shape index: {}]
  %s9 = inlined_call_operand.vmem [shape: f32[8,1], index: 9, kind: input, shape index: {}]
  %s10 = inlined_call_operand.vmem [shape: f32[9,6,4], index: 10, kind: input, shape index: {}]
  %s11 = inlined_call_operand.vmem [shape: f32[6,1], index: 11, kind: input, shape index: {}]
  %s12 = inlined_call_operand.vmem [shape: f32[9,8,6], index: 12, kind: input, shape index: {}]
  %s13 = inlined_call_operand.vmem [shape: f32[8,1], index: 13, kind: input, shape index: {}]
  %s14 = inlined_call_operand.vmem [shape: f32[9,8,8], index: 14, kind: input, shape index: {}]
  %s15 = inlined_call_operand.vmem [shape: f32[8,1], index: 15, kind: input, shape index: {}]
  %s16 = inlined_call_operand.vmem [shape: f32[32,24], index: 16, kind: input, shape index: {}]
  %s17 = inlined_call_operand.vmem [shape: f32[32,1], index: 17, kind: input, shape index: {}]
  %s18 = inlined_call_operand.vmem [shape: f32[2,32,352], index: 18, kind: output, shape index: {}]
  %s19 = sld [smem:[#allocation0]]
  $region105: #{basic_rfb_forward.1} parent=0
    _
  %s21 = ssub.s32 1, %s19
  %s22 = scalar_select 0, %s21, %s19
  loop: start=0, step=1, limit=4
  $region2: #{basic_rfb_forward.1} parent=0 // loop_pre_header
    _
  $region3: #{basic_rfb_forward.1} parent=0 // loop_header
    %s24 = sphi 0, %s28
    %p25 = scmp.ge.s32.totalorder %s24, 4
    %s34 = sphi 0, %s36
    %s37 = sphi 0, %s34
    %s38 = sphi 0, %s37
    %s54 = sphi 0, %s38
    %s58 = sphi 0, %s58
    %s60 = sphi 0, %s58
    %s61 = sphi 0, %s60
    %s75 = sphi 0, %s61
    %s79 = sphi 0, %s79
    %s81 = sphi 0, %s79
    %s82 = sphi 0, %s81
    %s96 = sphi 0, %s82
    %s100 = sphi 0, %s100
    %s102 = sphi 0, %s100
    %s103 = sphi 0, %s102
    %s117 = sphi 0, %s103
    %s121 = sphi 0, %s121
    %s123 = sphi 0, %s121
    %s124 = sphi 0, %s123
    %s138 = sphi 0, %s124
    %s142 = sphi 0, %s142
    %s144 = sphi 0, %s142
    %s145 = sphi 0, %s144
    %s159 = sphi 0, %s145
    %s163 = sphi 0, %s163
    %s165 = sphi 0, %s163
    %s166 = sphi 0, %s165
    %s180 = sphi 0, %s166
    %s184 = sphi 0, %s184
    %s186 = sphi 0, %s184
    %s187 = sphi 0, %s186
    %s201 = sphi 0, %s187
    %s205 = sphi 0, %s205
    %s207 = sphi 0, %s205
    %s208 = sphi 0, %s207
    %s222 = sphi 0, %s208
    %s226 = sphi 0, %s226
    %s228 = sphi 0, %s226
    %s229 = sphi 0, %s228
    %s243 = sphi 0, %s229
    %s247 = sphi 0, %s247
    %s249 = sphi 0, %s247
    %s250 = sphi 0, %s249
    %s264 = sphi 0, %s250
    %s268 = sphi 0, %s268
    %s270 = sphi 0, %s268
    %s271 = sphi 0, %s270
    %s285 = sphi 0, %s271
    %s289 = sphi 0, %s289
    %s291 = sphi 0, %s289
    %s292 = sphi 0, %s291
    %s306 = sphi 0, %s292
    %s310 = sphi 0, %s310
    %s312 = sphi 0, %s310
    %s313 = sphi 0, %s312
    %s327 = sphi 0, %s313
    %s331 = sphi 0, %s331
    %s333 = sphi 0, %s331
    %s334 = sphi 0, %s333
    %s348 = sphi 0, %s334
    %s352 = sphi 0, %s352
    %s354 = sphi 0, %s352
    %s355 = sphi 0, %s354
    %s369 = sphi 0, %s355
    %s373 = sphi 0, %s373
    %s375 = sphi 0, %s373
    %s376 = sphi 0, %s375
    %s390 = sphi 0, %s376
    %s394 = sphi 0, %s394
    %s396 = sphi 0, %s394
    %s397 = sphi 0, %s396
    %s411 = sphi 0, %s397
    %s417 = sphi 0, %s419
    %s420 = sphi 0, %s417
    %s421 = sphi 0, %s420
    %s437 = sphi 0, %s421
  $region4: #{basic_rfb_forward.1} parent=0 // loop_header_branch
    %27 = sbr.rel (%p25) target = $region8
  $region5: #{basic_rfb_forward.1} parent=0 // loop_body
    %s29 = ssub.s32 %s24, 1
    %s30 = ssub.s32 %s24, 2
    %s31 = sadd.s32 %s24, 1
    %s32 = ssub.s32 %s24, %s31
    %p33 = scmp.eq.s32.totalorder %s32, 0
    %s35 = sadd.s32 %s34, 1
    %s36 = scalar_select %p33, %s34, %s35
    %p39 = pneg %p33
    %p40 = scmp.eq.s32.totalorder %s24, 1
    %p41 = por %p39, %p40
    %p42 = scmp.ne.s32.totalorder %s34, %s37
    %p43 = scmp.eq.s32.totalorder %s24, 0
    %p44 = por %p42, %p43
    %p45 = scmp.ne.s32.totalorder %s34, %s37
    %p46 = scmp.eq.s32.totalorder %s29, 1
    %p47 = por %p45, %p46
    %p48 = scmp.ne.s32.totalorder %s37, %s38
    %p49 = scmp.eq.s32.totalorder %s29, 0
    %p50 = por %p48, %p49
    %p51 = scmp.ne.s32.totalorder %s37, %s38
    %p52 = scmp.eq.s32.totalorder %s30, 1
    %p53 = por %p51, %p52
    %p55 = scmp.ne.s32.totalorder %s38, %s54
    %p56 = scmp.eq.s32.totalorder %s30, 0
    %p57 = por %p55, %p56
    %s59 = sadd.s32 %s58, 1
    %p62 = scmp.eq.s32.totalorder %s24, 1
    %p63 = scmp.ne.s32.totalorder %s58, %s60
    %p64 = scmp.eq.s32.totalorder %s24, 0
    %p65 = por %p63, %p64
    %p66 = scmp.ne.s32.totalorder %s58, %s60
    %p67 = scmp.eq.s32.totalorder %s29, 1
    %p68 = por %p66, %p67
    %p69 = scmp.ne.s32.totalorder %s60, %s61
    %p70 = scmp.eq.s32.totalorder %s29, 0
    %p71 = por %p69, %p70
    %p72 = scmp.ne.s32.totalorder %s60, %s61
    %p73 = scmp.eq.s32.totalorder %s30, 1
    %p74 = por %p72, %p73
    %p76 = scmp.ne.s32.totalorder %s61, %s75
    %p77 = scmp.eq.s32.totalorder %s30, 0
    %p78 = por %p76, %p77
    %s80 = sadd.s32 %s79, 1
    %p83 = scmp.eq.s32.totalorder %s24, 1
    %p84 = scmp.ne.s32.totalorder %s79, %s81
    %p85 = scmp.eq.s32.totalorder %s24, 0
    %p86 = por %p84, %p85
    %p87 = scmp.ne.s32.totalorder %s79, %s81
    %p88 = scmp.eq.s32.totalorder %s29, 1
    %p89 = por %p87, %p88
    %p90 = scmp.ne.s32.totalorder %s81, %s82
    %p91 = scmp.eq.s32.totalorder %s29, 0
    %p92 = por %p90, %p91
    %p93 = scmp.ne.s32.totalorder %s81, %s82
    %p94 = scmp.eq.s32.totalorder %s30, 1
    %p95 = por %p93, %p94
    %p97 = scmp.ne.s32.totalorder %s82, %s96
    %p98 = scmp.eq.s32.totalorder %s30, 0
    %p99 = por %p97, %p98
    %s101 = sadd.s32 %s100, 1
    %p104 = scmp.eq.s32.totalorder %s24, 1
    %p105 = scmp.ne.s32.totalorder %s100, %s102
    %p106 = scmp.eq.s32.totalorder %s24, 0
    %p107 = por %p105, %p106
    %p108 = scmp.ne.s32.totalorder %s100, %s102
    %p109 = scmp.eq.s32.totalorder %s29, 1
    %p110 = por %p108, %p109
    %p111 = scmp.ne.s32.totalorder %s102, %s103
    %p112 = scmp.eq.s32.totalorder %s29, 0
    %p113 = por %p111, %p112
    %p114 = scmp.ne.s32.totalorder %s102, %s103
    %p115 = scmp.eq.s32.totalorder %s30, 1
    %p116 = por %p114, %p115
    %p118 = scmp.ne.s32.totalorder %s103, %s117
    %p119 = scmp.eq.s32.totalorder %s30, 0
    %p120 = por %p118, %p119
    %s122 = sadd.s32 %s121, 1
    %p125 = scmp.eq.s32.totalorder %s24, 1
    %p126 = scmp.ne.s32.totalorder %s121, %s123
    %p127 = scmp.eq.s32.totalorder %s24, 0
    %p128 = por %p126, %p127
    %p129 = scmp.ne.s32.totalorder %s121, %s123
    %p130 = scmp.eq.s32.totalorder %s29, 1
    %p131 = por %p129, %p130
    %p132 = scmp.ne.s32.totalorder %s123, %s124
    %p133 = scmp.eq.s32.totalorder %s29, 0
    %p134 = por %p132, %p133
    %p135 = scmp.ne.s32.totalorder %s123, %s124
    %p136 = scmp.eq.s32.totalorder %s30, 1
    %p137 = por %p135, %p136
    %p139 = scmp.ne.s32.totalorder %s124, %s138
    %p140 = scmp.eq.s32.totalorder %s30, 0
    %p141 = por %p139, %p140
    %s143 = sadd.s32 %s142, 1
    %p146 = scmp.eq.s32.totalorder %s24, 1
    %p147 = scmp.ne.s32.totalorder %s142, %s144
    %p148 = scmp.eq.s32.totalorder %s24, 0
    %p149 = por %p147, %p148
    %p150 = scmp.ne.s32.totalorder %s142, %s144
    %p151 = scmp.eq.s32.totalorder %s29, 1
    %p152 = por %p150, %p151
    %p153 = scmp.ne.s32.totalorder %s144, %s145
    %p154 = scmp.eq.s32.totalorder %s29, 0
    %p155 = por %p153, %p154
    %p156 = scmp.ne.s32.totalorder %s144, %s145
    %p157 = scmp.eq.s32.totalorder %s30, 1
    %p158 = por %p156, %p157
    %p160 = scmp.ne.s32.totalorder %s145, %s159
    %p161 = scmp.eq.s32.totalorder %s30, 0
    %p162 = por %p160, %p161
    %s164 = sadd.s32 %s163, 1
    %p167 = scmp.eq.s32.totalorder %s24, 1
    %p168 = scmp.ne.s32.totalorder %s163, %s165
    %p169 = scmp.eq.s32.totalorder %s24, 0
    %p170 = por %p168, %p169
    %p171 = scmp.ne.s32.totalorder %s163, %s165
    %p172 = scmp.eq.s32.totalorder %s29, 1
    %p173 = por %p171, %p172
    %p174 = scmp.ne.s32.totalorder %s165, %s166
    %p175 = scmp.eq.s32.totalorder %s29, 0
    %p176 = por %p174, %p175
    %p177 = scmp.ne.s32.totalorder %s165, %s166
    %p178 = scmp.eq.s32.totalorder %s30, 1
    %p179 = por %p177, %p178
    %p181 = scmp.ne.s32.totalorder %s166, %s180
    %p182 = scmp.eq.s32.totalorder %s30, 0
    %p183 = por %p181, %p182
    %s185 = sadd.s32 %s184, 1
    %p188 = scmp.eq.s32.totalorder %s24, 1
    %p189 = scmp.ne.s32.totalorder %s184, %s186
    %p190 = scmp.eq.s32.totalorder %s24, 0
    %p191 = por %p189, %p190
    %p192 = scmp.ne.s32.totalorder %s184, %s186
    %p193 = scmp.eq.s32.totalorder %s29, 1
    %p194 = por %p192, %p193
    %p195 = scmp.ne.s32.totalorder %s186, %s187
    %p196 = scmp.eq.s32.totalorder %s29, 0
    %p197 = por %p195, %p196
    %p198 = scmp.ne.s32.totalorder %s186, %s187
    %p199 = scmp.eq.s32.totalorder %s30, 1
    %p200 = por %p198, %p199
    %p202 = scmp.ne.s32.totalorder %s187, %s201
    %p203 = scmp.eq.s32.totalorder %s30, 0
    %p204 = por %p202, %p203
    %s206 = sadd.s32 %s205, 1
    %p209 = scmp.eq.s32.totalorder %s24, 1
    %p210 = scmp.ne.s32.totalorder %s205, %s207
    %p211 = scmp.eq.s32.totalorder %s24, 0
    %p212 = por %p210, %p211
    %p213 = scmp.ne.s32.totalorder %s205, %s207
    %p214 = scmp.eq.s32.totalorder %s29, 1
    %p215 = por %p213, %p214
    %p216 = scmp.ne.s32.totalorder %s207, %s208
    %p217 = scmp.eq.s32.totalorder %s29, 0
    %p218 = por %p216, %p217
    %p219 = scmp.ne.s32.totalorder %s207, %s208
    %p220 = scmp.eq.s32.totalorder %s30, 1
    %p221 = por %p219, %p220
    %p223 = scmp.ne.s32.totalorder %s208, %s222
    %p224 = scmp.eq.s32.totalorder %s30, 0
    %p225 = por %p223, %p224
    %s227 = sadd.s32 %s226, 1
    %p230 = scmp.eq.s32.totalorder %s24, 1
    %p231 = scmp.ne.s32.totalorder %s226, %s228
    %p232 = scmp.eq.s32.totalorder %s24, 0
    %p233 = por %p231, %p232
    %p234 = scmp.ne.s32.totalorder %s226, %s228
    %p235 = scmp.eq.s32.totalorder %s29, 1
    %p236 = por %p234, %p235
    %p237 = scmp.ne.s32.totalorder %s228, %s229
    %p238 = scmp.eq.s32.totalorder %s29, 0
    %p239 = por %p237, %p238
    %p240 = scmp.ne.s32.totalorder %s228, %s229
    %p241 = scmp.eq.s32.totalorder %s30, 1
    %p242 = por %p240, %p241
    %p244 = scmp.ne.s32.totalorder %s229, %s243
    %p245 = scmp.eq.s32.totalorder %s30, 0
    %p246 = por %p244, %p245
    %s248 = sadd.s32 %s247, 1
    %p251 = scmp.eq.s32.totalorder %s24, 1
    %p252 = scmp.ne.s32.totalorder %s247, %s249
    %p253 = scmp.eq.s32.totalorder %s24, 0
    %p254 = por %p252, %p253
    %p255 = scmp.ne.s32.totalorder %s247, %s249
    %p256 = scmp.eq.s32.totalorder %s29, 1
    %p257 = por %p255, %p256
    %p258 = scmp.ne.s32.totalorder %s249, %s250
    %p259 = scmp.eq.s32.totalorder %s29, 0
    %p260 = por %p258, %p259
    %p261 = scmp.ne.s32.totalorder %s249, %s250
    %p262 = scmp.eq.s32.totalorder %s30, 1
    %p263 = por %p261, %p262
    %p265 = scmp.ne.s32.totalorder %s250, %s264
    %p266 = scmp.eq.s32.totalorder %s30, 0
    %p267 = por %p265, %p266
    %s269 = sadd.s32 %s268, 1
    %p272 = scmp.eq.s32.totalorder %s24, 1
    %p273 = scmp.ne.s32.totalorder %s268, %s270
    %p274 = scmp.eq.s32.totalorder %s24, 0
    %p275 = por %p273, %p274
    %p276 = scmp.ne.s32.totalorder %s268, %s270
    %p277 = scmp.eq.s32.totalorder %s29, 1
    %p278 = por %p276, %p277
    %p279 = scmp.ne.s32.totalorder %s270, %s271
    %p280 = scmp.eq.s32.totalorder %s29, 0
    %p281 = por %p279, %p280
    %p282 = scmp.ne.s32.totalorder %s270, %s271
    %p283 = scmp.eq.s32.totalorder %s30, 1
    %p284 = por %p282, %p283
    %p286 = scmp.ne.s32.totalorder %s271, %s285
    %p287 = scmp.eq.s32.totalorder %s30, 0
    %p288 = por %p286, %p287
    %s290 = sadd.s32 %s289, 1
    %p293 = scmp.eq.s32.totalorder %s24, 1
    %p294 = scmp.ne.s32.totalorder %s289, %s291
    %p295 = scmp.eq.s32.totalorder %s24, 0
    %p296 = por %p294, %p295
    %p297 = scmp.ne.s32.totalorder %s289, %s291
    %p298 = scmp.eq.s32.totalorder %s29, 1
    %p299 = por %p297, %p298
    %p300 = scmp.ne.s32.totalorder %s291, %s292
    %p301 = scmp.eq.s32.totalorder %s29, 0
    %p302 = por %p300, %p301
    %p303 = scmp.ne.s32.totalorder %s291, %s292
    %p304 = scmp.eq.s32.totalorder %s30, 1
    %p305 = por %p303, %p304
    %p307 = scmp.ne.s32.totalorder %s292, %s306
    %p308 = scmp.eq.s32.totalorder %s30, 0
    %p309 = por %p307, %p308
    %s311 = sadd.s32 %s310, 1
    %p314 = scmp.eq.s32.totalorder %s24, 1
    %p315 = scmp.ne.s32.totalorder %s310, %s312
    %p316 = scmp.eq.s32.totalorder %s24, 0
    %p317 = por %p315, %p316
    %p318 = scmp.ne.s32.totalorder %s310, %s312
    %p319 = scmp.eq.s32.totalorder %s29, 1
    %p320 = por %p318, %p319
    %p321 = scmp.ne.s32.totalorder %s312, %s313
    %p322 = scmp.eq.s32.totalorder %s29, 0
    %p323 = por %p321, %p322
    %p324 = scmp.ne.s32.totalorder %s312, %s313
    %p325 = scmp.eq.s32.totalorder %s30, 1
    %p326 = por %p324, %p325
    %p328 = scmp.ne.s32.totalorder %s313, %s327
    %p329 = scmp.eq.s32.totalorder %s30, 0
    %p330 = por %p328, %p329
    %s332 = sadd.s32 %s331, 1
    %p335 = scmp.eq.s32.totalorder %s24, 1
    %p336 = scmp.ne.s32.totalorder %s331, %s333
    %p337 = scmp.eq.s32.totalorder %s24, 0
    %p338 = por %p336, %p337
    %p339 = scmp.ne.s32.totalorder %s331, %s333
    %p340 = scmp.eq.s32.totalorder %s29, 1
    %p341 = por %p339, %p340
    %p342 = scmp.ne.s32.totalorder %s333, %s334
    %p343 = scmp.eq.s32.totalorder %s29, 0
    %p344 = por %p342, %p343
    %p345 = scmp.ne.s32.totalorder %s333, %s334
    %p346 = scmp.eq.s32.totalorder %s30, 1
    %p347 = por %p345, %p346
    %p349 = scmp.ne.s32.totalorder %s334, %s348
    %p350 = scmp.eq.s32.totalorder %s30, 0
    %p351 = por %p349, %p350
    %s353 = sadd.s32 %s352, 1
    %p356 = scmp.eq.s32.totalorder %s24, 1
    %p357 = scmp.ne.s32.totalorder %s352, %s354
    %p358 = scmp.eq.s32.totalorder %s24, 0
    %p359 = por %p357, %p358
    %p360 = scmp.ne.s32.totalorder %s352, %s354
    %p361 = scmp.eq.s32.totalorder %s29, 1
    %p362 = por %p360, %p361
    %p363 = scmp.ne.s32.totalorder %s354, %s355
    %p364 = scmp.eq.s32.totalorder %s29, 0
    %p365 = por %p363, %p364
    %p366 = scmp.ne.s32.totalorder %s354, %s355
    %p367 = scmp.eq.s32.totalorder %s30, 1
    %p368 = por %p366, %p367
    %p370 = scmp.ne.s32.totalorder %s355, %s369
    %p371 = scmp.eq.s32.totalorder %s30, 0
    %p372 = por %p370, %p371
    %s374 = sadd.s32 %s373, 1
    %p377 = scmp.eq.s32.totalorder %s24, 1
    %p378 = scmp.ne.s32.totalorder %s373, %s375
    %p379 = scmp.eq.s32.totalorder %s24, 0
    %p380 = por %p378, %p379
    %p381 = scmp.ne.s32.totalorder %s373, %s375
    %p382 = scmp.eq.s32.totalorder %s29, 1
    %p383 = por %p381, %p382
    %p384 = scmp.ne.s32.totalorder %s375, %s376
    %p385 = scmp.eq.s32.totalorder %s29, 0
    %p386 = por %p384, %p385
    %p387 = scmp.ne.s32.totalorder %s375, %s376
    %p388 = scmp.eq.s32.totalorder %s30, 1
    %p389 = por %p387, %p388
    %p391 = scmp.ne.s32.totalorder %s376, %s390
    %p392 = scmp.eq.s32.totalorder %s30, 0
    %p393 = por %p391, %p392
    %s395 = sadd.s32 %s394, 1
    %p398 = scmp.eq.s32.totalorder %s24, 1
    %p399 = scmp.ne.s32.totalorder %s394, %s396
    %p400 = scmp.eq.s32.totalorder %s24, 0
    %p401 = por %p399, %p400
    %p402 = scmp.ne.s32.totalorder %s394, %s396
    %p403 = scmp.eq.s32.totalorder %s29, 1
    %p404 = por %p402, %p403
    %p405 = scmp.ne.s32.totalorder %s396, %s397
    %p406 = scmp.eq.s32.totalorder %s29, 0
    %p407 = por %p405, %p406
    %p408 = scmp.ne.s32.totalorder %s396, %s397
    %p409 = scmp.eq.s32.totalorder %s30, 1
    %p410 = por %p408, %p409
    %p412 = scmp.ne.s32.totalorder %s397, %s411
    %p413 = scmp.eq.s32.totalorder %s30, 0
    %p414 = por %p412, %p413
    %s415 = ssub.s32 %s24, %s31
    %p416 = scmp.eq.s32.totalorder %s415, 0
    %s418 = sadd.s32 %s417, 1
    %s419 = scalar_select %p416, %s417, %s418
    %p422 = pneg %p416
    %p423 = scmp.eq.s32.totalorder %s24, 1
    %p424 = por %p422, %p423
    %p425 = scmp.ne.s32.totalorder %s417, %s420
    %p426 = scmp.eq.s32.totalorder %s24, 0
    %p427 = por %p425, %p426
    %p428 = scmp.ne.s32.totalorder %s417, %s420
    %p429 = scmp.eq.s32.totalorder %s29, 1
    %p430 = por %p428, %p429
    %p431 = scmp.ne.s32.totalorder %s420, %s421
    %p432 = scmp.eq.s32.totalorder %s29, 0
    %p433 = por %p431, %p432
    %p434 = scmp.ne.s32.totalorder %s420, %s421
    %p435 = scmp.eq.s32.totalorder %s30, 1
    %p436 = por %p434, %p435
    %p438 = scmp.ne.s32.totalorder %s421, %s437
    %p439 = scmp.eq.s32.totalorder %s30, 0
    %p440 = por %p438, %p439
    %p441 = scmp.le.s32.totalorder 1, %s24
    %p442 = scmp.lt.s32.totalorder %s24, 3
    %p443 = pnand %p441, %p442
    %p444 = pneg %p443
    // Predicated region
    $region9: #{basic_rfb_forward.1} parent=5 // pred_check
      _
    $region10: #{basic_rfb_forward.1} parent=5 // pred_check_branch
      %446 = sbr.rel (%p443) target = $region12
    $region11: #{basic_rfb_forward.1} parent=5 // pred_region
      %s447 = ssub.s32 %s24, 1
      // Predicated region
      $region13: #{basic_rfb_forward.1} parent=11 // pred_check
        %p448 = pneg %p71
      $region14: #{basic_rfb_forward.1} parent=11 // pred_check_branch
        %450 = sbr.rel (%p448) target = $region16
      $region15: #{basic_rfb_forward.1} parent=11 // pred_region
        _
      $region16: #{basic_rfb_forward.1} parent=11 // pred_fallthru
        _
      // Predicated region
      $region17: #{basic_rfb_forward.1} parent=11 // pred_check
        %p451 = pneg %p92
      $region18: #{basic_rfb_forward.1} parent=11 // pred_check_branch
        %453 = sbr.rel (%p451) target = $region20
      $region19: #{basic_rfb_forward.1} parent=11 // pred_region
        _
      $region20: #{basic_rfb_forward.1} parent=11 // pred_fallthru
        _
      // Predicated region
      $region21: #{basic_rfb_forward.1} parent=11 // pred_check
        %p454 = pneg %p113
      $region22: #{basic_rfb_forward.1} parent=11 // pred_check_branch
        %456 = sbr.rel (%p454) target = $region24
      $region23: #{basic_rfb_forward.1} parent=11 // pred_region
        _
      $region24: #{basic_rfb_forward.1} parent=11 // pred_fallthru
        _
      // Predicated region
      $region25: #{basic_rfb_forward.1} parent=11 // pred_check
        %p457 = pneg %p134
      $region26: #{basic_rfb_forward.1} parent=11 // pred_check_branch
        %459 = sbr.rel (%p457) target = $region28
      $region27: #{basic_rfb_forward.1} parent=11 // pred_region
        _
      $region28: #{basic_rfb_forward.1} parent=11 // pred_fallthru
        _
      // Predicated region
      $region29: #{basic_rfb_forward.1} parent=11 // pred_check
        %p460 = pneg %p155
      $region30: #{basic_rfb_forward.1} parent=11 // pred_check_branch
        %462 = sbr.rel (%p460) target = $region32
      $region31: #{basic_rfb_forward.1} parent=11 // pred_region
        _
      $region32: #{basic_rfb_forward.1} parent=11 // pred_fallthru
        _
      // Predicated region
      $region33: #{basic_rfb_forward.1} parent=11 // pred_check
        %p463 = pneg %p176
      $region34: #{basic_rfb_forward.1} parent=11 // pred_check_branch
        %465 = sbr.rel (%p463) target = $region36
      $region35: #{basic_rfb_forward.1} parent=11 // pred_region
        _
      $region36: #{basic_rfb_forward.1} parent=11 // pred_fallthru
        _
      // Predicated region
      $region37: #{basic_rfb_forward.1} parent=11 // pred_check
        %p466 = pneg %p197
      $region38: #{basic_rfb_forward.1} parent=11 // pred_check_branch
        %468 = sbr.rel (%p466) target = $region40
      $region39: #{basic_rfb_forward.1} parent=11 // pred_region
        _
      $region40: #{basic_rfb_forward.1} parent=11 // pred_fallthru
        _
      // Predicated region
      $region41: #{basic_rfb_forward.1} parent=11 // pred_check
        %p469 = pneg %p218
      $region42: #{basic_rfb_forward.1} parent=11 // pred_check_branch
        %471 = sbr.rel (%p469) target = $region44
      $region43: #{basic_rfb_forward.1} parent=11 // pred_region
        _
      $region44: #{basic_rfb_forward.1} parent=11 // pred_fallthru
        _
      // Predicated region
      $region45: #{basic_rfb_forward.1} parent=11 // pred_check
        %p472 = pneg %p239
      $region46: #{basic_rfb_forward.1} parent=11 // pred_check_branch
        %474 = sbr.rel (%p472) target = $region48
      $region47: #{basic_rfb_forward.1} parent=11 // pred_region
        _
      $region48: #{basic_rfb_forward.1} parent=11 // pred_fallthru
        _
      // Predicated region
      $region49: #{basic_rfb_forward.1} parent=11 // pred_check
        %p475 = pneg %p260
      $region50: #{basic_rfb_forward.1} parent=11 // pred_check_branch
        %477 = sbr.rel (%p475) target = $region52
      $region51: #{basic_rfb_forward.1} parent=11 // pred_region
        _
      $region52: #{basic_rfb_forward.1} parent=11 // pred_fallthru
        _
      // Predicated region
      $region53: #{basic_rfb_forward.1} parent=11 // pred_check
        %p478 = pneg %p281
      $region54: #{basic_rfb_forward.1} parent=11 // pred_check_branch
        %480 = sbr.rel (%p478) target = $region56
      $region55: #{basic_rfb_forward.1} parent=11 // pred_region
        _
      $region56: #{basic_rfb_forward.1} parent=11 // pred_fallthru
        _
      // Predicated region
      $region57: #{basic_rfb_forward.1} parent=11 // pred_check
        %p481 = pneg %p302
      $region58: #{basic_rfb_forward.1} parent=11 // pred_check_branch
        %483 = sbr.rel (%p481) target = $region60
      $region59: #{basic_rfb_forward.1} parent=11 // pred_region
        _
      $region60: #{basic_rfb_forward.1} parent=11 // pred_fallthru
        _
      // Predicated region
      $region61: #{basic_rfb_forward.1} parent=11 // pred_check
        %p484 = pneg %p323
      $region62: #{basic_rfb_forward.1} parent=11 // pred_check_branch
        %486 = sbr.rel (%p484) target = $region64
      $region63: #{basic_rfb_forward.1} parent=11 // pred_region
        _
      $region64: #{basic_rfb_forward.1} parent=11 // pred_fallthru
        _
      // Predicated region
      $region65: #{basic_rfb_forward.1} parent=11 // pred_check
        %p487 = pneg %p344
      $region66: #{basic_rfb_forward.1} parent=11 // pred_check_branch
        %489 = sbr.rel (%p487) target = $region68
      $region67: #{basic_rfb_forward.1} parent=11 // pred_region
        _
      $region68: #{basic_rfb_forward.1} parent=11 // pred_fallthru
        _
      // Predicated region
      $region69: #{basic_rfb_forward.1} parent=11 // pred_check
        %p490 = pneg %p365
      $region70: #{basic_rfb_forward.1} parent=11 // pred_check_branch
        %492 = sbr.rel (%p490) target = $region72
      $region71: #{basic_rfb_forward.1} parent=11 // pred_region
        _
      $region72: #{basic_rfb_forward.1} parent=11 // pred_fallthru
        _
      // Predicated region
      $region73: #{basic_rfb_forward.1} parent=11 // pred_check
        %p493 = pneg %p386
      $region74: #{basic_rfb_forward.1} parent=11 // pred_check_branch
        %495 = sbr.rel (%p493) target = $region76
      $region75: #{basic_rfb_forward.1} parent=11 // pred_region
        _
      $region76: #{basic_rfb_forward.1} parent=11 // pred_fallthru
        _
      // Predicated region
      $region77: #{basic_rfb_forward.1} parent=11 // pred_check
        %p496 = pneg %p407
      $region78: #{basic_rfb_forward.1} parent=11 // pred_check_branch
        %498 = sbr.rel (%p496) target = $region80
      $region79: #{basic_rfb_forward.1} parent=11 // pred_region
        _
      $region80: #{basic_rfb_forward.1} parent=11 // pred_fallthru
        _
    $region12: #{basic_rfb_forward.1} parent=5 // pred_fallthru
      _
    %p499 = scmp.lt.s32.totalorder %s24, 2
    // Predicated region
    $region81: #{basic_rfb_forward.1} parent=5 // pred_check
      %p500 = pneg %p499
    $region82: #{basic_rfb_forward.1} parent=5 // pred_check_branch
      %502 = sbr.rel (%p500) target = $region84
    $region83: #{basic_rfb_forward.1} parent=5 // pred_region
      // Predicated region
      $region85: #{basic_rfb_forward.1} parent=83 // pred_check
        %p503 = pneg %p44
      $region86: #{basic_rfb_forward.1} parent=83 // pred_check_branch
        %505 = sbr.rel (%p503) target = $region88
      $region87: #{basic_rfb_forward.1} parent=83 // pred_region
        %p506 = scmp.lt.s32.totalorder %s24, 1
        %s507 = scalar_select %p506, %s24, 1
        %s508 = smul.addr %s507, 12
        %s509 = smul.addr %s508, 8
        %s510 = scalar_lea.vmem %s0, %s509
      $region88: #{basic_rfb_forward.1} parent=83 // pred_fallthru
        _
    $region84: #{basic_rfb_forward.1} parent=5 // pred_fallthru
      _
    %p511 = scmp.le.s32.totalorder 1, %s24
    %p512 = scmp.lt.s32.totalorder %s24, 3
    %p513 = pnand %p511, %p512
    %p514 = pneg %p513
    // Predicated region
    $region89: #{basic_rfb_forward.1} parent=5 // pred_check
      _
    $region90: #{basic_rfb_forward.1} parent=5 // pred_check_branch
      %516 = sbr.rel (%p513) target = $region92
    $region91: #{basic_rfb_forward.1} parent=5 // pred_region
      %s517 = ssub.s32 %s24, 1
      %p518 = scmp.lt.s32.totalorder %s29, 1
      %s519 = scalar_select %p518, %s29, 1
      %s520 = smul.addr %s519, 12
      %s521 = smul.addr %s520, 8
      %s522 = scalar_lea.vmem %s0, %s521
      %p523 = pneg %p50
      %p524 = pneg %p47
      %p525 = pneg %p71
      %p526 = pneg %p68
      %p527 = pneg %p92
      %p528 = pneg %p89
      %p529 = pneg %p113
      %p530 = pneg %p110
      %p531 = pneg %p134
      %p532 = pneg %p131
      %p533 = pneg %p155
      %p534 = pneg %p152
      %p535 = pneg %p176
      %p536 = pneg %p173
      %p537 = pneg %p197
      %p538 = pneg %p194
      %p539 = pneg %p218
      %p540 = pneg %p215
      %p541 = pneg %p239
      %p542 = pneg %p236
      %p543 = pneg %p260
      %p544 = pneg %p257
      %p545 = pneg %p281
      %p546 = pneg %p278
      %p547 = pneg %p302
      %p548 = pneg %p299
      %p549 = pneg %p323
      %p550 = pneg %p320
      %p551 = pneg %p344
      %p552 = pneg %p341
      %p553 = pneg %p365
      %p554 = pneg %p362
      %p555 = pneg %p386
      %p556 = pneg %p383
      %p557 = pneg %p407
      %p558 = pneg %p404
      %p559 = pneg %p433
      %p560 = pneg %p430
      %p561 = scmp.lt.s32.totalorder %s29, 1
      %s562 = scalar_select %p561, %s29, 1
      %s563 = smul.addr %s562, 12
      %s564 = smul.addr %s563, 8
      %s565 = scalar_lea.vmem %s18, %s564
      %p566 = scmp.lt.s32.totalorder %s29, 1
      %s567 = scalar_select %p566, %s29, 1
      %s568 = smul.addr %s567, 12
      %s569 = smul.addr %s568, 8
      %s570 = scalar_lea.vmem %s0, %s569
      %p571 = scmp.lt.s32.totalorder %s29, 1
      %s572 = scalar_select %p571, %s29, 1
      %s573 = smul.addr %s572, 12
      %s574 = smul.addr %s573, 8
      %s575 = scalar_lea.vmem %s18, %s574
      %v576 = vld [vmem:[%s1] sm:$0x7]
      %vm577 = vcmp.ne.f32.partialorder %v576, 0.0
      %v578 = vld [vmem:[%s570] sm:$0xff]
      %v579 = vld [vmem:[%s570 + $0x8] sm:$0xff]
      %v580 = vld [vmem:[%s570 + $0x10] sm:$0xff]
      %v581 = vld [vmem:[%s570 + $0x18] sm:$0xff]
      %v582 = vld [vmem:[%s570 + $0x20] sm:$0xff]
      %v583 = vld [vmem:[%s570 + $0x28] sm:$0xff]
      %v584 = vld [vmem:[%s570 + $0x30] sm:$0xff]
      %v585 = vld [vmem:[%s570 + $0x38] sm:$0xff]
      %v586 = vld [vmem:[%s570 + $0x40] sm:$0xff]
      %v587 = vld [vmem:[%s570 + $0x48] sm:$0xff]
      %v588 = vld [vmem:[%s570 + $0x50] sm:$0xff]
      %v589 = vld [vmem:[%s570 + $0x58] sm:$0xff]
      %v590 = vld [vmem:[%s2] sm:$0xff]
      %v591 = vld [vmem:[%s2 + $0x8] sm:$0xff]
      %v592 = vld [vmem:[%s2 + $0x10] sm:$0xff]
      %v593 = vld [vmem:[%s2 + $0x18] sm:$0xff]
      %v594 = vld [vmem:[%s2 + $0x20] sm:$0xff]
      %v595 = vld [vmem:[%s2 + $0x28] sm:$0xff]
      %v596 = vld [vmem:[%s3] sm:$0xff]
      %v597 = vld [vmem:[%s3 + $0x8] sm:$0xff]
      %v598 = vld [vmem:[%s3 + $0x10] sm:$0xff]
      %v599 = vld [vmem:[%s3 + $0x18] sm:$0xff]
      %v600 = vld [vmem:[%s3 + $0x20] sm:$0xff]
      %v601 = vld [vmem:[%s3 + $0x28] sm:$0xff]
      %603 = vset.pattern.permute.xlu0 0
      %604 = vperm.xlu0 %603, %v596
      %v605 = vpop.permute.xlu0 %604
      %608 = vset.pattern.permute.xlu0 0
      %609 = vperm.xlu0 %608, %v597
      %v610 = vpop.permute.xlu0 %609
      %613 = vset.pattern.permute.xlu0 0
      %614 = vperm.xlu0 %613, %v598
      %v615 = vpop.permute.xlu0 %614
      %618 = vset.pattern.permute.xlu0 0
      %619 = vperm.xlu0 %618, %v599
      %v620 = vpop.permute.xlu0 %619
      %623 = vset.pattern.permute.xlu0 0
      %624 = vperm.xlu0 %623, %v600
      %v625 = vpop.permute.xlu0 %624
      %628 = vset.pattern.permute.xlu0 0
      %629 = vperm.xlu0 %628, %v601
      %v630 = vpop.permute.xlu0 %629
      %vm632 = vcmask 261120
      %v634 = vsel %vm632, %v590, 0
      %v637 = vsel %vm632, %v591, 0
      %v640 = vsel %vm632, %v592, 0
      %v643 = vsel %vm632, %v593, 0
      %v646 = vsel %vm632, %v594, 0
      %v649 = vsel %vm632, %v595, 0
      %651 = vmatprep.subr.mxu0 %v579
      %652 = vmatpush1.msra.mxu0 %v578
      %653 = vmatprep.subr.mxu0 %v582
      %654 = vmatpush1.msra.mxu0 %v581
      %655 = vmatprep.subr.mxu0 %v585
      %656 = vmatpush1.msra.mxu0 %v584
      %657 = vmatprep.subr.mxu0 %v588
      %658 = vmatpush1.msra.mxu0 %v587
      %659 = vmatprep.subr.mxu0 0.0
      %660 = vmatpush1.msra.mxu0 0.0
      %661 = vmatprep.subr.mxu0 0.0
      %662 = vmatpush1.msra.mxu0 0.0
      %663 = vmatprep.subr.mxu0 0.0
      %664 = vmatpush1.msra.mxu0 0.0
      %665 = vmatprep.subr.mxu0 0.0
      %666 = vmatpush1.msra.mxu0 0.0
      %667 = vmatprep.subr.mxu0 0.0
      %668 = vmatpush1.msra.mxu0 0.0
      %669 = vmatprep.subr.mxu0 0.0
      %670 = vmatpush1.msra.mxu0 0.0
      %671 = vmatprep.subr.mxu0 0.0
      %672 = vmatpush1.msra.mxu0 0.0
      %673 = vmatprep.subr.mxu0 0.0
      %674 = vmatpush1.msra.mxu0 0.0
      %675 = vmatprep.subr.mxu0 0.0
      %676 = vmatpush1.msra.mxu0 0.0
      %677 = vmatprep.subr.mxu0 0.0
      %678 = vmatpush1.msra.mxu0 0.0
      %679 = vmatprep.subr.mxu0 0.0
      %680 = vmatpush1.msra.mxu0 0.0
      %681 = vmatprep.subr.mxu0 0.0
      %682 = vmatpush1.msra.mxu0 0.0
      %683 = vmatprep.subr.mxu0 0.0
      %684 = vmatpush1.msra.mxu0 0.0
      %685 = vmatprep.subr.mxu0 0.0
      %686 = vmatpush1.msra.mxu0 0.0
      %687 = vmatprep.subr.mxu0 0.0
      %688 = vmatpush1.msra.mxu0 0.0
      %689 = vmatprep.subr.mxu0 0.0
      %690 = vmatpush1.msra.mxu0 0.0
      %691 = vmatprep.subr.mxu0 0.0
      %692 = vmatpush1.msra.mxu0 0.0
      %693 = vmatprep.subr.mxu0 0.0
      %694 = vmatpush1.msra.mxu0 0.0
      %695 = vmatprep.subr.mxu0 0.0
      %696 = vmatpush1.msra.mxu0 0.0
      %697 = vmatprep.subr.mxu0 0.0
      %698 = vmatpush1.msra.mxu0 0.0
      %699 = vmatprep.subr.mxu0 0.0
      %700 = vmatpush1.msra.mxu0 0.0
      %701 = vmatprep.subr.mxu0 0.0
      %702 = vmatpush1.msra.mxu0 0.0
      %703 = vmatprep.subr.mxu0 0.0
      %704 = vmatpush1.msra.mxu0 0.0
      %705 = vmatprep.subr.mxu0 0.0
      %706 = vmatpush1.msra.mxu0 0.0
      %707 = vmatprep.subr.mxu0 0.0
      %708 = vmatpush1.msra.mxu0 0.0
      %709 = vmatprep.subr.mxu0 0.0
      %710 = vmatpush1.msra.mxu0 0.0
      %711 = vmatprep.subr.mxu0 0.0
      %712 = vmatpush1.msra.mxu0 0.0
      %713 = vmatprep.subr.mxu0 0.0
      %714 = vmatpush1.msra.mxu0 0.0
      %715 = vmatprep.mubr.f32.mxu0 0.0
      %716 = vmatmul.mubr.f32.gmra.mrb[0].mxu0 %v634
      %v717 = vpop.f32.mrb[0].mxu0
      %v718 = vadd.f32 %v605, %v717
      %v719 = vpop.f32.mrb[0].mxu0
      %v720 = vadd.f32 %v605, %v719
      %721 = vmatprep.mubr.f32.mxu0 0.0
      %722 = vmatmul.mubr.f32.gmra.mrb[0].mxu0 %v637
      %v723 = vpop.f32.mrb[0].mxu0
      %v724 = vadd.f32 %v610, %v723
      %v725 = vpop.f32.mrb[0].mxu0
      %v726 = vadd.f32 %v610, %v725
      %727 = vmatprep.mubr.f32.mxu0 0.0
      %728 = vmatmul.mubr.f32.gmra.mrb[0].mxu0 %v640
      %v729 = vpop.f32.mrb[0].mxu0
      %v730 = vadd.f32 %v615, %v729
      %v731 = vpop.f32.mrb[0].mxu0
      %v732 = vadd.f32 %v615, %v731
      %733 = vmatprep.mubr.f32.mxu0 0.0
      %734 = vmatmul.mubr.f32.gmra.mrb[0].mxu0 %v643
      %v735 = vpop.f32.mrb[0].mxu0
      %v736 = vadd.f32 %v620, %v735
      %v737 = vpop.f32.mrb[0].mxu0
      %v738 = vadd.f32 %v620, %v737
      %739 = vmatprep.mubr.f32.mxu0 0.0
      %740 = vmatmul.mubr.f32.gmra.mrb[0].mxu0 %v646
      %v741 = vpop.f32.mrb[0].mxu0
      %v742 = vadd.f32 %v625, %v741
      %v743 = vpop.f32.mrb[0].mxu0
      %v744 = vadd.f32 %v625, %v743
      %745 = vmatprep.mubr.f32.mxu0 0.0
      %746 = vmatmul.mubr.f32.gmra.mrb[0].mxu0 %v649
      %v747 = vpop.f32.mrb[0].mxu0
      %v748 = vadd.f32 %v630, %v747
      %v749 = vpop.f32.mrb[0].mxu0
      %v750 = vadd.f32 %v630, %v749
      %751 = vdwg.mxu0
      %752 = vmatprep.subr.mxu0 0.0
      %753 = vmatpush1.msra.mxu0 %v580
      %754 = vmatprep.subr.mxu0 0.0
      %755 = vmatpush1.msra.mxu0 %v583
      %756 = vmatprep.subr.mxu0 0.0
      %757 = vmatpush1.msra.mxu0 %v586
      %758 = vmatprep.subr.mxu0 0.0
      %759 = vmatpush1.msra.mxu0 %v589
      %760 = vmatprep.subr.mxu0 0.0
      %761 = vmatpush1.msra.mxu0 0.0
      %762 = vmatprep.subr.mxu0 0.0
      %763 = vmatpush1.msra.mxu0 0.0
      %764 = vmatprep.subr.mxu0 0.0
      %765 = vmatpush1.msra.mxu0 0.0
      %766 = vmatprep.subr.mxu0 0.0
      %767 = vmatpush1.msra.mxu0 0.0
      %768 = vmatprep.subr.mxu0 0.0
      %769 = vmatpush1.msra.mxu0 0.0
      %770 = vmatprep.subr.mxu0 0.0
      %771 = vmatpush1.msra.mxu0 0.0
      %772 = vmatprep.subr.mxu0 0.0
      %773 = vmatpush1.msra.mxu0 0.0
      %774 = vmatprep.subr.mxu0 0.0
      %775 = vmatpush1.msra.mxu0 0.0
      %776 = vmatprep.subr.mxu0 0.0
      %777 = vmatpush1.msra.mxu0 0.0
      %778 = vmatprep.subr.mxu0 0.0
      %779 = vmatpush1.msra.mxu0 0.0
      %780 = vmatprep.subr.mxu0 0.0
      %781 = vmatpush1.msra.mxu0 0.0
      %782 = vmatprep.subr.mxu0 0.0
      %783 = vmatpush1.msra.mxu0 0.0
      %784 = vmatprep.subr.mxu0 0.0
      %785 = vmatpush1.msra.mxu0 0.0
      %786 = vmatprep.subr.mxu0 0.0
      %787 = vmatpush1.msra.mxu0 0.0
      %788 = vmatprep.subr.mxu0 0.0
      %789 = vmatpush1.msra.mxu0 0.0
      %790 = vmatprep.subr.mxu0 0.0
      %791 = vmatpush1.msra.mxu0 0.0
      %792 = vmatprep.subr.mxu0 0.0
      %793 = vmatpush1.msra.mxu0 0.0
      %794 = vmatprep.subr.mxu0 0.0
      %795 = vmatpush1.msra.mxu0 0.0
      %796 = vmatprep.subr.mxu0 0.0
      %797 = vmatpush1.msra.mxu0 0.0
      %798 = vmatprep.subr.mxu0 0.0
      %799 = vmatpush1.msra.mxu0 0.0
      %800 = vmatprep.subr.mxu0 0.0
      %801 = vmatpush1.msra.mxu0 0.0
      %802 = vmatprep.subr.mxu0 0.0
      %803 = vmatpush1.msra.mxu0 0.0
      %804 = vmatprep.subr.mxu0 0.0
      %805 = vmatpush1.msra.mxu0 0.0
      %806 = vmatprep.subr.mxu0 0.0
      %807 = vmatpush1.msra.mxu0 0.0
      %808 = vmatprep.subr.mxu0 0.0
      %809 = vmatpush1.msra.mxu0 0.0
      %810 = vmatprep.subr.mxu0 0.0
      %811 = vmatpush1.msra.mxu0 0.0
      %812 = vmatprep.subr.mxu0 0.0
      %813 = vmatpush1.msra.mxu0 0.0
      %814 = vmatprep.subr.mxu0 0.0
      %815 = vmatpush1.msra.mxu0 0.0
      %816 = vmatprep.mubr.f32.mxu0 0.0
      %817 = vmatmul.mubr.f32.gmra.mrb[0].mxu0 %v634
      %v818 = vpop.f32.mrb[0].mxu0
      %v819 = vadd.f32 %v605, %v818
      %v820 = vpop.f32.mrb[0].mxu0
      %821 = vmatprep.mubr.f32.mxu0 0.0
      %822 = vmatmul.mubr.f32.gmra.mrb[0].mxu0 %v637
      %v823 = vpop.f32.mrb[0].mxu0
      %v824 = vadd.f32 %v610, %v823
      %v825 = vpop.f32.mrb[0].mxu0
      %826 = vmatprep.mubr.f32.mxu0 0.0
      %827 = vmatmul.mubr.f32.gmra.mrb[0].mxu0 %v640
      %v828 = vpop.f32.mrb[0].mxu0
      %v829 = vadd.f32 %v615, %v828
      %v830 = vpop.f32.mrb[0].mxu0
      %831 = vmatprep.mubr.f32.mxu0 0.0
      %832 = vmatmul.mubr.f32.gmra.mrb[0].mxu0 %v643
      %v833 = vpop.f32.mrb[0].mxu0
      %v834 = vadd.f32 %v620, %v833
      %v835 = vpop.f32.mrb[0].mxu0
      %836 = vmatprep.mubr.f32.mxu0 0.0
      %837 = vmatmul.mubr.f32.gmra.mrb[0].mxu0 %v646
      %v838 = vpop.f32.mrb[0].mxu0
      %v839 = vadd.f32 %v625, %v838
      %v840 = vpop.f32.mrb[0].mxu0
      %841 = vmatprep.mubr.f32.mxu0 0.0
      %842 = vmatmul.mubr.f32.gmra.mrb[0].mxu0 %v649
      %v843 = vpop.f32.mrb[0].mxu0
      %v844 = vadd.f32 %v630, %v843
      %v845 = vpop.f32.mrb[0].mxu0
      %846 = vdwg.mxu0
      %v847 = vmax.f32 %v718, 0.0
      %v848 = vmax.f32 %v720, 0.0
      %v849 = vmax.f32 %v819, 0.0
      %v850 = vmax.f32 %v724, 0.0
      %v851 = vmax.f32 %v726, 0.0
      %v852 = vmax.f32 %v824, 0.0
      %853 = vst [vmem:[#allocation2] sm:$0xff] 0.0
      %854 = vst [vmem:[#allocation2 + $0x8] sm:$0xff] 0.0
      %855 = vst [vmem:[#allocation2 + $0x10] sm:$0xff] 0.0
      %vm856 = vcmask 998400
      %857 = vst.msk [vmem:[#allocation2 + $0x18] sm:$0xff] %vm856, 0.0
      %v858 = vsel %vm577, 1, 0
      %v859 = vlaneseq
      %v860 = vshrl.u32 %v859, 7
      %v861 = vsub.s32 0, %v860
      %v862 = vrot.slane %v858, %v861
      %v863 = vlaneseq
      %v864 = vshrl.u32 %v863, 7
      %v865 = vsub.s32 1, %v864
      %v866 = vrot.slane %v858, %v865
      %v867 = vlaneseq
      %v868 = vshrl.u32 %v867, 7
      %v869 = vsub.s32 2, %v868
      %v870 = vrot.slane %v858, %v869
      %vm871 = vcmp.eq.s32.totalorder %v862, 1
      %vm872 = vcmp.eq.s32.totalorder %v866, 1
      %vm873 = vcmp.eq.s32.totalorder %v870, 1
      %v874 = vsel %vm871, %v847, 0.0
      %v875 = vsel %vm872, %v848, 0.0
      %v876 = vsel %vm873, %v849, 0.0
      %880 = vrot.lane.b32.xlu0 %v874, 69
      %v881 = vpop.permute.xlu0 %880
      %882 = vrot.lane.b32.xlu0 %v875, 69
      %v883 = vpop.permute.xlu0 %882
      %884 = vrot.lane.b32.xlu0 %v876, 69
      %v885 = vpop.permute.xlu0 %884
      %vm886 = vcmask 564224
      %v887 = vsel %vm886, %v881, %v883
      %v888 = vsel %vm886, %v883, %v885
      %vm893 = vcmask 1048104
      %894 = vst.msk [vmem:[#allocation2] sm:$0xff] %vm893, %v881
      %895 = vst [vmem:[#allocation2 + $0x8] sm:$0xff] %v887
      %896 = vst [vmem:[#allocation2 + $0x10] sm:$0xff] %v888
      %vm897 = vcmask 302080
      %898 = vst.msk [vmem:[#allocation2 + $0x18] sm:$0xff] %vm897, %v885
      %v899 = vld [vmem:[#allocation2] sm:$0xff]
      %v900 = vld [vmem:[#allocation2 + $0x8] sm:$0xff]
      %v901 = vld [vmem:[#allocation2 + $0x10] sm:$0xff]
      %v902 = vld [vmem:[#allocation2 + $0x18] sm:$0xff]
      %v903 = vld [vmem:[%s4] sm:$0xff]
      %s904 = scalar_lea.vmem %s4, 8
      %v905 = vld [vmem:[%s904] sm:$0xff]
      %910 = vrot.lane.b32.xlu0 %v899, 81
      %v911 = vpop.permute.xlu0 %910
      %912 = vrot.lane.b32.xlu0 %v900, 81
      %v913 = vpop.permute.xlu0 %912
      %914 = vrot.lane.b32.xlu0 %v901, 81
      %v915 = vpop.permute.xlu0 %914
      %916 = vrot.lane.b32.xlu0 %v902, 81
      %v917 = vpop.permute.xlu0 %916
      %vm918 = vcmask 662528
      %v919 = vsel %vm918, %v911, %v913
      %v920 = vsel %vm918, %v913, %v915
      %v921 = vsel %vm918, %v915, %v917
      %vm925 = vcmask 64512
      %v927 = vsel %vm925, %v905, 0
      %929 = vmatprep.subr.mxu0 %v920
      %930 = vmatpush1.msra.mxu0 %v919
      %931 = vmatprep.subr.mxu0 0.0
      %932 = vmatpush1.msra.mxu0 0.0
      %933 = vmatprep.subr.mxu0 0.0
      %934 = vmatpush1.msra.mxu0 0.0
      %935 = vmatprep.subr.mxu0 0.0
      %936 = vmatpush1.msra.mxu0 0.0
      %937 = vmatprep.subr.mxu0 0.0
      %938 = vmatpush1.msra.mxu0 0.0
      %939 = vmatprep.subr.mxu0 0.0
      %940 = vmatpush1.msra.mxu0 0.0
      %941 = vmatprep.subr.mxu0 0.0
      %942 = vmatpush1.msra.mxu0 0.0
      %943 = vmatprep.subr.mxu0 0.0
      %944 = vmatpush1.msra.mxu0 0.0
      %945 = vmatprep.subr.mxu0 0.0
      %946 = vmatpush1.msra.mxu0 0.0
      %947 = vmatprep.subr.mxu0 0.0
      %948 = vmatpush1.msra.mxu0 0.0
      %949 = vmatprep.subr.mxu0 0.0
      %950 = vmatpush1.msra.mxu0 0.0
      %951 = vmatprep.subr.mxu0 0.0
      %952 = vmatpush1.msra.mxu0 0.0
      %953 = vmatprep.subr.mxu0 0.0
      %954 = vmatpush1.msra.mxu0 0.0
      %955 = vmatprep.subr.mxu0 0.0
      %956 = vmatpush1.msra.mxu0 0.0
      %957 = vmatprep.subr.mxu0 0.0
      %958 = vmatpush1.msra.mxu0 0.0
      %959 = vmatprep.subr.mxu0 0.0
      %960 = vmatpush1.msra.mxu0 0.0
      %961 = vmatprep.subr.mxu0 0.0
      %962 = vmatpush1.msra.mxu0 0.0
      %963 = vmatprep.subr.mxu0 0.0
      %964 = vmatpush1.msra.mxu0 0.0
      %965 = vmatprep.subr.mxu0 0.0
      %966 = vmatpush1.msra.mxu0 0.0
      %967 = vmatprep.subr.mxu0 0.0
      %968 = vmatpush1.msra.mxu0 0.0
      %969 = vmatprep.subr.mxu0 0.0
      %970 = vmatpush1.msra.mxu0 0.0
      %971 = vmatprep.subr.mxu0 0.0
      %972 = vmatpush1.msra.mxu0 0.0
      %973 = vmatprep.subr.mxu0 0.0
      %974 = vmatpush1.msra.mxu0 0.0
      %975 = vmatprep.subr.mxu0 0.0
      %976 = vmatpush1.msra.mxu0 0.0
      %977 = vmatprep.subr.mxu0 0.0
      %978 = vmatpush1.msra.mxu0 0.0
      %979 = vmatprep.subr.mxu0 0.0
      %980 = vmatpush1.msra.mxu0 0.0
      %981 = vmatprep.subr.mxu0 0.0
      %982 = vmatpush1.msra.mxu0 0.0
      %983 = vmatprep.subr.mxu0 0.0
      %984 = vmatpush1.msra.mxu0 0.0
      %985 = vmatprep.subr.mxu0 0.0
      %986 = vmatpush1.msra.mxu0 0.0
      %987 = vmatprep.subr.mxu0 0.0
      %988 = vmatpush1.msra.mxu0 0.0
      %989 = vmatprep.subr.mxu0 0.0
      %990 = vmatpush1.msra.mxu0 0.0
      %991 = vmatprep.subr.mxu0 0.0
      %992 = vmatpush1.msra.mxu0 0.0
      %993 = vmatprep.mubr.f32.mxu0 0.0
      %994 = vmatmul.mubr.f32.gmra.mrb[0].mxu0 %v927
      %v995 = vpop.f32.mrb[0].mxu0
      %v996 = vadd.f32 0.0, %v995
      %v997 = vpop.f32.mrb[0].mxu0
      %v998 = vadd.f32 0.0, %v997
      %999 = vdwg.mxu0
      %1000 = vmatprep.subr.mxu0 0.0
      %1001 = vmatpush1.msra.mxu0 %v921
      %1002 = vmatprep.subr.mxu0 0.0
      %1003 = vmatpush1.msra.mxu0 0.0
      %1004 = vmatprep.subr.mxu0 0.0
      %1005 = vmatpush1.msra.mxu0 0.0
      %1006 = vmatprep.subr.mxu0 0.0
      %1007 = vmatpush1.msra.mxu0 0.0
      %1008 = vmatprep.subr.mxu0 0.0
      %1009 = vmatpush1.msra.mxu0 0.0
      %1010 = vmatprep.subr.mxu0 0.0
      %1011 = vmatpush1.msra.mxu0 0.0
      %1012 = vmatprep.subr.mxu0 0.0
      %1013 = vmatpush1.msra.mxu0 0.0
      %1014 = vmatprep.subr.mxu0 0.0
      %1015 = vmatpush1.msra.mxu0 0.0
      %1016 = vmatprep.subr.mxu0 0.0
      %1017 = vmatpush1.msra.mxu0 0.0
      %1018 = vmatprep.subr.mxu0 0.0
      %1019 = vmatpush1.msra.mxu0 0.0
      %1020 = vmatprep.subr.mxu0 0.0
      %1021 = vmatpush1.msra.mxu0 0.0
      %1022 = vmatprep.subr.mxu0 0.0
      %1023 = vmatpush1.msra.mxu0 0.0
      %1024 = vmatprep.subr.mxu0 0.0
      %1025 = vmatpush1.msra.mxu0 0.0
      %1026 = vmatprep.subr.mxu0 0.0
      %1027 = vmatpush1.msra.mxu0 0.0
      %1028 = vmatprep.subr.mxu0 0.0
      %1029 = vmatpush1.msra.mxu0 0.0
      %1030 = vmatprep.subr.mxu0 0.0
      %1031 = vmatpush1.msra.mxu0 0.0
      %1032 = vmatprep.subr.mxu0 0.0
      %1033 = vmatpush1.msra.mxu0 0.0
      %1034 = vmatprep.subr.mxu0 0.0
      %1035 = vmatpush1.msra.mxu0 0.0
      %1036 = vmatprep.subr.mxu0 0.0
      %1037 = vmatpush1.msra.mxu0 0.0
      %1038 = vmatprep.subr.mxu0 0.0
      %1039 = vmatpush1.msra.mxu0 0.0
      %1040 = vmatprep.subr.mxu0 0.0
      %1041 = vmatpush1.msra.mxu0 0.0
      %1042 = vmatprep.subr.mxu0 0.0
      %1043 = vmatpush1.msra.mxu0 0.0
      %1044 = vmatprep.subr.mxu0 0.0
      %1045 = vmatpush1.msra.mxu0 0.0
      %1046 = vmatprep.subr.mxu0 0.0
      %1047 = vmatpush1.msra.mxu0 0.0
      %1048 = vmatprep.subr.mxu0 0.0
      %1049 = vmatpush1.msra.mxu0 0.0
      %1050 = vmatprep.subr.mxu0 0.0
      %1051 = vmatpush1.msra.mxu0 0.0
      %1052 = vmatprep.subr.mxu0 0.0
      %1053 = vmatpush1.msra.mxu0 0.0
      %1054 = vmatprep.subr.mxu0 0.0
      %1055 = vmatpush1.msra.mxu0 0.0
      %1056 = vmatprep.subr.mxu0 0.0
      %1057 = vmatpush1.msra.mxu0 0.0
      %1058 = vmatprep.subr.mxu0 0.0
      %1059 = vmatpush1.msra.mxu0 0.0
      %1060 = vmatprep.subr.mxu0 0.0
      %1061 = vmatpush1.msra.mxu0 0.0
      %1062 = vmatprep.subr.mxu0 0.0
      %1063 = vmatpush1.msra.mxu0 0.0
      %1064 = vmatprep.mubr.f32.mxu0 0.0
      %1065 = vmatmul.mubr.f32.gmra.mrb[0].mxu0 %v927
      %v1066 = vpop.f32.mrb[0].mxu0
      %v1067 = vadd.f32 0.0, %v1066
      %v1068 = vpop.f32.mrb[0].mxu0
      %1069 = vdwg.mxu0
      %1070 = vrot.lane.b32.xlu0 %v899, 82
      %v1071 = vpop.permute.xlu0 %1070
      %1072 = vrot.lane.b32.xlu0 %v900, 82
      %v1073 = vpop.permute.xlu0 %1072
      %1074 = vrot.lane.b32.xlu0 %v901, 82
      %v1075 = vpop.permute.xlu0 %1074
      %1076 = vrot.lane.b32.xlu0 %v902, 82
      %v1077 = vpop.permute.xlu0 %1076
      %vm1078 = vcmask 670720
      %v1079 = vsel %vm1078, %v1071, %v1073
      %v1080 = vsel %vm1078, %v1073, %v1075
      %v1081 = vsel %vm1078, %v1075, %v1077
      %v1086 = vsel %vm925, %v903, 0
      %1088 = vmatprep.subr.mxu0 %v1080
      %1089 = vmatpush1.msra.mxu0 %v1079
      %1090 = vmatprep.subr.mxu0 0.0
      %1091 = vmatpush1.msra.mxu0 0.0
      %1092 = vmatprep.subr.mxu0 0.0
      %1093 = vmatpush1.msra.mxu0 0.0
      %1094 = vmatprep.subr.mxu0 0.0
      %1095 = vmatpush1.msra.mxu0 0.0
      %1096 = vmatprep.subr.mxu0 0.0
      %1097 = vmatpush1.msra.mxu0 0.0
      %1098 = vmatprep.subr.mxu0 0.0
      %1099 = vmatpush1.msra.mxu0 0.0
      %1100 = vmatprep.subr.mxu0 0.0
      %1101 = vmatpush1.msra.mxu0 0.0
      %1102 = vmatprep.subr.mxu0 0.0
      %1103 = vmatpush1.msra.mxu0 0.0
      %1104 = vmatprep.subr.mxu0 0.0
      %1105 = vmatpush1.msra.mxu0 0.0
      %1106 = vmatprep.subr.mxu0 0.0
      %1107 = vmatpush1.msra.mxu0 0.0
      %1108 = vmatprep.subr.mxu0 0.0
      %1109 = vmatpush1.msra.mxu0 0.0
      %1110 = vmatprep.subr.mxu0 0.0
      %1111 = vmatpush1.msra.mxu0 0.0
      %1112 = vmatprep.subr.mxu0 0.0
      %1113 = vmatpush1.msra.mxu0 0.0
      %1114 = vmatprep.subr.mxu0 0.0
      %1115 = vmatpush1.msra.mxu0 0.0
      %1116 = vmatprep.subr.mxu0 0.0
      %1117 = vmatpush1.msra.mxu0 0.0
      %1118 = vmatprep.subr.mxu0 0.0
      %1119 = vmatpush1.msra.mxu0 0.0
      %1120 = vmatprep.subr.mxu0 0.0
      %1121 = vmatpush1.msra.mxu0 0.0
      %1122 = vmatprep.subr.mxu0 0.0
      %1123 = vmatpush1.msra.mxu0 0.0
      %1124 = vmatprep.subr.mxu0 0.0
      %1125 = vmatpush1.msra.mxu0 0.0
      %1126 = vmatprep.subr.mxu0 0.0
      %1127 = vmatpush1.msra.mxu0 0.0
      %1128 = vmatprep.subr.mxu0 0.0
      %1129 = vmatpush1.msra.mxu0 0.0
      %1130 = vmatprep.subr.mxu0 0.0
      %1131 = vmatpush1.msra.mxu0 0.0
      %1132 = vmatprep.subr.mxu0 0.0
      %1133 = vmatpush1.msra.mxu0 0.0
      %1134 = vmatprep.subr.mxu0 0.0
      %1135 = vmatpush1.msra.mxu0 0.0
      %1136 = vmatprep.subr.mxu0 0.0
      %1137 = vmatpush1.msra.mxu0 0.0
      %1138 = vmatprep.subr.mxu0 0.0
      %1139 = vmatpush1.msra.mxu0 0.0
      %1140 = vmatprep.subr.mxu0 0.0
      %1141 = vmatpush1.msra.mxu0 0.0
      %1142 = vmatprep.subr.mxu0 0.0
      %1143 = vmatpush1.msra.mxu0 0.0
      %1144 = vmatprep.subr.mxu0 0.0
      %1145 = vmatpush1.msra.mxu0 0.0
      %1146 = vmatprep.subr.mxu0 0.0
      %1147 = vmatpush1.msra.mxu0 0.0
      %1148 = vmatprep.subr.mxu0 0.0
      %1149 = vmatpush1.msra.mxu0 0.0
      %1150 = vmatprep.subr.mxu0 0.0
      %1151 = vmatpush1.msra.mxu0 0.0
      %1152 = vmatprep.mubr.f32.mxu0 0.0
      %1153 = vmatmul.mubr.f32.gmra.mrb[0].mxu0 %v1086
      %v1154 = vpop.f32.mrb[0].mxu0
      %v1155 = vadd.f32 %v996, %v1154
      %v1156 = vpop.f32.mrb[0].mxu0
      %v1157 = vadd.f32 %v998, %v1156
      %1158 = vdwg.mxu0
      %1159 = vmatprep.subr.mxu0 0.0
      %1160 = vmatpush1.msra.mxu0 %v1081
      %1161 = vmatprep.subr.mxu0 0.0
      %1162 = vmatpush1.msra.mxu0 0.0
      %1163 = vmatprep.subr.mxu0 0.0
      %1164 = vmatpush1.msra.mxu0 0.0
      %1165 = vmatprep.subr.mxu0 0.0
      %1166 = vmatpush1.msra.mxu0 0.0
      %1167 = vmatprep.subr.mxu0 0.0
      %1168 = vmatpush1.msra.mxu0 0.0
      %1169 = vmatprep.subr.mxu0 0.0
      %1170 = vmatpush1.msra.mxu0 0.0
      %1171 = vmatprep.subr.mxu0 0.0
      %1172 = vmatpush1.msra.mxu0 0.0
      %1173 = vmatprep.subr.mxu0 0.0
      %1174 = vmatpush1.msra.mxu0 0.0
      %1175 = vmatprep.subr.mxu0 0.0
      %1176 = vmatpush1.msra.mxu0 0.0
      %1177 = vmatprep.subr.mxu0 0.0
      %1178 = vmatpush1.msra.mxu0 0.0
      %1179 = vmatprep.subr.mxu0 0.0
      %1180 = vmatpush1.msra.mxu0 0.0
      %1181 = vmatprep.subr.mxu0 0.0
      %1182 = vmatpush1.msra.mxu0 0.0
      %1183 = vmatprep.subr.mxu0 0.0
      %1184 = vmatpush1.msra.mxu0 0.0
      %1185 = vmatprep.subr.mxu0 0.0
      %1186 = vmatpush1.msra.mxu0 0.0
      %1187 = vmatprep.subr.mxu0 0.0
      %1188 = vmatpush1.msra.mxu0 0.0
      %1189 = vmatprep.subr.mxu0 0.0
      %1190 = vmatpush1.msra.mxu0 0.0
      %1191 = vmatprep.subr.mxu0 0.0
      %1192 = vmatpush1.msra.mxu0 0.0
      %1193 = vmatprep.subr.mxu0 0.0
      %1194 = vmatpush1.msra.mxu0 0.0
      %1195 = vmatprep.subr.mxu0 0.0
      %1196 = vmatpush1.msra.mxu0 0.0
      %1197 = vmatprep.subr.mxu0 0.0
      %1198 = vmatpush1.msra.mxu0 0.0
      %1199 = vmatprep.subr.mxu0 0.0
      %1200 = vmatpush1.msra.mxu0 0.0
      %1201 = vmatprep.subr.mxu0 0.0
      %1202 = vmatpush1.msra.mxu0 0.0
      %1203 = vmatprep.subr.mxu0 0.0
      %1204 = vmatpush1.msra.mxu0 0.0
      %1205 = vmatprep.subr.mxu0 0.0
      %1206 = vmatpush1.msra.mxu0 0.0
      %1207 = vmatprep.subr.mxu0 0.0
      %1208 = vmatpush1.msra.mxu0 0.0
      %1209 = vmatprep.subr.mxu0 0.0
      %1210 = vmatpush1.msra.mxu0 0.0
      %1211 = vmatprep.subr.mxu0 0.0
      %1212 = vmatpush1.msra.mxu0 0.0
      %1213 = vmatprep.subr.mxu0 0.0
      %1214 = vmatpush1.msra.mxu0 0.0
      %1215 = vmatprep.subr.mxu0 0.0
      %1216 = vmatpush1.msra.mxu0 0.0
      %1217 = vmatprep.subr.mxu0 0.0
      %1218 = vmatpush1.msra.mxu0 0.0
      %1219 = vmatprep.subr.mxu0 0.0
      %1220 = vmatpush1.msra.mxu0 0.0
      %1221 = vmatprep.subr.mxu0 0.0
      %1222 = vmatpush1.msra.mxu0 0.0
      %1223 = vmatprep.mubr.f32.mxu0 0.0
      %1224 = vmatmul.mubr.f32.gmra.mrb[0].mxu0 %v1086
      %v1225 = vpop.f32.mrb[0].mxu0
      %v1226 = vadd.f32 %v1067, %v1225
      %v1227 = vpop.f32.mrb[0].mxu0
      %1228 = vdwg.mxu0
      %s1229 = scalar_lea.vmem %s4, 16
      %v1230 = vld [vmem:[%s1229] sm:$0xff]
      %1231 = vrot.lane.b32.xlu0 %v899, 80
      %v1232 = vpop.permute.xlu0 %1231
      %1233 = vrot.lane.b32.xlu0 %v900, 80
      %v1234 = vpop.permute.xlu0 %1233
      %1235 = vrot.lane.b32.xlu0 %v901, 80
      %v1236 = vpop.permute.xlu0 %1235
      %1237 = vrot.lane.b32.xlu0 %v902, 80
      %v1238 = vpop.permute.xlu0 %1237
      %vm1239 = vcmask 654336
      %v1240 = vsel %vm1239, %v1232, %v1234
      %v1241 = vsel %vm1239, %v1234, %v1236
      %v1242 = vsel %vm1239, %v1236, %v1238
      %v1247 = vsel %vm925, %v1230, 0
      %1249 = vmatprep.subr.mxu0 %v1241
      %1250 = vmatpush1.msra.mxu0 %v1240
      %1251 = vmatprep.subr.mxu0 0.0
      %1252 = vmatpush1.msra.mxu0 0.0
      %1253 = vmatprep.subr.mxu0 0.0
      %1254 = vmatpush1.msra.mxu0 0.0
      %1255 = vmatprep.subr.mxu0 0.0
      %1256 = vmatpush1.msra.mxu0 0.0
      %1257 = vmatprep.subr.mxu0 0.0
      %1258 = vmatpush1.msra.mxu0 0.0
      %1259 = vmatprep.subr.mxu0 0.0
      %1260 = vmatpush1.msra.mxu0 0.0
      %1261 = vmatprep.subr.mxu0 0.0
      %1262 = vmatpush1.msra.mxu0 0.0
      %1263 = vmatprep.subr.mxu0 0.0
      %1264 = vmatpush1.msra.mxu0 0.0
      %1265 = vmatprep.subr.mxu0 0.0
      %1266 = vmatpush1.msra.mxu0 0.0
      %1267 = vmatprep.subr.mxu0 0.0
      %1268 = vmatpush1.msra.mxu0 0.0
      %1269 = vmatprep.subr.mxu0 0.0
      %1270 = vmatpush1.msra.mxu0 0.0
      %1271 = vmatprep.subr.mxu0 0.0
      %1272 = vmatpush1.msra.mxu0 0.0
      %1273 = vmatprep.subr.mxu0 0.0
      %1274 = vmatpush1.msra.mxu0 0.0
      %1275 = vmatprep.subr.mxu0 0.0
      %1276 = vmatpush1.msra.mxu0 0.0
      %1277 = vmatprep.subr.mxu0 0.0
      %1278 = vmatpush1.msra.mxu0 0.0
      %1279 = vmatprep.subr.mxu0 0.0
      %1280 = vmatpush1.msra.mxu0 0.0
      %1281 = vmatprep.subr.mxu0 0.0
      %1282 = vmatpush1.msra.mxu0 0.0
      %1283 = vmatprep.subr.mxu0 0.0
      %1284 = vmatpush1.msra.mxu0 0.0
      %1285 = vmatprep.subr.mxu0 0.0
      %1286 = vmatpush1.msra.mxu0 0.0
      %1287 = vmatprep.subr.mxu0 0.0
      %1288 = vmatpush1.msra.mxu0 0.0
      %1289 = vmatprep.subr.mxu0 0.0
      %1290 = vmatpush1.msra.mxu0 0.0
      %1291 = vmatprep.subr.mxu0 0.0
      %1292 = vmatpush1.msra.mxu0 0.0
      %1293 = vmatprep.subr.mxu0 0.0
      %1294 = vmatpush1.msra.mxu0 0.0
      %1295 = vmatprep.subr.mxu0 0.0
      %1296 = vmatpush1.msra.mxu0 0.0
      %1297 = vmatprep.subr.mxu0 0.0
      %1298 = vmatpush1.msra.mxu0 0.0
      %1299 = vmatprep.subr.mxu0 0.0
      %1300 = vmatpush1.msra.mxu0 0.0
      %1301 = vmatprep.subr.mxu0 0.0
      %1302 = vmatpush1.msra.mxu0 0.0
      %1303 = vmatprep.subr.mxu0 0.0
      %1304 = vmatpush1.msra.mxu0 0.0
      %1305 = vmatprep.subr.mxu0 0.0
      %1306 = vmatpush1.msra.mxu0 0.0
      %1307 = vmatprep.subr.mxu0 0.0
      %1308 = vmatpush1.msra.mxu0 0.0
      %1309 = vmatprep.subr.mxu0 0.0
      %1310 = vmatpush1.msra.mxu0 0.0
      %1311 = vmatprep.subr.mxu0 0.0
      %1312 = vmatpush1.msra.mxu0 0.0
      %1313 = vmatprep.mubr.f32.mxu0 0.0
      %1314 = vmatmul.mubr.f32.gmra.mrb[0].mxu0 %v1247
      %v1315 = vpop.f32.mrb[0].mxu0
      %v1316 = vadd.f32 0.0, %v1315
      %v1317 = vpop.f32.mrb[0].mxu0
      %v1318 = vadd.f32 0.0, %v1317
      %1319 = vdwg.mxu0
      %1320 = vmatprep.subr.mxu0 0.0
      %1321 = vmatpush1.msra.mxu0 %v1242
      %1322 = vmatprep.subr.mxu0 0.0
      %1323 = vmatpush1.msra.mxu0 0.0
      %1324 = vmatprep.subr.mxu0 0.0
      %1325 = vmatpush1.msra.mxu0 0.0
      %1326 = vmatprep.subr.mxu0 0.0
      %1327 = vmatpush1.msra.mxu0 0.0
      %1328 = vmatprep.subr.mxu0 0.0
      %1329 = vmatpush1.msra.mxu0 0.0
      %1330 = vmatprep.subr.mxu0 0.0
      %1331 = vmatpush1.msra.mxu0 0.0
      %1332 = vmatprep.subr.mxu0 0.0
      %1333 = vmatpush1.msra.mxu0 0.0
      %1334 = vmatprep.subr.mxu0 0.0
      %1335 = vmatpush1.msra.mxu0 0.0
      %1336 = vmatprep.subr.mxu0 0.0
      %1337 = vmatpush1.msra.mxu0 0.0
      %1338 = vmatprep.subr.mxu0 0.0
      %1339 = vmatpush1.msra.mxu0 0.0
      %1340 = vmatprep.subr.mxu0 0.0
      %1341 = vmatpush1.msra.mxu0 0.0
      %1342 = vmatprep.subr.mxu0 0.0
      %1343 = vmatpush1.msra.mxu0 0.0
      %1344 = vmatprep.subr.mxu0 0.0
      %1345 = vmatpush1.msra.mxu0 0.0
      %1346 = vmatprep.subr.mxu0 0.0
      %1347 = vmatpush1.msra.mxu0 0.0
      %1348 = vmatprep.subr.mxu0 0.0
      %1349 = vmatpush1.msra.mxu0 0.0
      %1350 = vmatprep.subr.mxu0 0.0
      %1351 = vmatpush1.msra.mxu0 0.0
      %1352 = vmatprep.subr.mxu0 0.0
      %1353 = vmatpush1.msra.mxu0 0.0
      %1354 = vmatprep.subr.mxu0 0.0
      %1355 = vmatpush1.msra.mxu0 0.0
      %1356 = vmatprep.subr.mxu0 0.0
      %1357 = vmatpush1.msra.mxu0 0.0
      %1358 = vmatprep.subr.mxu0 0.0
      %1359 = vmatpush1.msra.mxu0 0.0
      %1360 = vmatprep.subr.mxu0 0.0
      %1361 = vmatpush1.msra.mxu0 0.0
      %1362 = vmatprep.subr.mxu0 0.0
      %1363 = vmatpush1.msra.mxu0 0.0
      %1364 = vmatprep.subr.mxu0 0.0
      %1365 = vmatpush1.msra.mxu0 0.0
      %1366 = vmatprep.subr.mxu0 0.0
      %1367 = vmatpush1.msra.mxu0 0.0
      %1368 = vmatprep.subr.mxu0 0.0
      %1369 = vmatpush1.msra.mxu0 0.0
      %1370 = vmatprep.subr.mxu0 0.0
      %1371 = vmatpush1.msra.mxu0 0.0
      %1372 = vmatprep.subr.mxu0 0.0
      %1373 = vmatpush1.msra.mxu0 0.0
      %1374 = vmatprep.subr.mxu0 0.0
      %1375 = vmatpush1.msra.mxu0 0.0
      %1376 = vmatprep.subr.mxu0 0.0
      %1377 = vmatpush1.msra.mxu0 0.0
      %1378 = vmatprep.subr.mxu0 0.0
      %1379 = vmatpush1.msra.mxu0 0.0
      %1380 = vmatprep.subr.mxu0 0.0
      %1381 = vmatpush1.msra.mxu0 0.0
      %1382 = vmatprep.subr.mxu0 0.0
      %1383 = vmatpush1.msra.mxu0 0.0
      %1384 = vmatprep.mubr.f32.mxu0 0.0
      %1385 = vmatmul.mubr.f32.gmra.mrb[0].mxu0 %v1247
      %v1386 = vpop.f32.mrb[0].mxu0
      %v1387 = vadd.f32 0.0, %v1386
      %v1388 = vpop.f32.mrb[0].mxu0
      %1389 = vdwg.mxu0
      %v1390 = vadd.f32 %v1155, %v1316
      %v1391 = vadd.f32 %v1157, %v1318
      %v1392 = vadd.f32 %v1226, %v1387
      %s1393 = scalar_lea.vmem %s4, 24
      %v1394 = vld [vmem:[%s1393] sm:$0xff]
      %1395 = vrot.lane.b32.xlu0 %v899, 60
      %v1396 = vpop.permute.xlu0 %1395
      %1397 = vrot.lane.b32.xlu0 %v900, 60
      %v1398 = vpop.permute.xlu0 %1397
      %1399 = vrot.lane.b32.xlu0 %v901, 60
      %v1400 = vpop.permute.xlu0 %1399
      %1401 = vrot.lane.b32.xlu0 %v902, 60
      %v1402 = vpop.permute.xlu0 %1401
      %vm1403 = vcmask 490496
      %v1404 = vsel %vm1403, %v1396, %v1398
      %v1405 = vsel %vm1403, %v1398, %v1400
      %v1406 = vsel %vm1403, %v1400, %v1402
      %v1411 = vsel %vm925, %v1394, 0
      %1413 = vmatprep.subr.mxu0 %v1405
      %1414 = vmatpush1.msra.mxu0 %v1404
      %1415 = vmatprep.subr.mxu0 0.0
      %1416 = vmatpush1.msra.mxu0 0.0
      %1417 = vmatprep.subr.mxu0 0.0
      %1418 = vmatpush1.msra.mxu0 0.0
      %1419 = vmatprep.subr.mxu0 0.0
      %1420 = vmatpush1.msra.mxu0 0.0
      %1421 = vmatprep.subr.mxu0 0.0
      %1422 = vmatpush1.msra.mxu0 0.0
      %1423 = vmatprep.subr.mxu0 0.0
      %1424 = vmatpush1.msra.mxu0 0.0
      %1425 = vmatprep.subr.mxu0 0.0
      %1426 = vmatpush1.msra.mxu0 0.0
      %1427 = vmatprep.subr.mxu0 0.0
      %1428 = vmatpush1.msra.mxu0 0.0
      %1429 = vmatprep.subr.mxu0 0.0
      %1430 = vmatpush1.msra.mxu0 0.0
      %1431 = vmatprep.subr.mxu0 0.0
      %1432 = vmatpush1.msra.mxu0 0.0
      %1433 = vmatprep.subr.mxu0 0.0
      %1434 = vmatpush1.msra.mxu0 0.0
      %1435 = vmatprep.subr.mxu0 0.0
      %1436 = vmatpush1.msra.mxu0 0.0
      %1437 = vmatprep.subr.mxu0 0.0
      %1438 = vmatpush1.msra.mxu0 0.0
      %1439 = vmatprep.subr.mxu0 0.0
      %1440 = vmatpush1.msra.mxu0 0.0
      %1441 = vmatprep.subr.mxu0 0.0
      %1442 = vmatpush1.msra.mxu0 0.0
      %1443 = vmatprep.subr.mxu0 0.0
      %1444 = vmatpush1.msra.mxu0 0.0
      %1445 = vmatprep.subr.mxu0 0.0
      %1446 = vmatpush1.msra.mxu0 0.0
      %1447 = vmatprep.subr.mxu0 0.0
      %1448 = vmatpush1.msra.mxu0 0.0
      %1449 = vmatprep.subr.mxu0 0.0
      %1450 = vmatpush1.msra.mxu0 0.0
      %1451 = vmatprep.subr.mxu0 0.0
      %1452 = vmatpush1.msra.mxu0 0.0
      %1453 = vmatprep.subr.mxu0 0.0
      %1454 = vmatpush1.msra.mxu0 0.0
      %1455 = vmatprep.subr.mxu0 0.0
      %1456 = vmatpush1.msra.mxu0 0.0
      %1457 = vmatprep.subr.mxu0 0.0
      %1458 = vmatpush1.msra.mxu0 0.0
      %1459 = vmatprep.subr.mxu0 0.0
      %1460 = vmatpush1.msra.mxu0 0.0
      %1461 = vmatprep.subr.mxu0 0.0
      %1462 = vmatpush1.msra.mxu0 0.0
      %1463 = vmatprep.subr.mxu0 0.0
      %1464 = vmatpush1.msra.mxu0 0.0
      %1465 = vmatprep.subr.mxu0 0.0
      %1466 = vmatpush1.msra.mxu0 0.0
      %1467 = vmatprep.subr.mxu0 0.0
      %1468 = vmatpush1.msra.mxu0 0.0
      %1469 = vmatprep.subr.mxu0 0.0
      %1470 = vmatpush1.msra.mxu0 0.0
      %1471 = vmatprep.subr.mxu0 0.0
      %1472 = vmatpush1.msra.mxu0 0.0
      %1473 = vmatprep.subr.mxu0 0.0
      %1474 = vmatpush1.msra.mxu0 0.0
      %1475 = vmatprep.subr.mxu0 0.0
      %1476 = vmatpush1.msra.mxu0 0.0
      %1477 = vmatprep.mubr.f32.mxu0 0.0
      %1478 = vmatmul.mubr.f32.gmra.mrb[0].mxu0 %v1411
      %v1479 = vpop.f32.mrb[0].mxu0
      %v1480 = vadd.f32 0.0, %v1479
      %v1481 = vpop.f32.mrb[0].mxu0
      %v1482 = vadd.f32 0.0, %v1481
      %1483 = vdwg.mxu0
      %1484 = vmatprep.subr.mxu0 0.0
      %1485 = vmatpush1.msra.mxu0 %v1406
      %1486 = vmatprep.subr.mxu0 0.0
      %1487 = vmatpush1.msra.mxu0 0.0
      %1488 = vmatprep.subr.mxu0 0.0
      %1489 = vmatpush1.msra.mxu0 0.0
      %1490 = vmatprep.subr.mxu0 0.0
      %1491 = vmatpush1.msra.mxu0 0.0
      %1492 = vmatprep.subr.mxu0 0.0
      %1493 = vmatpush1.msra.mxu0 0.0
      %1494 = vmatprep.subr.mxu0 0.0
      %1495 = vmatpush1.msra.mxu0 0.0
      %1496 = vmatprep.subr.mxu0 0.0
      %1497 = vmatpush1.msra.mxu0 0.0
      %1498 = vmatprep.subr.mxu0 0.0
      %1499 = vmatpush1.msra.mxu0 0.0
      %1500 = vmatprep.subr.mxu0 0.0
      %1501 = vmatpush1.msra.mxu0 0.0
      %1502 = vmatprep.subr.mxu0 0.0
      %1503 = vmatpush1.msra.mxu0 0.0
      %1504 = vmatprep.subr.mxu0 0.0
      %1505 = vmatpush1.msra.mxu0 0.0
      %1506 = vmatprep.subr.mxu0 0.0
      %1507 = vmatpush1.msra.mxu0 0.0
      %1508 = vmatprep.subr.mxu0 0.0
      %1509 = vmatpush1.msra.mxu0 0.0
      %1510 = vmatprep.subr.mxu0 0.0
      %1511 = vmatpush1.msra.mxu0 0.0
      %1512 = vmatprep.subr.mxu0 0.0
      %1513 = vmatpush1.msra.mxu0 0.0
      %1514 = vmatprep.subr.mxu0 0.0
      %1515 = vmatpush1.msra.mxu0 0.0
      %1516 = vmatprep.subr.mxu0 0.0
      %1517 = vmatpush1.msra.mxu0 0.0
      %1518 = vmatprep.subr.mxu0 0.0
      %1519 = vmatpush1.msra.mxu0 0.0
      %1520 = vmatprep.subr.mxu0 0.0
      %1521 = vmatpush1.msra.mxu0 0.0
      %1522 = vmatprep.subr.mxu0 0.0
      %1523 = vmatpush1.msra.mxu0 0.0
      %1524 = vmatprep.subr.mxu0 0.0
      %1525 = vmatpush1.msra.mxu0 0.0
      %1526 = vmatprep.subr.mxu0 0.0
      %1527 = vmatpush1.msra.mxu0 0.0
      %1528 = vmatprep.subr.mxu0 0.0
      %1529 = vmatpush1.msra.mxu0 0.0
      %1530 = vmatprep.subr.mxu0 0.0
      %1531 = vmatpush1.msra.mxu0 0.0
      %1532 = vmatprep.subr.mxu0 0.0
      %1533 = vmatpush1.msra.mxu0 0.0
      %1534 = vmatprep.subr.mxu0 0.0
      %1535 = vmatpush1.msra.mxu0 0.0
      %1536 = vmatprep.subr.mxu0 0.0
      %1537 = vmatpush1.msra.mxu0 0.0
      %1538 = vmatprep.subr.mxu0 0.0
      %1539 = vmatpush1.msra.mxu0 0.0
      %1540 = vmatprep.subr.mxu0 0.0
      %1541 = vmatpush1.msra.mxu0 0.0
      %1542 = vmatprep.subr.mxu0 0.0
      %1543 = vmatpush1.msra.mxu0 0.0
      %1544 = vmatprep.subr.mxu0 0.0
      %1545 = vmatpush1.msra.mxu0 0.0
      %1546 = vmatprep.subr.mxu0 0.0
      %1547 = vmatpush1.msra.mxu0 0.0
      %1548 = vmatprep.mubr.f32.mxu0 0.0
      %1549 = vmatmul.mubr.f32.gmra.mrb[0].mxu0 %v1411
      %v1550 = vpop.f32.mrb[0].mxu0
      %v1551 = vadd.f32 0.0, %v1550
      %v1552 = vpop.f32.mrb[0].mxu0
      %1553 = vdwg.mxu0
      %v1554 = vadd.f32 %v1390, %v1480
      %v1555 = vadd.f32 %v1391, %v1482
      %v1556 = vadd.f32 %v1392, %v1551
      %s1557 = scalar_lea.vmem %s4, 32
      %v1558 = vld [vmem:[%s1557] sm:$0xff]
      %1559 = vrot.lane.b32.xlu0 %v899, 59
      %v1560 = vpop.permute.xlu0 %1559
      %1561 = vrot.lane.b32.xlu0 %v900, 59
      %v1562 = vpop.permute.xlu0 %1561
      %1563 = vrot.lane.b32.xlu0 %v901, 59
      %v1564 = vpop.permute.xlu0 %1563
      %1565 = vrot.lane.b32.xlu0 %v902, 59
      %v1566 = vpop.permute.xlu0 %1565
      %vm1567 = vcmask 482304
      %v1568 = vsel %vm1567, %v1560, %v1562
      %v1569 = vsel %vm1567, %v1562, %v1564
      %v1570 = vsel %vm1567, %v1564, %v1566
      %v1575 = vsel %vm925, %v1558, 0
      %1577 = vmatprep.subr.mxu0 %v1569
      %1578 = vmatpush1.msra.mxu0 %v1568
      %1579 = vmatprep.subr.mxu0 0.0
      %1580 = vmatpush1.msra.mxu0 0.0
      %1581 = vmatprep.subr.mxu0 0.0
      %1582 = vmatpush1.msra.mxu0 0.0
      %1583 = vmatprep.subr.mxu0 0.0
      %1584 = vmatpush1.msra.mxu0 0.0
      %1585 = vmatprep.subr.mxu0 0.0
      %1586 = vmatpush1.msra.mxu0 0.0
      %1587 = vmatprep.subr.mxu0 0.0
      %1588 = vmatpush1.msra.mxu0 0.0
      %1589 = vmatprep.subr.mxu0 0.0
      %1590 = vmatpush1.msra.mxu0 0.0
      %1591 = vmatprep.subr.mxu0 0.0
      %1592 = vmatpush1.msra.mxu0 0.0
      %1593 = vmatprep.subr.mxu0 0.0
      %1594 = vmatpush1.msra.mxu0 0.0
      %1595 = vmatprep.subr.mxu0 0.0
      %1596 = vmatpush1.msra.mxu0 0.0
      %1597 = vmatprep.subr.mxu0 0.0
      %1598 = vmatpush1.msra.mxu0 0.0
      %1599 = vmatprep.subr.mxu0 0.0
      %1600 = vmatpush1.msra.mxu0 0.0
      %1601 = vmatprep.subr.mxu0 0.0
      %1602 = vmatpush1.msra.mxu0 0.0
      %1603 = vmatprep.subr.mxu0 0.0
      %1604 = vmatpush1.msra.mxu0 0.0
      %1605 = vmatprep.subr.mxu0 0.0
      %1606 = vmatpush1.msra.mxu0 0.0
      %1607 = vmatprep.subr.mxu0 0.0
      %1608 = vmatpush1.msra.mxu0 0.0
      %1609 = vmatprep.subr.mxu0 0.0
      %1610 = vmatpush1.msra.mxu0 0.0
      %1611 = vmatprep.subr.mxu0 0.0
      %1612 = vmatpush1.msra.mxu0 0.0
      %1613 = vmatprep.subr.mxu0 0.0
      %1614 = vmatpush1.msra.mxu0 0.0
      %1615 = vmatprep.subr.mxu0 0.0
      %1616 = vmatpush1.msra.mxu0 0.0
      %1617 = vmatprep.subr.mxu0 0.0
      %1618 = vmatpush1.msra.mxu0 0.0
      %1619 = vmatprep.subr.mxu0 0.0
      %1620 = vmatpush1.msra.mxu0 0.0
      %1621 = vmatprep.subr.mxu0 0.0
      %1622 = vmatpush1.msra.mxu0 0.0
      %1623 = vmatprep.subr.mxu0 0.0
      %1624 = vmatpush1.msra.mxu0 0.0
      %1625 = vmatprep.subr.mxu0 0.0
      %1626 = vmatpush1.msra.mxu0 0.0
      %1627 = vmatprep.subr.mxu0 0.0
      %1628 = vmatpush1.msra.mxu0 0.0
      %1629 = vmatprep.subr.mxu0 0.0
      %1630 = vmatpush1.msra.mxu0 0.0
      %1631 = vmatprep.subr.mxu0 0.0
      %1632 = vmatpush1.msra.mxu0 0.0
      %1633 = vmatprep.subr.mxu0 0.0
      %1634 = vmatpush1.msra.mxu0 0.0
      %1635 = vmatprep.subr.mxu0 0.0
      %1636 = vmatpush1.msra.mxu0 0.0
      %1637 = vmatprep.subr.mxu0 0.0
      %1638 = vmatpush1.msra.mxu0 0.0
      %1639 = vmatprep.subr.mxu0 0.0
      %1640 = vmatpush1.msra.mxu0 0.0
      %1641 = vmatprep.mubr.f32.mxu0 0.0
      %1642 = vmatmul.mubr.f32.gmra.mrb[0].mxu0 %v1575
      %v1643 = vpop.f32.mrb[0].mxu0
      %v1644 = vadd.f32 0.0, %v1643
      %v1645 = vpop.f32.mrb[0].mxu0
      %v1646 = vadd.f32 0.0, %v1645
      %1647 = vdwg.mxu0
      %1648 = vmatprep.subr.mxu0 0.0
      %1649 = vmatpush1.msra.mxu0 %v1570
      %1650 = vmatprep.subr.mxu0 0.0
      %1651 = vmatpush1.msra.mxu0 0.0
      %1652 = vmatprep.subr.mxu0 0.0
      %1653 = vmatpush1.msra.mxu0 0.0
      %1654 = vmatprep.subr.mxu0 0.0
      %1655 = vmatpush1.msra.mxu0 0.0
      %1656 = vmatprep.subr.mxu0 0.0
      %1657 = vmatpush1.msra.mxu0 0.0
      %1658 = vmatprep.subr.mxu0 0.0
      %1659 = vmatpush1.msra.mxu0 0.0
      %1660 = vmatprep.subr.mxu0 0.0
      %1661 = vmatpush1.msra.mxu0 0.0
      %1662 = vmatprep.subr.mxu0 0.0
      %1663 = vmatpush1.msra.mxu0 0.0
      %1664 = vmatprep.subr.mxu0 0.0
      %1665 = vmatpush1.msra.mxu0 0.0
      %1666 = vmatprep.subr.mxu0 0.0
      %1667 = vmatpush1.msra.mxu0 0.0
      %1668 = vmatprep.subr.mxu0 0.0
      %1669 = vmatpush1.msra.mxu0 0.0
      %1670 = vmatprep.subr.mxu0 0.0
      %1671 = vmatpush1.msra.mxu0 0.0
      %1672 = vmatprep.subr.mxu0 0.0
      %1673 = vmatpush1.msra.mxu0 0.0
      %1674 = vmatprep.subr.mxu0 0.0
      %1675 = vmatpush1.msra.mxu0 0.0
      %1676 = vmatprep.subr.mxu0 0.0
      %1677 = vmatpush1.msra.mxu0 0.0
      %1678 = vmatprep.subr.mxu0 0.0
      %1679 = vmatpush1.msra.mxu0 0.0
      %1680 = vmatprep.subr.mxu0 0.0
      %1681 = vmatpush1.msra.mxu0 0.0
      %1682 = vmatprep.subr.mxu0 0.0
      %1683 = vmatpush1.msra.mxu0 0.0
      %1684 = vmatprep.subr.mxu0 0.0
      %1685 = vmatpush1.msra.mxu0 0.0
      %1686 = vmatprep.subr.mxu0 0.0
      %1687 = vmatpush1.msra.mxu0 0.0
      %1688 = vmatprep.subr.mxu0 0.0
      %1689 = vmatpush1.msra.mxu0 0.0
      %1690 = vmatprep.subr.mxu0 0.0
      %1691 = vmatpush1.msra.mxu0 0.0
      %1692 = vmatprep.subr.mxu0 0.0
      %1693 = vmatpush1.msra.mxu0 0.0
      %1694 = vmatprep.subr.mxu0 0.0
      %1695 = vmatpush1.msra.mxu0 0.0
      %1696 = vmatprep.subr.mxu0 0.0
      %1697 = vmatpush1.msra.mxu0 0.0
      %1698 = vmatprep.subr.mxu0 0.0
      %1699 = vmatpush1.msra.mxu0 0.0
      %1700 = vmatprep.subr.mxu0 0.0
      %1701 = vmatpush1.msra.mxu0 0.0
      %1702 = vmatprep.subr.mxu0 0.0
      %1703 = vmatpush1.msra.mxu0 0.0
      %1704 = vmatprep.subr.mxu0 0.0
      %1705 = vmatpush1.msra.mxu0 0.0
      %1706 = vmatprep.subr.mxu0 0.0
      %1707 = vmatpush1.msra.mxu0 0.0
      %1708 = vmatprep.subr.mxu0 0.0
      %1709 = vmatpush1.msra.mxu0 0.0
      %1710 = vmatprep.subr.mxu0 0.0
      %1711 = vmatpush1.msra.mxu0 0.0
      %1712 = vmatprep.mubr.f32.mxu0 0.0
      %1713 = vmatmul.mubr.f32.gmra.mrb[0].mxu0 %v1575
      %v1714 = vpop.f32.mrb[0].mxu0
      %v1715 = vadd.f32 0.0, %v1714
      %v1716 = vpop.f32.mrb[0].mxu0
      %1717 = vdwg.mxu0
      %v1718 = vadd.f32 %v1554, %v1644
      %v1719 = vadd.f32 %v1555, %v1646
      %v1720 = vadd.f32 %v1556, %v1715
      %s1721 = scalar_lea.vmem %s4, 40
      %v1722 = vld [vmem:[%s1721] sm:$0xff]
      %1723 = vrot.lane.b32.xlu0 %v899, 58
      %v1724 = vpop.permute.xlu0 %1723
      %1725 = vrot.lane.b32.xlu0 %v900, 58
      %v1726 = vpop.permute.xlu0 %1725
      %1727 = vrot.lane.b32.xlu0 %v901, 58
      %v1728 = vpop.permute.xlu0 %1727
      %1729 = vrot.lane.b32.xlu0 %v902, 58
      %v1730 = vpop.permute.xlu0 %1729
      %vm1731 = vcmask 474112
      %v1732 = vsel %vm1731, %v1724, %v1726
      %v1733 = vsel %vm1731, %v1726, %v1728
      %v1734 = vsel %vm1731, %v1728, %v1730
      %v1739 = vsel %vm925, %v1722, 0
      %1741 = vmatprep.subr.mxu0 %v1733
      %1742 = vmatpush1.msra.mxu0 %v1732
      %1743 = vmatprep.subr.mxu0 0.0
      %1744 = vmatpush1.msra.mxu0 0.0
      %1745 = vmatprep.subr.mxu0 0.0
      %1746 = vmatpush1.msra.mxu0 0.0
      %1747 = vmatprep.subr.mxu0 0.0
      %1748 = vmatpush1.msra.mxu0 0.0
      %1749 = vmatprep.subr.mxu0 0.0
      %1750 = vmatpush1.msra.mxu0 0.0
      %1751 = vmatprep.subr.mxu0 0.0
      %1752 = vmatpush1.msra.mxu0 0.0
      %1753 = vmatprep.subr.mxu0 0.0
      %1754 = vmatpush1.msra.mxu0 0.0
      %1755 = vmatprep.subr.mxu0 0.0
      %1756 = vmatpush1.msra.mxu0 0.0
      %1757 = vmatprep.subr.mxu0 0.0
      %1758 = vmatpush1.msra.mxu0 0.0
      %1759 = vmatprep.subr.mxu0 0.0
      %1760 = vmatpush1.msra.mxu0 0.0
      %1761 = vmatprep.subr.mxu0 0.0
      %1762 = vmatpush1.msra.mxu0 0.0
      %1763 = vmatprep.subr.mxu0 0.0
      %1764 = vmatpush1.msra.mxu0 0.0
      %1765 = vmatprep.subr.mxu0 0.0
      %1766 = vmatpush1.msra.mxu0 0.0
      %1767 = vmatprep.subr.mxu0 0.0
      %1768 = vmatpush1.msra.mxu0 0.0
      %1769 = vmatprep.subr.mxu0 0.0
      %1770 = vmatpush1.msra.mxu0 0.0
      %1771 = vmatprep.subr.mxu0 0.0
      %1772 = vmatpush1.msra.mxu0 0.0
      %1773 = vmatprep.subr.mxu0 0.0
      %1774 = vmatpush1.msra.mxu0 0.0
      %1775 = vmatprep.subr.mxu0 0.0
      %1776 = vmatpush1.msra.mxu0 0.0
      %1777 = vmatprep.subr.mxu0 0.0
      %1778 = vmatpush1.msra.mxu0 0.0
      %1779 = vmatprep.subr.mxu0 0.0
      %1780 = vmatpush1.msra.mxu0 0.0
      %1781 = vmatprep.subr.mxu0 0.0
      %1782 = vmatpush1.msra.mxu0 0.0
      %1783 = vmatprep.subr.mxu0 0.0
      %1784 = vmatpush1.msra.mxu0 0.0
      %1785 = vmatprep.subr.mxu0 0.0
      %1786 = vmatpush1.msra.mxu0 0.0
      %1787 = vmatprep.subr.mxu0 0.0
      %1788 = vmatpush1.msra.mxu0 0.0
      %1789 = vmatprep.subr.mxu0 0.0
      %1790 = vmatpush1.msra.mxu0 0.0
      %1791 = vmatprep.subr.mxu0 0.0
      %1792 = vmatpush1.msra.mxu0 0.0
      %1793 = vmatprep.subr.mxu0 0.0
      %1794 = vmatpush1.msra.mxu0 0.0
      %1795 = vmatprep.subr.mxu0 0.0
      %1796 = vmatpush1.msra.mxu0 0.0
      %1797 = vmatprep.subr.mxu0 0.0
      %1798 = vmatpush1.msra.mxu0 0.0
      %1799 = vmatprep.subr.mxu0 0.0
      %1800 = vmatpush1.msra.mxu0 0.0
      %1801 = vmatprep.subr.mxu0 0.0
      %1802 = vmatpush1.msra.mxu0 0.0
      %1803 = vmatprep.subr.mxu0 0.0
      %1804 = vmatpush1.msra.mxu0 0.0
      %1805 = vmatprep.mubr.f32.mxu0 0.0
      %1806 = vmatmul.mubr.f32.gmra.mrb[0].mxu0 %v1739
      %v1807 = vpop.f32.mrb[0].mxu0
      %v1808 = vadd.f32 0.0, %v1807
      %v1809 = vpop.f32.mrb[0].mxu0
      %v1810 = vadd.f32 0.0, %v1809
      %1811 = vdwg.mxu0
      %1812 = vmatprep.subr.mxu0 0.0
      %1813 = vmatpush1.msra.mxu0 %v1734
      %1814 = vmatprep.subr.mxu0 0.0
      %1815 = vmatpush1.msra.mxu0 0.0
      %1816 = vmatprep.subr.mxu0 0.0
      %1817 = vmatpush1.msra.mxu0 0.0
      %1818 = vmatprep.subr.mxu0 0.0
      %1819 = vmatpush1.msra.mxu0 0.0
      %1820 = vmatprep.subr.mxu0 0.0
      %1821 = vmatpush1.msra.mxu0 0.0
      %1822 = vmatprep.subr.mxu0 0.0
      %1823 = vmatpush1.msra.mxu0 0.0
      %1824 = vmatprep.subr.mxu0 0.0
      %1825 = vmatpush1.msra.mxu0 0.0
      %1826 = vmatprep.subr.mxu0 0.0
      %1827 = vmatpush1.msra.mxu0 0.0
      %1828 = vmatprep.subr.mxu0 0.0
      %1829 = vmatpush1.msra.mxu0 0.0
      %1830 = vmatprep.subr.mxu0 0.0
      %1831 = vmatpush1.msra.mxu0 0.0
      %1832 = vmatprep.subr.mxu0 0.0
      %1833 = vmatpush1.msra.mxu0 0.0
      %1834 = vmatprep.subr.mxu0 0.0
      %1835 = vmatpush1.msra.mxu0 0.0
      %1836 = vmatprep.subr.mxu0 0.0
      %1837 = vmatpush1.msra.mxu0 0.0
      %1838 = vmatprep.subr.mxu0 0.0
      %1839 = vmatpush1.msra.mxu0 0.0
      %1840 = vmatprep.subr.mxu0 0.0
      %1841 = vmatpush1.msra.mxu0 0.0
      %1842 = vmatprep.subr.mxu0 0.0
      %1843 = vmatpush1.msra.mxu0 0.0
      %1844 = vmatprep.subr.mxu0 0.0
      %1845 = vmatpush1.msra.mxu0 0.0
      %1846 = vmatprep.subr.mxu0 0.0
      %1847 = vmatpush1.msra.mxu0 0.0
      %1848 = vmatprep.subr.mxu0 0.0
      %1849 = vmatpush1.msra.mxu0 0.0
      %1850 = vmatprep.subr.mxu0 0.0
      %1851 = vmatpush1.msra.mxu0 0.0
      %1852 = vmatprep.subr.mxu0 0.0
      %1853 = vmatpush1.msra.mxu0 0.0
      %1854 = vmatprep.subr.mxu0 0.0
      %1855 = vmatpush1.msra.mxu0 0.0
      %1856 = vmatprep.subr.mxu0 0.0
      %1857 = vmatpush1.msra.mxu0 0.0
      %1858 = vmatprep.subr.mxu0 0.0
      %1859 = vmatpush1.msra.mxu0 0.0
      %1860 = vmatprep.subr.mxu0 0.0
      %1861 = vmatpush1.msra.mxu0 0.0
      %1862 = vmatprep.subr.mxu0 0.0
      %1863 = vmatpush1.msra.mxu0 0.0
      %1864 = vmatprep.subr.mxu0 0.0
      %1865 = vmatpush1.msra.mxu0 0.0
      %1866 = vmatprep.subr.mxu0 0.0
      %1867 = vmatpush1.msra.mxu0 0.0
      %1868 = vmatprep.subr.mxu0 0.0
      %1869 = vmatpush1.msra.mxu0 0.0
      %1870 = vmatprep.subr.mxu0 0.0
      %1871 = vmatpush1.msra.mxu0 0.0
      %1872 = vmatprep.subr.mxu0 0.0
      %1873 = vmatpush1.msra.mxu0 0.0
      %1874 = vmatprep.subr.mxu0 0.0
      %1875 = vmatpush1.msra.mxu0 0.0
      %1876 = vmatprep.mubr.f32.mxu0 0.0
      %1877 = vmatmul.mubr.f32.gmra.mrb[0].mxu0 %v1739
      %v1878 = vpop.f32.mrb[0].mxu0
      %v1879 = vadd.f32 0.0, %v1878
      %v1880 = vpop.f32.mrb[0].mxu0
      %1881 = vdwg.mxu0
      %v1882 = vadd.f32 %v1718, %v1808
      %v1883 = vadd.f32 %v1719, %v1810
      %v1884 = vadd.f32 %v1720, %v1879
      %s1885 = scalar_lea.vmem %s4, 48
      %v1886 = vld [vmem:[%s1885] sm:$0xff]
      %1887 = vrot.lane.b32.xlu0 %v899, 38
      %v1888 = vpop.permute.xlu0 %1887
      %1889 = vrot.lane.b32.xlu0 %v900, 38
      %v1890 = vpop.permute.xlu0 %1889
      %1891 = vrot.lane.b32.xlu0 %v901, 38
      %v1892 = vpop.permute.xlu0 %1891
      %1893 = vrot.lane.b32.xlu0 %v902, 38
      %v1894 = vpop.permute.xlu0 %1893
      %vm1895 = vcmask 310272
      %v1896 = vsel %vm1895, %v1888, %v1890
      %v1897 = vsel %vm1895, %v1890, %v1892
      %v1898 = vsel %vm1895, %v1892, %v1894
      %v1903 = vsel %vm925, %v1886, 0
      %1905 = vmatprep.subr.mxu0 %v1897
      %1906 = vmatpush1.msra.mxu0 %v1896
      %1907 = vmatprep.subr.mxu0 0.0
      %1908 = vmatpush1.msra.mxu0 0.0
      %1909 = vmatprep.subr.mxu0 0.0
      %1910 = vmatpush1.msra.mxu0 0.0
      %1911 = vmatprep.subr.mxu0 0.0
      %1912 = vmatpush1.msra.mxu0 0.0
      %1913 = vmatprep.subr.mxu0 0.0
      %1914 = vmatpush1.msra.mxu0 0.0
      %1915 = vmatprep.subr.mxu0 0.0
      %1916 = vmatpush1.msra.mxu0 0.0
      %1917 = vmatprep.subr.mxu0 0.0
      %1918 = vmatpush1.msra.mxu0 0.0
      %1919 = vmatprep.subr.mxu0 0.0
      %1920 = vmatpush1.msra.mxu0 0.0
      %1921 = vmatprep.subr.mxu0 0.0
      %1922 = vmatpush1.msra.mxu0 0.0
      %1923 = vmatprep.subr.mxu0 0.0
      %1924 = vmatpush1.msra.mxu0 0.0
      %1925 = vmatprep.subr.mxu0 0.0
      %1926 = vmatpush1.msra.mxu0 0.0
      %1927 = vmatprep.subr.mxu0 0.0
      %1928 = vmatpush1.msra.mxu0 0.0
      %1929 = vmatprep.subr.mxu0 0.0
      %1930 = vmatpush1.msra.mxu0 0.0
      %1931 = vmatprep.subr.mxu0 0.0
      %1932 = vmatpush1.msra.mxu0 0.0
      %1933 = vmatprep.subr.mxu0 0.0
      %1934 = vmatpush1.msra.mxu0 0.0
      %1935 = vmatprep.subr.mxu0 0.0
      %1936 = vmatpush1.msra.mxu0 0.0
      %1937 = vmatprep.subr.mxu0 0.0
      %1938 = vmatpush1.msra.mxu0 0.0
      %1939 = vmatprep.subr.mxu0 0.0
      %1940 = vmatpush1.msra.mxu0 0.0
      %1941 = vmatprep.subr.mxu0 0.0
      %1942 = vmatpush1.msra.mxu0 0.0
      %1943 = vmatprep.subr.mxu0 0.0
      %1944 = vmatpush1.msra.mxu0 0.0
      %1945 = vmatprep.subr.mxu0 0.0
      %1946 = vmatpush1.msra.mxu0 0.0
      %1947 = vmatprep.subr.mxu0 0.0
      %1948 = vmatpush1.msra.mxu0 0.0
      %1949 = vmatprep.subr.mxu0 0.0
      %1950 = vmatpush1.msra.mxu0 0.0
      %1951 = vmatprep.subr.mxu0 0.0
      %1952 = vmatpush1.msra.mxu0 0.0
      %1953 = vmatprep.subr.mxu0 0.0
      %1954 = vmatpush1.msra.mxu0 0.0
      %1955 = vmatprep.subr.mxu0 0.0
      %1956 = vmatpush1.msra.mxu0 0.0
      %1957 = vmatprep.subr.mxu0 0.0
      %1958 = vmatpush1.msra.mxu0 0.0
      %1959 = vmatprep.subr.mxu0 0.0
      %1960 = vmatpush1.msra.mxu0 0.0
      %1961 = vmatprep.subr.mxu0 0.0
      %1962 = vmatpush1.msra.mxu0 0.0
      %1963 = vmatprep.subr.mxu0 0.0
      %1964 = vmatpush1.msra.mxu0 0.0
      %1965 = vmatprep.subr.mxu0 0.0
      %1966 = vmatpush1.msra.mxu0 0.0
      %1967 = vmatprep.subr.mxu0 0.0
      %1968 = vmatpush1.msra.mxu0 0.0
      %1969 = vmatprep.mubr.f32.mxu0 0.0
      %1970 = vmatmul.mubr.f32.gmra.mrb[0].mxu0 %v1903
      %v1971 = vpop.f32.mrb[0].mxu0
      %v1972 = vadd.f32 0.0, %v1971
      %v1973 = vpop.f32.mrb[0].mxu0
      %v1974 = vadd.f32 0.0, %v1973
      %1975 = vdwg.mxu0
      %1976 = vmatprep.subr.mxu0 0.0
      %1977 = vmatpush1.msra.mxu0 %v1898
      %1978 = vmatprep.subr.mxu0 0.0
      %1979 = vmatpush1.msra.mxu0 0.0
      %1980 = vmatprep.subr.mxu0 0.0
      %1981 = vmatpush1.msra.mxu0 0.0
      %1982 = vmatprep.subr.mxu0 0.0
      %1983 = vmatpush1.msra.mxu0 0.0
      %1984 = vmatprep.subr.mxu0 0.0
      %1985 = vmatpush1.msra.mxu0 0.0
      %1986 = vmatprep.subr.mxu0 0.0
      %1987 = vmatpush1.msra.mxu0 0.0
      %1988 = vmatprep.subr.mxu0 0.0
      %1989 = vmatpush1.msra.mxu0 0.0
      %1990 = vmatprep.subr.mxu0 0.0
      %1991 = vmatpush1.msra.mxu0 0.0
      %1992 = vmatprep.subr.mxu0 0.0
      %1993 = vmatpush1.msra.mxu0 0.0
      %1994 = vmatprep.subr.mxu0 0.0
      %1995 = vmatpush1.msra.mxu0 0.0
      %1996 = vmatprep.subr.mxu0 0.0
      %1997 = vmatpush1.msra.mxu0 0.0
      %1998 = vmatprep.subr.mxu0 0.0
      %1999 = vmatpush1.msra.mxu0 0.0
      %2000 = vmatprep.subr.mxu0 0.0
      %2001 = vmatpush1.msra.mxu0 0.0
      %2002 = vmatprep.subr.mxu0 0.0
      %2003 = vmatpush1.msra.mxu0 0.0
      %2004 = vmatprep.subr.mxu0 0.0
      %2005 = vmatpush1.msra.mxu0 0.0
      %2006 = vmatprep.subr.mxu0 0.0
      %2007 = vmatpush1.msra.mxu0 0.0
      %2008 = vmatprep.subr.mxu0 0.0
      %2009 = vmatpush1.msra.mxu0 0.0
      %2010 = vmatprep.subr.mxu0 0.0
      %2011 = vmatpush1.msra.mxu0 0.0
      %2012 = vmatprep.subr.mxu0 0.0
      %2013 = vmatpush1.msra.mxu0 0.0
      %2014 = vmatprep.subr.mxu0 0.0
      %2015 = vmatpush1.msra.mxu0 0.0
      %2016 = vmatprep.subr.mxu0 0.0
      %2017 = vmatpush1.msra.mxu0 0.0
      %2018 = vmatprep.subr.mxu0 0.0
      %2019 = vmatpush1.msra.mxu0 0.0
      %2020 = vmatprep.subr.mxu0 0.0
      %2021 = vmatpush1.msra.mxu0 0.0
      %2022 = vmatprep.subr.mxu0 0.0
      %2023 = vmatpush1.msra.mxu0 0.0
      %2024 = vmatprep.subr.mxu0 0.0
      %2025 = vmatpush1.msra.mxu0 0.0
      %2026 = vmatprep.subr.mxu0 0.0
      %2027 = vmatpush1.msra.mxu0 0.0
      %2028 = vmatprep.subr.mxu0 0.0
      %2029 = vmatpush1.msra.mxu0 0.0
      %2030 = vmatprep.subr.mxu0 0.0
      %2031 = vmatpush1.msra.mxu0 0.0
      %2032 = vmatprep.subr.mxu0 0.0
      %2033 = vmatpush1.msra.mxu0 0.0
      %2034 = vmatprep.subr.mxu0 0.0
      %2035 = vmatpush1.msra.mxu0 0.0
      %2036 = vmatprep.subr.mxu0 0.0
      %2037 = vmatpush1.msra.mxu0 0.0
      %2038 = vmatprep.subr.mxu0 0.0
      %2039 = vmatpush1.msra.mxu0 0.0
      %2040 = vmatprep.mubr.f32.mxu0 0.0
      %2041 = vmatmul.mubr.f32.gmra.mrb[0].mxu0 %v1903
      %v2042 = vpop.f32.mrb[0].mxu0
      %v2043 = vadd.f32 0.0, %v2042
      %v2044 = vpop.f32.mrb[0].mxu0
      %2045 = vdwg.mxu0
      %v2046 = vadd.f32 %v1882, %v1972
      %v2047 = vadd.f32 %v1883, %v1974
      %v2048 = vadd.f32 %v1884, %v2043
      %s2049 = scalar_lea.vmem %s4, 56
      %v2050 = vld [vmem:[%s2049] sm:$0xff]
      %2051 = vrot.lane.b32.xlu0 %v899, 37
      %v2052 = vpop.permute.xlu0 %2051
      %2053 = vrot.lane.b32.xlu0 %v900, 37
      %v2054 = vpop.permute.xlu0 %2053
      %2055 = vrot.lane.b32.xlu0 %v901, 37
      %v2056 = vpop.permute.xlu0 %2055
      %2057 = vrot.lane.b32.xlu0 %v902, 37
      %v2058 = vpop.permute.xlu0 %2057
      %v2059 = vsel %vm897, %v2052, %v2054
      %v2060 = vsel %vm897, %v2054, %v2056
      %v2061 = vsel %vm897, %v2056, %v2058
      %v2066 = vsel %vm925, %v2050, 0
      %2068 = vmatprep.subr.mxu0 %v2060
      %2069 = vmatpush1.msra.mxu0 %v2059
      %2070 = vmatprep.subr.mxu0 0.0
      %2071 = vmatpush1.msra.mxu0 0.0
      %2072 = vmatprep.subr.mxu0 0.0
      %2073 = vmatpush1.msra.mxu0 0.0
      %2074 = vmatprep.subr.mxu0 0.0
      %2075 = vmatpush1.msra.mxu0 0.0
      %2076 = vmatprep.subr.mxu0 0.0
      %2077 = vmatpush1.msra.mxu0 0.0
      %2078 = vmatprep.subr.mxu0 0.0
      %2079 = vmatpush1.msra.mxu0 0.0
      %2080 = vmatprep.subr.mxu0 0.0
      %2081 = vmatpush1.msra.mxu0 0.0
      %2082 = vmatprep.subr.mxu0 0.0
      %2083 = vmatpush1.msra.mxu0 0.0
      %2084 = vmatprep.subr.mxu0 0.0
      %2085 = vmatpush1.msra.mxu0 0.0
      %2086 = vmatprep.subr.mxu0 0.0
      %2087 = vmatpush1.msra.mxu0 0.0
      %2088 = vmatprep.subr.mxu0 0.0
      %2089 = vmatpush1.msra.mxu0 0.0
      %2090 = vmatprep.subr.mxu0 0.0
      %2091 = vmatpush1.msra.mxu0 0.0
      %2092 = vmatprep.subr.mxu0 0.0
      %2093 = vmatpush1.msra.mxu0 0.0
      %2094 = vmatprep.subr.mxu0 0.0
      %2095 = vmatpush1.msra.mxu0 0.0
      %2096 = vmatprep.subr.mxu0 0.0
      %2097 = vmatpush1.msra.mxu0 0.0
      %2098 = vmatprep.subr.mxu0 0.0
      %2099 = vmatpush1.msra.mxu0 0.0
      %2100 = vmatprep.subr.mxu0 0.0
      %2101 = vmatpush1.msra.mxu0 0.0
      %2102 = vmatprep.subr.mxu0 0.0
      %2103 = vmatpush1.msra.mxu0 0.0
      %2104 = vmatprep.subr.mxu0 0.0
      %2105 = vmatpush1.msra.mxu0 0.0
      %2106 = vmatprep.subr.mxu0 0.0
      %2107 = vmatpush1.msra.mxu0 0.0
      %2108 = vmatprep.subr.mxu0 0.0
      %2109 = vmatpush1.msra.mxu0 0.0
      %2110 = vmatprep.subr.mxu0 0.0
      %2111 = vmatpush1.msra.mxu0 0.0
      %2112 = vmatprep.subr.mxu0 0.0
      %2113 = vmatpush1.msra.mxu0 0.0
      %2114 = vmatprep.subr.mxu0 0.0
      %2115 = vmatpush1.msra.mxu0 0.0
      %2116 = vmatprep.subr.mxu0 0.0
      %2117 = vmatpush1.msra.mxu0 0.0
      %2118 = vmatprep.subr.mxu0 0.0
      %2119 = vmatpush1.msra.mxu0 0.0
      %2120 = vmatprep.subr.mxu0 0.0
      %2121 = vmatpush1.msra.mxu0 0.0
      %2122 = vmatprep.subr.mxu0 0.0
      %2123 = vmatpush1.msra.mxu0 0.0
      %2124 = vmatprep.subr.mxu0 0.0
      %2125 = vmatpush1.msra.mxu0 0.0
      %2126 = vmatprep.subr.mxu0 0.0
      %2127 = vmatpush1.msra.mxu0 0.0
      %2128 = vmatprep.subr.mxu0 0.0
      %2129 = vmatpush1.msra.mxu0 0.0
      %2130 = vmatprep.subr.mxu0 0.0
      %2131 = vmatpush1.msra.mxu0 0.0
      %2132 = vmatprep.mubr.f32.mxu0 0.0
      %2133 = vmatmul.mubr.f32.gmra.mrb[0].mxu0 %v2066
      %v2134 = vpop.f32.mrb[0].mxu0
      %v2135 = vadd.f32 0.0, %v2134
      %v2136 = vpop.f32.mrb[0].mxu0
      %v2137 = vadd.f32 0.0, %v2136
      %2138 = vdwg.mxu0
      %2139 = vmatprep.subr.mxu0 0.0
      %2140 = vmatpush1.msra.mxu0 %v2061
      %2141 = vmatprep.subr.mxu0 0.0
      %2142 = vmatpush1.msra.mxu0 0.0
      %2143 = vmatprep.subr.mxu0 0.0
      %2144 = vmatpush1.msra.mxu0 0.0
      %2145 = vmatprep.subr.mxu0 0.0
      %2146 = vmatpush1.msra.mxu0 0.0
      %2147 = vmatprep.subr.mxu0 0.0
      %2148 = vmatpush1.msra.mxu0 0.0
      %2149 = vmatprep.subr.mxu0 0.0
      %2150 = vmatpush1.msra.mxu0 0.0
      %2151 = vmatprep.subr.mxu0 0.0
      %2152 = vmatpush1.msra.mxu0 0.0
      %2153 = vmatprep.subr.mxu0 0.0
      %2154 = vmatpush1.msra.mxu0 0.0
      %2155 = vmatprep.subr.mxu0 0.0
      %2156 = vmatpush1.msra.mxu0 0.0
      %2157 = vmatprep.subr.mxu0 0.0
      %2158 = vmatpush1.msra.mxu0 0.0
      %2159 = vmatprep.subr.mxu0 0.0
      %2160 = vmatpush1.msra.mxu0 0.0
      %2161 = vmatprep.subr.mxu0 0.0
      %2162 = vmatpush1.msra.mxu0 0.0
      %2163 = vmatprep.subr.mxu0 0.0
      %2164 = vmatpush1.msra.mxu0 0.0
      %2165 = vmatprep.subr.mxu0 0.0
      %2166 = vmatpush1.msra.mxu0 0.0
      %2167 = vmatprep.subr.mxu0 0.0
      %2168 = vmatpush1.msra.mxu0 0.0
      %2169 = vmatprep.subr.mxu0 0.0
      %2170 = vmatpush1.msra.mxu0 0.0
      %2171 = vmatprep.subr.mxu0 0.0
      %2172 = vmatpush1.msra.mxu0 0.0
      %2173 = vmatprep.subr.mxu0 0.0
      %2174 = vmatpush1.msra.mxu0 0.0
      %2175 = vmatprep.subr.mxu0 0.0
      %2176 = vmatpush1.msra.mxu0 0.0
      %2177 = vmatprep.subr.mxu0 0.0
      %2178 = vmatpush1.msra.mxu0 0.0
      %2179 = vmatprep.subr.mxu0 0.0
      %2180 = vmatpush1.msra.mxu0 0.0
      %2181 = vmatprep.subr.mxu0 0.0
      %2182 = vmatpush1.msra.mxu0 0.0
      %2183 = vmatprep.subr.mxu0 0.0
      %2184 = vmatpush1.msra.mxu0 0.0
      %2185 = vmatprep.subr.mxu0 0.0
      %2186 = vmatpush1.msra.mxu0 0.0
      %2187 = vmatprep.subr.mxu0 0.0
      %2188 = vmatpush1.msra.mxu0 0.0
      %2189 = vmatprep.subr.mxu0 0.0
      %2190 = vmatpush1.msra.mxu0 0.0
      %2191 = vmatprep.subr.mxu0 0.0
      %2192 = vmatpush1.msra.mxu0 0.0
      %2193 = vmatprep.subr.mxu0 0.0
      %2194 = vmatpush1.msra.mxu0 0.0
      %2195 = vmatprep.subr.mxu0 0.0
      %2196 = vmatpush1.msra.mxu0 0.0
      %2197 = vmatprep.subr.mxu0 0.0
      %2198 = vmatpush1.msra.mxu0 0.0
      %2199 = vmatprep.subr.mxu0 0.0
      %2200 = vmatpush1.msra.mxu0 0.0
      %2201 = vmatprep.subr.mxu0 0.0
      %2202 = vmatpush1.msra.mxu0 0.0
      %2203 = vmatprep.mubr.f32.mxu0 0.0
      %2204 = vmatmul.mubr.f32.gmra.mrb[0].mxu0 %v2066
      %v2205 = vpop.f32.mrb[0].mxu0
      %v2206 = vadd.f32 0.0, %v2205
      %v2207 = vpop.f32.mrb[0].mxu0
      %2208 = vdwg.mxu0
      %v2209 = vadd.f32 %v2046, %v2135
      %v2210 = vadd.f32 %v2047, %v2137
      %v2211 = vadd.f32 %v2048, %v2206
      %s2212 = scalar_lea.vmem %s4, 64
      %v2213 = vld [vmem:[%s2212] sm:$0xff]
      %2214 = vrot.lane.b32.xlu0 %v899, 36
      %v2215 = vpop.permute.xlu0 %2214
      %2216 = vrot.lane.b32.xlu0 %v900, 36
      %v2217 = vpop.permute.xlu0 %2216
      %2218 = vrot.lane.b32.xlu0 %v901, 36
      %v2219 = vpop.permute.xlu0 %2218
      %2220 = vrot.lane.b32.xlu0 %v902, 36
      %v2221 = vpop.permute.xlu0 %2220
      %vm2222 = vcmask 293888
      %v2223 = vsel %vm2222, %v2215, %v2217
      %v2224 = vsel %vm2222, %v2217, %v2219
      %v2225 = vsel %vm2222, %v2219, %v2221
      %v2230 = vsel %vm925, %v2213, 0
      %2232 = vmatprep.subr.mxu0 %v2224
      %2233 = vmatpush1.msra.mxu0 %v2223
      %2234 = vmatprep.subr.mxu0 0.0
      %2235 = vmatpush1.msra.mxu0 0.0
      %2236 = vmatprep.subr.mxu0 0.0
      %2237 = vmatpush1.msra.mxu0 0.0
      %2238 = vmatprep.subr.mxu0 0.0
      %2239 = vmatpush1.msra.mxu0 0.0
      %2240 = vmatprep.subr.mxu0 0.0
      %2241 = vmatpush1.msra.mxu0 0.0
      %2242 = vmatprep.subr.mxu0 0.0
      %2243 = vmatpush1.msra.mxu0 0.0
      %2244 = vmatprep.subr.mxu0 0.0
      %2245 = vmatpush1.msra.mxu0 0.0
      %2246 = vmatprep.subr.mxu0 0.0
      %2247 = vmatpush1.msra.mxu0 0.0
      %2248 = vmatprep.subr.mxu0 0.0
      %2249 = vmatpush1.msra.mxu0 0.0
      %2250 = vmatprep.subr.mxu0 0.0
      %2251 = vmatpush1.msra.mxu0 0.0
      %2252 = vmatprep.subr.mxu0 0.0
      %2253 = vmatpush1.msra.mxu0 0.0
      %2254 = vmatprep.subr.mxu0 0.0
      %2255 = vmatpush1.msra.mxu0 0.0
      %2256 = vmatprep.subr.mxu0 0.0
      %2257 = vmatpush1.msra.mxu0 0.0
      %2258 = vmatprep.subr.mxu0 0.0
      %2259 = vmatpush1.msra.mxu0 0.0
      %2260 = vmatprep.subr.mxu0 0.0
      %2261 = vmatpush1.msra.mxu0 0.0
      %2262 = vmatprep.subr.mxu0 0.0
      %2263 = vmatpush1.msra.mxu0 0.0
      %2264 = vmatprep.subr.mxu0 0.0
      %2265 = vmatpush1.msra.mxu0 0.0
      %2266 = vmatprep.subr.mxu0 0.0
      %2267 = vmatpush1.msra.mxu0 0.0
      %2268 = vmatprep.subr.mxu0 0.0
      %2269 = vmatpush1.msra.mxu0 0.0
      %2270 = vmatprep.subr.mxu0 0.0
      %2271 = vmatpush1.msra.mxu0 0.0
      %2272 = vmatprep.subr.mxu0 0.0
      %2273 = vmatpush1.msra.mxu0 0.0
      %2274 = vmatprep.subr.mxu0 0.0
      %2275 = vmatpush1.msra.mxu0 0.0
      %2276 = vmatprep.subr.mxu0 0.0
      %2277 = vmatpush1.msra.mxu0 0.0
      %2278 = vmatprep.subr.mxu0 0.0
      %2279 = vmatpush1.msra.mxu0 0.0
      %2280 = vmatprep.subr.mxu0 0.0
      %2281 = vmatpush1.msra.mxu0 0.0
      %2282 = vmatprep.subr.mxu0 0.0
      %2283 = vmatpush1.msra.mxu0 0.0
      %2284 = vmatprep.subr.mxu0 0.0
      %2285 = vmatpush1.msra.mxu0 0.0
      %2286 = vmatprep.subr.mxu0 0.0
      %2287 = vmatpush1.msra.mxu0 0.0
      %2288 = vmatprep.subr.mxu0 0.0
      %2289 = vmatpush1.msra.mxu0 0.0
      %2290 = vmatprep.subr.mxu0 0.0
      %2291 = vmatpush1.msra.mxu0 0.0
      %2292 = vmatprep.subr.mxu0 0.0
      %2293 = vmatpush1.msra.mxu0 0.0
      %2294 = vmatprep.subr.mxu0 0.0
      %2295 = vmatpush1.msra.mxu0 0.0
      %2296 = vmatprep.mubr.f32.mxu0 0.0
      %2297 = vmatmul.mubr.f32.gmra.mrb[0].mxu0 %v2230
      %v2298 = vpop.f32.mrb[0].mxu0
      %v2299 = vadd.f32 0.0, %v2298
      %v2300 = vpop.f32.mrb[0].mxu0
      %v2301 = vadd.f32 0.0, %v2300
      %2302 = vdwg.mxu0
      %2303 = vmatprep.subr.mxu0 0.0
      %2304 = vmatpush1.msra.mxu0 %v2225
      %2305 = vmatprep.subr.mxu0 0.0
      %2306 = vmatpush1.msra.mxu0 0.0
      %2307 = vmatprep.subr.mxu0 0.0
      %2308 = vmatpush1.msra.mxu0 0.0
      %2309 = vmatprep.subr.mxu0 0.0
      %2310 = vmatpush1.msra.mxu0 0.0
      %2311 = vmatprep.subr.mxu0 0.0
      %2312 = vmatpush1.msra.mxu0 0.0
      %2313 = vmatprep.subr.mxu0 0.0
      %2314 = vmatpush1.msra.mxu0 0.0
      %2315 = vmatprep.subr.mxu0 0.0
      %2316 = vmatpush1.msra.mxu0 0.0
      %2317 = vmatprep.subr.mxu0 0.0
      %2318 = vmatpush1.msra.mxu0 0.0
      %2319 = vmatprep.subr.mxu0 0.0
      %2320 = vmatpush1.msra.mxu0 0.0
      %2321 = vmatprep.subr.mxu0 0.0
      %2322 = vmatpush1.msra.mxu0 0.0
      %2323 = vmatprep.subr.mxu0 0.0
      %2324 = vmatpush1.msra.mxu0 0.0
      %2325 = vmatprep.subr.mxu0 0.0
      %2326 = vmatpush1.msra.mxu0 0.0
      %2327 = vmatprep.subr.mxu0 0.0
      %2328 = vmatpush1.msra.mxu0 0.0
      %2329 = vmatprep.subr.mxu0 0.0
      %2330 = vmatpush1.msra.mxu0 0.0
      %2331 = vmatprep.subr.mxu0 0.0
      %2332 = vmatpush1.msra.mxu0 0.0
      %2333 = vmatprep.subr.mxu0 0.0
      %2334 = vmatpush1.msra.mxu0 0.0
      %2335 = vmatprep.subr.mxu0 0.0
      %2336 = vmatpush1.msra.mxu0 0.0
      %2337 = vmatprep.subr.mxu0 0.0
      %2338 = vmatpush1.msra.mxu0 0.0
      %2339 = vmatprep.subr.mxu0 0.0
      %2340 = vmatpush1.msra.mxu0 0.0
      %2341 = vmatprep.subr.mxu0 0.0
      %2342 = vmatpush1.msra.mxu0 0.0
      %2343 = vmatprep.subr.mxu0 0.0
      %2344 = vmatpush1.msra.mxu0 0.0
      %2345 = vmatprep.subr.mxu0 0.0
      %2346 = vmatpush1.msra.mxu0 0.0
      %2347 = vmatprep.subr.mxu0 0.0
      %2348 = vmatpush1.msra.mxu0 0.0
      %2349 = vmatprep.subr.mxu0 0.0
      %2350 = vmatpush1.msra.mxu0 0.0
      %2351 = vmatprep.subr.mxu0 0.0
      %2352 = vmatpush1.msra.mxu0 0.0
      %2353 = vmatprep.subr.mxu0 0.0
      %2354 = vmatpush1.msra.mxu0 0.0
      %2355 = vmatprep.subr.mxu0 0.0
      %2356 = vmatpush1.msra.mxu0 0.0
      %2357 = vmatprep.subr.mxu0 0.0
      %2358 = vmatpush1.msra.mxu0 0.0
      %2359 = vmatprep.subr.mxu0 0.0
      %2360 = vmatpush1.msra.mxu0 0.0
      %2361 = vmatprep.subr.mxu0 0.0
      %2362 = vmatpush1.msra.mxu0 0.0
      %2363 = vmatprep.subr.mxu0 0.0
      %2364 = vmatpush1.msra.mxu0 0.0
      %2365 = vmatprep.subr.mxu0 0.0
      %2366 = vmatpush1.msra.mxu0 0.0
      %2367 = vmatprep.mubr.f32.mxu0 0.0
      %2368 = vmatmul.mubr.f32.gmra.mrb[0].mxu0 %v2230
      %v2369 = vpop.f32.mrb[0].mxu0
      %v2370 = vadd.f32 0.0, %v2369
      %v2371 = vpop.f32.mrb[0].mxu0
      %2372 = vdwg.mxu0
      %v2373 = vadd.f32 %v2209, %v2299
      %v2374 = vadd.f32 %v2210, %v2301
      %v2375 = vadd.f32 %v2211, %v2370
      %v2376 = vld [vmem:[%s5] sm:$0xff]
      %2378 = vset.pattern.permute.xlu0 0
      %2379 = vperm.xlu0 %2378, %v2376
      %v2380 = vpop.permute.xlu0 %2379
      %v2382 = vadd.f32 %v2373, %v2380
      %v2383 = vadd.f32 %v2374, %v2380
      %v2384 = vadd.f32 %v2375, %v2380
      %2385 = vst [vmem:[#allocation3] sm:$0xff] 0.0
      %vm2386 = vcmask 1043456
      %vm2387 = vcmask 998404
      %vm2388 = vmor %vm2387, %vm2386
      %2389 = vst.msk [vmem:[#allocation3 + $0x8] sm:$0xff] %vm2388, 0.0
      %v2390 = vsel %vm871, %v850, 0.0
      %v2391 = vsel %vm872, %v851, 0.0
      %v2392 = vsel %vm873, %v852, 0.0
      %v2396 = vcombine.low %v2390, %v2391
      %2397 = vrot.lane.b32.xlu0 %v2396, 69
      %v2398 = vpop.permute.xlu0 %2397
      %2399 = vrot.lane.b32.xlu0 %v2392, 69
      %v2400 = vpop.permute.xlu0 %2399
      %v2401 = vrot.slane %v2398, 4
      %v2402 = vrot.slane %v2400, 4
      %v2403 = vsel %vm886, %v2401, %v2398
      %v2404 = vsel %vm2386, %v2401, %v2402
      %v2405 = vsel %vm886, %v2404, %v2400
      %vm2408 = vcmask 1044008
      %vm2409 = vcmask 1047556
      %vm2410 = vmor %vm2409, %vm2408
      %2411 = vst.msk [vmem:[#allocation3] sm:$0xff] %vm2410, %v2403
      %vm2412 = vcmask 302084
      %vm2413 = vmor %vm2412, %vm2386
      %2414 = vst.msk [vmem:[#allocation3 + $0x8] sm:$0xff] %vm2413, %v2405
      %v2415 = vld [vmem:[#allocation3] sm:$0xff]
      %v2416 = vld [vmem:[#allocation3 + $0x8] sm:$0xff]
      %v2417 = vld [vmem:[%s6] sm:$0xff]
      %s2418 = scalar_lea.vmem %s6, 8
      %v2419 = vld [vmem:[%s2418] sm:$0xff]
      %v2422 = vcombine.high %v2415, %v2415
      %v2423 = vcombine.high %v2416, %v2416
      %2424 = vrot.lane.b32.xlu0 %v2415, 81
      %v2425 = vpop.permute.xlu0 %2424
      %2426 = vrot.lane.b32.xlu0 %v2422, 81
      %v2427 = vpop.permute.xlu0 %2426
      %2428 = vrot.lane.b32.xlu0 %v2416, 81
      %v2429 = vpop.permute.xlu0 %2428
      %2430 = vrot.lane.b32.xlu0 %v2423, 81
      %v2431 = vpop.permute.xlu0 %2430
      %v2432 = vsel %vm918, %v2425, %v2427
      %v2433 = vsel %vm918, %v2427, %v2429
      %v2434 = vsel %vm918, %v2429, %v2431
      %vm2435 = vcmask 31744
      %v2437 = vsel %vm2435, %v2419, 0
      %v2439 = vsel %vm2386, %v2432, 0
      %v2441 = vsel %vm2386, %v2433, 0
      %v2443 = vsel %vm2386, %v2434, 0
      %2445 = vmatprep.subr.mxu0 %v2441
      %2446 = vmatpush1.msra.mxu0 %v2439
      %2447 = vmatprep.subr.mxu0 0.0
      %2448 = vmatpush1.msra.mxu0 0.0
      %2449 = vmatprep.subr.mxu0 0.0
      %2450 = vmatpush1.msra.mxu0 0.0
      %2451 = vmatprep.subr.mxu0 0.0
      %2452 = vmatpush1.msra.mxu0 0.0
      %2453 = vmatprep.subr.mxu0 0.0
      %2454 = vmatpush1.msra.mxu0 0.0
      %2455 = vmatprep.subr.mxu0 0.0
      %2456 = vmatpush1.msra.mxu0 0.0
      %2457 = vmatprep.subr.mxu0 0.0
      %2458 = vmatpush1.msra.mxu0 0.0
      %2459 = vmatprep.subr.mxu0 0.0
      %2460 = vmatpush1.msra.mxu0 0.0
      %2461 = vmatprep.subr.mxu0 0.0
      %2462 = vmatpush1.msra.mxu0 0.0
      %2463 = vmatprep.subr.mxu0 0.0
      %2464 = vmatpush1.msra.mxu0 0.0
      %2465 = vmatprep.subr.mxu0 0.0
      %2466 = vmatpush1.msra.mxu0 0.0
      %2467 = vmatprep.subr.mxu0 0.0
      %2468 = vmatpush1.msra.mxu0 0.0
      %2469 = vmatprep.subr.mxu0 0.0
      %2470 = vmatpush1.msra.mxu0 0.0
      %2471 = vmatprep.subr.mxu0 0.0
      %2472 = vmatpush1.msra.mxu0 0.0
      %2473 = vmatprep.subr.mxu0 0.0
      %2474 = vmatpush1.msra.mxu0 0.0
      %2475 = vmatprep.subr.mxu0 0.0
      %2476 = vmatpush1.msra.mxu0 0.0
      %2477 = vmatprep.subr.mxu0 0.0
      %2478 = vmatpush1.msra.mxu0 0.0
      %2479 = vmatprep.subr.mxu0 0.0
      %2480 = vmatpush1.msra.mxu0 0.0
      %2481 = vmatprep.subr.mxu0 0.0
      %2482 = vmatpush1.msra.mxu0 0.0
      %2483 = vmatprep.subr.mxu0 0.0
      %2484 = vmatpush1.msra.mxu0 0.0
      %2485 = vmatprep.subr.mxu0 0.0
      %2486 = vmatpush1.msra.mxu0 0.0
      %2487 = vmatprep.subr.mxu0 0.0
      %2488 = vmatpush1.msra.mxu0 0.0
      %2489 = vmatprep.subr.mxu0 0.0
      %2490 = vmatpush1.msra.mxu0 0.0
      %2491 = vmatprep.subr.mxu0 0.0
      %2492 = vmatpush1.msra.mxu0 0.0
      %2493 = vmatprep.subr.mxu0 0.0
      %2494 = vmatpush1.msra.mxu0 0.0
      %2495 = vmatprep.subr.mxu0 0.0
      %2496 = vmatpush1.msra.mxu0 0.0
      %2497 = vmatprep.subr.mxu0 0.0
      %2498 = vmatpush1.msra.mxu0 0.0
      %2499 = vmatprep.subr.mxu0 0.0
      %2500 = vmatpush1.msra.mxu0 0.0
      %2501 = vmatprep.subr.mxu0 0.0
      %2502 = vmatpush1.msra.mxu0 0.0
      %2503 = vmatprep.subr.mxu0 0.0
      %2504 = vmatpush1.msra.mxu0 0.0
      %2505 = vmatprep.subr.mxu0 0.0
      %2506 = vmatpush1.msra.mxu0 0.0
      %2507 = vmatprep.subr.mxu0 0.0
      %2508 = vmatpush1.msra.mxu0 0.0
      %2509 = vmatprep.mubr.f32.mxu0 0.0
      %2510 = vmatmul.mubr.f32.gmra.mrb[0].mxu0 %v2437
      %v2511 = vpop.f32.mrb[0].mxu0
      %v2512 = vadd.f32 0.0, %v2511
      %v2513 = vpop.f32.mrb[0].mxu0
      %v2514 = vadd.f32 0.0, %v2513
      %2515 = vdwg.mxu0
      %2516 = vmatprep.subr.mxu0 0.0
      %2517 = vmatpush1.msra.mxu0 %v2443
      %2518 = vmatprep.subr.mxu0 0.0
      %2519 = vmatpush1.msra.mxu0 0.0
      %2520 = vmatprep.subr.mxu0 0.0
      %2521 = vmatpush1.msra.mxu0 0.0
      %2522 = vmatprep.subr.mxu0 0.0
      %2523 = vmatpush1.msra.mxu0 0.0
      %2524 = vmatprep.subr.mxu0 0.0
      %2525 = vmatpush1.msra.mxu0 0.0
      %2526 = vmatprep.subr.mxu0 0.0
      %2527 = vmatpush1.msra.mxu0 0.0
      %2528 = vmatprep.subr.mxu0 0.0
      %2529 = vmatpush1.msra.mxu0 0.0
      %2530 = vmatprep.subr.mxu0 0.0
      %2531 = vmatpush1.msra.mxu0 0.0
      %2532 = vmatprep.subr.mxu0 0.0
      %2533 = vmatpush1.msra.mxu0 0.0
      %2534 = vmatprep.subr.mxu0 0.0
      %2535 = vmatpush1.msra.mxu0 0.0
      %2536 = vmatprep.subr.mxu0 0.0
      %2537 = vmatpush1.msra.mxu0 0.0
      %2538 = vmatprep.subr.mxu0 0.0
      %2539 = vmatpush1.msra.mxu0 0.0
      %2540 = vmatprep.subr.mxu0 0.0
      %2541 = vmatpush1.msra.mxu0 0.0
      %2542 = vmatprep.subr.mxu0 0.0
      %2543 = vmatpush1.msra.mxu0 0.0
      %2544 = vmatprep.subr.mxu0 0.0
      %2545 = vmatpush1.msra.mxu0 0.0
      %2546 = vmatprep.subr.mxu0 0.0
      %2547 = vmatpush1.msra.mxu0 0.0
      %2548 = vmatprep.subr.mxu0 0.0
      %2549 = vmatpush1.msra.mxu0 0.0
      %2550 = vmatprep.subr.mxu0 0.0
      %2551 = vmatpush1.msra.mxu0 0.0
      %2552 = vmatprep.subr.mxu0 0.0
      %2553 = vmatpush1.msra.mxu0 0.0
      %2554 = vmatprep.subr.mxu0 0.0
      %2555 = vmatpush1.msra.mxu0 0.0
      %2556 = vmatprep.subr.mxu0 0.0
      %2557 = vmatpush1.msra.mxu0 0.0
      %2558 = vmatprep.subr.mxu0 0.0
      %2559 = vmatpush1.msra.mxu0 0.0
      %2560 = vmatprep.subr.mxu0 0.0
      %2561 = vmatpush1.msra.mxu0 0.0
      %2562 = vmatprep.subr.mxu0 0.0
      %2563 = vmatpush1.msra.mxu0 0.0
      %2564 = vmatprep.subr.mxu0 0.0
      %2565 = vmatpush1.msra.mxu0 0.0
      %2566 = vmatprep.subr.mxu0 0.0
      %2567 = vmatpush1.msra.mxu0 0.0
      %2568 = vmatprep.subr.mxu0 0.0
      %2569 = vmatpush1.msra.mxu0 0.0
      %2570 = vmatprep.subr.mxu0 0.0
      %2571 = vmatpush1.msra.mxu0 0.0
      %2572 = vmatprep.subr.mxu0 0.0
      %2573 = vmatpush1.msra.mxu0 0.0
      %2574 = vmatprep.subr.mxu0 0.0
      %2575 = vmatpush1.msra.mxu0 0.0
      %2576 = vmatprep.subr.mxu0 0.0
      %2577 = vmatpush1.msra.mxu0 0.0
      %2578 = vmatprep.subr.mxu0 0.0
      %2579 = vmatpush1.msra.mxu0 0.0
      %2580 = vmatprep.mubr.f32.mxu0 0.0
      %2581 = vmatmul.mubr.f32.gmra.mrb[0].mxu0 %v2437
      %v2582 = vpop.f32.mrb[0].mxu0
      %v2583 = vadd.f32 0.0, %v2582
      %v2584 = vpop.f32.mrb[0].mxu0
      %2585 = vdwg.mxu0
      %2586 = vrot.lane.b32.xlu0 %v2415, 82
      %v2587 = vpop.permute.xlu0 %2586
      %2588 = vrot.lane.b32.xlu0 %v2422, 82
      %v2589 = vpop.permute.xlu0 %2588
      %2590 = vrot.lane.b32.xlu0 %v2416, 82
      %v2591 = vpop.permute.xlu0 %2590
      %2592 = vrot.lane.b32.xlu0 %v2423, 82
      %v2593 = vpop.permute.xlu0 %2592
      %v2594 = vsel %vm1078, %v2587, %v2589
      %v2595 = vsel %vm1078, %v2589, %v2591
      %v2596 = vsel %vm1078, %v2591, %v2593
      %v2598 = vsel %vm2435, %v2417, 0
      %v2600 = vsel %vm2386, %v2594, 0
      %v2602 = vsel %vm2386, %v2595, 0
      %v2604 = vsel %vm2386, %v2596, 0
      %2606 = vmatprep.subr.mxu0 %v2602
      %2607 = vmatpush1.msra.mxu0 %v2600
      %2608 = vmatprep.subr.mxu0 0.0
      %2609 = vmatpush1.msra.mxu0 0.0
      %2610 = vmatprep.subr.mxu0 0.0
      %2611 = vmatpush1.msra.mxu0 0.0
      %2612 = vmatprep.subr.mxu0 0.0
      %2613 = vmatpush1.msra.mxu0 0.0
      %2614 = vmatprep.subr.mxu0 0.0
      %2615 = vmatpush1.msra.mxu0 0.0
      %2616 = vmatprep.subr.mxu0 0.0
      %2617 = vmatpush1.msra.mxu0 0.0
      %2618 = vmatprep.subr.mxu0 0.0
      %2619 = vmatpush1.msra.mxu0 0.0
      %2620 = vmatprep.subr.mxu0 0.0
      %2621 = vmatpush1.msra.mxu0 0.0
      %2622 = vmatprep.subr.mxu0 0.0
      %2623 = vmatpush1.msra.mxu0 0.0
      %2624 = vmatprep.subr.mxu0 0.0
      %2625 = vmatpush1.msra.mxu0 0.0
      %2626 = vmatprep.subr.mxu0 0.0
      %2627 = vmatpush1.msra.mxu0 0.0
      %2628 = vmatprep.subr.mxu0 0.0
      %2629 = vmatpush1.msra.mxu0 0.0
      %2630 = vmatprep.subr.mxu0 0.0
      %2631 = vmatpush1.msra.mxu0 0.0
      %2632 = vmatprep.subr.mxu0 0.0
      %2633 = vmatpush1.msra.mxu0 0.0
      %2634 = vmatprep.subr.mxu0 0.0
      %2635 = vmatpush1.msra.mxu0 0.0
      %2636 = vmatprep.subr.mxu0 0.0
      %2637 = vmatpush1.msra.mxu0 0.0
      %2638 = vmatprep.subr.mxu0 0.0
      %2639 = vmatpush1.msra.mxu0 0.0
      %2640 = vmatprep.subr.mxu0 0.0
      %2641 = vmatpush1.msra.mxu0 0.0
      %2642 = vmatprep.subr.mxu0 0.0
      %2643 = vmatpush1.msra.mxu0 0.0
      %2644 = vmatprep.subr.mxu0 0.0
      %2645 = vmatpush1.msra.mxu0 0.0
      %2646 = vmatprep.subr.mxu0 0.0
      %2647 = vmatpush1.msra.mxu0 0.0
      %2648 = vmatprep.subr.mxu0 0.0
      %2649 = vmatpush1.msra.mxu0 0.0
      %2650 = vmatprep.subr.mxu0 0.0
      %2651 = vmatpush1.msra.mxu0 0.0
      %2652 = vmatprep.subr.mxu0 0.0
      %2653 = vmatpush1.msra.mxu0 0.0
      %2654 = vmatprep.subr.mxu0 0.0
      %2655 = vmatpush1.msra.mxu0 0.0
      %2656 = vmatprep.subr.mxu0 0.0
      %2657 = vmatpush1.msra.mxu0 0.0
      %2658 = vmatprep.subr.mxu0 0.0
      %2659 = vmatpush1.msra.mxu0 0.0
      %2660 = vmatprep.subr.mxu0 0.0
      %2661 = vmatpush1.msra.mxu0 0.0
      %2662 = vmatprep.subr.mxu0 0.0
      %2663 = vmatpush1.msra.mxu0 0.0
      %2664 = vmatprep.subr.mxu0 0.0
      %2665 = vmatpush1.msra.mxu0 0.0
      %2666 = vmatprep.subr.mxu0 0.0
      %2667 = vmatpush1.msra.mxu0 0.0
      %2668 = vmatprep.subr.mxu0 0.0
      %2669 = vmatpush1.msra.mxu0 0.0
      %2670 = vmatprep.mubr.f32.mxu0 0.0
      %2671 = vmatmul.mubr.f32.gmra.mrb[0].mxu0 %v2598
      %v2672 = vpop.f32.mrb[0].mxu0
      %v2673 = vadd.f32 %v2512, %v2672
      %v2674 = vpop.f32.mrb[0].mxu0
      %v2675 = vadd.f32 %v2514, %v2674
      %2676 = vdwg.mxu0
      %2677 = vmatprep.subr.mxu0 0.0
      %2678 = vmatpush1.msra.mxu0 %v2604
      %2679 = vmatprep.subr.mxu0 0.0
      %2680 = vmatpush1.msra.mxu0 0.0
      %2681 = vmatprep.subr.mxu0 0.0
      %2682 = vmatpush1.msra.mxu0 0.0
      %2683 = vmatprep.subr.mxu0 0.0
      %2684 = vmatpush1.msra.mxu0 0.0
      %2685 = vmatprep.subr.mxu0 0.0
      %2686 = vmatpush1.msra.mxu0 0.0
      %2687 = vmatprep.subr.mxu0 0.0
      %2688 = vmatpush1.msra.mxu0 0.0
      %2689 = vmatprep.subr.mxu0 0.0
      %2690 = vmatpush1.msra.mxu0 0.0
      %2691 = vmatprep.subr.mxu0 0.0
      %2692 = vmatpush1.msra.mxu0 0.0
      %2693 = vmatprep.subr.mxu0 0.0
      %2694 = vmatpush1.msra.mxu0 0.0
      %2695 = vmatprep.subr.mxu0 0.0
      %2696 = vmatpush1.msra.mxu0 0.0
      %2697 = vmatprep.subr.mxu0 0.0
      %2698 = vmatpush1.msra.mxu0 0.0
      %2699 = vmatprep.subr.mxu0 0.0
      %2700 = vmatpush1.msra.mxu0 0.0
      %2701 = vmatprep.subr.mxu0 0.0
      %2702 = vmatpush1.msra.mxu0 0.0
      %2703 = vmatprep.subr.mxu0 0.0
      %2704 = vmatpush1.msra.mxu0 0.0
      %2705 = vmatprep.subr.mxu0 0.0
      %2706 = vmatpush1.msra.mxu0 0.0
      %2707 = vmatprep.subr.mxu0 0.0
      %2708 = vmatpush1.msra.mxu0 0.0
      %2709 = vmatprep.subr.mxu0 0.0
      %2710 = vmatpush1.msra.mxu0 0.0
      %2711 = vmatprep.subr.mxu0 0.0
      %2712 = vmatpush1.msra.mxu0 0.0
      %2713 = vmatprep.subr.mxu0 0.0
      %2714 = vmatpush1.msra.mxu0 0.0
      %2715 = vmatprep.subr.mxu0 0.0
      %2716 = vmatpush1.msra.mxu0 0.0
      %2717 = vmatprep.subr.mxu0 0.0
      %2718 = vmatpush1.msra.mxu0 0.0
      %2719 = vmatprep.subr.mxu0 0.0
      %2720 = vmatpush1.msra.mxu0 0.0
      %2721 = vmatprep.subr.mxu0 0.0
      %2722 = vmatpush1.msra.mxu0 0.0
      %2723 = vmatprep.subr.mxu0 0.0
      %2724 = vmatpush1.msra.mxu0 0.0
      %2725 = vmatprep.subr.mxu0 0.0
      %2726 = vmatpush1.msra.mxu0 0.0
      %2727 = vmatprep.subr.mxu0 0.0
      %2728 = vmatpush1.msra.mxu0 0.0
      %2729 = vmatprep.subr.mxu0 0.0
      %2730 = vmatpush1.msra.mxu0 0.0
      %2731 = vmatprep.subr.mxu0 0.0
      %2732 = vmatpush1.msra.mxu0 0.0
      %2733 = vmatprep.subr.mxu0 0.0
      %2734 = vmatpush1.msra.mxu0 0.0
      %2735 = vmatprep.subr.mxu0 0.0
      %2736 = vmatpush1.msra.mxu0 0.0
      %2737 = vmatprep.subr.mxu0 0.0
      %2738 = vmatpush1.msra.mxu0 0.0
      %2739 = vmatprep.subr.mxu0 0.0
      %2740 = vmatpush1.msra.mxu0 0.0
      %2741 = vmatprep.mubr.f32.mxu0 0.0
      %2742 = vmatmul.mubr.f32.gmra.mrb[0].mxu0 %v2598
      %v2743 = vpop.f32.mrb[0].mxu0
      %v2744 = vadd.f32 %v2583, %v2743
      %v2745 = vpop.f32.mrb[0].mxu0
      %2746 = vdwg.mxu0
      %v2747 = vld [vmem:[#allocation3] sm:$0xff]
      %v2748 = vld [vmem:[#allocation3 + $0x8] sm:$0xff]
      %s2749 = scalar_lea.vmem %s6, 16
      %v2750 = vld [vmem:[%s2749] sm:$0xff]
      %v2753 = vcombine.high %v2747, %v2747
      %v2754 = vcombine.high %v2748, %v2748
      %2755 = vrot.lane.b32.xlu0 %v2747, 80
      %v2756 = vpop.permute.xlu0 %2755
      %2757 = vrot.lane.b32.xlu0 %v2753, 80
      %v2758 = vpop.permute.xlu0 %2757
      %2759 = vrot.lane.b32.xlu0 %v2748, 80
      %v2760 = vpop.permute.xlu0 %2759
      %2761 = vrot.lane.b32.xlu0 %v2754, 80
      %v2762 = vpop.permute.xlu0 %2761
      %v2763 = vsel %vm1239, %v2756, %v2758
      %v2764 = vsel %vm1239, %v2758, %v2760
      %v2765 = vsel %vm1239, %v2760, %v2762
      %v2767 = vsel %vm2435, %v2750, 0
      %v2769 = vsel %vm2386, %v2763, 0
      %v2771 = vsel %vm2386, %v2764, 0
      %v2773 = vsel %vm2386, %v2765, 0
      %2775 = vmatprep.subr.mxu0 %v2771
      %2776 = vmatpush1.msra.mxu0 %v2769
      %2777 = vmatprep.subr.mxu0 0.0
      %2778 = vmatpush1.msra.mxu0 0.0
      %2779 = vmatprep.subr.mxu0 0.0
      %2780 = vmatpush1.msra.mxu0 0.0
      %2781 = vmatprep.subr.mxu0 0.0
      %2782 = vmatpush1.msra.mxu0 0.0
      %2783 = vmatprep.subr.mxu0 0.0
      %2784 = vmatpush1.msra.mxu0 0.0
      %2785 = vmatprep.subr.mxu0 0.0
      %2786 = vmatpush1.msra.mxu0 0.0
      %2787 = vmatprep.subr.mxu0 0.0
      %2788 = vmatpush1.msra.mxu0 0.0
      %2789 = vmatprep.subr.mxu0 0.0
      %2790 = vmatpush1.msra.mxu0 0.0
      %2791 = vmatprep.subr.mxu0 0.0
      %2792 = vmatpush1.msra.mxu0 0.0
      %2793 = vmatprep.subr.mxu0 0.0
      %2794 = vmatpush1.msra.mxu0 0.0
      %2795 = vmatprep.subr.mxu0 0.0
      %2796 = vmatpush1.msra.mxu0 0.0
      %2797 = vmatprep.subr.mxu0 0.0
      %2798 = vmatpush1.msra.mxu0 0.0
      %2799 = vmatprep.subr.mxu0 0.0
      %2800 = vmatpush1.msra.mxu0 0.0
      %2801 = vmatprep.subr.mxu0 0.0
      %2802 = vmatpush1.msra.mxu0 0.0
      %2803 = vmatprep.subr.mxu0 0.0
      %2804 = vmatpush1.msra.mxu0 0.0
      %2805 = vmatprep.subr.mxu0 0.0
      %2806 = vmatpush1.msra.mxu0 0.0
      %2807 = vmatprep.subr.mxu0 0.0
      %2808 = vmatpush1.msra.mxu0 0.0
      %2809 = vmatprep.subr.mxu0 0.0
      %2810 = vmatpush1.msra.mxu0 0.0
      %2811 = vmatprep.subr.mxu0 0.0
      %2812 = vmatpush1.msra.mxu0 0.0
      %2813 = vmatprep.subr.mxu0 0.0
      %2814 = vmatpush1.msra.mxu0 0.0
      %2815 = vmatprep.subr.mxu0 0.0
      %2816 = vmatpush1.msra.mxu0 0.0
      %2817 = vmatprep.subr.mxu0 0.0
      %2818 = vmatpush1.msra.mxu0 0.0
      %2819 = vmatprep.subr.mxu0 0.0
      %2820 = vmatpush1.msra.mxu0 0.0
      %2821 = vmatprep.subr.mxu0 0.0
      %2822 = vmatpush1.msra.mxu0 0.0
      %2823 = vmatprep.subr.mxu0 0.0
      %2824 = vmatpush1.msra.mxu0 0.0
      %2825 = vmatprep.subr.mxu0 0.0
      %2826 = vmatpush1.msra.mxu0 0.0
      %2827 = vmatprep.subr.mxu0 0.0
      %2828 = vmatpush1.msra.mxu0 0.0
      %2829 = vmatprep.subr.mxu0 0.0
      %2830 = vmatpush1.msra.mxu0 0.0
      %2831 = vmatprep.subr.mxu0 0.0
      %2832 = vmatpush1.msra.mxu0 0.0
      %2833 = vmatprep.subr.mxu0 0.0
      %2834 = vmatpush1.msra.mxu0 0.0
      %2835 = vmatprep.subr.mxu0 0.0
      %2836 = vmatpush1.msra.mxu0 0.0
      %2837 = vmatprep.subr.mxu0 0.0
      %2838 = vmatpush1.msra.mxu0 0.0
      %2839 = vmatprep.mubr.f32.mxu0 0.0
      %2840 = vmatmul.mubr.f32.gmra.mrb[0].mxu0 %v2767
      %v2841 = vpop.f32.mrb[0].mxu0
      %v2842 = vadd.f32 0.0, %v2841
      %v2843 = vpop.f32.mrb[0].mxu0
      %v2844 = vadd.f32 0.0, %v2843
      %2845 = vdwg.mxu0
      %2846 = vmatprep.subr.mxu0 0.0
      %2847 = vmatpush1.msra.mxu0 %v2773
      %2848 = vmatprep.subr.mxu0 0.0
      %2849 = vmatpush1.msra.mxu0 0.0
      %2850 = vmatprep.subr.mxu0 0.0
      %2851 = vmatpush1.msra.mxu0 0.0
      %2852 = vmatprep.subr.mxu0 0.0
      %2853 = vmatpush1.msra.mxu0 0.0
      %2854 = vmatprep.subr.mxu0 0.0
      %2855 = vmatpush1.msra.mxu0 0.0
      %2856 = vmatprep.subr.mxu0 0.0
      %2857 = vmatpush1.msra.mxu0 0.0
      %2858 = vmatprep.subr.mxu0 0.0
      %2859 = vmatpush1.msra.mxu0 0.0
      %2860 = vmatprep.subr.mxu0 0.0
      %2861 = vmatpush1.msra.mxu0 0.0
      %2862 = vmatprep.subr.mxu0 0.0
      %2863 = vmatpush1.msra.mxu0 0.0
      %2864 = vmatprep.subr.mxu0 0.0
      %2865 = vmatpush1.msra.mxu0 0.0
      %2866 = vmatprep.subr.mxu0 0.0
      %2867 = vmatpush1.msra.mxu0 0.0
      %2868 = vmatprep.subr.mxu0 0.0
      %2869 = vmatpush1.msra.mxu0 0.0
      %2870 = vmatprep.subr.mxu0 0.0
      %2871 = vmatpush1.msra.mxu0 0.0
      %2872 = vmatprep.subr.mxu0 0.0
      %2873 = vmatpush1.msra.mxu0 0.0
      %2874 = vmatprep.subr.mxu0 0.0
      %2875 = vmatpush1.msra.mxu0 0.0
      %2876 = vmatprep.subr.mxu0 0.0
      %2877 = vmatpush1.msra.mxu0 0.0
      %2878 = vmatprep.subr.mxu0 0.0
      %2879 = vmatpush1.msra.mxu0 0.0
      %2880 = vmatprep.subr.mxu0 0.0
      %2881 = vmatpush1.msra.mxu0 0.0
      %2882 = vmatprep.subr.mxu0 0.0
      %2883 = vmatpush1.msra.mxu0 0.0
      %2884 = vmatprep.subr.mxu0 0.0
      %2885 = vmatpush1.msra.mxu0 0.0
      %2886 = vmatprep.subr.mxu0 0.0
      %2887 = vmatpush1.msra.mxu0 0.0
      %2888 = vmatprep.subr.mxu0 0.0
      %2889 = vmatpush1.msra.mxu0 0.0
      %2890 = vmatprep.subr.mxu0 0.0
      %2891 = vmatpush1.msra.mxu0 0.0
      %2892 = vmatprep.subr.mxu0 0.0
      %2893 = vmatpush1.msra.mxu0 0.0
      %2894 = vmatprep.subr.mxu0 0.0
      %2895 = vmatpush1.msra.mxu0 0.0
      %2896 = vmatprep.subr.mxu0 0.0
      %2897 = vmatpush1.msra.mxu0 0.0
      %2898 = vmatprep.subr.mxu0 0.0
      %2899 = vmatpush1.msra.mxu0 0.0
      %2900 = vmatprep.subr.mxu0 0.0
      %2901 = vmatpush1.msra.mxu0 0.0
      %2902 = vmatprep.subr.mxu0 0.0
      %2903 = vmatpush1.msra.mxu0 0.0
      %2904 = vmatprep.subr.mxu0 0.0
      %2905 = vmatpush1.msra.mxu0 0.0
      %2906 = vmatprep.subr.mxu0 0.0
      %2907 = vmatpush1.msra.mxu0 0.0
      %2908 = vmatprep.subr.mxu0 0.0
      %2909 = vmatpush1.msra.mxu0 0.0
      %2910 = vmatprep.mubr.f32.mxu0 0.0
      %2911 = vmatmul.mubr.f32.gmra.mrb[0].mxu0 %v2767
      %v2912 = vpop.f32.mrb[0].mxu0
      %v2913 = vadd.f32 0.0, %v2912
      %v2914 = vpop.f32.mrb[0].mxu0
      %2915 = vdwg.mxu0
      %v2916 = vadd.f32 %v2673, %v2842
      %v2917 = vadd.f32 %v2675, %v2844
      %v2918 = vadd.f32 %v2744, %v2913
      %v2919 = vld [vmem:[#allocation3] sm:$0xff]
      %v2920 = vld [vmem:[#allocation3 + $0x8] sm:$0xff]
      %s2921 = scalar_lea.vmem %s6, 24
      %v2922 = vld [vmem:[%s2921] sm:$0xff]
      %v2925 = vcombine.high %v2919, %v2919
      %v2926 = vcombine.high %v2920, %v2920
      %2927 = vrot.lane.b32.xlu0 %v2919, 60
      %v2928 = vpop.permute.xlu0 %2927
      %2929 = vrot.lane.b32.xlu0 %v2925, 60
      %v2930 = vpop.permute.xlu0 %2929
      %2931 = vrot.lane.b32.xlu0 %v2920, 60
      %v2932 = vpop.permute.xlu0 %2931
      %2933 = vrot.lane.b32.xlu0 %v2926, 60
      %v2934 = vpop.permute.xlu0 %2933
      %v2935 = vsel %vm1403, %v2928, %v2930
      %v2936 = vsel %vm1403, %v2930, %v2932
      %v2937 = vsel %vm1403, %v2932, %v2934
      %v2939 = vsel %vm2435, %v2922, 0
      %v2941 = vsel %vm2386, %v2935, 0
      %v2943 = vsel %vm2386, %v2936, 0
      %v2945 = vsel %vm2386, %v2937, 0
      %2947 = vmatprep.subr.mxu0 %v2943
      %2948 = vmatpush1.msra.mxu0 %v2941
      %2949 = vmatprep.subr.mxu0 0.0
      %2950 = vmatpush1.msra.mxu0 0.0
      %2951 = vmatprep.subr.mxu0 0.0
      %2952 = vmatpush1.msra.mxu0 0.0
      %2953 = vmatprep.subr.mxu0 0.0
      %2954 = vmatpush1.msra.mxu0 0.0
      %2955 = vmatprep.subr.mxu0 0.0
      %2956 = vmatpush1.msra.mxu0 0.0
      %2957 = vmatprep.subr.mxu0 0.0
      %2958 = vmatpush1.msra.mxu0 0.0
      %2959 = vmatprep.subr.mxu0 0.0
      %2960 = vmatpush1.msra.mxu0 0.0
      %2961 = vmatprep.subr.mxu0 0.0
      %2962 = vmatpush1.msra.mxu0 0.0
      %2963 = vmatprep.subr.mxu0 0.0
      %2964 = vmatpush1.msra.mxu0 0.0
      %2965 = vmatprep.subr.mxu0 0.0
      %2966 = vmatpush1.msra.mxu0 0.0
      %2967 = vmatprep.subr.mxu0 0.0
      %2968 = vmatpush1.msra.mxu0 0.0
      %2969 = vmatprep.subr.mxu0 0.0
      %2970 = vmatpush1.msra.mxu0 0.0
      %2971 = vmatprep.subr.mxu0 0.0
      %2972 = vmatpush1.msra.mxu0 0.0
      %2973 = vmatprep.subr.mxu0 0.0
      %2974 = vmatpush1.msra.mxu0 0.0
      %2975 = vmatprep.subr.mxu0 0.0
      %2976 = vmatpush1.msra.mxu0 0.0
      %2977 = vmatprep.subr.mxu0 0.0
      %2978 = vmatpush1.msra.mxu0 0.0
      %2979 = vmatprep.subr.mxu0 0.0
      %2980 = vmatpush1.msra.mxu0 0.0
      %2981 = vmatprep.subr.mxu0 0.0
      %2982 = vmatpush1.msra.mxu0 0.0
      %2983 = vmatprep.subr.mxu0 0.0
      %2984 = vmatpush1.msra.mxu0 0.0
      %2985 = vmatprep.subr.mxu0 0.0
      %2986 = vmatpush1.msra.mxu0 0.0
      %2987 = vmatprep.subr.mxu0 0.0
      %2988 = vmatpush1.msra.mxu0 0.0
      %2989 = vmatprep.subr.mxu0 0.0
      %2990 = vmatpush1.msra.mxu0 0.0
      %2991 = vmatprep.subr.mxu0 0.0
      %2992 = vmatpush1.msra.mxu0 0.0
      %2993 = vmatprep.subr.mxu0 0.0
      %2994 = vmatpush1.msra.mxu0 0.0
      %2995 = vmatprep.subr.mxu0 0.0
      %2996 = vmatpush1.msra.mxu0 0.0
      %2997 = vmatprep.subr.mxu0 0.0
      %2998 = vmatpush1.msra.mxu0 0.0
      %2999 = vmatprep.subr.mxu0 0.0
      %3000 = vmatpush1.msra.mxu0 0.0
      %3001 = vmatprep.subr.mxu0 0.0
      %3002 = vmatpush1.msra.mxu0 0.0
      %3003 = vmatprep.subr.mxu0 0.0
      %3004 = vmatpush1.msra.mxu0 0.0
      %3005 = vmatprep.subr.mxu0 0.0
      %3006 = vmatpush1.msra.mxu0 0.0
      %3007 = vmatprep.subr.mxu0 0.0
      %3008 = vmatpush1.msra.mxu0 0.0
      %3009 = vmatprep.subr.mxu0 0.0
      %3010 = vmatpush1.msra.mxu0 0.0
      %3011 = vmatprep.mubr.f32.mxu0 0.0
      %3012 = vmatmul.mubr.f32.gmra.mrb[0].mxu0 %v2939
      %v3013 = vpop.f32.mrb[0].mxu0
      %v3014 = vadd.f32 0.0, %v3013
      %v3015 = vpop.f32.mrb[0].mxu0
      %v3016 = vadd.f32 0.0, %v3015
      %3017 = vdwg.mxu0
      %3018 = vmatprep.subr.mxu0 0.0
      %3019 = vmatpush1.msra.mxu0 %v2945
      %3020 = vmatprep.subr.mxu0 0.0
      %3021 = vmatpush1.msra.mxu0 0.0
      %3022 = vmatprep.subr.mxu0 0.0
      %3023 = vmatpush1.msra.mxu0 0.0
      %3024 = vmatprep.subr.mxu0 0.0
      %3025 = vmatpush1.msra.mxu0 0.0
      %3026 = vmatprep.subr.mxu0 0.0
      %3027 = vmatpush1.msra.mxu0 0.0
      %3028 = vmatprep.subr.mxu0 0.0
      %3029 = vmatpush1.msra.mxu0 0.0
      %3030 = vmatprep.subr.mxu0 0.0
      %3031 = vmatpush1.msra.mxu0 0.0
      %3032 = vmatprep.subr.mxu0 0.0
      %3033 = vmatpush1.msra.mxu0 0.0
      %3034 = vmatprep.subr.mxu0 0.0
      %3035 = vmatpush1.msra.mxu0 0.0
      %3036 = vmatprep.subr.mxu0 0.0
      %3037 = vmatpush1.msra.mxu0 0.0
      %3038 = vmatprep.subr.mxu0 0.0
      %3039 = vmatpush1.msra.mxu0 0.0
      %3040 = vmatprep.subr.mxu0 0.0
      %3041 = vmatpush1.msra.mxu0 0.0
      %3042 = vmatprep.subr.mxu0 0.0
      %3043 = vmatpush1.msra.mxu0 0.0
      %3044 = vmatprep.subr.mxu0 0.0
      %3045 = vmatpush1.msra.mxu0 0.0
      %3046 = vmatprep.subr.mxu0 0.0
      %3047 = vmatpush1.msra.mxu0 0.0
      %3048 = vmatprep.subr.mxu0 0.0
      %3049 = vmatpush1.msra.mxu0 0.0
      %3050 = vmatprep.subr.mxu0 0.0
      %3051 = vmatpush1.msra.mxu0 0.0
      %3052 = vmatprep.subr.mxu0 0.0
      %3053 = vmatpush1.msra.mxu0 0.0
      %3054 = vmatprep.subr.mxu0 0.0
      %3055 = vmatpush1.msra.mxu0 0.0
      %3056 = vmatprep.subr.mxu0 0.0
      %3057 = vmatpush1.msra.mxu0 0.0
      %3058 = vmatprep.subr.mxu0 0.0
      %3059 = vmatpush1.msra.mxu0 0.0
      %3060 = vmatprep.subr.mxu0 0.0
      %3061 = vmatpush1.msra.mxu0 0.0
      %3062 = vmatprep.subr.mxu0 0.0
      %3063 = vmatpush1.msra.mxu0 0.0
      %3064 = vmatprep.subr.mxu0 0.0
      %3065 = vmatpush1.msra.mxu0 0.0
      %3066 = vmatprep.subr.mxu0 0.0
      %3067 = vmatpush1.msra.mxu0 0.0
      %3068 = vmatprep.subr.mxu0 0.0
      %3069 = vmatpush1.msra.mxu0 0.0
      %3070 = vmatprep.subr.mxu0 0.0
      %3071 = vmatpush1.msra.mxu0 0.0
      %3072 = vmatprep.subr.mxu0 0.0
      %3073 = vmatpush1.msra.mxu0 0.0
      %3074 = vmatprep.subr.mxu0 0.0
      %3075 = vmatpush1.msra.mxu0 0.0
      %3076 = vmatprep.subr.mxu0 0.0
      %3077 = vmatpush1.msra.mxu0 0.0
      %3078 = vmatprep.subr.mxu0 0.0
      %3079 = vmatpush1.msra.mxu0 0.0
      %3080 = vmatprep.subr.mxu0 0.0
      %3081 = vmatpush1.msra.mxu0 0.0
      %3082 = vmatprep.mubr.f32.mxu0 0.0
      %3083 = vmatmul.mubr.f32.gmra.mrb[0].mxu0 %v2939
      %v3084 = vpop.f32.mrb[0].mxu0
      %v3085 = vadd.f32 0.0, %v3084
      %v3086 = vpop.f32.mrb[0].mxu0
      %3087 = vdwg.mxu0
      %v3088 = vadd.f32 %v2916, %v3014
      %v3089 = vadd.f32 %v2917, %v3016
      %v3090 = vadd.f32 %v2918, %v3085
      %v3091 = vld [vmem:[#allocation3] sm:$0xff]
      %v3092 = vld [vmem:[#allocation3 + $0x8] sm:$0xff]
      %s3093 = scalar_lea.vmem %s6, 32
      %v3094 = vld [vmem:[%s3093] sm:$0xff]
      %v3097 = vcombine.high %v3091, %v3091
      %v3098 = vcombine.high %v3092, %v3092
      %3099 = vrot.lane.b32.xlu0 %v3091, 59
      %v3100 = vpop.permute.xlu0 %3099
      %3101 = vrot.lane.b32.xlu0 %v3097, 59
      %v3102 = vpop.permute.xlu0 %3101
      %3103 = vrot.lane.b32.xlu0 %v3092, 59
      %v3104 = vpop.permute.xlu0 %3103
      %3105 = vrot.lane.b32.xlu0 %v3098, 59
      %v3106 = vpop.permute.xlu0 %3105
      %v3107 = vsel %vm1567, %v3100, %v3102
      %v3108 = vsel %vm1567, %v3102, %v3104
      %v3109 = vsel %vm1567, %v3104, %v3106
      %v3111 = vsel %vm2435, %v3094, 0
      %v3113 = vsel %vm2386, %v3107, 0
      %v3115 = vsel %vm2386, %v3108, 0
      %v3117 = vsel %vm2386, %v3109, 0
      %3119 = vmatprep.subr.mxu0 %v3115
      %3120 = vmatpush1.msra.mxu0 %v3113
      %3121 = vmatprep.subr.mxu0 0.0
      %3122 = vmatpush1.msra.mxu0 0.0
      %3123 = vmatprep.subr.mxu0 0.0
      %3124 = vmatpush1.msra.mxu0 0.0
      %3125 = vmatprep.subr.mxu0 0.0
      %3126 = vmatpush1.msra.mxu0 0.0
      %3127 = vmatprep.subr.mxu0 0.0
      %3128 = vmatpush1.msra.mxu0 0.0
      %3129 = vmatprep.subr.mxu0 0.0
      %3130 = vmatpush1.msra.mxu0 0.0
      %3131 = vmatprep.subr.mxu0 0.0
      %3132 = vmatpush1.msra.mxu0 0.0
      %3133 = vmatprep.subr.mxu0 0.0
      %3134 = vmatpush1.msra.mxu0 0.0
      %3135 = vmatprep.subr.mxu0 0.0
      %3136 = vmatpush1.msra.mxu0 0.0
      %3137 = vmatprep.subr.mxu0 0.0
      %3138 = vmatpush1.msra.mxu0 0.0
      %3139 = vmatprep.subr.mxu0 0.0
      %3140 = vmatpush1.msra.mxu0 0.0
      %3141 = vmatprep.subr.mxu0 0.0
      %3142 = vmatpush1.msra.mxu0 0.0
      %3143 = vmatprep.subr.mxu0 0.0
      %3144 = vmatpush1.msra.mxu0 0.0
      %3145 = vmatprep.subr.mxu0 0.0
      %3146 = vmatpush1.msra.mxu0 0.0
      %3147 = vmatprep.subr.mxu0 0.0
      %3148 = vmatpush1.msra.mxu0 0.0
      %3149 = vmatprep.subr.mxu0 0.0
      %3150 = vmatpush1.msra.mxu0 0.0
      %3151 = vmatprep.subr.mxu0 0.0
      %3152 = vmatpush1.msra.mxu0 0.0
      %3153 = vmatprep.subr.mxu0 0.0
      %3154 = vmatpush1.msra.mxu0 0.0
      %3155 = vmatprep.subr.mxu0 0.0
      %3156 = vmatpush1.msra.mxu0 0.0
      %3157 = vmatprep.subr.mxu0 0.0
      %3158 = vmatpush1.msra.mxu0 0.0
      %3159 = vmatprep.subr.mxu0 0.0
      %3160 = vmatpush1.msra.mxu0 0.0
      %3161 = vmatprep.subr.mxu0 0.0
      %3162 = vmatpush1.msra.mxu0 0.0
      %3163 = vmatprep.subr.mxu0 0.0
      %3164 = vmatpush1.msra.mxu0 0.0
      %3165 = vmatprep.subr.mxu0 0.0
      %3166 = vmatpush1.msra.mxu0 0.0
      %3167 = vmatprep.subr.mxu0 0.0
      %3168 = vmatpush1.msra.mxu0 0.0
      %3169 = vmatprep.subr.mxu0 0.0
      %3170 = vmatpush1.msra.mxu0 0.0
      %3171 = vmatprep.subr.mxu0 0.0
      %3172 = vmatpush1.msra.mxu0 0.0
      %3173 = vmatprep.subr.mxu0 0.0
      %3174 = vmatpush1.msra.mxu0 0.0
      %3175 = vmatprep.subr.mxu0 0.0
      %3176 = vmatpush1.msra.mxu0 0.0
      %3177 = vmatprep.subr.mxu0 0.0
      %3178 = vmatpush1.msra.mxu0 0.0
      %3179 = vmatprep.subr.mxu0 0.0
      %3180 = vmatpush1.msra.mxu0 0.0
      %3181 = vmatprep.subr.mxu0 0.0
      %3182 = vmatpush1.msra.mxu0 0.0
      %3183 = vmatprep.mubr.f32.mxu0 0.0
      %3184 = vmatmul.mubr.f32.gmra.mrb[0].mxu0 %v3111
      %v3185 = vpop.f32.mrb[0].mxu0
      %v3186 = vadd.f32 0.0, %v3185
      %v3187 = vpop.f32.mrb[0].mxu0
      %v3188 = vadd.f32 0.0, %v3187
      %3189 = vdwg.mxu0
      %3190 = vmatprep.subr.mxu0 0.0
      %3191 = vmatpush1.msra.mxu0 %v3117
      %3192 = vmatprep.subr.mxu0 0.0
      %3193 = vmatpush1.msra.mxu0 0.0
      %3194 = vmatprep.subr.mxu0 0.0
      %3195 = vmatpush1.msra.mxu0 0.0
      %3196 = vmatprep.subr.mxu0 0.0
      %3197 = vmatpush1.msra.mxu0 0.0
      %3198 = vmatprep.subr.mxu0 0.0
      %3199 = vmatpush1.msra.mxu0 0.0
      %3200 = vmatprep.subr.mxu0 0.0
      %3201 = vmatpush1.msra.mxu0 0.0
      %3202 = vmatprep.subr.mxu0 0.0
      %3203 = vmatpush1.msra.mxu0 0.0
      %3204 = vmatprep.subr.mxu0 0.0
      %3205 = vmatpush1.msra.mxu0 0.0
      %3206 = vmatprep.subr.mxu0 0.0
      %3207 = vmatpush1.msra.mxu0 0.0
      %3208 = vmatprep.subr.mxu0 0.0
      %3209 = vmatpush1.msra.mxu0 0.0
      %3210 = vmatprep.subr.mxu0 0.0
      %3211 = vmatpush1.msra.mxu0 0.0
      %3212 = vmatprep.subr.mxu0 0.0
      %3213 = vmatpush1.msra.mxu0 0.0
      %3214 = vmatprep.subr.mxu0 0.0
      %3215 = vmatpush1.msra.mxu0 0.0
      %3216 = vmatprep.subr.mxu0 0.0
      %3217 = vmatpush1.msra.mxu0 0.0
      %3218 = vmatprep.subr.mxu0 0.0
      %3219 = vmatpush1.msra.mxu0 0.0
      %3220 = vmatprep.subr.mxu0 0.0
      %3221 = vmatpush1.msra.mxu0 0.0
      %3222 = vmatprep.subr.mxu0 0.0
      %3223 = vmatpush1.msra.mxu0 0.0
      %3224 = vmatprep.subr.mxu0 0.0
      %3225 = vmatpush1.msra.mxu0 0.0
      %3226 = vmatprep.subr.mxu0 0.0
      %3227 = vmatpush1.msra.mxu0 0.0
      %3228 = vmatprep.subr.mxu0 0.0
      %3229 = vmatpush1.msra.mxu0 0.0
      %3230 = vmatprep.subr.mxu0 0.0
      %3231 = vmatpush1.msra.mxu0 0.0
      %3232 = vmatprep.subr.mxu0 0.0
      %3233 = vmatpush1.msra.mxu0 0.0
      %3234 = vmatprep.subr.mxu0 0.0
      %3235 = vmatpush1.msra.mxu0 0.0
      %3236 = vmatprep.subr.mxu0 0.0
      %3237 = vmatpush1.msra.mxu0 0.0
      %3238 = vmatprep.subr.mxu0 0.0
      %3239 = vmatpush1.msra.mxu0 0.0
      %3240 = vmatprep.subr.mxu0 0.0
      %3241 = vmatpush1.msra.mxu0 0.0
      %3242 = vmatprep.subr.mxu0 0.0
      %3243 = vmatpush1.msra.mxu0 0.0
      %3244 = vmatprep.subr.mxu0 0.0
      %3245 = vmatpush1.msra.mxu0 0.0
      %3246 = vmatprep.subr.mxu0 0.0
      %3247 = vmatpush1.msra.mxu0 0.0
      %3248 = vmatprep.subr.mxu0 0.0
      %3249 = vmatpush1.msra.mxu0 0.0
      %3250 = vmatprep.subr.mxu0 0.0
      %3251 = vmatpush1.msra.mxu0 0.0
      %3252 = vmatprep.subr.mxu0 0.0
      %3253 = vmatpush1.msra.mxu0 0.0
      %3254 = vmatprep.mubr.f32.mxu0 0.0
      %3255 = vmatmul.mubr.f32.gmra.mrb[0].mxu0 %v3111
      %v3256 = vpop.f32.mrb[0].mxu0
      %v3257 = vadd.f32 0.0, %v3256
      %v3258 = vpop.f32.mrb[0].mxu0
      %3259 = vdwg.mxu0
      %v3260 = vadd.f32 %v3088, %v3186
      %v3261 = vadd.f32 %v3089, %v3188
      %v3262 = vadd.f32 %v3090, %v3257
      %v3263 = vld [vmem:[#allocation3] sm:$0xff]
      %v3264 = vld [vmem:[#allocation3 + $0x8] sm:$0xff]
      %s3265 = scalar_lea.vmem %s6, 40
      %v3266 = vld [vmem:[%s3265] sm:$0xff]
      %v3269 = vcombine.high %v3263, %v3263
      %v3270 = vcombine.high %v3264, %v3264
      %3271 = vrot.lane.b32.xlu0 %v3263, 58
      %v3272 = vpop.permute.xlu0 %3271
      %3273 = vrot.lane.b32.xlu0 %v3269, 58
      %v3274 = vpop.permute.xlu0 %3273
      %3275 = vrot.lane.b32.xlu0 %v3264, 58
      %v3276 = vpop.permute.xlu0 %3275
      %3277 = vrot.lane.b32.xlu0 %v3270, 58
      %v3278 = vpop.permute.xlu0 %3277
      %v3279 = vsel %vm1731, %v3272, %v3274
      %v3280 = vsel %vm1731, %v3274, %v3276
      %v3281 = vsel %vm1731, %v3276, %v3278
      %v3283 = vsel %vm2435, %v3266, 0
      %v3285 = vsel %vm2386, %v3279, 0
      %v3287 = vsel %vm2386, %v3280, 0
      %v3289 = vsel %vm2386, %v3281, 0
      %3291 = vmatprep.subr.mxu0 %v3287
      %3292 = vmatpush1.msra.mxu0 %v3285
      %3293 = vmatprep.subr.mxu0 0.0
      %3294 = vmatpush1.msra.mxu0 0.0
      %3295 = vmatprep.subr.mxu0 0.0
      %3296 = vmatpush1.msra.mxu0 0.0
      %3297 = vmatprep.subr.mxu0 0.0
      %3298 = vmatpush1.msra.mxu0 0.0
      %3299 = vmatprep.subr.mxu0 0.0
      %3300 = vmatpush1.msra.mxu0 0.0
      %3301 = vmatprep.subr.mxu0 0.0
      %3302 = vmatpush1.msra.mxu0 0.0
      %3303 = vmatprep.subr.mxu0 0.0
      %3304 = vmatpush1.msra.mxu0 0.0
      %3305 = vmatprep.subr.mxu0 0.0
      %3306 = vmatpush1.msra.mxu0 0.0
      %3307 = vmatprep.subr.mxu0 0.0
      %3308 = vmatpush1.msra.mxu0 0.0
      %3309 = vmatprep.subr.mxu0 0.0
      %3310 = vmatpush1.msra.mxu0 0.0
      %3311 = vmatprep.subr.mxu0 0.0
      %3312 = vmatpush1.msra.mxu0 0.0
      %3313 = vmatprep.subr.mxu0 0.0
      %3314 = vmatpush1.msra.mxu0 0.0
      %3315 = vmatprep.subr.mxu0 0.0
      %3316 = vmatpush1.msra.mxu0 0.0
      %3317 = vmatprep.subr.mxu0 0.0
      %3318 = vmatpush1.msra.mxu0 0.0
      %3319 = vmatprep.subr.mxu0 0.0
      %3320 = vmatpush1.msra.mxu0 0.0
      %3321 = vmatprep.subr.mxu0 0.0
      %3322 = vmatpush1.msra.mxu0 0.0
      %3323 = vmatprep.subr.mxu0 0.0
      %3324 = vmatpush1.msra.mxu0 0.0
      %3325 = vmatprep.subr.mxu0 0.0
      %3326 = vmatpush1.msra.mxu0 0.0
      %3327 = vmatprep.subr.mxu0 0.0
      %3328 = vmatpush1.msra.mxu0 0.0
      %3329 = vmatprep.subr.mxu0 0.0
      %3330 = vmatpush1.msra.mxu0 0.0
      %3331 = vmatprep.subr.mxu0 0.0
      %3332 = vmatpush1.msra.mxu0 0.0
      %3333 = vmatprep.subr.mxu0 0.0
      %3334 = vmatpush1.msra.mxu0 0.0
      %3335 = vmatprep.subr.mxu0 0.0
      %3336 = vmatpush1.msra.mxu0 0.0
      %3337 = vmatprep.subr.mxu0 0.0
      %3338 = vmatpush1.msra.mxu0 0.0
      %3339 = vmatprep.subr.mxu0 0.0
      %3340 = vmatpush1.msra.mxu0 0.0
      %3341 = vmatprep.subr.mxu0 0.0
      %3342 = vmatpush1.msra.mxu0 0.0
      %3343 = vmatprep.subr.mxu0 0.0
      %3344 = vmatpush1.msra.mxu0 0.0
      %3345 = vmatprep.subr.mxu0 0.0
      %3346 = vmatpush1.msra.mxu0 0.0
      %3347 = vmatprep.subr.mxu0 0.0
      %3348 = vmatpush1.msra.mxu0 0.0
      %3349 = vmatprep.subr.mxu0 0.0
      %3350 = vmatpush1.msra.mxu0 0.0
      %3351 = vmatprep.subr.mxu0 0.0
      %3352 = vmatpush1.msra.mxu0 0.0
      %3353 = vmatprep.subr.mxu0 0.0
      %3354 = vmatpush1.msra.mxu0 0.0
      %3355 = vmatprep.mubr.f32.mxu0 0.0
      %3356 = vmatmul.mubr.f32.gmra.mrb[0].mxu0 %v3283
      %v3357 = vpop.f32.mrb[0].mxu0
      %v3358 = vadd.f32 0.0, %v3357
      %v3359 = vpop.f32.mrb[0].mxu0
      %v3360 = vadd.f32 0.0, %v3359
      %3361 = vdwg.mxu0
      %3362 = vmatprep.subr.mxu0 0.0
      %3363 = vmatpush1.msra.mxu0 %v3289
      %3364 = vmatprep.subr.mxu0 0.0
      %3365 = vmatpush1.msra.mxu0 0.0
      %3366 = vmatprep.subr.mxu0 0.0
      %3367 = vmatpush1.msra.mxu0 0.0
      %3368 = vmatprep.subr.mxu0 0.0
      %3369 = vmatpush1.msra.mxu0 0.0
      %3370 = vmatprep.subr.mxu0 0.0
      %3371 = vmatpush1.msra.mxu0 0.0
      %3372 = vmatprep.subr.mxu0 0.0
      %3373 = vmatpush1.msra.mxu0 0.0
      %3374 = vmatprep.subr.mxu0 0.0
      %3375 = vmatpush1.msra.mxu0 0.0
      %3376 = vmatprep.subr.mxu0 0.0
      %3377 = vmatpush1.msra.mxu0 0.0
      %3378 = vmatprep.subr.mxu0 0.0
      %3379 = vmatpush1.msra.mxu0 0.0
      %3380 = vmatprep.subr.mxu0 0.0
      %3381 = vmatpush1.msra.mxu0 0.0
      %3382 = vmatprep.subr.mxu0 0.0
      %3383 = vmatpush1.msra.mxu0 0.0
      %3384 = vmatprep.subr.mxu0 0.0
      %3385 = vmatpush1.msra.mxu0 0.0
      %3386 = vmatprep.subr.mxu0 0.0
      %3387 = vmatpush1.msra.mxu0 0.0
      %3388 = vmatprep.subr.mxu0 0.0
      %3389 = vmatpush1.msra.mxu0 0.0
      %3390 = vmatprep.subr.mxu0 0.0
      %3391 = vmatpush1.msra.mxu0 0.0
      %3392 = vmatprep.subr.mxu0 0.0
      %3393 = vmatpush1.msra.mxu0 0.0
      %3394 = vmatprep.subr.mxu0 0.0
      %3395 = vmatpush1.msra.mxu0 0.0
      %3396 = vmatprep.subr.mxu0 0.0
      %3397 = vmatpush1.msra.mxu0 0.0
      %3398 = vmatprep.subr.mxu0 0.0
      %3399 = vmatpush1.msra.mxu0 0.0
      %3400 = vmatprep.subr.mxu0 0.0
      %3401 = vmatpush1.msra.mxu0 0.0
      %3402 = vmatprep.subr.mxu0 0.0
      %3403 = vmatpush1.msra.mxu0 0.0
      %3404 = vmatprep.subr.mxu0 0.0
      %3405 = vmatpush1.msra.mxu0 0.0
      %3406 = vmatprep.subr.mxu0 0.0
      %3407 = vmatpush1.msra.mxu0 0.0
      %3408 = vmatprep.subr.mxu0 0.0
      %3409 = vmatpush1.msra.mxu0 0.0
      %3410 = vmatprep.subr.mxu0 0.0
      %3411 = vmatpush1.msra.mxu0 0.0
      %3412 = vmatprep.subr.mxu0 0.0
      %3413 = vmatpush1.msra.mxu0 0.0
      %3414 = vmatprep.subr.mxu0 0.0
      %3415 = vmatpush1.msra.mxu0 0.0
      %3416 = vmatprep.subr.mxu0 0.0
      %3417 = vmatpush1.msra.mxu0 0.0
      %3418 = vmatprep.subr.mxu0 0.0
      %3419 = vmatpush1.msra.mxu0 0.0
      %3420 = vmatprep.subr.mxu0 0.0
      %3421 = vmatpush1.msra.mxu0 0.0
      %3422 = vmatprep.subr.mxu0 0.0
      %3423 = vmatpush1.msra.mxu0 0.0
      %3424 = vmatprep.subr.mxu0 0.0
      %3425 = vmatpush1.msra.mxu0 0.0
      %3426 = vmatprep.mubr.f32.mxu0 0.0
      %3427 = vmatmul.mubr.f32.gmra.mrb[0].mxu0 %v3283
      %v3428 = vpop.f32.mrb[0].mxu0
      %v3429 = vadd.f32 0.0, %v3428
      %v3430 = vpop.f32.mrb[0].mxu0
      %3431 = vdwg.mxu0
      %v3432 = vadd.f32 %v3260, %v3358
      %v3433 = vadd.f32 %v3261, %v3360
      %v3434 = vadd.f32 %v3262, %v3429
      %v3435 = vld [vmem:[#allocation3] sm:$0xff]
      %v3436 = vld [vmem:[#allocation3 + $0x8] sm:$0xff]
      %s3437 = scalar_lea.vmem %s6, 48
      %v3438 = vld [vmem:[%s3437] sm:$0xff]
      %v3441 = vcombine.high %v3435, %v3435
      %v3442 = vcombine.high %v3436, %v3436
      %3443 = vrot.lane.b32.xlu0 %v3435, 38
      %v3444 = vpop.permute.xlu0 %3443
      %3445 = vrot.lane.b32.xlu0 %v3441, 38
      %v3446 = vpop.permute.xlu0 %3445
      %3447 = vrot.lane.b32.xlu0 %v3436, 38
      %v3448 = vpop.permute.xlu0 %3447
      %3449 = vrot.lane.b32.xlu0 %v3442, 38
      %v3450 = vpop.permute.xlu0 %3449
      %v3451 = vsel %vm1895, %v3444, %v3446
      %v3452 = vsel %vm1895, %v3446, %v3448
      %v3453 = vsel %vm1895, %v3448, %v3450
      %v3455 = vsel %vm2435, %v3438, 0
      %v3457 = vsel %vm2386, %v3451, 0
      %v3459 = vsel %vm2386, %v3452, 0
      %v3461 = vsel %vm2386, %v3453, 0
      %3463 = vmatprep.subr.mxu0 %v3459
      %3464 = vmatpush1.msra.mxu0 %v3457
      %3465 = vmatprep.subr.mxu0 0.0
      %3466 = vmatpush1.msra.mxu0 0.0
      %3467 = vmatprep.subr.mxu0 0.0
      %3468 = vmatpush1.msra.mxu0 0.0
      %3469 = vmatprep.subr.mxu0 0.0
      %3470 = vmatpush1.msra.mxu0 0.0
      %3471 = vmatprep.subr.mxu0 0.0
      %3472 = vmatpush1.msra.mxu0 0.0
      %3473 = vmatprep.subr.mxu0 0.0
      %3474 = vmatpush1.msra.mxu0 0.0
      %3475 = vmatprep.subr.mxu0 0.0
      %3476 = vmatpush1.msra.mxu0 0.0
      %3477 = vmatprep.subr.mxu0 0.0
      %3478 = vmatpush1.msra.mxu0 0.0
      %3479 = vmatprep.subr.mxu0 0.0
      %3480 = vmatpush1.msra.mxu0 0.0
      %3481 = vmatprep.subr.mxu0 0.0
      %3482 = vmatpush1.msra.mxu0 0.0
      %3483 = vmatprep.subr.mxu0 0.0
      %3484 = vmatpush1.msra.mxu0 0.0
      %3485 = vmatprep.subr.mxu0 0.0
      %3486 = vmatpush1.msra.mxu0 0.0
      %3487 = vmatprep.subr.mxu0 0.0
      %3488 = vmatpush1.msra.mxu0 0.0
      %3489 = vmatprep.subr.mxu0 0.0
      %3490 = vmatpush1.msra.mxu0 0.0
      %3491 = vmatprep.subr.mxu0 0.0
      %3492 = vmatpush1.msra.mxu0 0.0
      %3493 = vmatprep.subr.mxu0 0.0
      %3494 = vmatpush1.msra.mxu0 0.0
      %3495 = vmatprep.subr.mxu0 0.0
      %3496 = vmatpush1.msra.mxu0 0.0
      %3497 = vmatprep.subr.mxu0 0.0
      %3498 = vmatpush1.msra.mxu0 0.0
      %3499 = vmatprep.subr.mxu0 0.0
      %3500 = vmatpush1.msra.mxu0 0.0
      %3501 = vmatprep.subr.mxu0 0.0
      %3502 = vmatpush1.msra.mxu0 0.0
      %3503 = vmatprep.subr.mxu0 0.0
      %3504 = vmatpush1.msra.mxu0 0.0
      %3505 = vmatprep.subr.mxu0 0.0
      %3506 = vmatpush1.msra.mxu0 0.0
      %3507 = vmatprep.subr.mxu0 0.0
      %3508 = vmatpush1.msra.mxu0 0.0
      %3509 = vmatprep.subr.mxu0 0.0
      %3510 = vmatpush1.msra.mxu0 0.0
      %3511 = vmatprep.subr.mxu0 0.0
      %3512 = vmatpush1.msra.mxu0 0.0
      %3513 = vmatprep.subr.mxu0 0.0
      %3514 = vmatpush1.msra.mxu0 0.0
      %3515 = vmatprep.subr.mxu0 0.0
      %3516 = vmatpush1.msra.mxu0 0.0
      %3517 = vmatprep.subr.mxu0 0.0
      %3518 = vmatpush1.msra.mxu0 0.0
      %3519 = vmatprep.subr.mxu0 0.0
      %3520 = vmatpush1.msra.mxu0 0.0
      %3521 = vmatprep.subr.mxu0 0.0
      %3522 = vmatpush1.msra.mxu0 0.0
      %3523 = vmatprep.subr.mxu0 0.0
      %3524 = vmatpush1.msra.mxu0 0.0
      %3525 = vmatprep.subr.mxu0 0.0
      %3526 = vmatpush1.msra.mxu0 0.0
      %3527 = vmatprep.mubr.f32.mxu0 0.0
      %3528 = vmatmul.mubr.f32.gmra.mrb[0].mxu0 %v3455
      %v3529 = vpop.f32.mrb[0].mxu0
      %v3530 = vadd.f32 0.0, %v3529
      %v3531 = vpop.f32.mrb[0].mxu0
      %v3532 = vadd.f32 0.0, %v3531
      %3533 = vdwg.mxu0
      %3534 = vmatprep.subr.mxu0 0.0
      %3535 = vmatpush1.msra.mxu0 %v3461
      %3536 = vmatprep.subr.mxu0 0.0
      %3537 = vmatpush1.msra.mxu0 0.0
      %3538 = vmatprep.subr.mxu0 0.0
      %3539 = vmatpush1.msra.mxu0 0.0
      %3540 = vmatprep.subr.mxu0 0.0
      %3541 = vmatpush1.msra.mxu0 0.0
      %3542 = vmatprep.subr.mxu0 0.0
      %3543 = vmatpush1.msra.mxu0 0.0
      %3544 = vmatprep.subr.mxu0 0.0
      %3545 = vmatpush1.msra.mxu0 0.0
      %3546 = vmatprep.subr.mxu0 0.0
      %3547 = vmatpush1.msra.mxu0 0.0
      %3548 = vmatprep.subr.mxu0 0.0
      %3549 = vmatpush1.msra.mxu0 0.0
      %3550 = vmatprep.subr.mxu0 0.0
      %3551 = vmatpush1.msra.mxu0 0.0
      %3552 = vmatprep.subr.mxu0 0.0
      %3553 = vmatpush1.msra.mxu0 0.0
      %3554 = vmatprep.subr.mxu0 0.0
      %3555 = vmatpush1.msra.mxu0 0.0
      %3556 = vmatprep.subr.mxu0 0.0
      %3557 = vmatpush1.msra.mxu0 0.0
      %3558 = vmatprep.subr.mxu0 0.0
      %3559 = vmatpush1.msra.mxu0 0.0
      %3560 = vmatprep.subr.mxu0 0.0
      %3561 = vmatpush1.msra.mxu0 0.0
      %3562 = vmatprep.subr.mxu0 0.0
      %3563 = vmatpush1.msra.mxu0 0.0
      %3564 = vmatprep.subr.mxu0 0.0
      %3565 = vmatpush1.msra.mxu0 0.0
      %3566 = vmatprep.subr.mxu0 0.0
      %3567 = vmatpush1.msra.mxu0 0.0
      %3568 = vmatprep.subr.mxu0 0.0
      %3569 = vmatpush1.msra.mxu0 0.0
      %3570 = vmatprep.subr.mxu0 0.0
      %3571 = vmatpush1.msra.mxu0 0.0
      %3572 = vmatprep.subr.mxu0 0.0
      %3573 = vmatpush1.msra.mxu0 0.0
      %3574 = vmatprep.subr.mxu0 0.0
      %3575 = vmatpush1.msra.mxu0 0.0
      %3576 = vmatprep.subr.mxu0 0.0
      %3577 = vmatpush1.msra.mxu0 0.0
      %3578 = vmatprep.subr.mxu0 0.0
      %3579 = vmatpush1.msra.mxu0 0.0
      %3580 = vmatprep.subr.mxu0 0.0
      %3581 = vmatpush1.msra.mxu0 0.0
      %3582 = vmatprep.subr.mxu0 0.0
      %3583 = vmatpush1.msra.mxu0 0.0
      %3584 = vmatprep.subr.mxu0 0.0
      %3585 = vmatpush1.msra.mxu0 0.0
      %3586 = vmatprep.subr.mxu0 0.0
      %3587 = vmatpush1.msra.mxu0 0.0
      %3588 = vmatprep.subr.mxu0 0.0
      %3589 = vmatpush1.msra.mxu0 0.0
      %3590 = vmatprep.subr.mxu0 0.0
      %3591 = vmatpush1.msra.mxu0 0.0
      %3592 = vmatprep.subr.mxu0 0.0
      %3593 = vmatpush1.msra.mxu0 0.0
      %3594 = vmatprep.subr.mxu0 0.0
      %3595 = vmatpush1.msra.mxu0 0.0
      %3596 = vmatprep.subr.mxu0 0.0
      %3597 = vmatpush1.msra.mxu0 0.0
      %3598 = vmatprep.mubr.f32.mxu0 0.0
      %3599 = vmatmul.mubr.f32.gmra.mrb[0].mxu0 %v3455
      %v3600 = vpop.f32.mrb[0].mxu0
      %v3601 = vadd.f32 0.0, %v3600
      %v3602 = vpop.f32.mrb[0].mxu0
      %3603 = vdwg.mxu0
      %v3604 = vadd.f32 %v3432, %v3530
      %v3605 = vadd.f32 %v3433, %v3532
      %v3606 = vadd.f32 %v3434, %v3601
      %v3607 = vld [vmem:[#allocation3] sm:$0xff]
      %v3608 = vld [vmem:[#allocation3 + $0x8] sm:$0xff]
      %s3609 = scalar_lea.vmem %s6, 56
      %v3610 = vld [vmem:[%s3609] sm:$0xff]
      %v3613 = vcombine.high %v3607, %v3607
      %v3614 = vcombine.high %v3608, %v3608
      %3615 = vrot.lane.b32.xlu0 %v3607, 37
      %v3616 = vpop.permute.xlu0 %3615
      %3617 = vrot.lane.b32.xlu0 %v3613, 37
      %v3618 = vpop.permute.xlu0 %3617
      %3619 = vrot.lane.b32.xlu0 %v3608, 37
      %v3620 = vpop.permute.xlu0 %3619
      %3621 = vrot.lane.b32.xlu0 %v3614, 37
      %v3622 = vpop.permute.xlu0 %3621
      %v3623 = vsel %vm897, %v3616, %v3618
      %v3624 = vsel %vm897, %v3618, %v3620
      %v3625 = vsel %vm897, %v3620, %v3622
      %v3627 = vsel %vm2435, %v3610, 0
      %v3629 = vsel %vm2386, %v3623, 0
      %v3631 = vsel %vm2386, %v3624, 0
      %v3633 = vsel %vm2386, %v3625, 0
      %3635 = vmatprep.subr.mxu0 %v3631
      %3636 = vmatpush1.msra.mxu0 %v3629
      %3637 = vmatprep.subr.mxu0 0.0
      %3638 = vmatpush1.msra.mxu0 0.0
      %3639 = vmatprep.subr.mxu0 0.0
      %3640 = vmatpush1.msra.mxu0 0.0
      %3641 = vmatprep.subr.mxu0 0.0
      %3642 = vmatpush1.msra.mxu0 0.0
      %3643 = vmatprep.subr.mxu0 0.0
      %3644 = vmatpush1.msra.mxu0 0.0
      %3645 = vmatprep.subr.mxu0 0.0
      %3646 = vmatpush1.msra.mxu0 0.0
      %3647 = vmatprep.subr.mxu0 0.0
      %3648 = vmatpush1.msra.mxu0 0.0
      %3649 = vmatprep.subr.mxu0 0.0
      %3650 = vmatpush1.msra.mxu0 0.0
      %3651 = vmatprep.subr.mxu0 0.0
      %3652 = vmatpush1.msra.mxu0 0.0
      %3653 = vmatprep.subr.mxu0 0.0
      %3654 = vmatpush1.msra.mxu0 0.0
      %3655 = vmatprep.subr.mxu0 0.0
      %3656 = vmatpush1.msra.mxu0 0.0
      %3657 = vmatprep.subr.mxu0 0.0
      %3658 = vmatpush1.msra.mxu0 0.0
      %3659 = vmatprep.subr.mxu0 0.0
      %3660 = vmatpush1.msra.mxu0 0.0
      %3661 = vmatprep.subr.mxu0 0.0
      %3662 = vmatpush1.msra.mxu0 0.0
      %3663 = vmatprep.subr.mxu0 0.0
      %3664 = vmatpush1.msra.mxu0 0.0
      %3665 = vmatprep.subr.mxu0 0.0
      %3666 = vmatpush1.msra.mxu0 0.0
      %3667 = vmatprep.subr.mxu0 0.0
      %3668 = vmatpush1.msra.mxu0 0.0
      %3669 = vmatprep.subr.mxu0 0.0
      %3670 = vmatpush1.msra.mxu0 0.0
      %3671 = vmatprep.subr.mxu0 0.0
      %3672 = vmatpush1.msra.mxu0 0.0
      %3673 = vmatprep.subr.mxu0 0.0
      %3674 = vmatpush1.msra.mxu0 0.0
      %3675 = vmatprep.subr.mxu0 0.0
      %3676 = vmatpush1.msra.mxu0 0.0
      %3677 = vmatprep.subr.mxu0 0.0
      %3678 = vmatpush1.msra.mxu0 0.0
      %3679 = vmatprep.subr.mxu0 0.0
      %3680 = vmatpush1.msra.mxu0 0.0
      %3681 = vmatprep.subr.mxu0 0.0
      %3682 = vmatpush1.msra.mxu0 0.0
      %3683 = vmatprep.subr.mxu0 0.0
      %3684 = vmatpush1.msra.mxu0 0.0
      %3685 = vmatprep.subr.mxu0 0.0
      %3686 = vmatpush1.msra.mxu0 0.0
      %3687 = vmatprep.subr.mxu0 0.0
      %3688 = vmatpush1.msra.mxu0 0.0
      %3689 = vmatprep.subr.mxu0 0.0
      %3690 = vmatpush1.msra.mxu0 0.0
      %3691 = vmatprep.subr.mxu0 0.0
      %3692 = vmatpush1.msra.mxu0 0.0
      %3693 = vmatprep.subr.mxu0 0.0
      %3694 = vmatpush1.msra.mxu0 0.0
      %3695 = vmatprep.subr.mxu0 0.0
      %3696 = vmatpush1.msra.mxu0 0.0
      %3697 = vmatprep.subr.mxu0 0.0
      %3698 = vmatpush1.msra.mxu0 0.0
      %3699 = vmatprep.mubr.f32.mxu0 0.0
      %3700 = vmatmul.mubr.f32.gmra.mrb[0].mxu0 %v3627
      %v3701 = vpop.f32.mrb[0].mxu0
      %v3702 = vadd.f32 0.0, %v3701
      %v3703 = vpop.f32.mrb[0].mxu0
      %v3704 = vadd.f32 0.0, %v3703
      %3705 = vdwg.mxu0
      %3706 = vmatprep.subr.mxu0 0.0
      %3707 = vmatpush1.msra.mxu0 %v3633
      %3708 = vmatprep.subr.mxu0 0.0
      %3709 = vmatpush1.msra.mxu0 0.0
      %3710 = vmatprep.subr.mxu0 0.0
      %3711 = vmatpush1.msra.mxu0 0.0
      %3712 = vmatprep.subr.mxu0 0.0
      %3713 = vmatpush1.msra.mxu0 0.0
      %3714 = vmatprep.subr.mxu0 0.0
      %3715 = vmatpush1.msra.mxu0 0.0
      %3716 = vmatprep.subr.mxu0 0.0
      %3717 = vmatpush1.msra.mxu0 0.0
      %3718 = vmatprep.subr.mxu0 0.0
      %3719 = vmatpush1.msra.mxu0 0.0
      %3720 = vmatprep.subr.mxu0 0.0
      %3721 = vmatpush1.msra.mxu0 0.0
      %3722 = vmatprep.subr.mxu0 0.0
      %3723 = vmatpush1.msra.mxu0 0.0
      %3724 = vmatprep.subr.mxu0 0.0
      %3725 = vmatpush1.msra.mxu0 0.0
      %3726 = vmatprep.subr.mxu0 0.0
      %3727 = vmatpush1.msra.mxu0 0.0
      %3728 = vmatprep.subr.mxu0 0.0
      %3729 = vmatpush1.msra.mxu0 0.0
      %3730 = vmatprep.subr.mxu0 0.0
      %3731 = vmatpush1.msra.mxu0 0.0
      %3732 = vmatprep.subr.mxu0 0.0
      %3733 = vmatpush1.msra.mxu0 0.0
      %3734 = vmatprep.subr.mxu0 0.0
      %3735 = vmatpush1.msra.mxu0 0.0
      %3736 = vmatprep.subr.mxu0 0.0
      %3737 = vmatpush1.msra.mxu0 0.0
      %3738 = vmatprep.subr.mxu0 0.0
      %3739 = vmatpush1.msra.mxu0 0.0
      %3740 = vmatprep.subr.mxu0 0.0
      %3741 = vmatpush1.msra.mxu0 0.0
      %3742 = vmatprep.subr.mxu0 0.0
      %3743 = vmatpush1.msra.mxu0 0.0
      %3744 = vmatprep.subr.mxu0 0.0
      %3745 = vmatpush1.msra.mxu0 0.0
      %3746 = vmatprep.subr.mxu0 0.0
      %3747 = vmatpush1.msra.mxu0 0.0
      %3748 = vmatprep.subr.mxu0 0.0
      %3749 = vmatpush1.msra.mxu0 0.0
      %3750 = vmatprep.subr.mxu0 0.0
      %3751 = vmatpush1.msra.mxu0 0.0
      %3752 = vmatprep.subr.mxu0 0.0
      %3753 = vmatpush1.msra.mxu0 0.0
      %3754 = vmatprep.subr.mxu0 0.0
      %3755 = vmatpush1.msra.mxu0 0.0
      %3756 = vmatprep.subr.mxu0 0.0
      %3757 = vmatpush1.msra.mxu0 0.0
      %3758 = vmatprep.subr.mxu0 0.0
      %3759 = vmatpush1.msra.mxu0 0.0
      %3760 = vmatprep.subr.mxu0 0.0
      %3761 = vmatpush1.msra.mxu0 0.0
      %3762 = vmatprep.subr.mxu0 0.0
      %3763 = vmatpush1.msra.mxu0 0.0
      %3764 = vmatprep.subr.mxu0 0.0
      %3765 = vmatpush1.msra.mxu0 0.0
      %3766 = vmatprep.subr.mxu0 0.0
      %3767 = vmatpush1.msra.mxu0 0.0
      %3768 = vmatprep.subr.mxu0 0.0
      %3769 = vmatpush1.msra.mxu0 0.0
      %3770 = vmatprep.mubr.f32.mxu0 0.0
      %3771 = vmatmul.mubr.f32.gmra.mrb[0].mxu0 %v3627
      %v3772 = vpop.f32.mrb[0].mxu0
      %v3773 = vadd.f32 0.0, %v3772
      %v3774 = vpop.f32.mrb[0].mxu0
      %3775 = vdwg.mxu0
      %v3776 = vadd.f32 %v3604, %v3702
      %v3777 = vadd.f32 %v3605, %v3704
      %v3778 = vadd.f32 %v3606, %v3773
      %v3779 = vld [vmem:[#allocation3] sm:$0xff]
      %v3780 = vld [vmem:[#allocation3 + $0x8] sm:$0xff]
      %s3781 = scalar_lea.vmem %s6, 64
      %v3782 = vld [vmem:[%s3781] sm:$0xff]
      %v3785 = vcombine.high %v3779, %v3779
      %v3786 = vcombine.high %v3780, %v3780
      %3787 = vrot.lane.b32.xlu0 %v3779, 36
      %v3788 = vpop.permute.xlu0 %3787
      %3789 = vrot.lane.b32.xlu0 %v3785, 36
      %v3790 = vpop.permute.xlu0 %3789
      %3791 = vrot.lane.b32.xlu0 %v3780, 36
      %v3792 = vpop.permute.xlu0 %3791
      %3793 = vrot.lane.b32.xlu0 %v3786, 36
      %v3794 = vpop.permute.xlu0 %3793
      %v3795 = vsel %vm2222, %v3788, %v3790
      %v3796 = vsel %vm2222, %v3790, %v3792
      %v3797 = vsel %vm2222, %v3792, %v3794
      %v3799 = vsel %vm2435, %v3782, 0
      %v3801 = vsel %vm2386, %v3795, 0
      %v3803 = vsel %vm2386, %v3796, 0
      %v3805 = vsel %vm2386, %v3797, 0
      %3807 = vmatprep.subr.mxu0 %v3803
      %3808 = vmatpush1.msra.mxu0 %v3801
      %3809 = vmatprep.subr.mxu0 0.0
      %3810 = vmatpush1.msra.mxu0 0.0
      %3811 = vmatprep.subr.mxu0 0.0
      %3812 = vmatpush1.msra.mxu0 0.0
      %3813 = vmatprep.subr.mxu0 0.0
      %3814 = vmatpush1.msra.mxu0 0.0
      %3815 = vmatprep.subr.mxu0 0.0
      %3816 = vmatpush1.msra.mxu0 0.0
      %3817 = vmatprep.subr.mxu0 0.0
      %3818 = vmatpush1.msra.mxu0 0.0
      %3819 = vmatprep.subr.mxu0 0.0
      %3820 = vmatpush1.msra.mxu0 0.0
      %3821 = vmatprep.subr.mxu0 0.0
      %3822 = vmatpush1.msra.mxu0 0.0
      %3823 = vmatprep.subr.mxu0 0.0
      %3824 = vmatpush1.msra.mxu0 0.0
      %3825 = vmatprep.subr.mxu0 0.0
      %3826 = vmatpush1.msra.mxu0 0.0
      %3827 = vmatprep.subr.mxu0 0.0
      %3828 = vmatpush1.msra.mxu0 0.0
      %3829 = vmatprep.subr.mxu0 0.0
      %3830 = vmatpush1.msra.mxu0 0.0
      %3831 = vmatprep.subr.mxu0 0.0
      %3832 = vmatpush1.msra.mxu0 0.0
      %3833 = vmatprep.subr.mxu0 0.0
      %3834 = vmatpush1.msra.mxu0 0.0
      %3835 = vmatprep.subr.mxu0 0.0
      %3836 = vmatpush1.msra.mxu0 0.0
      %3837 = vmatprep.subr.mxu0 0.0
      %3838 = vmatpush1.msra.mxu0 0.0
      %3839 = vmatprep.subr.mxu0 0.0
      %3840 = vmatpush1.msra.mxu0 0.0
      %3841 = vmatprep.subr.mxu0 0.0
      %3842 = vmatpush1.msra.mxu0 0.0
      %3843 = vmatprep.subr.mxu0 0.0
      %3844 = vmatpush1.msra.mxu0 0.0
      %3845 = vmatprep.subr.mxu0 0.0
      %3846 = vmatpush1.msra.mxu0 0.0
      %3847 = vmatprep.subr.mxu0 0.0
      %3848 = vmatpush1.msra.mxu0 0.0
      %3849 = vmatprep.subr.mxu0 0.0
      %3850 = vmatpush1.msra.mxu0 0.0
      %3851 = vmatprep.subr.mxu0 0.0
      %3852 = vmatpush1.msra.mxu0 0.0
      %3853 = vmatprep.subr.mxu0 0.0
      %3854 = vmatpush1.msra.mxu0 0.0
      %3855 = vmatprep.subr.mxu0 0.0
      %3856 = vmatpush1.msra.mxu0 0.0
      %3857 = vmatprep.subr.mxu0 0.0
      %3858 = vmatpush1.msra.mxu0 0.0
      %3859 = vmatprep.subr.mxu0 0.0
      %3860 = vmatpush1.msra.mxu0 0.0
      %3861 = vmatprep.subr.mxu0 0.0
      %3862 = vmatpush1.msra.mxu0 0.0
      %3863 = vmatprep.subr.mxu0 0.0
      %3864 = vmatpush1.msra.mxu0 0.0
      %3865 = vmatprep.subr.mxu0 0.0
      %3866 = vmatpush1.msra.mxu0 0.0
      %3867 = vmatprep.subr.mxu0 0.0
      %3868 = vmatpush1.msra.mxu0 0.0
      %3869 = vmatprep.subr.mxu0 0.0
      %3870 = vmatpush1.msra.mxu0 0.0
      %3871 = vmatprep.mubr.f32.mxu0 0.0
      %3872 = vmatmul.mubr.f32.gmra.mrb[0].mxu0 %v3799
      %v3873 = vpop.f32.mrb[0].mxu0
      %v3874 = vadd.f32 0.0, %v3873
      %v3875 = vpop.f32.mrb[0].mxu0
      %v3876 = vadd.f32 0.0, %v3875
      %3877 = vdwg.mxu0
      %3878 = vmatprep.subr.mxu0 0.0
      %3879 = vmatpush1.msra.mxu0 %v3805
      %3880 = vmatprep.subr.mxu0 0.0
      %3881 = vmatpush1.msra.mxu0 0.0
      %3882 = vmatprep.subr.mxu0 0.0
      %3883 = vmatpush1.msra.mxu0 0.0
      %3884 = vmatprep.subr.mxu0 0.0
      %3885 = vmatpush1.msra.mxu0 0.0
      %3886 = vmatprep.subr.mxu0 0.0
      %3887 = vmatpush1.msra.mxu0 0.0
      %3888 = vmatprep.subr.mxu0 0.0
      %3889 = vmatpush1.msra.mxu0 0.0
      %3890 = vmatprep.subr.mxu0 0.0
      %3891 = vmatpush1.msra.mxu0 0.0
      %3892 = vmatprep.subr.mxu0 0.0
      %3893 = vmatpush1.msra.mxu0 0.0
      %3894 = vmatprep.subr.mxu0 0.0
      %3895 = vmatpush1.msra.mxu0 0.0
      %3896 = vmatprep.subr.mxu0 0.0
      %3897 = vmatpush1.msra.mxu0 0.0
      %3898 = vmatprep.subr.mxu0 0.0
      %3899 = vmatpush1.msra.mxu0 0.0
      %3900 = vmatprep.subr.mxu0 0.0
      %3901 = vmatpush1.msra.mxu0 0.0
      %3902 = vmatprep.subr.mxu0 0.0
      %3903 = vmatpush1.msra.mxu0 0.0
      %3904 = vmatprep.subr.mxu0 0.0
      %3905 = vmatpush1.msra.mxu0 0.0
      %3906 = vmatprep.subr.mxu0 0.0
      %3907 = vmatpush1.msra.mxu0 0.0
      %3908 = vmatprep.subr.mxu0 0.0
      %3909 = vmatpush1.msra.mxu0 0.0
      %3910 = vmatprep.subr.mxu0 0.0
      %3911 = vmatpush1.msra.mxu0 0.0
      %3912 = vmatprep.subr.mxu0 0.0
      %3913 = vmatpush1.msra.mxu0 0.0
      %3914 = vmatprep.subr.mxu0 0.0
      %3915 = vmatpush1.msra.mxu0 0.0
      %3916 = vmatprep.subr.mxu0 0.0
      %3917 = vmatpush1.msra.mxu0 0.0
      %3918 = vmatprep.subr.mxu0 0.0
      %3919 = vmatpush1.msra.mxu0 0.0
      %3920 = vmatprep.subr.mxu0 0.0
      %3921 = vmatpush1.msra.mxu0 0.0
      %3922 = vmatprep.subr.mxu0 0.0
      %3923 = vmatpush1.msra.mxu0 0.0
      %3924 = vmatprep.subr.mxu0 0.0
      %3925 = vmatpush1.msra.mxu0 0.0
      %3926 = vmatprep.subr.mxu0 0.0
      %3927 = vmatpush1.msra.mxu0 0.0
      %3928 = vmatprep.subr.mxu0 0.0
      %3929 = vmatpush1.msra.mxu0 0.0
      %3930 = vmatprep.subr.mxu0 0.0
      %3931 = vmatpush1.msra.mxu0 0.0
      %3932 = vmatprep.subr.mxu0 0.0
      %3933 = vmatpush1.msra.mxu0 0.0
      %3934 = vmatprep.subr.mxu0 0.0
      %3935 = vmatpush1.msra.mxu0 0.0
      %3936 = vmatprep.subr.mxu0 0.0
      %3937 = vmatpush1.msra.mxu0 0.0
      %3938 = vmatprep.subr.mxu0 0.0
      %3939 = vmatpush1.msra.mxu0 0.0
      %3940 = vmatprep.subr.mxu0 0.0
      %3941 = vmatpush1.msra.mxu0 0.0
      %3942 = vmatprep.mubr.f32.mxu0 0.0
      %3943 = vmatmul.mubr.f32.gmra.mrb[0].mxu0 %v3799
      %v3944 = vpop.f32.mrb[0].mxu0
      %v3945 = vadd.f32 0.0, %v3944
      %v3946 = vpop.f32.mrb[0].mxu0
      %3947 = vdwg.mxu0
      %v3948 = vadd.f32 %v3776, %v3874
      %v3949 = vadd.f32 %v3777, %v3876
      %v3950 = vadd.f32 %v3778, %v3945
      %v3951 = vld [vmem:[%s7] sm:$0xff]
      %3953 = vset.pattern.permute.xlu0 0
      %3954 = vperm.xlu0 %3953, %v3951
      %v3955 = vpop.permute.xlu0 %3954
      %v3957 = vadd.f32 %v3948, %v3955
      %v3958 = vadd.f32 %v3949, %v3955
      %v3959 = vadd.f32 %v3950, %v3955
      %v3960 = vmax.f32 %v3957, 0.0
      %v3961 = vmax.f32 %v3958, 0.0
      %v3962 = vmax.f32 %v3959, 0.0
      %3963 = vst [vmem:[#allocation4] sm:$0xff] 0.0
      %3964 = vst [vmem:[#allocation4 + $0x8] sm:$0xff] 0.0
      %3965 = vst [vmem:[#allocation4 + $0x10] sm:$0xff] 0.0
      %3966 = vst.msk [vmem:[#allocation4 + $0x18] sm:$0xff] %vm856, 0.0
      %v3967 = vsel %vm871, %v3960, 0.0
      %v3968 = vsel %vm872, %v3961, 0.0
      %v3969 = vsel %vm873, %v3962, 0.0
      %3973 = vrot.lane.b32.xlu0 %v3967, 69
      %v3974 = vpop.permute.xlu0 %3973
      %3975 = vrot.lane.b32.xlu0 %v3968, 69
      %v3976 = vpop.permute.xlu0 %3975
      %3977 = vrot.lane.b32.xlu0 %v3969, 69
      %v3978 = vpop.permute.xlu0 %3977
      %v3979 = vsel %vm886, %v3974, %v3976
      %v3980 = vsel %vm886, %v3976, %v3978
      %3985 = vst.msk [vmem:[#allocation4] sm:$0xff] %vm893, %v3974
      %3986 = vst [vmem:[#allocation4 + $0x8] sm:$0xff] %v3979
      %3987 = vst [vmem:[#allocation4 + $0x10] sm:$0xff] %v3980
      %3988 = vst.msk [vmem:[#allocation4 + $0x18] sm:$0xff] %vm897, %v3978
      %v3989 = vld [vmem:[#allocation4] sm:$0xff]
      %v3990 = vld [vmem:[#allocation4 + $0x8] sm:$0xff]
      %v3991 = vld [vmem:[#allocation4 + $0x10] sm:$0xff]
      %v3992 = vld [vmem:[%s8] sm:$0xff]
      %s3993 = scalar_lea.vmem %s8, 8
      %v3994 = vld [vmem:[%s3993] sm:$0xff]
      %3998 = vrot.lane.b32.xlu0 %v3989, 103
      %v3999 = vpop.permute.xlu0 %3998
      %4000 = vrot.lane.b32.xlu0 %v3990, 103
      %v4001 = vpop.permute.xlu0 %4000
      %4002 = vrot.lane.b32.xlu0 %v3991, 103
      %v4003 = vpop.permute.xlu0 %4002
      %vm4004 = vcmask 842752
      %v4005 = vsel %vm4004, %v3999, %v4001
      %v4006 = vsel %vm4004, %v4001, %v4003
      %v4011 = vsel %vm925, %v3994, 0
      %4013 = vmatprep.subr.mxu0 %v4006
      %4014 = vmatpush1.msra.mxu0 %v4005
      %4015 = vmatprep.subr.mxu0 0.0
      %4016 = vmatpush1.msra.mxu0 0.0
      %4017 = vmatprep.subr.mxu0 0.0
      %4018 = vmatpush1.msra.mxu0 0.0
      %4019 = vmatprep.subr.mxu0 0.0
      %4020 = vmatpush1.msra.mxu0 0.0
      %4021 = vmatprep.subr.mxu0 0.0
      %4022 = vmatpush1.msra.mxu0 0.0
      %4023 = vmatprep.subr.mxu0 0.0
      %4024 = vmatpush1.msra.mxu0 0.0
      %4025 = vmatprep.subr.mxu0 0.0
      %4026 = vmatpush1.msra.mxu0 0.0
      %4027 = vmatprep.subr.mxu0 0.0
      %4028 = vmatpush1.msra.mxu0 0.0
      %4029 = vmatprep.subr.mxu0 0.0
      %4030 = vmatpush1.msra.mxu0 0.0
      %4031 = vmatprep.subr.mxu0 0.0
      %4032 = vmatpush1.msra.mxu0 0.0
      %4033 = vmatprep.subr.mxu0 0.0
      %4034 = vmatpush1.msra.mxu0 0.0
      %4035 = vmatprep.subr.mxu0 0.0
      %4036 = vmatpush1.msra.mxu0 0.0
      %4037 = vmatprep.subr.mxu0 0.0
      %4038 = vmatpush1.msra.mxu0 0.0
      %4039 = vmatprep.subr.mxu0 0.0
      %4040 = vmatpush1.msra.mxu0 0.0
      %4041 = vmatprep.subr.mxu0 0.0
      %4042 = vmatpush1.msra.mxu0 0.0
      %4043 = vmatprep.subr.mxu0 0.0
      %4044 = vmatpush1.msra.mxu0 0.0
      %4045 = vmatprep.subr.mxu0 0.0
      %4046 = vmatpush1.msra.mxu0 0.0
      %4047 = vmatprep.subr.mxu0 0.0
      %4048 = vmatpush1.msra.mxu0 0.0
      %4049 = vmatprep.subr.mxu0 0.0
      %4050 = vmatpush1.msra.mxu0 0.0
      %4051 = vmatprep.subr.mxu0 0.0
      %4052 = vmatpush1.msra.mxu0 0.0
      %4053 = vmatprep.subr.mxu0 0.0
      %4054 = vmatpush1.msra.mxu0 0.0
      %4055 = vmatprep.subr.mxu0 0.0
      %4056 = vmatpush1.msra.mxu0 0.0
      %4057 = vmatprep.subr.mxu0 0.0
      %4058 = vmatpush1.msra.mxu0 0.0
      %4059 = vmatprep.subr.mxu0 0.0
      %4060 = vmatpush1.msra.mxu0 0.0
      %4061 = vmatprep.subr.mxu0 0.0
      %4062 = vmatpush1.msra.mxu0 0.0
      %4063 = vmatprep.subr.mxu0 0.0
      %4064 = vmatpush1.msra.mxu0 0.0
      %4065 = vmatprep.subr.mxu0 0.0
      %4066 = vmatpush1.msra.mxu0 0.0
      %4067 = vmatprep.subr.mxu0 0.0
      %4068 = vmatpush1.msra.mxu0 0.0
      %4069 = vmatprep.subr.mxu0 0.0
      %4070 = vmatpush1.msra.mxu0 0.0
      %4071 = vmatprep.subr.mxu0 0.0
      %4072 = vmatpush1.msra.mxu0 0.0
      %4073 = vmatprep.subr.mxu0 0.0
      %4074 = vmatpush1.msra.mxu0 0.0
      %4075 = vmatprep.subr.mxu0 0.0
      %4076 = vmatpush1.msra.mxu0 0.0
      %4077 = vmatprep.mubr.f32.mxu0 0.0
      %4078 = vmatmul.mubr.f32.gmra.mrb[0].mxu0 %v4011
      %v4079 = vpop.f32.mrb[0].mxu0
      %v4080 = vadd.f32 0.0, %v4079
      %v4081 = vpop.f32.mrb[0].mxu0
      %v4082 = vadd.f32 0.0, %v4081
      %4083 = vdwg.mxu0
      %4084 = vmatprep.subr.mxu0 0.0
      %4085 = vmatpush1.msra.mxu0 %v4003
      %4086 = vmatprep.subr.mxu0 0.0
      %4087 = vmatpush1.msra.mxu0 0.0
      %4088 = vmatprep.subr.mxu0 0.0
      %4089 = vmatpush1.msra.mxu0 0.0
      %4090 = vmatprep.subr.mxu0 0.0
      %4091 = vmatpush1.msra.mxu0 0.0
      %4092 = vmatprep.subr.mxu0 0.0
      %4093 = vmatpush1.msra.mxu0 0.0
      %4094 = vmatprep.subr.mxu0 0.0
      %4095 = vmatpush1.msra.mxu0 0.0
      %4096 = vmatprep.subr.mxu0 0.0
      %4097 = vmatpush1.msra.mxu0 0.0
      %4098 = vmatprep.subr.mxu0 0.0
      %4099 = vmatpush1.msra.mxu0 0.0
      %4100 = vmatprep.subr.mxu0 0.0
      %4101 = vmatpush1.msra.mxu0 0.0
      %4102 = vmatprep.subr.mxu0 0.0
      %4103 = vmatpush1.msra.mxu0 0.0
      %4104 = vmatprep.subr.mxu0 0.0
      %4105 = vmatpush1.msra.mxu0 0.0
      %4106 = vmatprep.subr.mxu0 0.0
      %4107 = vmatpush1.msra.mxu0 0.0
      %4108 = vmatprep.subr.mxu0 0.0
      %4109 = vmatpush1.msra.mxu0 0.0
      %4110 = vmatprep.subr.mxu0 0.0
      %4111 = vmatpush1.msra.mxu0 0.0
      %4112 = vmatprep.subr.mxu0 0.0
      %4113 = vmatpush1.msra.mxu0 0.0
      %4114 = vmatprep.subr.mxu0 0.0
      %4115 = vmatpush1.msra.mxu0 0.0
      %4116 = vmatprep.subr.mxu0 0.0
      %4117 = vmatpush1.msra.mxu0 0.0
      %4118 = vmatprep.subr.mxu0 0.0
      %4119 = vmatpush1.msra.mxu0 0.0
      %4120 = vmatprep.subr.mxu0 0.0
      %4121 = vmatpush1.msra.mxu0 0.0
      %4122 = vmatprep.subr.mxu0 0.0
      %4123 = vmatpush1.msra.mxu0 0.0
      %4124 = vmatprep.subr.mxu0 0.0
      %4125 = vmatpush1.msra.mxu0 0.0
      %4126 = vmatprep.subr.mxu0 0.0
      %4127 = vmatpush1.msra.mxu0 0.0
      %4128 = vmatprep.subr.mxu0 0.0
      %4129 = vmatpush1.msra.mxu0 0.0
      %4130 = vmatprep.subr.mxu0 0.0
      %4131 = vmatpush1.msra.mxu0 0.0
      %4132 = vmatprep.subr.mxu0 0.0
      %4133 = vmatpush1.msra.mxu0 0.0
      %4134 = vmatprep.subr.mxu0 0.0
      %4135 = vmatpush1.msra.mxu0 0.0
      %4136 = vmatprep.subr.mxu0 0.0
      %4137 = vmatpush1.msra.mxu0 0.0
      %4138 = vmatprep.subr.mxu0 0.0
      %4139 = vmatpush1.msra.mxu0 0.0
      %4140 = vmatprep.subr.mxu0 0.0
      %4141 = vmatpush1.msra.mxu0 0.0
      %4142 = vmatprep.subr.mxu0 0.0
      %4143 = vmatpush1.msra.mxu0 0.0
      %4144 = vmatprep.subr.mxu0 0.0
      %4145 = vmatpush1.msra.mxu0 0.0
      %4146 = vmatprep.subr.mxu0 0.0
      %4147 = vmatpush1.msra.mxu0 0.0
      %4148 = vmatprep.mubr.f32.mxu0 0.0
      %4149 = vmatmul.mubr.f32.gmra.mrb[0].mxu0 %v4011
      %v4150 = vpop.f32.mrb[0].mxu0
      %v4151 = vadd.f32 0.0, %v4150
      %v4152 = vpop.f32.mrb[0].mxu0
      %4153 = vdwg.mxu0
      %4154 = vrot.lane.b32.xlu0 %v3989, 105
      %v4155 = vpop.permute.xlu0 %4154
      %4156 = vrot.lane.b32.xlu0 %v3990, 105
      %v4157 = vpop.permute.xlu0 %4156
      %4158 = vrot.lane.b32.xlu0 %v3991, 105
      %v4159 = vpop.permute.xlu0 %4158
      %vm4160 = vcmask 859136
      %v4161 = vsel %vm4160, %v4155, %v4157
      %v4162 = vsel %vm4160, %v4157, %v4159
      %v4167 = vsel %vm925, %v3992, 0
      %4169 = vmatprep.subr.mxu0 %v4162
      %4170 = vmatpush1.msra.mxu0 %v4161
      %4171 = vmatprep.subr.mxu0 0.0
      %4172 = vmatpush1.msra.mxu0 0.0
      %4173 = vmatprep.subr.mxu0 0.0
      %4174 = vmatpush1.msra.mxu0 0.0
      %4175 = vmatprep.subr.mxu0 0.0
      %4176 = vmatpush1.msra.mxu0 0.0
      %4177 = vmatprep.subr.mxu0 0.0
      %4178 = vmatpush1.msra.mxu0 0.0
      %4179 = vmatprep.subr.mxu0 0.0
      %4180 = vmatpush1.msra.mxu0 0.0
      %4181 = vmatprep.subr.mxu0 0.0
      %4182 = vmatpush1.msra.mxu0 0.0
      %4183 = vmatprep.subr.mxu0 0.0
      %4184 = vmatpush1.msra.mxu0 0.0
      %4185 = vmatprep.subr.mxu0 0.0
      %4186 = vmatpush1.msra.mxu0 0.0
      %4187 = vmatprep.subr.mxu0 0.0
      %4188 = vmatpush1.msra.mxu0 0.0
      %4189 = vmatprep.subr.mxu0 0.0
      %4190 = vmatpush1.msra.mxu0 0.0
      %4191 = vmatprep.subr.mxu0 0.0
      %4192 = vmatpush1.msra.mxu0 0.0
      %4193 = vmatprep.subr.mxu0 0.0
      %4194 = vmatpush1.msra.mxu0 0.0
      %4195 = vmatprep.subr.mxu0 0.0
      %4196 = vmatpush1.msra.mxu0 0.0
      %4197 = vmatprep.subr.mxu0 0.0
      %4198 = vmatpush1.msra.mxu0 0.0
      %4199 = vmatprep.subr.mxu0 0.0
      %4200 = vmatpush1.msra.mxu0 0.0
      %4201 = vmatprep.subr.mxu0 0.0
      %4202 = vmatpush1.msra.mxu0 0.0
      %4203 = vmatprep.subr.mxu0 0.0
      %4204 = vmatpush1.msra.mxu0 0.0
      %4205 = vmatprep.subr.mxu0 0.0
      %4206 = vmatpush1.msra.mxu0 0.0
      %4207 = vmatprep.subr.mxu0 0.0
      %4208 = vmatpush1.msra.mxu0 0.0
      %4209 = vmatprep.subr.mxu0 0.0
      %4210 = vmatpush1.msra.mxu0 0.0
      %4211 = vmatprep.subr.mxu0 0.0
      %4212 = vmatpush1.msra.mxu0 0.0
      %4213 = vmatprep.subr.mxu0 0.0
      %4214 = vmatpush1.msra.mxu0 0.0
      %4215 = vmatprep.subr.mxu0 0.0
      %4216 = vmatpush1.msra.mxu0 0.0
      %4217 = vmatprep.subr.mxu0 0.0
      %4218 = vmatpush1.msra.mxu0 0.0
      %4219 = vmatprep.subr.mxu0 0.0
      %4220 = vmatpush1.msra.mxu0 0.0
      %4221 = vmatprep.subr.mxu0 0.0
      %4222 = vmatpush1.msra.mxu0 0.0
      %4223 = vmatprep.subr.mxu0 0.0
      %4224 = vmatpush1.msra.mxu0 0.0
      %4225 = vmatprep.subr.mxu0 0.0
      %4226 = vmatpush1.msra.mxu0 0.0
      %4227 = vmatprep.subr.mxu0 0.0
      %4228 = vmatpush1.msra.mxu0 0.0
      %4229 = vmatprep.subr.mxu0 0.0
      %4230 = vmatpush1.msra.mxu0 0.0
      %4231 = vmatprep.subr.mxu0 0.0
      %4232 = vmatpush1.msra.mxu0 0.0
      %4233 = vmatprep.mubr.f32.mxu0 0.0
      %4234 = vmatmul.mubr.f32.gmra.mrb[0].mxu0 %v4167
      %v4235 = vpop.f32.mrb[0].mxu0
      %v4236 = vadd.f32 %v4080, %v4235
      %v4237 = vpop.f32.mrb[0].mxu0
      %v4238 = vadd.f32 %v4082, %v4237
      %4239 = vdwg.mxu0
      %4240 = vmatprep.subr.mxu0 0.0
      %4241 = vmatpush1.msra.mxu0 %v4159
      %4242 = vmatprep.subr.mxu0 0.0
      %4243 = vmatpush1.msra.mxu0 0.0
      %4244 = vmatprep.subr.mxu0 0.0
      %4245 = vmatpush1.msra.mxu0 0.0
      %4246 = vmatprep.subr.mxu0 0.0
      %4247 = vmatpush1.msra.mxu0 0.0
      %4248 = vmatprep.subr.mxu0 0.0
      %4249 = vmatpush1.msra.mxu0 0.0
      %4250 = vmatprep.subr.mxu0 0.0
      %4251 = vmatpush1.msra.mxu0 0.0
      %4252 = vmatprep.subr.mxu0 0.0
      %4253 = vmatpush1.msra.mxu0 0.0
      %4254 = vmatprep.subr.mxu0 0.0
      %4255 = vmatpush1.msra.mxu0 0.0
      %4256 = vmatprep.subr.mxu0 0.0
      %4257 = vmatpush1.msra.mxu0 0.0
      %4258 = vmatprep.subr.mxu0 0.0
      %4259 = vmatpush1.msra.mxu0 0.0
      %4260 = vmatprep.subr.mxu0 0.0
      %4261 = vmatpush1.msra.mxu0 0.0
      %4262 = vmatprep.subr.mxu0 0.0
      %4263 = vmatpush1.msra.mxu0 0.0
      %4264 = vmatprep.subr.mxu0 0.0
      %4265 = vmatpush1.msra.mxu0 0.0
      %4266 = vmatprep.subr.mxu0 0.0
      %4267 = vmatpush1.msra.mxu0 0.0
      %4268 = vmatprep.subr.mxu0 0.0
      %4269 = vmatpush1.msra.mxu0 0.0
      %4270 = vmatprep.subr.mxu0 0.0
      %4271 = vmatpush1.msra.mxu0 0.0
      %4272 = vmatprep.subr.mxu0 0.0
      %4273 = vmatpush1.msra.mxu0 0.0
      %4274 = vmatprep.subr.mxu0 0.0
      %4275 = vmatpush1.msra.mxu0 0.0
      %4276 = vmatprep.subr.mxu0 0.0
      %4277 = vmatpush1.msra.mxu0 0.0
      %4278 = vmatprep.subr.mxu0 0.0
      %4279 = vmatpush1.msra.mxu0 0.0
      %4280 = vmatprep.subr.mxu0 0.0
      %4281 = vmatpush1.msra.mxu0 0.0
      %4282 = vmatprep.subr.mxu0 0.0
      %4283 = vmatpush1.msra.mxu0 0.0
      %4284 = vmatprep.subr.mxu0 0.0
      %4285 = vmatpush1.msra.mxu0 0.0
      %4286 = vmatprep.subr.mxu0 0.0
      %4287 = vmatpush1.msra.mxu0 0.0
      %4288 = vmatprep.subr.mxu0 0.0
      %4289 = vmatpush1.msra.mxu0 0.0
      %4290 = vmatprep.subr.mxu0 0.0
      %4291 = vmatpush1.msra.mxu0 0.0
      %4292 = vmatprep.subr.mxu0 0.0
      %4293 = vmatpush1.msra.mxu0 0.0
      %4294 = vmatprep.subr.mxu0 0.0
      %4295 = vmatpush1.msra.mxu0 0.0
      %4296 = vmatprep.subr.mxu0 0.0
      %4297 = vmatpush1.msra.mxu0 0.0
      %4298 = vmatprep.subr.mxu0 0.0
      %4299 = vmatpush1.msra.mxu0 0.0
      %4300 = vmatprep.subr.mxu0 0.0
      %4301 = vmatpush1.msra.mxu0 0.0
      %4302 = vmatprep.subr.mxu0 0.0
      %4303 = vmatpush1.msra.mxu0 0.0
      %4304 = vmatprep.mubr.f32.mxu0 0.0
      %4305 = vmatmul.mubr.f32.gmra.mrb[0].mxu0 %v4167
      %v4306 = vpop.f32.mrb[0].mxu0
      %v4307 = vadd.f32 %v4151, %v4306
      %v4308 = vpop.f32.mrb[0].mxu0
      %4309 = vdwg.mxu0
      %s4310 = scalar_lea.vmem %s8, 16
      %v4311 = vld [vmem:[%s4310] sm:$0xff]
      %4312 = vrot.lane.b32.xlu0 %v3989, 101
      %v4313 = vpop.permute.xlu0 %4312
      %4314 = vrot.lane.b32.xlu0 %v3990, 101
      %v4315 = vpop.permute.xlu0 %4314
      %4316 = vrot.lane.b32.xlu0 %v3991, 101
      %v4317 = vpop.permute.xlu0 %4316
      %vm4318 = vcmask 826368
      %v4319 = vsel %vm4318, %v4313, %v4315
      %v4320 = vsel %vm4318, %v4315, %v4317
      %v4325 = vsel %vm925, %v4311, 0
      %4327 = vmatprep.subr.mxu0 %v4320
      %4328 = vmatpush1.msra.mxu0 %v4319
      %4329 = vmatprep.subr.mxu0 0.0
      %4330 = vmatpush1.msra.mxu0 0.0
      %4331 = vmatprep.subr.mxu0 0.0
      %4332 = vmatpush1.msra.mxu0 0.0
      %4333 = vmatprep.subr.mxu0 0.0
      %4334 = vmatpush1.msra.mxu0 0.0
      %4335 = vmatprep.subr.mxu0 0.0
      %4336 = vmatpush1.msra.mxu0 0.0
      %4337 = vmatprep.subr.mxu0 0.0
      %4338 = vmatpush1.msra.mxu0 0.0
      %4339 = vmatprep.subr.mxu0 0.0
      %4340 = vmatpush1.msra.mxu0 0.0
      %4341 = vmatprep.subr.mxu0 0.0
      %4342 = vmatpush1.msra.mxu0 0.0
      %4343 = vmatprep.subr.mxu0 0.0
      %4344 = vmatpush1.msra.mxu0 0.0
      %4345 = vmatprep.subr.mxu0 0.0
      %4346 = vmatpush1.msra.mxu0 0.0
      %4347 = vmatprep.subr.mxu0 0.0
      %4348 = vmatpush1.msra.mxu0 0.0
      %4349 = vmatprep.subr.mxu0 0.0
      %4350 = vmatpush1.msra.mxu0 0.0
      %4351 = vmatprep.subr.mxu0 0.0
      %4352 = vmatpush1.msra.mxu0 0.0
      %4353 = vmatprep.subr.mxu0 0.0
      %4354 = vmatpush1.msra.mxu0 0.0
      %4355 = vmatprep.subr.mxu0 0.0
      %4356 = vmatpush1.msra.mxu0 0.0
      %4357 = vmatprep.subr.mxu0 0.0
      %4358 = vmatpush1.msra.mxu0 0.0
      %4359 = vmatprep.subr.mxu0 0.0
      %4360 = vmatpush1.msra.mxu0 0.0
      %4361 = vmatprep.subr.mxu0 0.0
      %4362 = vmatpush1.msra.mxu0 0.0
      %4363 = vmatprep.subr.mxu0 0.0
      %4364 = vmatpush1.msra.mxu0 0.0
      %4365 = vmatprep.subr.mxu0 0.0
      %4366 = vmatpush1.msra.mxu0 0.0
      %4367 = vmatprep.subr.mxu0 0.0
      %4368 = vmatpush1.msra.mxu0 0.0
      %4369 = vmatprep.subr.mxu0 0.0
      %4370 = vmatpush1.msra.mxu0 0.0
      %4371 = vmatprep.subr.mxu0 0.0
      %4372 = vmatpush1.msra.mxu0 0.0
      %4373 = vmatprep.subr.mxu0 0.0
      %4374 = vmatpush1.msra.mxu0 0.0
      %4375 = vmatprep.subr.mxu0 0.0
      %4376 = vmatpush1.msra.mxu0 0.0
      %4377 = vmatprep.subr.mxu0 0.0
      %4378 = vmatpush1.msra.mxu0 0.0
      %4379 = vmatprep.subr.mxu0 0.0
      %4380 = vmatpush1.msra.mxu0 0.0
      %4381 = vmatprep.subr.mxu0 0.0
      %4382 = vmatpush1.msra.mxu0 0.0
      %4383 = vmatprep.subr.mxu0 0.0
      %4384 = vmatpush1.msra.mxu0 0.0
      %4385 = vmatprep.subr.mxu0 0.0
      %4386 = vmatpush1.msra.mxu0 0.0
      %4387 = vmatprep.subr.mxu0 0.0
      %4388 = vmatpush1.msra.mxu0 0.0
      %4389 = vmatprep.subr.mxu0 0.0
      %4390 = vmatpush1.msra.mxu0 0.0
      %4391 = vmatprep.mubr.f32.mxu0 0.0
      %4392 = vmatmul.mubr.f32.gmra.mrb[0].mxu0 %v4325
      %v4393 = vpop.f32.mrb[0].mxu0
      %v4394 = vadd.f32 0.0, %v4393
      %v4395 = vpop.f32.mrb[0].mxu0
      %v4396 = vadd.f32 0.0, %v4395
      %4397 = vdwg.mxu0
      %4398 = vmatprep.subr.mxu0 0.0
      %4399 = vmatpush1.msra.mxu0 %v4317
      %4400 = vmatprep.subr.mxu0 0.0
      %4401 = vmatpush1.msra.mxu0 0.0
      %4402 = vmatprep.subr.mxu0 0.0
      %4403 = vmatpush1.msra.mxu0 0.0
      %4404 = vmatprep.subr.mxu0 0.0
      %4405 = vmatpush1.msra.mxu0 0.0
      %4406 = vmatprep.subr.mxu0 0.0
      %4407 = vmatpush1.msra.mxu0 0.0
      %4408 = vmatprep.subr.mxu0 0.0
      %4409 = vmatpush1.msra.mxu0 0.0
      %4410 = vmatprep.subr.mxu0 0.0
      %4411 = vmatpush1.msra.mxu0 0.0
      %4412 = vmatprep.subr.mxu0 0.0
      %4413 = vmatpush1.msra.mxu0 0.0
      %4414 = vmatprep.subr.mxu0 0.0
      %4415 = vmatpush1.msra.mxu0 0.0
      %4416 = vmatprep.subr.mxu0 0.0
      %4417 = vmatpush1.msra.mxu0 0.0
      %4418 = vmatprep.subr.mxu0 0.0
      %4419 = vmatpush1.msra.mxu0 0.0
      %4420 = vmatprep.subr.mxu0 0.0
      %4421 = vmatpush1.msra.mxu0 0.0
      %4422 = vmatprep.subr.mxu0 0.0
      %4423 = vmatpush1.msra.mxu0 0.0
      %4424 = vmatprep.subr.mxu0 0.0
      %4425 = vmatpush1.msra.mxu0 0.0
      %4426 = vmatprep.subr.mxu0 0.0
      %4427 = vmatpush1.msra.mxu0 0.0
      %4428 = vmatprep.subr.mxu0 0.0
      %4429 = vmatpush1.msra.mxu0 0.0
      %4430 = vmatprep.subr.mxu0 0.0
      %4431 = vmatpush1.msra.mxu0 0.0
      %4432 = vmatprep.subr.mxu0 0.0
      %4433 = vmatpush1.msra.mxu0 0.0
      %4434 = vmatprep.subr.mxu0 0.0
      %4435 = vmatpush1.msra.mxu0 0.0
      %4436 = vmatprep.subr.mxu0 0.0
      %4437 = vmatpush1.msra.mxu0 0.0
      %4438 = vmatprep.subr.mxu0 0.0
      %4439 = vmatpush1.msra.mxu0 0.0
      %4440 = vmatprep.subr.mxu0 0.0
      %4441 = vmatpush1.msra.mxu0 0.0
      %4442 = vmatprep.subr.mxu0 0.0
      %4443 = vmatpush1.msra.mxu0 0.0
      %4444 = vmatprep.subr.mxu0 0.0
      %4445 = vmatpush1.msra.mxu0 0.0
      %4446 = vmatprep.subr.mxu0 0.0
      %4447 = vmatpush1.msra.mxu0 0.0
      %4448 = vmatprep.subr.mxu0 0.0
      %4449 = vmatpush1.msra.mxu0 0.0
      %4450 = vmatprep.subr.mxu0 0.0
      %4451 = vmatpush1.msra.mxu0 0.0
      %4452 = vmatprep.subr.mxu0 0.0
      %4453 = vmatpush1.msra.mxu0 0.0
      %4454 = vmatprep.subr.mxu0 0.0
      %4455 = vmatpush1.msra.mxu0 0.0
      %4456 = vmatprep.subr.mxu0 0.0
      %4457 = vmatpush1.msra.mxu0 0.0
      %4458 = vmatprep.subr.mxu0 0.0
      %4459 = vmatpush1.msra.mxu0 0.0
      %4460 = vmatprep.subr.mxu0 0.0
      %4461 = vmatpush1.msra.mxu0 0.0
      %4462 = vmatprep.mubr.f32.mxu0 0.0
      %4463 = vmatmul.mubr.f32.gmra.mrb[0].mxu0 %v4325
      %v4464 = vpop.f32.mrb[0].mxu0
      %v4465 = vadd.f32 0.0, %v4464
      %v4466 = vpop.f32.mrb[0].mxu0
      %4467 = vdwg.mxu0
      %v4468 = vadd.f32 %v4236, %v4394
      %v4469 = vadd.f32 %v4238, %v4396
      %v4470 = vadd.f32 %v4307, %v4465
      %v4471 = vld [vmem:[#allocation4] sm:$0xff]
      %v4472 = vld [vmem:[#allocation4 + $0x8] sm:$0xff]
      %v4473 = vld [vmem:[#allocation4 + $0x10] sm:$0xff]
      %v4474 = vld [vmem:[#allocation4 + $0x18] sm:$0xff]
      %s4475 = scalar_lea.vmem %s8, 24
      %v4476 = vld [vmem:[%s4475] sm:$0xff]
      %4481 = vrot.lane.b32.xlu0 %v4471, 61
      %v4482 = vpop.permute.xlu0 %4481
      %4483 = vrot.lane.b32.xlu0 %v4472, 61
      %v4484 = vpop.permute.xlu0 %4483
      %4485 = vrot.lane.b32.xlu0 %v4473, 61
      %v4486 = vpop.permute.xlu0 %4485
      %4487 = vrot.lane.b32.xlu0 %v4474, 61
      %v4488 = vpop.permute.xlu0 %4487
      %vm4489 = vcmask 498688
      %v4490 = vsel %vm4489, %v4482, %v4484
      %v4491 = vsel %vm4489, %v4484, %v4486
      %v4492 = vsel %vm4489, %v4486, %v4488
      %v4497 = vsel %vm925, %v4476, 0
      %4499 = vmatprep.subr.mxu0 %v4491
      %4500 = vmatpush1.msra.mxu0 %v4490
      %4501 = vmatprep.subr.mxu0 0.0
      %4502 = vmatpush1.msra.mxu0 0.0
      %4503 = vmatprep.subr.mxu0 0.0
      %4504 = vmatpush1.msra.mxu0 0.0
      %4505 = vmatprep.subr.mxu0 0.0
      %4506 = vmatpush1.msra.mxu0 0.0
      %4507 = vmatprep.subr.mxu0 0.0
      %4508 = vmatpush1.msra.mxu0 0.0
      %4509 = vmatprep.subr.mxu0 0.0
      %4510 = vmatpush1.msra.mxu0 0.0
      %4511 = vmatprep.subr.mxu0 0.0
      %4512 = vmatpush1.msra.mxu0 0.0
      %4513 = vmatprep.subr.mxu0 0.0
      %4514 = vmatpush1.msra.mxu0 0.0
      %4515 = vmatprep.subr.mxu0 0.0
      %4516 = vmatpush1.msra.mxu0 0.0
      %4517 = vmatprep.subr.mxu0 0.0
      %4518 = vmatpush1.msra.mxu0 0.0
      %4519 = vmatprep.subr.mxu0 0.0
      %4520 = vmatpush1.msra.mxu0 0.0
      %4521 = vmatprep.subr.mxu0 0.0
      %4522 = vmatpush1.msra.mxu0 0.0
      %4523 = vmatprep.subr.mxu0 0.0
      %4524 = vmatpush1.msra.mxu0 0.0
      %4525 = vmatprep.subr.mxu0 0.0
      %4526 = vmatpush1.msra.mxu0 0.0
      %4527 = vmatprep.subr.mxu0 0.0
      %4528 = vmatpush1.msra.mxu0 0.0
      %4529 = vmatprep.subr.mxu0 0.0
      %4530 = vmatpush1.msra.mxu0 0.0
      %4531 = vmatprep.subr.mxu0 0.0
      %4532 = vmatpush1.msra.mxu0 0.0
      %4533 = vmatprep.subr.mxu0 0.0
      %4534 = vmatpush1.msra.mxu0 0.0
      %4535 = vmatprep.subr.mxu0 0.0
      %4536 = vmatpush1.msra.mxu0 0.0
      %4537 = vmatprep.subr.mxu0 0.0
      %4538 = vmatpush1.msra.mxu0 0.0
      %4539 = vmatprep.subr.mxu0 0.0
      %4540 = vmatpush1.msra.mxu0 0.0
      %4541 = vmatprep.subr.mxu0 0.0
      %4542 = vmatpush1.msra.mxu0 0.0
      %4543 = vmatprep.subr.mxu0 0.0
      %4544 = vmatpush1.msra.mxu0 0.0
      %4545 = vmatprep.subr.mxu0 0.0
      %4546 = vmatpush1.msra.mxu0 0.0
      %4547 = vmatprep.subr.mxu0 0.0
      %4548 = vmatpush1.msra.mxu0 0.0
      %4549 = vmatprep.subr.mxu0 0.0
      %4550 = vmatpush1.msra.mxu0 0.0
      %4551 = vmatprep.subr.mxu0 0.0
      %4552 = vmatpush1.msra.mxu0 0.0
      %4553 = vmatprep.subr.mxu0 0.0
      %4554 = vmatpush1.msra.mxu0 0.0
      %4555 = vmatprep.subr.mxu0 0.0
      %4556 = vmatpush1.msra.mxu0 0.0
      %4557 = vmatprep.subr.mxu0 0.0
      %4558 = vmatpush1.msra.mxu0 0.0
      %4559 = vmatprep.subr.mxu0 0.0
      %4560 = vmatpush1.msra.mxu0 0.0
      %4561 = vmatprep.subr.mxu0 0.0
      %4562 = vmatpush1.msra.mxu0 0.0
      %4563 = vmatprep.mubr.f32.mxu0 0.0
      %4564 = vmatmul.mubr.f32.gmra.mrb[0].mxu0 %v4497
      %v4565 = vpop.f32.mrb[0].mxu0
      %v4566 = vadd.f32 0.0, %v4565
      %v4567 = vpop.f32.mrb[0].mxu0
      %v4568 = vadd.f32 0.0, %v4567
      %4569 = vdwg.mxu0
      %4570 = vmatprep.subr.mxu0 0.0
      %4571 = vmatpush1.msra.mxu0 %v4492
      %4572 = vmatprep.subr.mxu0 0.0
      %4573 = vmatpush1.msra.mxu0 0.0
      %4574 = vmatprep.subr.mxu0 0.0
      %4575 = vmatpush1.msra.mxu0 0.0
      %4576 = vmatprep.subr.mxu0 0.0
      %4577 = vmatpush1.msra.mxu0 0.0
      %4578 = vmatprep.subr.mxu0 0.0
      %4579 = vmatpush1.msra.mxu0 0.0
      %4580 = vmatprep.subr.mxu0 0.0
      %4581 = vmatpush1.msra.mxu0 0.0
      %4582 = vmatprep.subr.mxu0 0.0
      %4583 = vmatpush1.msra.mxu0 0.0
      %4584 = vmatprep.subr.mxu0 0.0
      %4585 = vmatpush1.msra.mxu0 0.0
      %4586 = vmatprep.subr.mxu0 0.0
      %4587 = vmatpush1.msra.mxu0 0.0
      %4588 = vmatprep.subr.mxu0 0.0
      %4589 = vmatpush1.msra.mxu0 0.0
      %4590 = vmatprep.subr.mxu0 0.0
      %4591 = vmatpush1.msra.mxu0 0.0
      %4592 = vmatprep.subr.mxu0 0.0
      %4593 = vmatpush1.msra.mxu0 0.0
      %4594 = vmatprep.subr.mxu0 0.0
      %4595 = vmatpush1.msra.mxu0 0.0
      %4596 = vmatprep.subr.mxu0 0.0
      %4597 = vmatpush1.msra.mxu0 0.0
      %4598 = vmatprep.subr.mxu0 0.0
      %4599 = vmatpush1.msra.mxu0 0.0
      %4600 = vmatprep.subr.mxu0 0.0
      %4601 = vmatpush1.msra.mxu0 0.0
      %4602 = vmatprep.subr.mxu0 0.0
      %4603 = vmatpush1.msra.mxu0 0.0
      %4604 = vmatprep.subr.mxu0 0.0
      %4605 = vmatpush1.msra.mxu0 0.0
      %4606 = vmatprep.subr.mxu0 0.0
      %4607 = vmatpush1.msra.mxu0 0.0
      %4608 = vmatprep.subr.mxu0 0.0
      %4609 = vmatpush1.msra.mxu0 0.0
      %4610 = vmatprep.subr.mxu0 0.0
      %4611 = vmatpush1.msra.mxu0 0.0
      %4612 = vmatprep.subr.mxu0 0.0
      %4613 = vmatpush1.msra.mxu0 0.0
      %4614 = vmatprep.subr.mxu0 0.0
      %4615 = vmatpush1.msra.mxu0 0.0
      %4616 = vmatprep.subr.mxu0 0.0
      %4617 = vmatpush1.msra.mxu0 0.0
      %4618 = vmatprep.subr.mxu0 0.0
      %4619 = vmatpush1.msra.mxu0 0.0
      %4620 = vmatprep.subr.mxu0 0.0
      %4621 = vmatpush1.msra.mxu0 0.0
      %4622 = vmatprep.subr.mxu0 0.0
      %4623 = vmatpush1.msra.mxu0 0.0
      %4624 = vmatprep.subr.mxu0 0.0
      %4625 = vmatpush1.msra.mxu0 0.0
      %4626 = vmatprep.subr.mxu0 0.0
      %4627 = vmatpush1.msra.mxu0 0.0
      %4628 = vmatprep.subr.mxu0 0.0
      %4629 = vmatpush1.msra.mxu0 0.0
      %4630 = vmatprep.subr.mxu0 0.0
      %4631 = vmatpush1.msra.mxu0 0.0
      %4632 = vmatprep.subr.mxu0 0.0
      %4633 = vmatpush1.msra.mxu0 0.0
      %4634 = vmatprep.mubr.f32.mxu0 0.0
      %4635 = vmatmul.mubr.f32.gmra.mrb[0].mxu0 %v4497
      %v4636 = vpop.f32.mrb[0].mxu0
      %v4637 = vadd.f32 0.0, %v4636
      %v4638 = vpop.f32.mrb[0].mxu0
      %4639 = vdwg.mxu0
      %v4640 = vadd.f32 %v4468, %v4566
      %v4641 = vadd.f32 %v4469, %v4568
      %v4642 = vadd.f32 %v4470, %v4637
      %s4643 = scalar_lea.vmem %s8, 32
      %v4644 = vld [vmem:[%s4643] sm:$0xff]
      %4645 = vrot.lane.b32.xlu0 %v4471, 59
      %v4646 = vpop.permute.xlu0 %4645
      %4647 = vrot.lane.b32.xlu0 %v4472, 59
      %v4648 = vpop.permute.xlu0 %4647
      %4649 = vrot.lane.b32.xlu0 %v4473, 59
      %v4650 = vpop.permute.xlu0 %4649
      %4651 = vrot.lane.b32.xlu0 %v4474, 59
      %v4652 = vpop.permute.xlu0 %4651
      %v4653 = vsel %vm1567, %v4646, %v4648
      %v4654 = vsel %vm1567, %v4648, %v4650
      %v4655 = vsel %vm1567, %v4650, %v4652
      %v4660 = vsel %vm925, %v4644, 0
      %4662 = vmatprep.subr.mxu0 %v4654
      %4663 = vmatpush1.msra.mxu0 %v4653
      %4664 = vmatprep.subr.mxu0 0.0
      %4665 = vmatpush1.msra.mxu0 0.0
      %4666 = vmatprep.subr.mxu0 0.0
      %4667 = vmatpush1.msra.mxu0 0.0
      %4668 = vmatprep.subr.mxu0 0.0
      %4669 = vmatpush1.msra.mxu0 0.0
      %4670 = vmatprep.subr.mxu0 0.0
      %4671 = vmatpush1.msra.mxu0 0.0
      %4672 = vmatprep.subr.mxu0 0.0
      %4673 = vmatpush1.msra.mxu0 0.0
      %4674 = vmatprep.subr.mxu0 0.0
      %4675 = vmatpush1.msra.mxu0 0.0
      %4676 = vmatprep.subr.mxu0 0.0
      %4677 = vmatpush1.msra.mxu0 0.0
      %4678 = vmatprep.subr.mxu0 0.0
      %4679 = vmatpush1.msra.mxu0 0.0
      %4680 = vmatprep.subr.mxu0 0.0
      %4681 = vmatpush1.msra.mxu0 0.0
      %4682 = vmatprep.subr.mxu0 0.0
      %4683 = vmatpush1.msra.mxu0 0.0
      %4684 = vmatprep.subr.mxu0 0.0
      %4685 = vmatpush1.msra.mxu0 0.0
      %4686 = vmatprep.subr.mxu0 0.0
      %4687 = vmatpush1.msra.mxu0 0.0
      %4688 = vmatprep.subr.mxu0 0.0
      %4689 = vmatpush1.msra.mxu0 0.0
      %4690 = vmatprep.subr.mxu0 0.0
      %4691 = vmatpush1.msra.mxu0 0.0
      %4692 = vmatprep.subr.mxu0 0.0
      %4693 = vmatpush1.msra.mxu0 0.0
      %4694 = vmatprep.subr.mxu0 0.0
      %4695 = vmatpush1.msra.mxu0 0.0
      %4696 = vmatprep.subr.mxu0 0.0
      %4697 = vmatpush1.msra.mxu0 0.0
      %4698 = vmatprep.subr.mxu0 0.0
      %4699 = vmatpush1.msra.mxu0 0.0
      %4700 = vmatprep.subr.mxu0 0.0
      %4701 = vmatpush1.msra.mxu0 0.0
      %4702 = vmatprep.subr.mxu0 0.0
      %4703 = vmatpush1.msra.mxu0 0.0
      %4704 = vmatprep.subr.mxu0 0.0
      %4705 = vmatpush1.msra.mxu0 0.0
      %4706 = vmatprep.subr.mxu0 0.0
      %4707 = vmatpush1.msra.mxu0 0.0
      %4708 = vmatprep.subr.mxu0 0.0
      %4709 = vmatpush1.msra.mxu0 0.0
      %4710 = vmatprep.subr.mxu0 0.0
      %4711 = vmatpush1.msra.mxu0 0.0
      %4712 = vmatprep.subr.mxu0 0.0
      %4713 = vmatpush1.msra.mxu0 0.0
      %4714 = vmatprep.subr.mxu0 0.0
      %4715 = vmatpush1.msra.mxu0 0.0
      %4716 = vmatprep.subr.mxu0 0.0
      %4717 = vmatpush1.msra.mxu0 0.0
      %4718 = vmatprep.subr.mxu0 0.0
      %4719 = vmatpush1.msra.mxu0 0.0
      %4720 = vmatprep.subr.mxu0 0.0
      %4721 = vmatpush1.msra.mxu0 0.0
      %4722 = vmatprep.subr.mxu0 0.0
      %4723 = vmatpush1.msra.mxu0 0.0
      %4724 = vmatprep.subr.mxu0 0.0
      %4725 = vmatpush1.msra.mxu0 0.0
      %4726 = vmatprep.mubr.f32.mxu0 0.0
      %4727 = vmatmul.mubr.f32.gmra.mrb[0].mxu0 %v4660
      %v4728 = vpop.f32.mrb[0].mxu0
      %v4729 = vadd.f32 0.0, %v4728
      %v4730 = vpop.f32.mrb[0].mxu0
      %v4731 = vadd.f32 0.0, %v4730
      %4732 = vdwg.mxu0
      %4733 = vmatprep.subr.mxu0 0.0
      %4734 = vmatpush1.msra.mxu0 %v4655
      %4735 = vmatprep.subr.mxu0 0.0
      %4736 = vmatpush1.msra.mxu0 0.0
      %4737 = vmatprep.subr.mxu0 0.0
      %4738 = vmatpush1.msra.mxu0 0.0
      %4739 = vmatprep.subr.mxu0 0.0
      %4740 = vmatpush1.msra.mxu0 0.0
      %4741 = vmatprep.subr.mxu0 0.0
      %4742 = vmatpush1.msra.mxu0 0.0
      %4743 = vmatprep.subr.mxu0 0.0
      %4744 = vmatpush1.msra.mxu0 0.0
      %4745 = vmatprep.subr.mxu0 0.0
      %4746 = vmatpush1.msra.mxu0 0.0
      %4747 = vmatprep.subr.mxu0 0.0
      %4748 = vmatpush1.msra.mxu0 0.0
      %4749 = vmatprep.subr.mxu0 0.0
      %4750 = vmatpush1.msra.mxu0 0.0
      %4751 = vmatprep.subr.mxu0 0.0
      %4752 = vmatpush1.msra.mxu0 0.0
      %4753 = vmatprep.subr.mxu0 0.0
      %4754 = vmatpush1.msra.mxu0 0.0
      %4755 = vmatprep.subr.mxu0 0.0
      %4756 = vmatpush1.msra.mxu0 0.0
      %4757 = vmatprep.subr.mxu0 0.0
      %4758 = vmatpush1.msra.mxu0 0.0
      %4759 = vmatprep.subr.mxu0 0.0
      %4760 = vmatpush1.msra.mxu0 0.0
      %4761 = vmatprep.subr.mxu0 0.0
      %4762 = vmatpush1.msra.mxu0 0.0
      %4763 = vmatprep.subr.mxu0 0.0
      %4764 = vmatpush1.msra.mxu0 0.0
      %4765 = vmatprep.subr.mxu0 0.0
      %4766 = vmatpush1.msra.mxu0 0.0
      %4767 = vmatprep.subr.mxu0 0.0
      %4768 = vmatpush1.msra.mxu0 0.0
      %4769 = vmatprep.subr.mxu0 0.0
      %4770 = vmatpush1.msra.mxu0 0.0
      %4771 = vmatprep.subr.mxu0 0.0
      %4772 = vmatpush1.msra.mxu0 0.0
      %4773 = vmatprep.subr.mxu0 0.0
      %4774 = vmatpush1.msra.mxu0 0.0
      %4775 = vmatprep.subr.mxu0 0.0
      %4776 = vmatpush1.msra.mxu0 0.0
      %4777 = vmatprep.subr.mxu0 0.0
      %4778 = vmatpush1.msra.mxu0 0.0
      %4779 = vmatprep.subr.mxu0 0.0
      %4780 = vmatpush1.msra.mxu0 0.0
      %4781 = vmatprep.subr.mxu0 0.0
      %4782 = vmatpush1.msra.mxu0 0.0
      %4783 = vmatprep.subr.mxu0 0.0
      %4784 = vmatpush1.msra.mxu0 0.0
      %4785 = vmatprep.subr.mxu0 0.0
      %4786 = vmatpush1.msra.mxu0 0.0
      %4787 = vmatprep.subr.mxu0 0.0
      %4788 = vmatpush1.msra.mxu0 0.0
      %4789 = vmatprep.subr.mxu0 0.0
      %4790 = vmatpush1.msra.mxu0 0.0
      %4791 = vmatprep.subr.mxu0 0.0
      %4792 = vmatpush1.msra.mxu0 0.0
      %4793 = vmatprep.subr.mxu0 0.0
      %4794 = vmatpush1.msra.mxu0 0.0
      %4795 = vmatprep.subr.mxu0 0.0
      %4796 = vmatpush1.msra.mxu0 0.0
      %4797 = vmatprep.mubr.f32.mxu0 0.0
      %4798 = vmatmul.mubr.f32.gmra.mrb[0].mxu0 %v4660
      %v4799 = vpop.f32.mrb[0].mxu0
      %v4800 = vadd.f32 0.0, %v4799
      %v4801 = vpop.f32.mrb[0].mxu0
      %4802 = vdwg.mxu0
      %v4803 = vadd.f32 %v4640, %v4729
      %v4804 = vadd.f32 %v4641, %v4731
      %v4805 = vadd.f32 %v4642, %v4800
      %s4806 = scalar_lea.vmem %s8, 40
      %v4807 = vld [vmem:[%s4806] sm:$0xff]
      %4808 = vrot.lane.b32.xlu0 %v4471, 57
      %v4809 = vpop.permute.xlu0 %4808
      %4810 = vrot.lane.b32.xlu0 %v4472, 57
      %v4811 = vpop.permute.xlu0 %4810
      %4812 = vrot.lane.b32.xlu0 %v4473, 57
      %v4813 = vpop.permute.xlu0 %4812
      %4814 = vrot.lane.b32.xlu0 %v4474, 57
      %v4815 = vpop.permute.xlu0 %4814
      %vm4816 = vcmask 465920
      %v4817 = vsel %vm4816, %v4809, %v4811
      %v4818 = vsel %vm4816, %v4811, %v4813
      %v4819 = vsel %vm4816, %v4813, %v4815
      %v4824 = vsel %vm925, %v4807, 0
      %4826 = vmatprep.subr.mxu0 %v4818
      %4827 = vmatpush1.msra.mxu0 %v4817
      %4828 = vmatprep.subr.mxu0 0.0
      %4829 = vmatpush1.msra.mxu0 0.0
      %4830 = vmatprep.subr.mxu0 0.0
      %4831 = vmatpush1.msra.mxu0 0.0
      %4832 = vmatprep.subr.mxu0 0.0
      %4833 = vmatpush1.msra.mxu0 0.0
      %4834 = vmatprep.subr.mxu0 0.0
      %4835 = vmatpush1.msra.mxu0 0.0
      %4836 = vmatprep.subr.mxu0 0.0
      %4837 = vmatpush1.msra.mxu0 0.0
      %4838 = vmatprep.subr.mxu0 0.0
      %4839 = vmatpush1.msra.mxu0 0.0
      %4840 = vmatprep.subr.mxu0 0.0
      %4841 = vmatpush1.msra.mxu0 0.0
      %4842 = vmatprep.subr.mxu0 0.0
      %4843 = vmatpush1.msra.mxu0 0.0
      %4844 = vmatprep.subr.mxu0 0.0
      %4845 = vmatpush1.msra.mxu0 0.0
      %4846 = vmatprep.subr.mxu0 0.0
      %4847 = vmatpush1.msra.mxu0 0.0
      %4848 = vmatprep.subr.mxu0 0.0
      %4849 = vmatpush1.msra.mxu0 0.0
      %4850 = vmatprep.subr.mxu0 0.0
      %4851 = vmatpush1.msra.mxu0 0.0
      %4852 = vmatprep.subr.mxu0 0.0
      %4853 = vmatpush1.msra.mxu0 0.0
      %4854 = vmatprep.subr.mxu0 0.0
      %4855 = vmatpush1.msra.mxu0 0.0
      %4856 = vmatprep.subr.mxu0 0.0
      %4857 = vmatpush1.msra.mxu0 0.0
      %4858 = vmatprep.subr.mxu0 0.0
      %4859 = vmatpush1.msra.mxu0 0.0
      %4860 = vmatprep.subr.mxu0 0.0
      %4861 = vmatpush1.msra.mxu0 0.0
      %4862 = vmatprep.subr.mxu0 0.0
      %4863 = vmatpush1.msra.mxu0 0.0
      %4864 = vmatprep.subr.mxu0 0.0
      %4865 = vmatpush1.msra.mxu0 0.0
      %4866 = vmatprep.subr.mxu0 0.0
      %4867 = vmatpush1.msra.mxu0 0.0
      %4868 = vmatprep.subr.mxu0 0.0
      %4869 = vmatpush1.msra.mxu0 0.0
      %4870 = vmatprep.subr.mxu0 0.0
      %4871 = vmatpush1.msra.mxu0 0.0
      %4872 = vmatprep.subr.mxu0 0.0
      %4873 = vmatpush1.msra.mxu0 0.0
      %4874 = vmatprep.subr.mxu0 0.0
      %4875 = vmatpush1.msra.mxu0 0.0
      %4876 = vmatprep.subr.mxu0 0.0
      %4877 = vmatpush1.msra.mxu0 0.0
      %4878 = vmatprep.subr.mxu0 0.0
      %4879 = vmatpush1.msra.mxu0 0.0
      %4880 = vmatprep.subr.mxu0 0.0
      %4881 = vmatpush1.msra.mxu0 0.0
      %4882 = vmatprep.subr.mxu0 0.0
      %4883 = vmatpush1.msra.mxu0 0.0
      %4884 = vmatprep.subr.mxu0 0.0
      %4885 = vmatpush1.msra.mxu0 0.0
      %4886 = vmatprep.subr.mxu0 0.0
      %4887 = vmatpush1.msra.mxu0 0.0
      %4888 = vmatprep.subr.mxu0 0.0
      %4889 = vmatpush1.msra.mxu0 0.0
      %4890 = vmatprep.mubr.f32.mxu0 0.0
      %4891 = vmatmul.mubr.f32.gmra.mrb[0].mxu0 %v4824
      %v4892 = vpop.f32.mrb[0].mxu0
      %v4893 = vadd.f32 0.0, %v4892
      %v4894 = vpop.f32.mrb[0].mxu0
      %v4895 = vadd.f32 0.0, %v4894
      %4896 = vdwg.mxu0
      %4897 = vmatprep.subr.mxu0 0.0
      %4898 = vmatpush1.msra.mxu0 %v4819
      %4899 = vmatprep.subr.mxu0 0.0
      %4900 = vmatpush1.msra.mxu0 0.0
      %4901 = vmatprep.subr.mxu0 0.0
      %4902 = vmatpush1.msra.mxu0 0.0
      %4903 = vmatprep.subr.mxu0 0.0
      %4904 = vmatpush1.msra.mxu0 0.0
      %4905 = vmatprep.subr.mxu0 0.0
      %4906 = vmatpush1.msra.mxu0 0.0
      %4907 = vmatprep.subr.mxu0 0.0
      %4908 = vmatpush1.msra.mxu0 0.0
      %4909 = vmatprep.subr.mxu0 0.0
      %4910 = vmatpush1.msra.mxu0 0.0
      %4911 = vmatprep.subr.mxu0 0.0
      %4912 = vmatpush1.msra.mxu0 0.0
      %4913 = vmatprep.subr.mxu0 0.0
      %4914 = vmatpush1.msra.mxu0 0.0
      %4915 = vmatprep.subr.mxu0 0.0
      %4916 = vmatpush1.msra.mxu0 0.0
      %4917 = vmatprep.subr.mxu0 0.0
      %4918 = vmatpush1.msra.mxu0 0.0
      %4919 = vmatprep.subr.mxu0 0.0
      %4920 = vmatpush1.msra.mxu0 0.0
      %4921 = vmatprep.subr.mxu0 0.0
      %4922 = vmatpush1.msra.mxu0 0.0
      %4923 = vmatprep.subr.mxu0 0.0
      %4924 = vmatpush1.msra.mxu0 0.0
      %4925 = vmatprep.subr.mxu0 0.0
      %4926 = vmatpush1.msra.mxu0 0.0
      %4927 = vmatprep.subr.mxu0 0.0
      %4928 = vmatpush1.msra.mxu0 0.0
      %4929 = vmatprep.subr.mxu0 0.0
      %4930 = vmatpush1.msra.mxu0 0.0
      %4931 = vmatprep.subr.mxu0 0.0
      %4932 = vmatpush1.msra.mxu0 0.0
      %4933 = vmatprep.subr.mxu0 0.0
      %4934 = vmatpush1.msra.mxu0 0.0
      %4935 = vmatprep.subr.mxu0 0.0
      %4936 = vmatpush1.msra.mxu0 0.0
      %4937 = vmatprep.subr.mxu0 0.0
      %4938 = vmatpush1.msra.mxu0 0.0
      %4939 = vmatprep.subr.mxu0 0.0
      %4940 = vmatpush1.msra.mxu0 0.0
      %4941 = vmatprep.subr.mxu0 0.0
      %4942 = vmatpush1.msra.mxu0 0.0
      %4943 = vmatprep.subr.mxu0 0.0
      %4944 = vmatpush1.msra.mxu0 0.0
      %4945 = vmatprep.subr.mxu0 0.0
      %4946 = vmatpush1.msra.mxu0 0.0
      %4947 = vmatprep.subr.mxu0 0.0
      %4948 = vmatpush1.msra.mxu0 0.0
      %4949 = vmatprep.subr.mxu0 0.0
      %4950 = vmatpush1.msra.mxu0 0.0
      %4951 = vmatprep.subr.mxu0 0.0
      %4952 = vmatpush1.msra.mxu0 0.0
      %4953 = vmatprep.subr.mxu0 0.0
      %4954 = vmatpush1.msra.mxu0 0.0
      %4955 = vmatprep.subr.mxu0 0.0
      %4956 = vmatpush1.msra.mxu0 0.0
      %4957 = vmatprep.subr.mxu0 0.0
      %4958 = vmatpush1.msra.mxu0 0.0
      %4959 = vmatprep.subr.mxu0 0.0
      %4960 = vmatpush1.msra.mxu0 0.0
      %4961 = vmatprep.mubr.f32.mxu0 0.0
      %4962 = vmatmul.mubr.f32.gmra.mrb[0].mxu0 %v4824
      %v4963 = vpop.f32.mrb[0].mxu0
      %v4964 = vadd.f32 0.0, %v4963
      %v4965 = vpop.f32.mrb[0].mxu0
      %4966 = vdwg.mxu0
      %v4967 = vadd.f32 %v4803, %v4893
      %v4968 = vadd.f32 %v4804, %v4895
      %v4969 = vadd.f32 %v4805, %v4964
      %s4970 = scalar_lea.vmem %s8, 48
      %v4971 = vld [vmem:[%s4970] sm:$0xff]
      %4972 = vrot.lane.b32.xlu0 %v4471, 17
      %v4973 = vpop.permute.xlu0 %4972
      %4974 = vrot.lane.b32.xlu0 %v4472, 17
      %v4975 = vpop.permute.xlu0 %4974
      %4976 = vrot.lane.b32.xlu0 %v4473, 17
      %v4977 = vpop.permute.xlu0 %4976
      %4978 = vrot.lane.b32.xlu0 %v4474, 17
      %v4979 = vpop.permute.xlu0 %4978
      %vm4980 = vcmask 138240
      %v4981 = vsel %vm4980, %v4973, %v4975
      %v4982 = vsel %vm4980, %v4975, %v4977
      %v4983 = vsel %vm4980, %v4977, %v4979
      %v4988 = vsel %vm925, %v4971, 0
      %4990 = vmatprep.subr.mxu0 %v4982
      %4991 = vmatpush1.msra.mxu0 %v4981
      %4992 = vmatprep.subr.mxu0 0.0
      %4993 = vmatpush1.msra.mxu0 0.0
      %4994 = vmatprep.subr.mxu0 0.0
      %4995 = vmatpush1.msra.mxu0 0.0
      %4996 = vmatprep.subr.mxu0 0.0
      %4997 = vmatpush1.msra.mxu0 0.0
      %4998 = vmatprep.subr.mxu0 0.0
      %4999 = vmatpush1.msra.mxu0 0.0
      %5000 = vmatprep.subr.mxu0 0.0
      %5001 = vmatpush1.msra.mxu0 0.0
      %5002 = vmatprep.subr.mxu0 0.0
      %5003 = vmatpush1.msra.mxu0 0.0
      %5004 = vmatprep.subr.mxu0 0.0
      %5005 = vmatpush1.msra.mxu0 0.0
      %5006 = vmatprep.subr.mxu0 0.0
      %5007 = vmatpush1.msra.mxu0 0.0
      %5008 = vmatprep.subr.mxu0 0.0
      %5009 = vmatpush1.msra.mxu0 0.0
      %5010 = vmatprep.subr.mxu0 0.0
      %5011 = vmatpush1.msra.mxu0 0.0
      %5012 = vmatprep.subr.mxu0 0.0
      %5013 = vmatpush1.msra.mxu0 0.0
      %5014 = vmatprep.subr.mxu0 0.0
      %5015 = vmatpush1.msra.mxu0 0.0
      %5016 = vmatprep.subr.mxu0 0.0
      %5017 = vmatpush1.msra.mxu0 0.0
      %5018 = vmatprep.subr.mxu0 0.0
      %5019 = vmatpush1.msra.mxu0 0.0
      %5020 = vmatprep.subr.mxu0 0.0
      %5021 = vmatpush1.msra.mxu0 0.0
      %5022 = vmatprep.subr.mxu0 0.0
      %5023 = vmatpush1.msra.mxu0 0.0
      %5024 = vmatprep.subr.mxu0 0.0
      %5025 = vmatpush1.msra.mxu0 0.0
      %5026 = vmatprep.subr.mxu0 0.0
      %5027 = vmatpush1.msra.mxu0 0.0
      %5028 = vmatprep.subr.mxu0 0.0
      %5029 = vmatpush1.msra.mxu0 0.0
      %5030 = vmatprep.subr.mxu0 0.0
      %5031 = vmatpush1.msra.mxu0 0.0
      %5032 = vmatprep.subr.mxu0 0.0
      %5033 = vmatpush1.msra.mxu0 0.0
      %5034 = vmatprep.subr.mxu0 0.0
      %5035 = vmatpush1.msra.mxu0 0.0
      %5036 = vmatprep.subr.mxu0 0.0
      %5037 = vmatpush1.msra.mxu0 0.0
      %5038 = vmatprep.subr.mxu0 0.0
      %5039 = vmatpush1.msra.mxu0 0.0
      %5040 = vmatprep.subr.mxu0 0.0
      %5041 = vmatpush1.msra.mxu0 0.0
      %5042 = vmatprep.subr.mxu0 0.0
      %5043 = vmatpush1.msra.mxu0 0.0
      %5044 = vmatprep.subr.mxu0 0.0
      %5045 = vmatpush1.msra.mxu0 0.0
      %5046 = vmatprep.subr.mxu0 0.0
      %5047 = vmatpush1.msra.mxu0 0.0
      %5048 = vmatprep.subr.mxu0 0.0
      %5049 = vmatpush1.msra.mxu0 0.0
      %5050 = vmatprep.subr.mxu0 0.0
      %5051 = vmatpush1.msra.mxu0 0.0
      %5052 = vmatprep.subr.mxu0 0.0
      %5053 = vmatpush1.msra.mxu0 0.0
      %5054 = vmatprep.mubr.f32.mxu0 0.0
      %5055 = vmatmul.mubr.f32.gmra.mrb[0].mxu0 %v4988
      %v5056 = vpop.f32.mrb[0].mxu0
      %v5057 = vadd.f32 0.0, %v5056
      %v5058 = vpop.f32.mrb[0].mxu0
      %v5059 = vadd.f32 0.0, %v5058
      %5060 = vdwg.mxu0
      %5061 = vmatprep.subr.mxu0 0.0
      %5062 = vmatpush1.msra.mxu0 %v4983
      %5063 = vmatprep.subr.mxu0 0.0
      %5064 = vmatpush1.msra.mxu0 0.0
      %5065 = vmatprep.subr.mxu0 0.0
      %5066 = vmatpush1.msra.mxu0 0.0
      %5067 = vmatprep.subr.mxu0 0.0
      %5068 = vmatpush1.msra.mxu0 0.0
      %5069 = vmatprep.subr.mxu0 0.0
      %5070 = vmatpush1.msra.mxu0 0.0
      %5071 = vmatprep.subr.mxu0 0.0
      %5072 = vmatpush1.msra.mxu0 0.0
      %5073 = vmatprep.subr.mxu0 0.0
      %5074 = vmatpush1.msra.mxu0 0.0
      %5075 = vmatprep.subr.mxu0 0.0
      %5076 = vmatpush1.msra.mxu0 0.0
      %5077 = vmatprep.subr.mxu0 0.0
      %5078 = vmatpush1.msra.mxu0 0.0
      %5079 = vmatprep.subr.mxu0 0.0
      %5080 = vmatpush1.msra.mxu0 0.0
      %5081 = vmatprep.subr.mxu0 0.0
      %5082 = vmatpush1.msra.mxu0 0.0
      %5083 = vmatprep.subr.mxu0 0.0
      %5084 = vmatpush1.msra.mxu0 0.0
      %5085 = vmatprep.subr.mxu0 0.0
      %5086 = vmatpush1.msra.mxu0 0.0
      %5087 = vmatprep.subr.mxu0 0.0
      %5088 = vmatpush1.msra.mxu0 0.0
      %5089 = vmatprep.subr.mxu0 0.0
      %5090 = vmatpush1.msra.mxu0 0.0
      %5091 = vmatprep.subr.mxu0 0.0
      %5092 = vmatpush1.msra.mxu0 0.0
      %5093 = vmatprep.subr.mxu0 0.0
      %5094 = vmatpush1.msra.mxu0 0.0
      %5095 = vmatprep.subr.mxu0 0.0
      %5096 = vmatpush1.msra.mxu0 0.0
      %5097 = vmatprep.subr.mxu0 0.0
      %5098 = vmatpush1.msra.mxu0 0.0
      %5099 = vmatprep.subr.mxu0 0.0
      %5100 = vmatpush1.msra.mxu0 0.0
      %5101 = vmatprep.subr.mxu0 0.0
      %5102 = vmatpush1.msra.mxu0 0.0
      %5103 = vmatprep.subr.mxu0 0.0
      %5104 = vmatpush1.msra.mxu0 0.0
      %5105 = vmatprep.subr.mxu0 0.0
      %5106 = vmatpush1.msra.mxu0 0.0
      %5107 = vmatprep.subr.mxu0 0.0
      %5108 = vmatpush1.msra.mxu0 0.0
      %5109 = vmatprep.subr.mxu0 0.0
      %5110 = vmatpush1.msra.mxu0 0.0
      %5111 = vmatprep.subr.mxu0 0.0
      %5112 = vmatpush1.msra.mxu0 0.0
      %5113 = vmatprep.subr.mxu0 0.0
      %5114 = vmatpush1.msra.mxu0 0.0
      %5115 = vmatprep.subr.mxu0 0.0
      %5116 = vmatpush1.msra.mxu0 0.0
      %5117 = vmatprep.subr.mxu0 0.0
      %5118 = vmatpush1.msra.mxu0 0.0
      %5119 = vmatprep.subr.mxu0 0.0
      %5120 = vmatpush1.msra.mxu0 0.0
      %5121 = vmatprep.subr.mxu0 0.0
      %5122 = vmatpush1.msra.mxu0 0.0
      %5123 = vmatprep.subr.mxu0 0.0
      %5124 = vmatpush1.msra.mxu0 0.0
      %5125 = vmatprep.mubr.f32.mxu0 0.0
      %5126 = vmatmul.mubr.f32.gmra.mrb[0].mxu0 %v4988
      %v5127 = vpop.f32.mrb[0].mxu0
      %v5128 = vadd.f32 0.0, %v5127
      %v5129 = vpop.f32.mrb[0].mxu0
      %5130 = vdwg.mxu0
      %v5131 = vadd.f32 %v4967, %v5057
      %v5132 = vadd.f32 %v4968, %v5059
      %v5133 = vadd.f32 %v4969, %v5128
      %s5134 = scalar_lea.vmem %s8, 56
      %v5135 = vld [vmem:[%s5134] sm:$0xff]
      %5136 = vrot.lane.b32.xlu0 %v4471, 15
      %v5137 = vpop.permute.xlu0 %5136
      %5138 = vrot.lane.b32.xlu0 %v4472, 15
      %v5139 = vpop.permute.xlu0 %5138
      %5140 = vrot.lane.b32.xlu0 %v4473, 15
      %v5141 = vpop.permute.xlu0 %5140
      %5142 = vrot.lane.b32.xlu0 %v4474, 15
      %v5143 = vpop.permute.xlu0 %5142
      %vm5144 = vcmask 121856
      %v5145 = vsel %vm5144, %v5137, %v5139
      %v5146 = vsel %vm5144, %v5139, %v5141
      %v5147 = vsel %vm5144, %v5141, %v5143
      %v5152 = vsel %vm925, %v5135, 0
      %5154 = vmatprep.subr.mxu0 %v5146
      %5155 = vmatpush1.msra.mxu0 %v5145
      %5156 = vmatprep.subr.mxu0 0.0
      %5157 = vmatpush1.msra.mxu0 0.0
      %5158 = vmatprep.subr.mxu0 0.0
      %5159 = vmatpush1.msra.mxu0 0.0
      %5160 = vmatprep.subr.mxu0 0.0
      %5161 = vmatpush1.msra.mxu0 0.0
      %5162 = vmatprep.subr.mxu0 0.0
      %5163 = vmatpush1.msra.mxu0 0.0
      %5164 = vmatprep.subr.mxu0 0.0
      %5165 = vmatpush1.msra.mxu0 0.0
      %5166 = vmatprep.subr.mxu0 0.0
      %5167 = vmatpush1.msra.mxu0 0.0
      %5168 = vmatprep.subr.mxu0 0.0
      %5169 = vmatpush1.msra.mxu0 0.0
      %5170 = vmatprep.subr.mxu0 0.0
      %5171 = vmatpush1.msra.mxu0 0.0
      %5172 = vmatprep.subr.mxu0 0.0
      %5173 = vmatpush1.msra.mxu0 0.0
      %5174 = vmatprep.subr.mxu0 0.0
      %5175 = vmatpush1.msra.mxu0 0.0
      %5176 = vmatprep.subr.mxu0 0.0
      %5177 = vmatpush1.msra.mxu0 0.0
      %5178 = vmatprep.subr.mxu0 0.0
      %5179 = vmatpush1.msra.mxu0 0.0
      %5180 = vmatprep.subr.mxu0 0.0
      %5181 = vmatpush1.msra.mxu0 0.0
      %5182 = vmatprep.subr.mxu0 0.0
      %5183 = vmatpush1.msra.mxu0 0.0
      %5184 = vmatprep.subr.mxu0 0.0
      %5185 = vmatpush1.msra.mxu0 0.0
      %5186 = vmatprep.subr.mxu0 0.0
      %5187 = vmatpush1.msra.mxu0 0.0
      %5188 = vmatprep.subr.mxu0 0.0
      %5189 = vmatpush1.msra.mxu0 0.0
      %5190 = vmatprep.subr.mxu0 0.0
      %5191 = vmatpush1.msra.mxu0 0.0
      %5192 = vmatprep.subr.mxu0 0.0
      %5193 = vmatpush1.msra.mxu0 0.0
      %5194 = vmatprep.subr.mxu0 0.0
      %5195 = vmatpush1.msra.mxu0 0.0
      %5196 = vmatprep.subr.mxu0 0.0
      %5197 = vmatpush1.msra.mxu0 0.0
      %5198 = vmatprep.subr.mxu0 0.0
      %5199 = vmatpush1.msra.mxu0 0.0
      %5200 = vmatprep.subr.mxu0 0.0
      %5201 = vmatpush1.msra.mxu0 0.0
      %5202 = vmatprep.subr.mxu0 0.0
      %5203 = vmatpush1.msra.mxu0 0.0
      %5204 = vmatprep.subr.mxu0 0.0
      %5205 = vmatpush1.msra.mxu0 0.0
      %5206 = vmatprep.subr.mxu0 0.0
      %5207 = vmatpush1.msra.mxu0 0.0
      %5208 = vmatprep.subr.mxu0 0.0
      %5209 = vmatpush1.msra.mxu0 0.0
      %5210 = vmatprep.subr.mxu0 0.0
      %5211 = vmatpush1.msra.mxu0 0.0
      %5212 = vmatprep.subr.mxu0 0.0
      %5213 = vmatpush1.msra.mxu0 0.0
      %5214 = vmatprep.subr.mxu0 0.0
      %5215 = vmatpush1.msra.mxu0 0.0
      %5216 = vmatprep.subr.mxu0 0.0
      %5217 = vmatpush1.msra.mxu0 0.0
      %5218 = vmatprep.mubr.f32.mxu0 0.0
      %5219 = vmatmul.mubr.f32.gmra.mrb[0].mxu0 %v5152
      %v5220 = vpop.f32.mrb[0].mxu0
      %v5221 = vadd.f32 0.0, %v5220
      %v5222 = vpop.f32.mrb[0].mxu0
      %v5223 = vadd.f32 0.0, %v5222
      %5224 = vdwg.mxu0
      %5225 = vmatprep.subr.mxu0 0.0
      %5226 = vmatpush1.msra.mxu0 %v5147
      %5227 = vmatprep.subr.mxu0 0.0
      %5228 = vmatpush1.msra.mxu0 0.0
      %5229 = vmatprep.subr.mxu0 0.0
      %5230 = vmatpush1.msra.mxu0 0.0
      %5231 = vmatprep.subr.mxu0 0.0
      %5232 = vmatpush1.msra.mxu0 0.0
      %5233 = vmatprep.subr.mxu0 0.0
      %5234 = vmatpush1.msra.mxu0 0.0
      %5235 = vmatprep.subr.mxu0 0.0
      %5236 = vmatpush1.msra.mxu0 0.0
      %5237 = vmatprep.subr.mxu0 0.0
      %5238 = vmatpush1.msra.mxu0 0.0
      %5239 = vmatprep.subr.mxu0 0.0
      %5240 = vmatpush1.msra.mxu0 0.0
      %5241 = vmatprep.subr.mxu0 0.0
      %5242 = vmatpush1.msra.mxu0 0.0
      %5243 = vmatprep.subr.mxu0 0.0
      %5244 = vmatpush1.msra.mxu0 0.0
      %5245 = vmatprep.subr.mxu0 0.0
      %5246 = vmatpush1.msra.mxu0 0.0
      %5247 = vmatprep.subr.mxu0 0.0
      %5248 = vmatpush1.msra.mxu0 0.0
      %5249 = vmatprep.subr.mxu0 0.0
      %5250 = vmatpush1.msra.mxu0 0.0
      %5251 = vmatprep.subr.mxu0 0.0
      %5252 = vmatpush1.msra.mxu0 0.0
      %5253 = vmatprep.subr.mxu0 0.0
      %5254 = vmatpush1.msra.mxu0 0.0
      %5255 = vmatprep.subr.mxu0 0.0
      %5256 = vmatpush1.msra.mxu0 0.0
      %5257 = vmatprep.subr.mxu0 0.0
      %5258 = vmatpush1.msra.mxu0 0.0
      %5259 = vmatprep.subr.mxu0 0.0
      %5260 = vmatpush1.msra.mxu0 0.0
      %5261 = vmatprep.subr.mxu0 0.0
      %5262 = vmatpush1.msra.mxu0 0.0
      %5263 = vmatprep.subr.mxu0 0.0
      %5264 = vmatpush1.msra.mxu0 0.0
      %5265 = vmatprep.subr.mxu0 0.0
      %5266 = vmatpush1.msra.mxu0 0.0
      %5267 = vmatprep.subr.mxu0 0.0
      %5268 = vmatpush1.msra.mxu0 0.0
      %5269 = vmatprep.subr.mxu0 0.0
      %5270 = vmatpush1.msra.mxu0 0.0
      %5271 = vmatprep.subr.mxu0 0.0
      %5272 = vmatpush1.msra.mxu0 0.0
      %5273 = vmatprep.subr.mxu0 0.0
      %5274 = vmatpush1.msra.mxu0 0.0
      %5275 = vmatprep.subr.mxu0 0.0
      %5276 = vmatpush1.msra.mxu0 0.0
      %5277 = vmatprep.subr.mxu0 0.0
      %5278 = vmatpush1.msra.mxu0 0.0
      %5279 = vmatprep.subr.mxu0 0.0
      %5280 = vmatpush1.msra.mxu0 0.0
      %5281 = vmatprep.subr.mxu0 0.0
      %5282 = vmatpush1.msra.mxu0 0.0
      %5283 = vmatprep.subr.mxu0 0.0
      %5284 = vmatpush1.msra.mxu0 0.0
      %5285 = vmatprep.subr.mxu0 0.0
      %5286 = vmatpush1.msra.mxu0 0.0
      %5287 = vmatprep.subr.mxu0 0.0
      %5288 = vmatpush1.msra.mxu0 0.0
      %5289 = vmatprep.mubr.f32.mxu0 0.0
      %5290 = vmatmul.mubr.f32.gmra.mrb[0].mxu0 %v5152
      %v5291 = vpop.f32.mrb[0].mxu0
      %v5292 = vadd.f32 0.0, %v5291
      %v5293 = vpop.f32.mrb[0].mxu0
      %5294 = vdwg.mxu0
      %v5295 = vadd.f32 %v5131, %v5221
      %v5296 = vadd.f32 %v5132, %v5223
      %v5297 = vadd.f32 %v5133, %v5292
      %s5298 = scalar_lea.vmem %s8, 64
      %v5299 = vld [vmem:[%s5298] sm:$0xff]
      %5300 = vrot.lane.b32.xlu0 %v4471, 13
      %v5301 = vpop.permute.xlu0 %5300
      %5302 = vrot.lane.b32.xlu0 %v4472, 13
      %v5303 = vpop.permute.xlu0 %5302
      %5304 = vrot.lane.b32.xlu0 %v4473, 13
      %v5305 = vpop.permute.xlu0 %5304
      %5306 = vrot.lane.b32.xlu0 %v4474, 13
      %v5307 = vpop.permute.xlu0 %5306
      %vm5308 = vcmask 105472
      %v5309 = vsel %vm5308, %v5301, %v5303
      %v5310 = vsel %vm5308, %v5303, %v5305
      %v5311 = vsel %vm5308, %v5305, %v5307
      %v5316 = vsel %vm925, %v5299, 0
      %5318 = vmatprep.subr.mxu0 %v5310
      %5319 = vmatpush1.msra.mxu0 %v5309
      %5320 = vmatprep.subr.mxu0 0.0
      %5321 = vmatpush1.msra.mxu0 0.0
      %5322 = vmatprep.subr.mxu0 0.0
      %5323 = vmatpush1.msra.mxu0 0.0
      %5324 = vmatprep.subr.mxu0 0.0
      %5325 = vmatpush1.msra.mxu0 0.0
      %5326 = vmatprep.subr.mxu0 0.0
      %5327 = vmatpush1.msra.mxu0 0.0
      %5328 = vmatprep.subr.mxu0 0.0
      %5329 = vmatpush1.msra.mxu0 0.0
      %5330 = vmatprep.subr.mxu0 0.0
      %5331 = vmatpush1.msra.mxu0 0.0
      %5332 = vmatprep.subr.mxu0 0.0
      %5333 = vmatpush1.msra.mxu0 0.0
      %5334 = vmatprep.subr.mxu0 0.0
      %5335 = vmatpush1.msra.mxu0 0.0
      %5336 = vmatprep.subr.mxu0 0.0
      %5337 = vmatpush1.msra.mxu0 0.0
      %5338 = vmatprep.subr.mxu0 0.0
      %5339 = vmatpush1.msra.mxu0 0.0
      %5340 = vmatprep.subr.mxu0 0.0
      %5341 = vmatpush1.msra.mxu0 0.0
      %5342 = vmatprep.subr.mxu0 0.0
      %5343 = vmatpush1.msra.mxu0 0.0
      %5344 = vmatprep.subr.mxu0 0.0
      %5345 = vmatpush1.msra.mxu0 0.0
      %5346 = vmatprep.subr.mxu0 0.0
      %5347 = vmatpush1.msra.mxu0 0.0
      %5348 = vmatprep.subr.mxu0 0.0
      %5349 = vmatpush1.msra.mxu0 0.0
      %5350 = vmatprep.subr.mxu0 0.0
      %5351 = vmatpush1.msra.mxu0 0.0
      %5352 = vmatprep.subr.mxu0 0.0
      %5353 = vmatpush1.msra.mxu0 0.0
      %5354 = vmatprep.subr.mxu0 0.0
      %5355 = vmatpush1.msra.mxu0 0.0
      %5356 = vmatprep.subr.mxu0 0.0
      %5357 = vmatpush1.msra.mxu0 0.0
      %5358 = vmatprep.subr.mxu0 0.0
      %5359 = vmatpush1.msra.mxu0 0.0
      %5360 = vmatprep.subr.mxu0 0.0
      %5361 = vmatpush1.msra.mxu0 0.0
      %5362 = vmatprep.subr.mxu0 0.0
      %5363 = vmatpush1.msra.mxu0 0.0
      %5364 = vmatprep.subr.mxu0 0.0
      %5365 = vmatpush1.msra.mxu0 0.0
      %5366 = vmatprep.subr.mxu0 0.0
      %5367 = vmatpush1.msra.mxu0 0.0
      %5368 = vmatprep.subr.mxu0 0.0
      %5369 = vmatpush1.msra.mxu0 0.0
      %5370 = vmatprep.subr.mxu0 0.0
      %5371 = vmatpush1.msra.mxu0 0.0
      %5372 = vmatprep.subr.mxu0 0.0
      %5373 = vmatpush1.msra.mxu0 0.0
      %5374 = vmatprep.subr.mxu0 0.0
      %5375 = vmatpush1.msra.mxu0 0.0
      %5376 = vmatprep.subr.mxu0 0.0
      %5377 = vmatpush1.msra.mxu0 0.0
      %5378 = vmatprep.subr.mxu0 0.0
      %5379 = vmatpush1.msra.mxu0 0.0
      %5380 = vmatprep.subr.mxu0 0.0
      %5381 = vmatpush1.msra.mxu0 0.0
      %5382 = vmatprep.mubr.f32.mxu0 0.0
      %5383 = vmatmul.mubr.f32.gmra.mrb[0].mxu0 %v5316
      %v5384 = vpop.f32.mrb[0].mxu0
      %v5385 = vadd.f32 0.0, %v5384
      %v5386 = vpop.f32.mrb[0].mxu0
      %v5387 = vadd.f32 0.0, %v5386
      %5388 = vdwg.mxu0
      %5389 = vmatprep.subr.mxu0 0.0
      %5390 = vmatpush1.msra.mxu0 %v5311
      %5391 = vmatprep.subr.mxu0 0.0
      %5392 = vmatpush1.msra.mxu0 0.0
      %5393 = vmatprep.subr.mxu0 0.0
      %5394 = vmatpush1.msra.mxu0 0.0
      %5395 = vmatprep.subr.mxu0 0.0
      %5396 = vmatpush1.msra.mxu0 0.0
      %5397 = vmatprep.subr.mxu0 0.0
      %5398 = vmatpush1.msra.mxu0 0.0
      %5399 = vmatprep.subr.mxu0 0.0
      %5400 = vmatpush1.msra.mxu0 0.0
      %5401 = vmatprep.subr.mxu0 0.0
      %5402 = vmatpush1.msra.mxu0 0.0
      %5403 = vmatprep.subr.mxu0 0.0
      %5404 = vmatpush1.msra.mxu0 0.0
      %5405 = vmatprep.subr.mxu0 0.0
      %5406 = vmatpush1.msra.mxu0 0.0
      %5407 = vmatprep.subr.mxu0 0.0
      %5408 = vmatpush1.msra.mxu0 0.0
      %5409 = vmatprep.subr.mxu0 0.0
      %5410 = vmatpush1.msra.mxu0 0.0
      %5411 = vmatprep.subr.mxu0 0.0
      %5412 = vmatpush1.msra.mxu0 0.0
      %5413 = vmatprep.subr.mxu0 0.0
      %5414 = vmatpush1.msra.mxu0 0.0
      %5415 = vmatprep.subr.mxu0 0.0
      %5416 = vmatpush1.msra.mxu0 0.0
      %5417 = vmatprep.subr.mxu0 0.0
      %5418 = vmatpush1.msra.mxu0 0.0
      %5419 = vmatprep.subr.mxu0 0.0
      %5420 = vmatpush1.msra.mxu0 0.0
      %5421 = vmatprep.subr.mxu0 0.0
      %5422 = vmatpush1.msra.mxu0 0.0
      %5423 = vmatprep.subr.mxu0 0.0
      %5424 = vmatpush1.msra.mxu0 0.0
      %5425 = vmatprep.subr.mxu0 0.0
      %5426 = vmatpush1.msra.mxu0 0.0
      %5427 = vmatprep.subr.mxu0 0.0
      %5428 = vmatpush1.msra.mxu0 0.0
      %5429 = vmatprep.subr.mxu0 0.0
      %5430 = vmatpush1.msra.mxu0 0.0
      %5431 = vmatprep.subr.mxu0 0.0
      %5432 = vmatpush1.msra.mxu0 0.0
      %5433 = vmatprep.subr.mxu0 0.0
      %5434 = vmatpush1.msra.mxu0 0.0
      %5435 = vmatprep.subr.mxu0 0.0
      %5436 = vmatpush1.msra.mxu0 0.0
      %5437 = vmatprep.subr.mxu0 0.0
      %5438 = vmatpush1.msra.mxu0 0.0
      %5439 = vmatprep.subr.mxu0 0.0
      %5440 = vmatpush1.msra.mxu0 0.0
      %5441 = vmatprep.subr.mxu0 0.0
      %5442 = vmatpush1.msra.mxu0 0.0
      %5443 = vmatprep.subr.mxu0 0.0
      %5444 = vmatpush1.msra.mxu0 0.0
      %5445 = vmatprep.subr.mxu0 0.0
      %5446 = vmatpush1.msra.mxu0 0.0
      %5447 = vmatprep.subr.mxu0 0.0
      %5448 = vmatpush1.msra.mxu0 0.0
      %5449 = vmatprep.subr.mxu0 0.0
      %5450 = vmatpush1.msra.mxu0 0.0
      %5451 = vmatprep.subr.mxu0 0.0
      %5452 = vmatpush1.msra.mxu0 0.0
      %5453 = vmatprep.mubr.f32.mxu0 0.0
      %5454 = vmatmul.mubr.f32.gmra.mrb[0].mxu0 %v5316
      %v5455 = vpop.f32.mrb[0].mxu0
      %v5456 = vadd.f32 0.0, %v5455
      %v5457 = vpop.f32.mrb[0].mxu0
      %5458 = vdwg.mxu0
      %v5459 = vadd.f32 %v5295, %v5385
      %v5460 = vadd.f32 %v5296, %v5387
      %v5461 = vadd.f32 %v5297, %v5456
      %v5462 = vld [vmem:[%s9] sm:$0xff]
      %5464 = vset.pattern.permute.xlu0 0
      %5465 = vperm.xlu0 %5464, %v5462
      %v5466 = vpop.permute.xlu0 %5465
      %v5468 = vadd.f32 %v5459, %v5466
      %v5469 = vadd.f32 %v5460, %v5466
      %v5470 = vadd.f32 %v5461, %v5466
      %5471 = vst [vmem:[#allocation5] sm:$0xff] 0.0
      %5472 = vst.msk [vmem:[#allocation5 + $0x8] sm:$0xff] %vm2388, 0.0
      %v5473 = vcombine.high %v2390, %v2391
      %v5474 = vcombine.high %v2392, %v2392
      %5475 = vrot.lane.b32.xlu0 %v5473, 69
      %v5476 = vpop.permute.xlu0 %5475
      %5477 = vrot.lane.b32.xlu0 %v5474, 69
      %v5478 = vpop.permute.xlu0 %5477
      %v5479 = vrot.slane %v5476, 4
      %v5480 = vrot.slane %v5478, 4
      %v5481 = vsel %vm886, %v5479, %v5476
      %v5482 = vsel %vm2386, %v5479, %v5480
      %v5483 = vsel %vm886, %v5482, %v5478
      %5486 = vst.msk [vmem:[#allocation5] sm:$0xff] %vm2410, %v5481
      %5487 = vst.msk [vmem:[#allocation5 + $0x8] sm:$0xff] %vm2413, %v5483
      %v5488 = vld [vmem:[#allocation5] sm:$0xff]
      %v5489 = vld [vmem:[#allocation5 + $0x8] sm:$0xff]
      %v5490 = vld [vmem:[%s10] sm:$0x3f]
      %s5491 = scalar_lea.vmem %s10, 8
      %v5492 = vld [vmem:[%s5491] sm:$0x3f]
      %v5495 = vcombine.high %v5488, %v5488
      %v5496 = vcombine.high %v5489, %v5489
      %5497 = vrot.lane.b32.xlu0 %v5488, 81
      %v5498 = vpop.permute.xlu0 %5497
      %5499 = vrot.lane.b32.xlu0 %v5495, 81
      %v5500 = vpop.permute.xlu0 %5499
      %5501 = vrot.lane.b32.xlu0 %v5489, 81
      %v5502 = vpop.permute.xlu0 %5501
      %5503 = vrot.lane.b32.xlu0 %v5496, 81
      %v5504 = vpop.permute.xlu0 %5503
      %v5505 = vsel %vm918, %v5498, %v5500
      %v5506 = vsel %vm918, %v5500, %v5502
      %v5507 = vsel %vm918, %v5502, %v5504
      %v5509 = vsel %vm2435, %v5492, 0
      %v5511 = vsel %vm2386, %v5505, 0
      %v5513 = vsel %vm2386, %v5506, 0
      %v5515 = vsel %vm2386, %v5507, 0
      %5517 = vmatprep.subr.mxu0 %v5513
      %5518 = vmatpush1.msra.mxu0 %v5511
      %5519 = vmatprep.subr.mxu0 0.0
      %5520 = vmatpush1.msra.mxu0 0.0
      %5521 = vmatprep.subr.mxu0 0.0
      %5522 = vmatpush1.msra.mxu0 0.0
      %5523 = vmatprep.subr.mxu0 0.0
      %5524 = vmatpush1.msra.mxu0 0.0
      %5525 = vmatprep.subr.mxu0 0.0
      %5526 = vmatpush1.msra.mxu0 0.0
      %5527 = vmatprep.subr.mxu0 0.0
      %5528 = vmatpush1.msra.mxu0 0.0
      %5529 = vmatprep.subr.mxu0 0.0
      %5530 = vmatpush1.msra.mxu0 0.0
      %5531 = vmatprep.subr.mxu0 0.0
      %5532 = vmatpush1.msra.mxu0 0.0
      %5533 = vmatprep.subr.mxu0 0.0
      %5534 = vmatpush1.msra.mxu0 0.0
      %5535 = vmatprep.subr.mxu0 0.0
      %5536 = vmatpush1.msra.mxu0 0.0
      %5537 = vmatprep.subr.mxu0 0.0
      %5538 = vmatpush1.msra.mxu0 0.0
      %5539 = vmatprep.subr.mxu0 0.0
      %5540 = vmatpush1.msra.mxu0 0.0
      %5541 = vmatprep.subr.mxu0 0.0
      %5542 = vmatpush1.msra.mxu0 0.0
      %5543 = vmatprep.subr.mxu0 0.0
      %5544 = vmatpush1.msra.mxu0 0.0
      %5545 = vmatprep.subr.mxu0 0.0
      %5546 = vmatpush1.msra.mxu0 0.0
      %5547 = vmatprep.subr.mxu0 0.0
      %5548 = vmatpush1.msra.mxu0 0.0
      %5549 = vmatprep.subr.mxu0 0.0
      %5550 = vmatpush1.msra.mxu0 0.0
      %5551 = vmatprep.subr.mxu0 0.0
      %5552 = vmatpush1.msra.mxu0 0.0
      %5553 = vmatprep.subr.mxu0 0.0
      %5554 = vmatpush1.msra.mxu0 0.0
      %5555 = vmatprep.subr.mxu0 0.0
      %5556 = vmatpush1.msra.mxu0 0.0
      %5557 = vmatprep.subr.mxu0 0.0
      %5558 = vmatpush1.msra.mxu0 0.0
      %5559 = vmatprep.subr.mxu0 0.0
      %5560 = vmatpush1.msra.mxu0 0.0
      %5561 = vmatprep.subr.mxu0 0.0
      %5562 = vmatpush1.msra.mxu0 0.0
      %5563 = vmatprep.subr.mxu0 0.0
      %5564 = vmatpush1.msra.mxu0 0.0
      %5565 = vmatprep.subr.mxu0 0.0
      %5566 = vmatpush1.msra.mxu0 0.0
      %5567 = vmatprep.subr.mxu0 0.0
      %5568 = vmatpush1.msra.mxu0 0.0
      %5569 = vmatprep.subr.mxu0 0.0
      %5570 = vmatpush1.msra.mxu0 0.0
      %5571 = vmatprep.subr.mxu0 0.0
      %5572 = vmatpush1.msra.mxu0 0.0
      %5573 = vmatprep.subr.mxu0 0.0
      %5574 = vmatpush1.msra.mxu0 0.0
      %5575 = vmatprep.subr.mxu0 0.0
      %5576 = vmatpush1.msra.mxu0 0.0
      %5577 = vmatprep.subr.mxu0 0.0
      %5578 = vmatpush1.msra.mxu0 0.0
      %5579 = vmatprep.subr.mxu0 0.0
      %5580 = vmatpush1.msra.mxu0 0.0
      %5581 = vmatprep.mubr.f32.mxu0 0.0
      %5582 = vmatmul.mubr.f32.gmra.mrb[0].mxu0 %v5509
      %v5583 = vpop.f32.mrb[0].mxu0
      %v5584 = vadd.f32 0.0, %v5583
      %v5585 = vpop.f32.mrb[0].mxu0
      %v5586 = vadd.f32 0.0, %v5585
      %5587 = vdwg.mxu0
      %5588 = vmatprep.subr.mxu0 0.0
      %5589 = vmatpush1.msra.mxu0 %v5515
      %5590 = vmatprep.subr.mxu0 0.0
      %5591 = vmatpush1.msra.mxu0 0.0
      %5592 = vmatprep.subr.mxu0 0.0
      %5593 = vmatpush1.msra.mxu0 0.0
      %5594 = vmatprep.subr.mxu0 0.0
      %5595 = vmatpush1.msra.mxu0 0.0
      %5596 = vmatprep.subr.mxu0 0.0
      %5597 = vmatpush1.msra.mxu0 0.0
      %5598 = vmatprep.subr.mxu0 0.0
      %5599 = vmatpush1.msra.mxu0 0.0
      %5600 = vmatprep.subr.mxu0 0.0
      %5601 = vmatpush1.msra.mxu0 0.0
      %5602 = vmatprep.subr.mxu0 0.0
      %5603 = vmatpush1.msra.mxu0 0.0
      %5604 = vmatprep.subr.mxu0 0.0
      %5605 = vmatpush1.msra.mxu0 0.0
      %5606 = vmatprep.subr.mxu0 0.0
      %5607 = vmatpush1.msra.mxu0 0.0
      %5608 = vmatprep.subr.mxu0 0.0
      %5609 = vmatpush1.msra.mxu0 0.0
      %5610 = vmatprep.subr.mxu0 0.0
      %5611 = vmatpush1.msra.mxu0 0.0
      %5612 = vmatprep.subr.mxu0 0.0
      %5613 = vmatpush1.msra.mxu0 0.0
      %5614 = vmatprep.subr.mxu0 0.0
      %5615 = vmatpush1.msra.mxu0 0.0
      %5616 = vmatprep.subr.mxu0 0.0
      %5617 = vmatpush1.msra.mxu0 0.0
      %5618 = vmatprep.subr.mxu0 0.0
      %5619 = vmatpush1.msra.mxu0 0.0
      %5620 = vmatprep.subr.mxu0 0.0
      %5621 = vmatpush1.msra.mxu0 0.0
      %5622 = vmatprep.subr.mxu0 0.0
      %5623 = vmatpush1.msra.mxu0 0.0
      %5624 = vmatprep.subr.mxu0 0.0
      %5625 = vmatpush1.msra.mxu0 0.0
      %5626 = vmatprep.subr.mxu0 0.0
      %5627 = vmatpush1.msra.mxu0 0.0
      %5628 = vmatprep.subr.mxu0 0.0
      %5629 = vmatpush1.msra.mxu0 0.0
      %5630 = vmatprep.subr.mxu0 0.0
      %5631 = vmatpush1.msra.mxu0 0.0
      %5632 = vmatprep.subr.mxu0 0.0
      %5633 = vmatpush1.msra.mxu0 0.0
      %5634 = vmatprep.subr.mxu0 0.0
      %5635 = vmatpush1.msra.mxu0 0.0
      %5636 = vmatprep.subr.mxu0 0.0
      %5637 = vmatpush1.msra.mxu0 0.0
      %5638 = vmatprep.subr.mxu0 0.0
      %5639 = vmatpush1.msra.mxu0 0.0
      %5640 = vmatprep.subr.mxu0 0.0
      %5641 = vmatpush1.msra.mxu0 0.0
      %5642 = vmatprep.subr.mxu0 0.0
      %5643 = vmatpush1.msra.mxu0 0.0
      %5644 = vmatprep.subr.mxu0 0.0
      %5645 = vmatpush1.msra.mxu0 0.0
      %5646 = vmatprep.subr.mxu0 0.0
      %5647 = vmatpush1.msra.mxu0 0.0
      %5648 = vmatprep.subr.mxu0 0.0
      %5649 = vmatpush1.msra.mxu0 0.0
      %5650 = vmatprep.subr.mxu0 0.0
      %5651 = vmatpush1.msra.mxu0 0.0
      %5652 = vmatprep.mubr.f32.mxu0 0.0
      %5653 = vmatmul.mubr.f32.gmra.mrb[0].mxu0 %v5509
      %v5654 = vpop.f32.mrb[0].mxu0
      %v5655 = vadd.f32 0.0, %v5654
      %v5656 = vpop.f32.mrb[0].mxu0
      %5657 = vdwg.mxu0
      %5658 = vrot.lane.b32.xlu0 %v5488, 82
      %v5659 = vpop.permute.xlu0 %5658
      %5660 = vrot.lane.b32.xlu0 %v5495, 82
      %v5661 = vpop.permute.xlu0 %5660
      %5662 = vrot.lane.b32.xlu0 %v5489, 82
      %v5663 = vpop.permute.xlu0 %5662
      %5664 = vrot.lane.b32.xlu0 %v5496, 82
      %v5665 = vpop.permute.xlu0 %5664
      %v5666 = vsel %vm1078, %v5659, %v5661
      %v5667 = vsel %vm1078, %v5661, %v5663
      %v5668 = vsel %vm1078, %v5663, %v5665
      %v5670 = vsel %vm2435, %v5490, 0
      %v5672 = vsel %vm2386, %v5666, 0
      %v5674 = vsel %vm2386, %v5667, 0
      %v5676 = vsel %vm2386, %v5668, 0
      %5678 = vmatprep.subr.mxu0 %v5674
      %5679 = vmatpush1.msra.mxu0 %v5672
      %5680 = vmatprep.subr.mxu0 0.0
      %5681 = vmatpush1.msra.mxu0 0.0
      %5682 = vmatprep.subr.mxu0 0.0
      %5683 = vmatpush1.msra.mxu0 0.0
      %5684 = vmatprep.subr.mxu0 0.0
      %5685 = vmatpush1.msra.mxu0 0.0
      %5686 = vmatprep.subr.mxu0 0.0
      %5687 = vmatpush1.msra.mxu0 0.0
      %5688 = vmatprep.subr.mxu0 0.0
      %5689 = vmatpush1.msra.mxu0 0.0
      %5690 = vmatprep.subr.mxu0 0.0
      %5691 = vmatpush1.msra.mxu0 0.0
      %5692 = vmatprep.subr.mxu0 0.0
      %5693 = vmatpush1.msra.mxu0 0.0
      %5694 = vmatprep.subr.mxu0 0.0
      %5695 = vmatpush1.msra.mxu0 0.0
      %5696 = vmatprep.subr.mxu0 0.0
      %5697 = vmatpush1.msra.mxu0 0.0
      %5698 = vmatprep.subr.mxu0 0.0
      %5699 = vmatpush1.msra.mxu0 0.0
      %5700 = vmatprep.subr.mxu0 0.0
      %5701 = vmatpush1.msra.mxu0 0.0
      %5702 = vmatprep.subr.mxu0 0.0
      %5703 = vmatpush1.msra.mxu0 0.0
      %5704 = vmatprep.subr.mxu0 0.0
      %5705 = vmatpush1.msra.mxu0 0.0
      %5706 = vmatprep.subr.mxu0 0.0
      %5707 = vmatpush1.msra.mxu0 0.0
      %5708 = vmatprep.subr.mxu0 0.0
      %5709 = vmatpush1.msra.mxu0 0.0
      %5710 = vmatprep.subr.mxu0 0.0
      %5711 = vmatpush1.msra.mxu0 0.0
      %5712 = vmatprep.subr.mxu0 0.0
      %5713 = vmatpush1.msra.mxu0 0.0
      %5714 = vmatprep.subr.mxu0 0.0
      %5715 = vmatpush1.msra.mxu0 0.0
      %5716 = vmatprep.subr.mxu0 0.0
      %5717 = vmatpush1.msra.mxu0 0.0
      %5718 = vmatprep.subr.mxu0 0.0
      %5719 = vmatpush1.msra.mxu0 0.0
      %5720 = vmatprep.subr.mxu0 0.0
      %5721 = vmatpush1.msra.mxu0 0.0
      %5722 = vmatprep.subr.mxu0 0.0
      %5723 = vmatpush1.msra.mxu0 0.0
      %5724 = vmatprep.subr.mxu0 0.0
      %5725 = vmatpush1.msra.mxu0 0.0
      %5726 = vmatprep.subr.mxu0 0.0
      %5727 = vmatpush1.msra.mxu0 0.0
      %5728 = vmatprep.subr.mxu0 0.0
      %5729 = vmatpush1.msra.mxu0 0.0
      %5730 = vmatprep.subr.mxu0 0.0
      %5731 = vmatpush1.msra.mxu0 0.0
      %5732 = vmatprep.subr.mxu0 0.0
      %5733 = vmatpush1.msra.mxu0 0.0
      %5734 = vmatprep.subr.mxu0 0.0
      %5735 = vmatpush1.msra.mxu0 0.0
      %5736 = vmatprep.subr.mxu0 0.0
      %5737 = vmatpush1.msra.mxu0 0.0
      %5738 = vmatprep.subr.mxu0 0.0
      %5739 = vmatpush1.msra.mxu0 0.0
      %5740 = vmatprep.subr.mxu0 0.0
      %5741 = vmatpush1.msra.mxu0 0.0
      %5742 = vmatprep.mubr.f32.mxu0 0.0
      %5743 = vmatmul.mubr.f32.gmra.mrb[0].mxu0 %v5670
      %v5744 = vpop.f32.mrb[0].mxu0
      %v5745 = vadd.f32 %v5584, %v5744
      %v5746 = vpop.f32.mrb[0].mxu0
      %v5747 = vadd.f32 %v5586, %v5746
      %5748 = vdwg.mxu0
      %5749 = vmatprep.subr.mxu0 0.0
      %5750 = vmatpush1.msra.mxu0 %v5676
      %5751 = vmatprep.subr.mxu0 0.0
      %5752 = vmatpush1.msra.mxu0 0.0
      %5753 = vmatprep.subr.mxu0 0.0
      %5754 = vmatpush1.msra.mxu0 0.0
      %5755 = vmatprep.subr.mxu0 0.0
      %5756 = vmatpush1.msra.mxu0 0.0
      %5757 = vmatprep.subr.mxu0 0.0
      %5758 = vmatpush1.msra.mxu0 0.0
      %5759 = vmatprep.subr.mxu0 0.0
      %5760 = vmatpush1.msra.mxu0 0.0
      %5761 = vmatprep.subr.mxu0 0.0
      %5762 = vmatpush1.msra.mxu0 0.0
      %5763 = vmatprep.subr.mxu0 0.0
      %5764 = vmatpush1.msra.mxu0 0.0
      %5765 = vmatprep.subr.mxu0 0.0
      %5766 = vmatpush1.msra.mxu0 0.0
      %5767 = vmatprep.subr.mxu0 0.0
      %5768 = vmatpush1.msra.mxu0 0.0
      %5769 = vmatprep.subr.mxu0 0.0
      %5770 = vmatpush1.msra.mxu0 0.0
      %5771 = vmatprep.subr.mxu0 0.0
      %5772 = vmatpush1.msra.mxu0 0.0
      %5773 = vmatprep.subr.mxu0 0.0
      %5774 = vmatpush1.msra.mxu0 0.0
      %5775 = vmatprep.subr.mxu0 0.0
      %5776 = vmatpush1.msra.mxu0 0.0
      %5777 = vmatprep.subr.mxu0 0.0
      %5778 = vmatpush1.msra.mxu0 0.0
      %5779 = vmatprep.subr.mxu0 0.0
      %5780 = vmatpush1.msra.mxu0 0.0
      %5781 = vmatprep.subr.mxu0 0.0
      %5782 = vmatpush1.msra.mxu0 0.0
      %5783 = vmatprep.subr.mxu0 0.0
      %5784 = vmatpush1.msra.mxu0 0.0
      %5785 = vmatprep.subr.mxu0 0.0
      %5786 = vmatpush1.msra.mxu0 0.0
      %5787 = vmatprep.subr.mxu0 0.0
      %5788 = vmatpush1.msra.mxu0 0.0
      %5789 = vmatprep.subr.mxu0 0.0
      %5790 = vmatpush1.msra.mxu0 0.0
      %5791 = vmatprep.subr.mxu0 0.0
      %5792 = vmatpush1.msra.mxu0 0.0
      %5793 = vmatprep.subr.mxu0 0.0
      %5794 = vmatpush1.msra.mxu0 0.0
      %5795 = vmatprep.subr.mxu0 0.0
      %5796 = vmatpush1.msra.mxu0 0.0
      %5797 = vmatprep.subr.mxu0 0.0
      %5798 = vmatpush1.msra.mxu0 0.0
      %5799 = vmatprep.subr.mxu0 0.0
      %5800 = vmatpush1.msra.mxu0 0.0
      %5801 = vmatprep.subr.mxu0 0.0
      %5802 = vmatpush1.msra.mxu0 0.0
      %5803 = vmatprep.subr.mxu0 0.0
      %5804 = vmatpush1.msra.mxu0 0.0
      %5805 = vmatprep.subr.mxu0 0.0
      %5806 = vmatpush1.msra.mxu0 0.0
      %5807 = vmatprep.subr.mxu0 0.0
      %5808 = vmatpush1.msra.mxu0 0.0
      %5809 = vmatprep.subr.mxu0 0.0
      %5810 = vmatpush1.msra.mxu0 0.0
      %5811 = vmatprep.subr.mxu0 0.0
      %5812 = vmatpush1.msra.mxu0 0.0
      %5813 = vmatprep.mubr.f32.mxu0 0.0
      %5814 = vmatmul.mubr.f32.gmra.mrb[0].mxu0 %v5670
      %v5815 = vpop.f32.mrb[0].mxu0
      %v5816 = vadd.f32 %v5655, %v5815
      %v5817 = vpop.f32.mrb[0].mxu0
      %5818 = vdwg.mxu0
      %v5819 = vld [vmem:[#allocation5] sm:$0xff]
      %v5820 = vld [vmem:[#allocation5 + $0x8] sm:$0xff]
      %s5821 = scalar_lea.vmem %s10, 16
      %v5822 = vld [vmem:[%s5821] sm:$0x3f]
      %v5825 = vcombine.high %v5819, %v5819
      %v5826 = vcombine.high %v5820, %v5820
      %5827 = vrot.lane.b32.xlu0 %v5819, 80
      %v5828 = vpop.permute.xlu0 %5827
      %5829 = vrot.lane.b32.xlu0 %v5825, 80
      %v5830 = vpop.permute.xlu0 %5829
      %5831 = vrot.lane.b32.xlu0 %v5820, 80
      %v5832 = vpop.permute.xlu0 %5831
      %5833 = vrot.lane.b32.xlu0 %v5826, 80
      %v5834 = vpop.permute.xlu0 %5833
      %v5835 = vsel %vm1239, %v5828, %v5830
      %v5836 = vsel %vm1239, %v5830, %v5832
      %v5837 = vsel %vm1239, %v5832, %v5834
      %v5839 = vsel %vm2435, %v5822, 0
      %v5841 = vsel %vm2386, %v5835, 0
      %v5843 = vsel %vm2386, %v5836, 0
      %v5845 = vsel %vm2386, %v5837, 0
      %5847 = vmatprep.subr.mxu0 %v5843
      %5848 = vmatpush1.msra.mxu0 %v5841
      %5849 = vmatprep.subr.mxu0 0.0
      %5850 = vmatpush1.msra.mxu0 0.0
      %5851 = vmatprep.subr.mxu0 0.0
      %5852 = vmatpush1.msra.mxu0 0.0
      %5853 = vmatprep.subr.mxu0 0.0
      %5854 = vmatpush1.msra.mxu0 0.0
      %5855 = vmatprep.subr.mxu0 0.0
      %5856 = vmatpush1.msra.mxu0 0.0
      %5857 = vmatprep.subr.mxu0 0.0
      %5858 = vmatpush1.msra.mxu0 0.0
      %5859 = vmatprep.subr.mxu0 0.0
      %5860 = vmatpush1.msra.mxu0 0.0
      %5861 = vmatprep.subr.mxu0 0.0
      %5862 = vmatpush1.msra.mxu0 0.0
      %5863 = vmatprep.subr.mxu0 0.0
      %5864 = vmatpush1.msra.mxu0 0.0
      %5865 = vmatprep.subr.mxu0 0.0
      %5866 = vmatpush1.msra.mxu0 0.0
      %5867 = vmatprep.subr.mxu0 0.0
      %5868 = vmatpush1.msra.mxu0 0.0
      %5869 = vmatprep.subr.mxu0 0.0
      %5870 = vmatpush1.msra.mxu0 0.0
      %5871 = vmatprep.subr.mxu0 0.0
      %5872 = vmatpush1.msra.mxu0 0.0
      %5873 = vmatprep.subr.mxu0 0.0
      %5874 = vmatpush1.msra.mxu0 0.0
      %5875 = vmatprep.subr.mxu0 0.0
      %5876 = vmatpush1.msra.mxu0 0.0
      %5877 = vmatprep.subr.mxu0 0.0
      %5878 = vmatpush1.msra.mxu0 0.0
      %5879 = vmatprep.subr.mxu0 0.0
      %5880 = vmatpush1.msra.mxu0 0.0
      %5881 = vmatprep.subr.mxu0 0.0
      %5882 = vmatpush1.msra.mxu0 0.0
      %5883 = vmatprep.subr.mxu0 0.0
      %5884 = vmatpush1.msra.mxu0 0.0
      %5885 = vmatprep.subr.mxu0 0.0
      %5886 = vmatpush1.msra.mxu0 0.0
      %5887 = vmatprep.subr.mxu0 0.0
      %5888 = vmatpush1.msra.mxu0 0.0
      %5889 = vmatprep.subr.mxu0 0.0
      %5890 = vmatpush1.msra.mxu0 0.0
      %5891 = vmatprep.subr.mxu0 0.0
      %5892 = vmatpush1.msra.mxu0 0.0
      %5893 = vmatprep.subr.mxu0 0.0
      %5894 = vmatpush1.msra.mxu0 0.0
      %5895 = vmatprep.subr.mxu0 0.0
      %5896 = vmatpush1.msra.mxu0 0.0
      %5897 = vmatprep.subr.mxu0 0.0
      %5898 = vmatpush1.msra.mxu0 0.0
      %5899 = vmatprep.subr.mxu0 0.0
      %5900 = vmatpush1.msra.mxu0 0.0
      %5901 = vmatprep.subr.mxu0 0.0
      %5902 = vmatpush1.msra.mxu0 0.0
      %5903 = vmatprep.subr.mxu0 0.0
      %5904 = vmatpush1.msra.mxu0 0.0
      %5905 = vmatprep.subr.mxu0 0.0
      %5906 = vmatpush1.msra.mxu0 0.0
      %5907 = vmatprep.subr.mxu0 0.0
      %5908 = vmatpush1.msra.mxu0 0.0
      %5909 = vmatprep.subr.mxu0 0.0
      %5910 = vmatpush1.msra.mxu0 0.0
      %5911 = vmatprep.mubr.f32.mxu0 0.0
      %5912 = vmatmul.mubr.f32.gmra.mrb[0].mxu0 %v5839
      %v5913 = vpop.f32.mrb[0].mxu0
      %v5914 = vadd.f32 0.0, %v5913
      %v5915 = vpop.f32.mrb[0].mxu0
      %v5916 = vadd.f32 0.0, %v5915
      %5917 = vdwg.mxu0
      %5918 = vmatprep.subr.mxu0 0.0
      %5919 = vmatpush1.msra.mxu0 %v5845
      %5920 = vmatprep.subr.mxu0 0.0
      %5921 = vmatpush1.msra.mxu0 0.0
      %5922 = vmatprep.subr.mxu0 0.0
      %5923 = vmatpush1.msra.mxu0 0.0
      %5924 = vmatprep.subr.mxu0 0.0
      %5925 = vmatpush1.msra.mxu0 0.0
      %5926 = vmatprep.subr.mxu0 0.0
      %5927 = vmatpush1.msra.mxu0 0.0
      %5928 = vmatprep.subr.mxu0 0.0
      %5929 = vmatpush1.msra.mxu0 0.0
      %5930 = vmatprep.subr.mxu0 0.0
      %5931 = vmatpush1.msra.mxu0 0.0
      %5932 = vmatprep.subr.mxu0 0.0
      %5933 = vmatpush1.msra.mxu0 0.0
      %5934 = vmatprep.subr.mxu0 0.0
      %5935 = vmatpush1.msra.mxu0 0.0
      %5936 = vmatprep.subr.mxu0 0.0
      %5937 = vmatpush1.msra.mxu0 0.0
      %5938 = vmatprep.subr.mxu0 0.0
      %5939 = vmatpush1.msra.mxu0 0.0
      %5940 = vmatprep.subr.mxu0 0.0
      %5941 = vmatpush1.msra.mxu0 0.0
      %5942 = vmatprep.subr.mxu0 0.0
      %5943 = vmatpush1.msra.mxu0 0.0
      %5944 = vmatprep.subr.mxu0 0.0
      %5945 = vmatpush1.msra.mxu0 0.0
      %5946 = vmatprep.subr.mxu0 0.0
      %5947 = vmatpush1.msra.mxu0 0.0
      %5948 = vmatprep.subr.mxu0 0.0
      %5949 = vmatpush1.msra.mxu0 0.0
      %5950 = vmatprep.subr.mxu0 0.0
      %5951 = vmatpush1.msra.mxu0 0.0
      %5952 = vmatprep.subr.mxu0 0.0
      %5953 = vmatpush1.msra.mxu0 0.0
      %5954 = vmatprep.subr.mxu0 0.0
      %5955 = vmatpush1.msra.mxu0 0.0
      %5956 = vmatprep.subr.mxu0 0.0
      %5957 = vmatpush1.msra.mxu0 0.0
      %5958 = vmatprep.subr.mxu0 0.0
      %5959 = vmatpush1.msra.mxu0 0.0
      %5960 = vmatprep.subr.mxu0 0.0
      %5961 = vmatpush1.msra.mxu0 0.0
      %5962 = vmatprep.subr.mxu0 0.0
      %5963 = vmatpush1.msra.mxu0 0.0
      %5964 = vmatprep.subr.mxu0 0.0
      %5965 = vmatpush1.msra.mxu0 0.0
      %5966 = vmatprep.subr.mxu0 0.0
      %5967 = vmatpush1.msra.mxu0 0.0
      %5968 = vmatprep.subr.mxu0 0.0
      %5969 = vmatpush1.msra.mxu0 0.0
      %5970 = vmatprep.subr.mxu0 0.0
      %5971 = vmatpush1.msra.mxu0 0.0
      %5972 = vmatprep.subr.mxu0 0.0
      %5973 = vmatpush1.msra.mxu0 0.0
      %5974 = vmatprep.subr.mxu0 0.0
      %5975 = vmatpush1.msra.mxu0 0.0
      %5976 = vmatprep.subr.mxu0 0.0
      %5977 = vmatpush1.msra.mxu0 0.0
      %5978 = vmatprep.subr.mxu0 0.0
      %5979 = vmatpush1.msra.mxu0 0.0
      %5980 = vmatprep.subr.mxu0 0.0
      %5981 = vmatpush1.msra.mxu0 0.0
      %5982 = vmatprep.mubr.f32.mxu0 0.0
      %5983 = vmatmul.mubr.f32.gmra.mrb[0].mxu0 %v5839
      %v5984 = vpop.f32.mrb[0].mxu0
      %v5985 = vadd.f32 0.0, %v5984
      %v5986 = vpop.f32.mrb[0].mxu0
      %5987 = vdwg.mxu0
      %v5988 = vadd.f32 %v5745, %v5914
      %v5989 = vadd.f32 %v5747, %v5916
      %v5990 = vadd.f32 %v5816, %v5985
      %v5991 = vld [vmem:[#allocation5] sm:$0xff]
      %v5992 = vld [vmem:[#allocation5 + $0x8] sm:$0xff]
      %s5993 = scalar_lea.vmem %s10, 24
      %v5994 = vld [vmem:[%s5993] sm:$0x3f]
      %v5997 = vcombine.high %v5991, %v5991
      %v5998 = vcombine.high %v5992, %v5992
      %5999 = vrot.lane.b32.xlu0 %v5991, 60
      %v6000 = vpop.permute.xlu0 %5999
      %6001 = vrot.lane.b32.xlu0 %v5997, 60
      %v6002 = vpop.permute.xlu0 %6001
      %6003 = vrot.lane.b32.xlu0 %v5992, 60
      %v6004 = vpop.permute.xlu0 %6003
      %6005 = vrot.lane.b32.xlu0 %v5998, 60
      %v6006 = vpop.permute.xlu0 %6005
      %v6007 = vsel %vm1403, %v6000, %v6002
      %v6008 = vsel %vm1403, %v6002, %v6004
      %v6009 = vsel %vm1403, %v6004, %v6006
      %v6011 = vsel %vm2435, %v5994, 0
      %v6013 = vsel %vm2386, %v6007, 0
      %v6015 = vsel %vm2386, %v6008, 0
      %v6017 = vsel %vm2386, %v6009, 0
      %6019 = vmatprep.subr.mxu0 %v6015
      %6020 = vmatpush1.msra.mxu0 %v6013
      %6021 = vmatprep.subr.mxu0 0.0
      %6022 = vmatpush1.msra.mxu0 0.0
      %6023 = vmatprep.subr.mxu0 0.0
      %6024 = vmatpush1.msra.mxu0 0.0
      %6025 = vmatprep.subr.mxu0 0.0
      %6026 = vmatpush1.msra.mxu0 0.0
      %6027 = vmatprep.subr.mxu0 0.0
      %6028 = vmatpush1.msra.mxu0 0.0
      %6029 = vmatprep.subr.mxu0 0.0
      %6030 = vmatpush1.msra.mxu0 0.0
      %6031 = vmatprep.subr.mxu0 0.0
      %6032 = vmatpush1.msra.mxu0 0.0
      %6033 = vmatprep.subr.mxu0 0.0
      %6034 = vmatpush1.msra.mxu0 0.0
      %6035 = vmatprep.subr.mxu0 0.0
      %6036 = vmatpush1.msra.mxu0 0.0
      %6037 = vmatprep.subr.mxu0 0.0
      %6038 = vmatpush1.msra.mxu0 0.0
      %6039 = vmatprep.subr.mxu0 0.0
      %6040 = vmatpush1.msra.mxu0 0.0
      %6041 = vmatprep.subr.mxu0 0.0
      %6042 = vmatpush1.msra.mxu0 0.0
      %6043 = vmatprep.subr.mxu0 0.0
      %6044 = vmatpush1.msra.mxu0 0.0
      %6045 = vmatprep.subr.mxu0 0.0
      %6046 = vmatpush1.msra.mxu0 0.0
      %6047 = vmatprep.subr.mxu0 0.0
      %6048 = vmatpush1.msra.mxu0 0.0
      %6049 = vmatprep.subr.mxu0 0.0
      %6050 = vmatpush1.msra.mxu0 0.0
      %6051 = vmatprep.subr.mxu0 0.0
      %6052 = vmatpush1.msra.mxu0 0.0
      %6053 = vmatprep.subr.mxu0 0.0
      %6054 = vmatpush1.msra.mxu0 0.0
      %6055 = vmatprep.subr.mxu0 0.0
      %6056 = vmatpush1.msra.mxu0 0.0
      %6057 = vmatprep.subr.mxu0 0.0
      %6058 = vmatpush1.msra.mxu0 0.0
      %6059 = vmatprep.subr.mxu0 0.0
      %6060 = vmatpush1.msra.mxu0 0.0
      %6061 = vmatprep.subr.mxu0 0.0
      %6062 = vmatpush1.msra.mxu0 0.0
      %6063 = vmatprep.subr.mxu0 0.0
      %6064 = vmatpush1.msra.mxu0 0.0
      %6065 = vmatprep.subr.mxu0 0.0
      %6066 = vmatpush1.msra.mxu0 0.0
      %6067 = vmatprep.subr.mxu0 0.0
      %6068 = vmatpush1.msra.mxu0 0.0
      %6069 = vmatprep.subr.mxu0 0.0
      %6070 = vmatpush1.msra.mxu0 0.0
      %6071 = vmatprep.subr.mxu0 0.0
      %6072 = vmatpush1.msra.mxu0 0.0
      %6073 = vmatprep.subr.mxu0 0.0
      %6074 = vmatpush1.msra.mxu0 0.0
      %6075 = vmatprep.subr.mxu0 0.0
      %6076 = vmatpush1.msra.mxu0 0.0
      %6077 = vmatprep.subr.mxu0 0.0
      %6078 = vmatpush1.msra.mxu0 0.0
      %6079 = vmatprep.subr.mxu0 0.0
      %6080 = vmatpush1.msra.mxu0 0.0
      %6081 = vmatprep.subr.mxu0 0.0
      %6082 = vmatpush1.msra.mxu0 0.0
      %6083 = vmatprep.mubr.f32.mxu0 0.0
      %6084 = vmatmul.mubr.f32.gmra.mrb[0].mxu0 %v6011
      %v6085 = vpop.f32.mrb[0].mxu0
      %v6086 = vadd.f32 0.0, %v6085
      %v6087 = vpop.f32.mrb[0].mxu0
      %v6088 = vadd.f32 0.0, %v6087
      %6089 = vdwg.mxu0
      %6090 = vmatprep.subr.mxu0 0.0
      %6091 = vmatpush1.msra.mxu0 %v6017
      %6092 = vmatprep.subr.mxu0 0.0
      %6093 = vmatpush1.msra.mxu0 0.0
      %6094 = vmatprep.subr.mxu0 0.0
      %6095 = vmatpush1.msra.mxu0 0.0
      %6096 = vmatprep.subr.mxu0 0.0
      %6097 = vmatpush1.msra.mxu0 0.0
      %6098 = vmatprep.subr.mxu0 0.0
      %6099 = vmatpush1.msra.mxu0 0.0
      %6100 = vmatprep.subr.mxu0 0.0
      %6101 = vmatpush1.msra.mxu0 0.0
      %6102 = vmatprep.subr.mxu0 0.0
      %6103 = vmatpush1.msra.mxu0 0.0
      %6104 = vmatprep.subr.mxu0 0.0
      %6105 = vmatpush1.msra.mxu0 0.0
      %6106 = vmatprep.subr.mxu0 0.0
      %6107 = vmatpush1.msra.mxu0 0.0
      %6108 = vmatprep.subr.mxu0 0.0
      %6109 = vmatpush1.msra.mxu0 0.0
      %6110 = vmatprep.subr.mxu0 0.0
      %6111 = vmatpush1.msra.mxu0 0.0
      %6112 = vmatprep.subr.mxu0 0.0
      %6113 = vmatpush1.msra.mxu0 0.0
      %6114 = vmatprep.subr.mxu0 0.0
      %6115 = vmatpush1.msra.mxu0 0.0
      %6116 = vmatprep.subr.mxu0 0.0
      %6117 = vmatpush1.msra.mxu0 0.0
      %6118 = vmatprep.subr.mxu0 0.0
      %6119 = vmatpush1.msra.mxu0 0.0
      %6120 = vmatprep.subr.mxu0 0.0
      %6121 = vmatpush1.msra.mxu0 0.0
      %6122 = vmatprep.subr.mxu0 0.0
      %6123 = vmatpush1.msra.mxu0 0.0
      %6124 = vmatprep.subr.mxu0 0.0
      %6125 = vmatpush1.msra.mxu0 0.0
      %6126 = vmatprep.subr.mxu0 0.0
      %6127 = vmatpush1.msra.mxu0 0.0
      %6128 = vmatprep.subr.mxu0 0.0
      %6129 = vmatpush1.msra.mxu0 0.0
      %6130 = vmatprep.subr.mxu0 0.0
      %6131 = vmatpush1.msra.mxu0 0.0
      %6132 = vmatprep.subr.mxu0 0.0
      %6133 = vmatpush1.msra.mxu0 0.0
      %6134 = vmatprep.subr.mxu0 0.0
      %6135 = vmatpush1.msra.mxu0 0.0
      %6136 = vmatprep.subr.mxu0 0.0
      %6137 = vmatpush1.msra.mxu0 0.0
      %6138 = vmatprep.subr.mxu0 0.0
      %6139 = vmatpush1.msra.mxu0 0.0
      %6140 = vmatprep.subr.mxu0 0.0
      %6141 = vmatpush1.msra.mxu0 0.0
      %6142 = vmatprep.subr.mxu0 0.0
      %6143 = vmatpush1.msra.mxu0 0.0
      %6144 = vmatprep.subr.mxu0 0.0
      %6145 = vmatpush1.msra.mxu0 0.0
      %6146 = vmatprep.subr.mxu0 0.0
      %6147 = vmatpush1.msra.mxu0 0.0
      %6148 = vmatprep.subr.mxu0 0.0
      %6149 = vmatpush1.msra.mxu0 0.0
      %6150 = vmatprep.subr.mxu0 0.0
      %6151 = vmatpush1.msra.mxu0 0.0
      %6152 = vmatprep.subr.mxu0 0.0
      %6153 = vmatpush1.msra.mxu0 0.0
      %6154 = vmatprep.mubr.f32.mxu0 0.0
      %6155 = vmatmul.mubr.f32.gmra.mrb[0].mxu0 %v6011
      %v6156 = vpop.f32.mrb[0].mxu0
      %v6157 = vadd.f32 0.0, %v6156
      %v6158 = vpop.f32.mrb[0].mxu0
      %6159 = vdwg.mxu0
      %v6160 = vadd.f32 %v5988, %v6086
      %v6161 = vadd.f32 %v5989, %v6088
      %v6162 = vadd.f32 %v5990, %v6157
      %v6163 = vld [vmem:[#allocation5] sm:$0xff]
      %v6164 = vld [vmem:[#allocation5 + $0x8] sm:$0xff]
      %s6165 = scalar_lea.vmem %s10, 32
      %v6166 = vld [vmem:[%s6165] sm:$0x3f]
      %v6169 = vcombine.high %v6163, %v6163
      %v6170 = vcombine.high %v6164, %v6164
      %6171 = vrot.lane.b32.xlu0 %v6163, 59
      %v6172 = vpop.permute.xlu0 %6171
      %6173 = vrot.lane.b32.xlu0 %v6169, 59
      %v6174 = vpop.permute.xlu0 %6173
      %6175 = vrot.lane.b32.xlu0 %v6164, 59
      %v6176 = vpop.permute.xlu0 %6175
      %6177 = vrot.lane.b32.xlu0 %v6170, 59
      %v6178 = vpop.permute.xlu0 %6177
      %v6179 = vsel %vm1567, %v6172, %v6174
      %v6180 = vsel %vm1567, %v6174, %v6176
      %v6181 = vsel %vm1567, %v6176, %v6178
      %v6183 = vsel %vm2435, %v6166, 0
      %v6185 = vsel %vm2386, %v6179, 0
      %v6187 = vsel %vm2386, %v6180, 0
      %v6189 = vsel %vm2386, %v6181, 0
      %6191 = vmatprep.subr.mxu0 %v6187
      %6192 = vmatpush1.msra.mxu0 %v6185
      %6193 = vmatprep.subr.mxu0 0.0
      %6194 = vmatpush1.msra.mxu0 0.0
      %6195 = vmatprep.subr.mxu0 0.0
      %6196 = vmatpush1.msra.mxu0 0.0
      %6197 = vmatprep.subr.mxu0 0.0
      %6198 = vmatpush1.msra.mxu0 0.0
      %6199 = vmatprep.subr.mxu0 0.0
      %6200 = vmatpush1.msra.mxu0 0.0
      %6201 = vmatprep.subr.mxu0 0.0
      %6202 = vmatpush1.msra.mxu0 0.0
      %6203 = vmatprep.subr.mxu0 0.0
      %6204 = vmatpush1.msra.mxu0 0.0
      %6205 = vmatprep.subr.mxu0 0.0
      %6206 = vmatpush1.msra.mxu0 0.0
      %6207 = vmatprep.subr.mxu0 0.0
      %6208 = vmatpush1.msra.mxu0 0.0
      %6209 = vmatprep.subr.mxu0 0.0
      %6210 = vmatpush1.msra.mxu0 0.0
      %6211 = vmatprep.subr.mxu0 0.0
      %6212 = vmatpush1.msra.mxu0 0.0
      %6213 = vmatprep.subr.mxu0 0.0
      %6214 = vmatpush1.msra.mxu0 0.0
      %6215 = vmatprep.subr.mxu0 0.0
      %6216 = vmatpush1.msra.mxu0 0.0
      %6217 = vmatprep.subr.mxu0 0.0
      %6218 = vmatpush1.msra.mxu0 0.0
      %6219 = vmatprep.subr.mxu0 0.0
      %6220 = vmatpush1.msra.mxu0 0.0
      %6221 = vmatprep.subr.mxu0 0.0
      %6222 = vmatpush1.msra.mxu0 0.0
      %6223 = vmatprep.subr.mxu0 0.0
      %6224 = vmatpush1.msra.mxu0 0.0
      %6225 = vmatprep.subr.mxu0 0.0
      %6226 = vmatpush1.msra.mxu0 0.0
      %6227 = vmatprep.subr.mxu0 0.0
      %6228 = vmatpush1.msra.mxu0 0.0
      %6229 = vmatprep.subr.mxu0 0.0
      %6230 = vmatpush1.msra.mxu0 0.0
      %6231 = vmatprep.subr.mxu0 0.0
      %6232 = vmatpush1.msra.mxu0 0.0
      %6233 = vmatprep.subr.mxu0 0.0
      %6234 = vmatpush1.msra.mxu0 0.0
      %6235 = vmatprep.subr.mxu0 0.0
      %6236 = vmatpush1.msra.mxu0 0.0
      %6237 = vmatprep.subr.mxu0 0.0
      %6238 = vmatpush1.msra.mxu0 0.0
      %6239 = vmatprep.subr.mxu0 0.0
      %6240 = vmatpush1.msra.mxu0 0.0
      %6241 = vmatprep.subr.mxu0 0.0
      %6242 = vmatpush1.msra.mxu0 0.0
      %6243 = vmatprep.subr.mxu0 0.0
      %6244 = vmatpush1.msra.mxu0 0.0
      %6245 = vmatprep.subr.mxu0 0.0
      %6246 = vmatpush1.msra.mxu0 0.0
      %6247 = vmatprep.subr.mxu0 0.0
      %6248 = vmatpush1.msra.mxu0 0.0
      %6249 = vmatprep.subr.mxu0 0.0
      %6250 = vmatpush1.msra.mxu0 0.0
      %6251 = vmatprep.subr.mxu0 0.0
      %6252 = vmatpush1.msra.mxu0 0.0
      %6253 = vmatprep.subr.mxu0 0.0
      %6254 = vmatpush1.msra.mxu0 0.0
      %6255 = vmatprep.mubr.f32.mxu0 0.0
      %6256 = vmatmul.mubr.f32.gmra.mrb[0].mxu0 %v6183
      %v6257 = vpop.f32.mrb[0].mxu0
      %v6258 = vadd.f32 0.0, %v6257
      %v6259 = vpop.f32.mrb[0].mxu0
      %v6260 = vadd.f32 0.0, %v6259
      %6261 = vdwg.mxu0
      %6262 = vmatprep.subr.mxu0 0.0
      %6263 = vmatpush1.msra.mxu0 %v6189
      %6264 = vmatprep.subr.mxu0 0.0
      %6265 = vmatpush1.msra.mxu0 0.0
      %6266 = vmatprep.subr.mxu0 0.0
      %6267 = vmatpush1.msra.mxu0 0.0
      %6268 = vmatprep.subr.mxu0 0.0
      %6269 = vmatpush1.msra.mxu0 0.0
      %6270 = vmatprep.subr.mxu0 0.0
      %6271 = vmatpush1.msra.mxu0 0.0
      %6272 = vmatprep.subr.mxu0 0.0
      %6273 = vmatpush1.msra.mxu0 0.0
      %6274 = vmatprep.subr.mxu0 0.0
      %6275 = vmatpush1.msra.mxu0 0.0
      %6276 = vmatprep.subr.mxu0 0.0
      %6277 = vmatpush1.msra.mxu0 0.0
      %6278 = vmatprep.subr.mxu0 0.0
      %6279 = vmatpush1.msra.mxu0 0.0
      %6280 = vmatprep.subr.mxu0 0.0
      %6281 = vmatpush1.msra.mxu0 0.0
      %6282 = vmatprep.subr.mxu0 0.0
      %6283 = vmatpush1.msra.mxu0 0.0
      %6284 = vmatprep.subr.mxu0 0.0
      %6285 = vmatpush1.msra.mxu0 0.0
      %6286 = vmatprep.subr.mxu0 0.0
      %6287 = vmatpush1.msra.mxu0 0.0
      %6288 = vmatprep.subr.mxu0 0.0
      %6289 = vmatpush1.msra.mxu0 0.0
      %6290 = vmatprep.subr.mxu0 0.0
      %6291 = vmatpush1.msra.mxu0 0.0
      %6292 = vmatprep.subr.mxu0 0.0
      %6293 = vmatpush1.msra.mxu0 0.0
      %6294 = vmatprep.subr.mxu0 0.0
      %6295 = vmatpush1.msra.mxu0 0.0
      %6296 = vmatprep.subr.mxu0 0.0
      %6297 = vmatpush1.msra.mxu0 0.0
      %6298 = vmatprep.subr.mxu0 0.0
      %6299 = vmatpush1.msra.mxu0 0.0
      %6300 = vmatprep.subr.mxu0 0.0
      %6301 = vmatpush1.msra.mxu0 0.0
      %6302 = vmatprep.subr.mxu0 0.0
      %6303 = vmatpush1.msra.mxu0 0.0
      %6304 = vmatprep.subr.mxu0 0.0
      %6305 = vmatpush1.msra.mxu0 0.0
      %6306 = vmatprep.subr.mxu0 0.0
      %6307 = vmatpush1.msra.mxu0 0.0
      %6308 = vmatprep.subr.mxu0 0.0
      %6309 = vmatpush1.msra.mxu0 0.0
      %6310 = vmatprep.subr.mxu0 0.0
      %6311 = vmatpush1.msra.mxu0 0.0
      %6312 = vmatprep.subr.mxu0 0.0
      %6313 = vmatpush1.msra.mxu0 0.0
      %6314 = vmatprep.subr.mxu0 0.0
      %6315 = vmatpush1.msra.mxu0 0.0
      %6316 = vmatprep.subr.mxu0 0.0
      %6317 = vmatpush1.msra.mxu0 0.0
      %6318 = vmatprep.subr.mxu0 0.0
      %6319 = vmatpush1.msra.mxu0 0.0
      %6320 = vmatprep.subr.mxu0 0.0
      %6321 = vmatpush1.msra.mxu0 0.0
      %6322 = vmatprep.subr.mxu0 0.0
      %6323 = vmatpush1.msra.mxu0 0.0
      %6324 = vmatprep.subr.mxu0 0.0
      %6325 = vmatpush1.msra.mxu0 0.0
      %6326 = vmatprep.mubr.f32.mxu0 0.0
      %6327 = vmatmul.mubr.f32.gmra.mrb[0].mxu0 %v6183
      %v6328 = vpop.f32.mrb[0].mxu0
      %v6329 = vadd.f32 0.0, %v6328
      %v6330 = vpop.f32.mrb[0].mxu0
      %6331 = vdwg.mxu0
      %v6332 = vadd.f32 %v6160, %v6258
      %v6333 = vadd.f32 %v6161, %v6260
      %v6334 = vadd.f32 %v6162, %v6329
      %v6335 = vld [vmem:[#allocation5] sm:$0xff]
      %v6336 = vld [vmem:[#allocation5 + $0x8] sm:$0xff]
      %s6337 = scalar_lea.vmem %s10, 40
      %v6338 = vld [vmem:[%s6337] sm:$0x3f]
      %v6341 = vcombine.high %v6335, %v6335
      %v6342 = vcombine.high %v6336, %v6336
      %6343 = vrot.lane.b32.xlu0 %v6335, 58
      %v6344 = vpop.permute.xlu0 %6343
      %6345 = vrot.lane.b32.xlu0 %v6341, 58
      %v6346 = vpop.permute.xlu0 %6345
      %6347 = vrot.lane.b32.xlu0 %v6336, 58
      %v6348 = vpop.permute.xlu0 %6347
      %6349 = vrot.lane.b32.xlu0 %v6342, 58
      %v6350 = vpop.permute.xlu0 %6349
      %v6351 = vsel %vm1731, %v6344, %v6346
      %v6352 = vsel %vm1731, %v6346, %v6348
      %v6353 = vsel %vm1731, %v6348, %v6350
      %v6355 = vsel %vm2435, %v6338, 0
      %v6357 = vsel %vm2386, %v6351, 0
      %v6359 = vsel %vm2386, %v6352, 0
      %v6361 = vsel %vm2386, %v6353, 0
      %6363 = vmatprep.subr.mxu0 %v6359
      %6364 = vmatpush1.msra.mxu0 %v6357
      %6365 = vmatprep.subr.mxu0 0.0
      %6366 = vmatpush1.msra.mxu0 0.0
      %6367 = vmatprep.subr.mxu0 0.0
      %6368 = vmatpush1.msra.mxu0 0.0
      %6369 = vmatprep.subr.mxu0 0.0
      %6370 = vmatpush1.msra.mxu0 0.0
      %6371 = vmatprep.subr.mxu0 0.0
      %6372 = vmatpush1.msra.mxu0 0.0
      %6373 = vmatprep.subr.mxu0 0.0
      %6374 = vmatpush1.msra.mxu0 0.0
      %6375 = vmatprep.subr.mxu0 0.0
      %6376 = vmatpush1.msra.mxu0 0.0
      %6377 = vmatprep.subr.mxu0 0.0
      %6378 = vmatpush1.msra.mxu0 0.0
      %6379 = vmatprep.subr.mxu0 0.0
      %6380 = vmatpush1.msra.mxu0 0.0
      %6381 = vmatprep.subr.mxu0 0.0
      %6382 = vmatpush1.msra.mxu0 0.0
      %6383 = vmatprep.subr.mxu0 0.0
      %6384 = vmatpush1.msra.mxu0 0.0
      %6385 = vmatprep.subr.mxu0 0.0
      %6386 = vmatpush1.msra.mxu0 0.0
      %6387 = vmatprep.subr.mxu0 0.0
      %6388 = vmatpush1.msra.mxu0 0.0
      %6389 = vmatprep.subr.mxu0 0.0
      %6390 = vmatpush1.msra.mxu0 0.0
      %6391 = vmatprep.subr.mxu0 0.0
      %6392 = vmatpush1.msra.mxu0 0.0
      %6393 = vmatprep.subr.mxu0 0.0
      %6394 = vmatpush1.msra.mxu0 0.0
      %6395 = vmatprep.subr.mxu0 0.0
      %6396 = vmatpush1.msra.mxu0 0.0
      %6397 = vmatprep.subr.mxu0 0.0
      %6398 = vmatpush1.msra.mxu0 0.0
      %6399 = vmatprep.subr.mxu0 0.0
      %6400 = vmatpush1.msra.mxu0 0.0
      %6401 = vmatprep.subr.mxu0 0.0
      %6402 = vmatpush1.msra.mxu0 0.0
      %6403 = vmatprep.subr.mxu0 0.0
      %6404 = vmatpush1.msra.mxu0 0.0
      %6405 = vmatprep.subr.mxu0 0.0
      %6406 = vmatpush1.msra.mxu0 0.0
      %6407 = vmatprep.subr.mxu0 0.0
      %6408 = vmatpush1.msra.mxu0 0.0
      %6409 = vmatprep.subr.mxu0 0.0
      %6410 = vmatpush1.msra.mxu0 0.0
      %6411 = vmatprep.subr.mxu0 0.0
      %6412 = vmatpush1.msra.mxu0 0.0
      %6413 = vmatprep.subr.mxu0 0.0
      %6414 = vmatpush1.msra.mxu0 0.0
      %6415 = vmatprep.subr.mxu0 0.0
      %6416 = vmatpush1.msra.mxu0 0.0
      %6417 = vmatprep.subr.mxu0 0.0
      %6418 = vmatpush1.msra.mxu0 0.0
      %6419 = vmatprep.subr.mxu0 0.0
      %6420 = vmatpush1.msra.mxu0 0.0
      %6421 = vmatprep.subr.mxu0 0.0
      %6422 = vmatpush1.msra.mxu0 0.0
      %6423 = vmatprep.subr.mxu0 0.0
      %6424 = vmatpush1.msra.mxu0 0.0
      %6425 = vmatprep.subr.mxu0 0.0
      %6426 = vmatpush1.msra.mxu0 0.0
      %6427 = vmatprep.mubr.f32.mxu0 0.0
      %6428 = vmatmul.mubr.f32.gmra.mrb[0].mxu0 %v6355
      %v6429 = vpop.f32.mrb[0].mxu0
      %v6430 = vadd.f32 0.0, %v6429
      %v6431 = vpop.f32.mrb[0].mxu0
      %v6432 = vadd.f32 0.0, %v6431
      %6433 = vdwg.mxu0
      %6434 = vmatprep.subr.mxu0 0.0
      %6435 = vmatpush1.msra.mxu0 %v6361
      %6436 = vmatprep.subr.mxu0 0.0
      %6437 = vmatpush1.msra.mxu0 0.0
      %6438 = vmatprep.subr.mxu0 0.0
      %6439 = vmatpush1.msra.mxu0 0.0
      %6440 = vmatprep.subr.mxu0 0.0
      %6441 = vmatpush1.msra.mxu0 0.0
      %6442 = vmatprep.subr.mxu0 0.0
      %6443 = vmatpush1.msra.mxu0 0.0
      %6444 = vmatprep.subr.mxu0 0.0
      %6445 = vmatpush1.msra.mxu0 0.0
      %6446 = vmatprep.subr.mxu0 0.0
      %6447 = vmatpush1.msra.mxu0 0.0
      %6448 = vmatprep.subr.mxu0 0.0
      %6449 = vmatpush1.msra.mxu0 0.0
      %6450 = vmatprep.subr.mxu0 0.0
      %6451 = vmatpush1.msra.mxu0 0.0
      %6452 = vmatprep.subr.mxu0 0.0
      %6453 = vmatpush1.msra.mxu0 0.0
      %6454 = vmatprep.subr.mxu0 0.0
      %6455 = vmatpush1.msra.mxu0 0.0
      %6456 = vmatprep.subr.mxu0 0.0
      %6457 = vmatpush1.msra.mxu0 0.0
      %6458 = vmatprep.subr.mxu0 0.0
      %6459 = vmatpush1.msra.mxu0 0.0
      %6460 = vmatprep.subr.mxu0 0.0
      %6461 = vmatpush1.msra.mxu0 0.0
      %6462 = vmatprep.subr.mxu0 0.0
      %6463 = vmatpush1.msra.mxu0 0.0
      %6464 = vmatprep.subr.mxu0 0.0
      %6465 = vmatpush1.msra.mxu0 0.0
      %6466 = vmatprep.subr.mxu0 0.0
      %6467 = vmatpush1.msra.mxu0 0.0
      %6468 = vmatprep.subr.mxu0 0.0
      %6469 = vmatpush1.msra.mxu0 0.0
      %6470 = vmatprep.subr.mxu0 0.0
      %6471 = vmatpush1.msra.mxu0 0.0
      %6472 = vmatprep.subr.mxu0 0.0
      %6473 = vmatpush1.msra.mxu0 0.0
      %6474 = vmatprep.subr.mxu0 0.0
      %6475 = vmatpush1.msra.mxu0 0.0
      %6476 = vmatprep.subr.mxu0 0.0
      %6477 = vmatpush1.msra.mxu0 0.0
      %6478 = vmatprep.subr.mxu0 0.0
      %6479 = vmatpush1.msra.mxu0 0.0
      %6480 = vmatprep.subr.mxu0 0.0
      %6481 = vmatpush1.msra.mxu0 0.0
      %6482 = vmatprep.subr.mxu0 0.0
      %6483 = vmatpush1.msra.mxu0 0.0
      %6484 = vmatprep.subr.mxu0 0.0
      %6485 = vmatpush1.msra.mxu0 0.0
      %6486 = vmatprep.subr.mxu0 0.0
      %6487 = vmatpush1.msra.mxu0 0.0
      %6488 = vmatprep.subr.mxu0 0.0
      %6489 = vmatpush1.msra.mxu0 0.0
      %6490 = vmatprep.subr.mxu0 0.0
      %6491 = vmatpush1.msra.mxu0 0.0
      %6492 = vmatprep.subr.mxu0 0.0
      %6493 = vmatpush1.msra.mxu0 0.0
      %6494 = vmatprep.subr.mxu0 0.0
      %6495 = vmatpush1.msra.mxu0 0.0
      %6496 = vmatprep.subr.mxu0 0.0
      %6497 = vmatpush1.msra.mxu0 0.0
      %6498 = vmatprep.mubr.f32.mxu0 0.0
      %6499 = vmatmul.mubr.f32.gmra.mrb[0].mxu0 %v6355
      %v6500 = vpop.f32.mrb[0].mxu0
      %v6501 = vadd.f32 0.0, %v6500
      %v6502 = vpop.f32.mrb[0].mxu0
      %6503 = vdwg.mxu0
      %v6504 = vadd.f32 %v6332, %v6430
      %v6505 = vadd.f32 %v6333, %v6432
      %v6506 = vadd.f32 %v6334, %v6501
      %v6507 = vld [vmem:[#allocation5] sm:$0xff]
      %v6508 = vld [vmem:[#allocation5 + $0x8] sm:$0xff]
      %s6509 = scalar_lea.vmem %s10, 48
      %v6510 = vld [vmem:[%s6509] sm:$0x3f]
      %v6513 = vcombine.high %v6507, %v6507
      %v6514 = vcombine.high %v6508, %v6508
      %6515 = vrot.lane.b32.xlu0 %v6507, 38
      %v6516 = vpop.permute.xlu0 %6515
      %6517 = vrot.lane.b32.xlu0 %v6513, 38
      %v6518 = vpop.permute.xlu0 %6517
      %6519 = vrot.lane.b32.xlu0 %v6508, 38
      %v6520 = vpop.permute.xlu0 %6519
      %6521 = vrot.lane.b32.xlu0 %v6514, 38
      %v6522 = vpop.permute.xlu0 %6521
      %v6523 = vsel %vm1895, %v6516, %v6518
      %v6524 = vsel %vm1895, %v6518, %v6520
      %v6525 = vsel %vm1895, %v6520, %v6522
      %v6527 = vsel %vm2435, %v6510, 0
      %v6529 = vsel %vm2386, %v6523, 0
      %v6531 = vsel %vm2386, %v6524, 0
      %v6533 = vsel %vm2386, %v6525, 0
      %6535 = vmatprep.subr.mxu0 %v6531
      %6536 = vmatpush1.msra.mxu0 %v6529
      %6537 = vmatprep.subr.mxu0 0.0
      %6538 = vmatpush1.msra.mxu0 0.0
      %6539 = vmatprep.subr.mxu0 0.0
      %6540 = vmatpush1.msra.mxu0 0.0
      %6541 = vmatprep.subr.mxu0 0.0
      %6542 = vmatpush1.msra.mxu0 0.0
      %6543 = vmatprep.subr.mxu0 0.0
      %6544 = vmatpush1.msra.mxu0 0.0
      %6545 = vmatprep.subr.mxu0 0.0
      %6546 = vmatpush1.msra.mxu0 0.0
      %6547 = vmatprep.subr.mxu0 0.0
      %6548 = vmatpush1.msra.mxu0 0.0
      %6549 = vmatprep.subr.mxu0 0.0
      %6550 = vmatpush1.msra.mxu0 0.0
      %6551 = vmatprep.subr.mxu0 0.0
      %6552 = vmatpush1.msra.mxu0 0.0
      %6553 = vmatprep.subr.mxu0 0.0
      %6554 = vmatpush1.msra.mxu0 0.0
      %6555 = vmatprep.subr.mxu0 0.0
      %6556 = vmatpush1.msra.mxu0 0.0
      %6557 = vmatprep.subr.mxu0 0.0
      %6558 = vmatpush1.msra.mxu0 0.0
      %6559 = vmatprep.subr.mxu0 0.0
      %6560 = vmatpush1.msra.mxu0 0.0
      %6561 = vmatprep.subr.mxu0 0.0
      %6562 = vmatpush1.msra.mxu0 0.0
      %6563 = vmatprep.subr.mxu0 0.0
      %6564 = vmatpush1.msra.mxu0 0.0
      %6565 = vmatprep.subr.mxu0 0.0
      %6566 = vmatpush1.msra.mxu0 0.0
      %6567 = vmatprep.subr.mxu0 0.0
      %6568 = vmatpush1.msra.mxu0 0.0
      %6569 = vmatprep.subr.mxu0 0.0
      %6570 = vmatpush1.msra.mxu0 0.0
      %6571 = vmatprep.subr.mxu0 0.0
      %6572 = vmatpush1.msra.mxu0 0.0
      %6573 = vmatprep.subr.mxu0 0.0
      %6574 = vmatpush1.msra.mxu0 0.0
      %6575 = vmatprep.subr.mxu0 0.0
      %6576 = vmatpush1.msra.mxu0 0.0
      %6577 = vmatprep.subr.mxu0 0.0
      %6578 = vmatpush1.msra.mxu0 0.0
      %6579 = vmatprep.subr.mxu0 0.0
      %6580 = vmatpush1.msra.mxu0 0.0
      %6581 = vmatprep.subr.mxu0 0.0
      %6582 = vmatpush1.msra.mxu0 0.0
      %6583 = vmatprep.subr.mxu0 0.0
      %6584 = vmatpush1.msra.mxu0 0.0
      %6585 = vmatprep.subr.mxu0 0.0
      %6586 = vmatpush1.msra.mxu0 0.0
      %6587 = vmatprep.subr.mxu0 0.0
      %6588 = vmatpush1.msra.mxu0 0.0
      %6589 = vmatprep.subr.mxu0 0.0
      %6590 = vmatpush1.msra.mxu0 0.0
      %6591 = vmatprep.subr.mxu0 0.0
      %6592 = vmatpush1.msra.mxu0 0.0
      %6593 = vmatprep.subr.mxu0 0.0
      %6594 = vmatpush1.msra.mxu0 0.0
      %6595 = vmatprep.subr.mxu0 0.0
      %6596 = vmatpush1.msra.mxu0 0.0
      %6597 = vmatprep.subr.mxu0 0.0
      %6598 = vmatpush1.msra.mxu0 0.0
      %6599 = vmatprep.mubr.f32.mxu0 0.0
      %6600 = vmatmul.mubr.f32.gmra.mrb[0].mxu0 %v6527
      %v6601 = vpop.f32.mrb[0].mxu0
      %v6602 = vadd.f32 0.0, %v6601
      %v6603 = vpop.f32.mrb[0].mxu0
      %v6604 = vadd.f32 0.0, %v6603
      %6605 = vdwg.mxu0
      %6606 = vmatprep.subr.mxu0 0.0
      %6607 = vmatpush1.msra.mxu0 %v6533
      %6608 = vmatprep.subr.mxu0 0.0
      %6609 = vmatpush1.msra.mxu0 0.0
      %6610 = vmatprep.subr.mxu0 0.0
      %6611 = vmatpush1.msra.mxu0 0.0
      %6612 = vmatprep.subr.mxu0 0.0
      %6613 = vmatpush1.msra.mxu0 0.0
      %6614 = vmatprep.subr.mxu0 0.0
      %6615 = vmatpush1.msra.mxu0 0.0
      %6616 = vmatprep.subr.mxu0 0.0
      %6617 = vmatpush1.msra.mxu0 0.0
      %6618 = vmatprep.subr.mxu0 0.0
      %6619 = vmatpush1.msra.mxu0 0.0
      %6620 = vmatprep.subr.mxu0 0.0
      %6621 = vmatpush1.msra.mxu0 0.0
      %6622 = vmatprep.subr.mxu0 0.0
      %6623 = vmatpush1.msra.mxu0 0.0
      %6624 = vmatprep.subr.mxu0 0.0
      %6625 = vmatpush1.msra.mxu0 0.0
      %6626 = vmatprep.subr.mxu0 0.0
      %6627 = vmatpush1.msra.mxu0 0.0
      %6628 = vmatprep.subr.mxu0 0.0
      %6629 = vmatpush1.msra.mxu0 0.0
      %6630 = vmatprep.subr.mxu0 0.0
      %6631 = vmatpush1.msra.mxu0 0.0
      %6632 = vmatprep.subr.mxu0 0.0
      %6633 = vmatpush1.msra.mxu0 0.0
      %6634 = vmatprep.subr.mxu0 0.0
      %6635 = vmatpush1.msra.mxu0 0.0
      %6636 = vmatprep.subr.mxu0 0.0
      %6637 = vmatpush1.msra.mxu0 0.0
      %6638 = vmatprep.subr.mxu0 0.0
      %6639 = vmatpush1.msra.mxu0 0.0
      %6640 = vmatprep.subr.mxu0 0.0
      %6641 = vmatpush1.msra.mxu0 0.0
      %6642 = vmatprep.subr.mxu0 0.0
      %6643 = vmatpush1.msra.mxu0 0.0
      %6644 = vmatprep.subr.mxu0 0.0
      %6645 = vmatpush1.msra.mxu0 0.0
      %6646 = vmatprep.subr.mxu0 0.0
      %6647 = vmatpush1.msra.mxu0 0.0
      %6648 = vmatprep.subr.mxu0 0.0
      %6649 = vmatpush1.msra.mxu0 0.0
      %6650 = vmatprep.subr.mxu0 0.0
      %6651 = vmatpush1.msra.mxu0 0.0
      %6652 = vmatprep.subr.mxu0 0.0
      %6653 = vmatpush1.msra.mxu0 0.0
      %6654 = vmatprep.subr.mxu0 0.0
      %6655 = vmatpush1.msra.mxu0 0.0
      %6656 = vmatprep.subr.mxu0 0.0
      %6657 = vmatpush1.msra.mxu0 0.0
      %6658 = vmatprep.subr.mxu0 0.0
      %6659 = vmatpush1.msra.mxu0 0.0
      %6660 = vmatprep.subr.mxu0 0.0
      %6661 = vmatpush1.msra.mxu0 0.0
      %6662 = vmatprep.subr.mxu0 0.0
      %6663 = vmatpush1.msra.mxu0 0.0
      %6664 = vmatprep.subr.mxu0 0.0
      %6665 = vmatpush1.msra.mxu0 0.0
      %6666 = vmatprep.subr.mxu0 0.0
      %6667 = vmatpush1.msra.mxu0 0.0
      %6668 = vmatprep.subr.mxu0 0.0
      %6669 = vmatpush1.msra.mxu0 0.0
      %6670 = vmatprep.mubr.f32.mxu0 0.0
      %6671 = vmatmul.mubr.f32.gmra.mrb[0].mxu0 %v6527
      %v6672 = vpop.f32.mrb[0].mxu0
      %v6673 = vadd.f32 0.0, %v6672
      %v6674 = vpop.f32.mrb[0].mxu0
      %6675 = vdwg.mxu0
      %v6676 = vadd.f32 %v6504, %v6602
      %v6677 = vadd.f32 %v6505, %v6604
      %v6678 = vadd.f32 %v6506, %v6673
      %v6679 = vld [vmem:[#allocation5] sm:$0xff]
      %v6680 = vld [vmem:[#allocation5 + $0x8] sm:$0xff]
      %s6681 = scalar_lea.vmem %s10, 56
      %v6682 = vld [vmem:[%s6681] sm:$0x3f]
      %v6685 = vcombine.high %v6679, %v6679
      %v6686 = vcombine.high %v6680, %v6680
      %6687 = vrot.lane.b32.xlu0 %v6679, 37
      %v6688 = vpop.permute.xlu0 %6687
      %6689 = vrot.lane.b32.xlu0 %v6685, 37
      %v6690 = vpop.permute.xlu0 %6689
      %6691 = vrot.lane.b32.xlu0 %v6680, 37
      %v6692 = vpop.permute.xlu0 %6691
      %6693 = vrot.lane.b32.xlu0 %v6686, 37
      %v6694 = vpop.permute.xlu0 %6693
      %v6695 = vsel %vm897, %v6688, %v6690
      %v6696 = vsel %vm897, %v6690, %v6692
      %v6697 = vsel %vm897, %v6692, %v6694
      %v6699 = vsel %vm2435, %v6682, 0
      %v6701 = vsel %vm2386, %v6695, 0
      %v6703 = vsel %vm2386, %v6696, 0
      %v6705 = vsel %vm2386, %v6697, 0
      %6707 = vmatprep.subr.mxu0 %v6703
      %6708 = vmatpush1.msra.mxu0 %v6701
      %6709 = vmatprep.subr.mxu0 0.0
      %6710 = vmatpush1.msra.mxu0 0.0
      %6711 = vmatprep.subr.mxu0 0.0
      %6712 = vmatpush1.msra.mxu0 0.0
      %6713 = vmatprep.subr.mxu0 0.0
      %6714 = vmatpush1.msra.mxu0 0.0
      %6715 = vmatprep.subr.mxu0 0.0
      %6716 = vmatpush1.msra.mxu0 0.0
      %6717 = vmatprep.subr.mxu0 0.0
      %6718 = vmatpush1.msra.mxu0 0.0
      %6719 = vmatprep.subr.mxu0 0.0
      %6720 = vmatpush1.msra.mxu0 0.0
      %6721 = vmatprep.subr.mxu0 0.0
      %6722 = vmatpush1.msra.mxu0 0.0
      %6723 = vmatprep.subr.mxu0 0.0
      %6724 = vmatpush1.msra.mxu0 0.0
      %6725 = vmatprep.subr.mxu0 0.0
      %6726 = vmatpush1.msra.mxu0 0.0
      %6727 = vmatprep.subr.mxu0 0.0
      %6728 = vmatpush1.msra.mxu0 0.0
      %6729 = vmatprep.subr.mxu0 0.0
      %6730 = vmatpush1.msra.mxu0 0.0
      %6731 = vmatprep.subr.mxu0 0.0
      %6732 = vmatpush1.msra.mxu0 0.0
      %6733 = vmatprep.subr.mxu0 0.0
      %6734 = vmatpush1.msra.mxu0 0.0
      %6735 = vmatprep.subr.mxu0 0.0
      %6736 = vmatpush1.msra.mxu0 0.0
      %6737 = vmatprep.subr.mxu0 0.0
      %6738 = vmatpush1.msra.mxu0 0.0
      %6739 = vmatprep.subr.mxu0 0.0
      %6740 = vmatpush1.msra.mxu0 0.0
      %6741 = vmatprep.subr.mxu0 0.0
      %6742 = vmatpush1.msra.mxu0 0.0
      %6743 = vmatprep.subr.mxu0 0.0
      %6744 = vmatpush1.msra.mxu0 0.0
      %6745 = vmatprep.subr.mxu0 0.0
      %6746 = vmatpush1.msra.mxu0 0.0
      %6747 = vmatprep.subr.mxu0 0.0
      %6748 = vmatpush1.msra.mxu0 0.0
      %6749 = vmatprep.subr.mxu0 0.0
      %6750 = vmatpush1.msra.mxu0 0.0
      %6751 = vmatprep.subr.mxu0 0.0
      %6752 = vmatpush1.msra.mxu0 0.0
      %6753 = vmatprep.subr.mxu0 0.0
      %6754 = vmatpush1.msra.mxu0 0.0
      %6755 = vmatprep.subr.mxu0 0.0
      %6756 = vmatpush1.msra.mxu0 0.0
      %6757 = vmatprep.subr.mxu0 0.0
      %6758 = vmatpush1.msra.mxu0 0.0
      %6759 = vmatprep.subr.mxu0 0.0
      %6760 = vmatpush1.msra.mxu0 0.0
      %6761 = vmatprep.subr.mxu0 0.0
      %6762 = vmatpush1.msra.mxu0 0.0
      %6763 = vmatprep.subr.mxu0 0.0
      %6764 = vmatpush1.msra.mxu0 0.0
      %6765 = vmatprep.subr.mxu0 0.0
      %6766 = vmatpush1.msra.mxu0 0.0
      %6767 = vmatprep.subr.mxu0 0.0
      %6768 = vmatpush1.msra.mxu0 0.0
      %6769 = vmatprep.subr.mxu0 0.0
      %6770 = vmatpush1.msra.mxu0 0.0
      %6771 = vmatprep.mubr.f32.mxu0 0.0
      %6772 = vmatmul.mubr.f32.gmra.mrb[0].mxu0 %v6699
      %v6773 = vpop.f32.mrb[0].mxu0
      %v6774 = vadd.f32 0.0, %v6773
      %v6775 = vpop.f32.mrb[0].mxu0
      %v6776 = vadd.f32 0.0, %v6775
      %6777 = vdwg.mxu0
      %6778 = vmatprep.subr.mxu0 0.0
      %6779 = vmatpush1.msra.mxu0 %v6705
      %6780 = vmatprep.subr.mxu0 0.0
      %6781 = vmatpush1.msra.mxu0 0.0
      %6782 = vmatprep.subr.mxu0 0.0
      %6783 = vmatpush1.msra.mxu0 0.0
      %6784 = vmatprep.subr.mxu0 0.0
      %6785 = vmatpush1.msra.mxu0 0.0
      %6786 = vmatprep.subr.mxu0 0.0
      %6787 = vmatpush1.msra.mxu0 0.0
      %6788 = vmatprep.subr.mxu0 0.0
      %6789 = vmatpush1.msra.mxu0 0.0
      %6790 = vmatprep.subr.mxu0 0.0
      %6791 = vmatpush1.msra.mxu0 0.0
      %6792 = vmatprep.subr.mxu0 0.0
      %6793 = vmatpush1.msra.mxu0 0.0
      %6794 = vmatprep.subr.mxu0 0.0
      %6795 = vmatpush1.msra.mxu0 0.0
      %6796 = vmatprep.subr.mxu0 0.0
      %6797 = vmatpush1.msra.mxu0 0.0
      %6798 = vmatprep.subr.mxu0 0.0
      %6799 = vmatpush1.msra.mxu0 0.0
      %6800 = vmatprep.subr.mxu0 0.0
      %6801 = vmatpush1.msra.mxu0 0.0
      %6802 = vmatprep.subr.mxu0 0.0
      %6803 = vmatpush1.msra.mxu0 0.0
      %6804 = vmatprep.subr.mxu0 0.0
      %6805 = vmatpush1.msra.mxu0 0.0
      %6806 = vmatprep.subr.mxu0 0.0
      %6807 = vmatpush1.msra.mxu0 0.0
      %6808 = vmatprep.subr.mxu0 0.0
      %6809 = vmatpush1.msra.mxu0 0.0
      %6810 = vmatprep.subr.mxu0 0.0
      %6811 = vmatpush1.msra.mxu0 0.0
      %6812 = vmatprep.subr.mxu0 0.0
      %6813 = vmatpush1.msra.mxu0 0.0
      %6814 = vmatprep.subr.mxu0 0.0
      %6815 = vmatpush1.msra.mxu0 0.0
      %6816 = vmatprep.subr.mxu0 0.0
      %6817 = vmatpush1.msra.mxu0 0.0
      %6818 = vmatprep.subr.mxu0 0.0
      %6819 = vmatpush1.msra.mxu0 0.0
      %6820 = vmatprep.subr.mxu0 0.0
      %6821 = vmatpush1.msra.mxu0 0.0
      %6822 = vmatprep.subr.mxu0 0.0
      %6823 = vmatpush1.msra.mxu0 0.0
      %6824 = vmatprep.subr.mxu0 0.0
      %6825 = vmatpush1.msra.mxu0 0.0
      %6826 = vmatprep.subr.mxu0 0.0
      %6827 = vmatpush1.msra.mxu0 0.0
      %6828 = vmatprep.subr.mxu0 0.0
      %6829 = vmatpush1.msra.mxu0 0.0
      %6830 = vmatprep.subr.mxu0 0.0
      %6831 = vmatpush1.msra.mxu0 0.0
      %6832 = vmatprep.subr.mxu0 0.0
      %6833 = vmatpush1.msra.mxu0 0.0
      %6834 = vmatprep.subr.mxu0 0.0
      %6835 = vmatpush1.msra.mxu0 0.0
      %6836 = vmatprep.subr.mxu0 0.0
      %6837 = vmatpush1.msra.mxu0 0.0
      %6838 = vmatprep.subr.mxu0 0.0
      %6839 = vmatpush1.msra.mxu0 0.0
      %6840 = vmatprep.subr.mxu0 0.0
      %6841 = vmatpush1.msra.mxu0 0.0
      %6842 = vmatprep.mubr.f32.mxu0 0.0
      %6843 = vmatmul.mubr.f32.gmra.mrb[0].mxu0 %v6699
      %v6844 = vpop.f32.mrb[0].mxu0
      %v6845 = vadd.f32 0.0, %v6844
      %v6846 = vpop.f32.mrb[0].mxu0
      %6847 = vdwg.mxu0
      %v6848 = vadd.f32 %v6676, %v6774
      %v6849 = vadd.f32 %v6677, %v6776
      %v6850 = vadd.f32 %v6678, %v6845
      %v6851 = vld [vmem:[#allocation5] sm:$0xff]
      %v6852 = vld [vmem:[#allocation5 + $0x8] sm:$0xff]
      %s6853 = scalar_lea.vmem %s10, 64
      %v6854 = vld [vmem:[%s6853] sm:$0x3f]
      %v6857 = vcombine.high %v6851, %v6851
      %v6858 = vcombine.high %v6852, %v6852
      %6859 = vrot.lane.b32.xlu0 %v6851, 36
      %v6860 = vpop.permute.xlu0 %6859
      %6861 = vrot.lane.b32.xlu0 %v6857, 36
      %v6862 = vpop.permute.xlu0 %6861
      %6863 = vrot.lane.b32.xlu0 %v6852, 36
      %v6864 = vpop.permute.xlu0 %6863
      %6865 = vrot.lane.b32.xlu0 %v6858, 36
      %v6866 = vpop.permute.xlu0 %6865
      %v6867 = vsel %vm2222, %v6860, %v6862
      %v6868 = vsel %vm2222, %v6862, %v6864
      %v6869 = vsel %vm2222, %v6864, %v6866
      %v6871 = vsel %vm2435, %v6854, 0
      %v6873 = vsel %vm2386, %v6867, 0
      %v6875 = vsel %vm2386, %v6868, 0
      %v6877 = vsel %vm2386, %v6869, 0
      %6879 = vmatprep.subr.mxu0 %v6875
      %6880 = vmatpush1.msra.mxu0 %v6873
      %6881 = vmatprep.subr.mxu0 0.0
      %6882 = vmatpush1.msra.mxu0 0.0
      %6883 = vmatprep.subr.mxu0 0.0
      %6884 = vmatpush1.msra.mxu0 0.0
      %6885 = vmatprep.subr.mxu0 0.0
      %6886 = vmatpush1.msra.mxu0 0.0
      %6887 = vmatprep.subr.mxu0 0.0
      %6888 = vmatpush1.msra.mxu0 0.0
      %6889 = vmatprep.subr.mxu0 0.0
      %6890 = vmatpush1.msra.mxu0 0.0
      %6891 = vmatprep.subr.mxu0 0.0
      %6892 = vmatpush1.msra.mxu0 0.0
      %6893 = vmatprep.subr.mxu0 0.0
      %6894 = vmatpush1.msra.mxu0 0.0
      %6895 = vmatprep.subr.mxu0 0.0
      %6896 = vmatpush1.msra.mxu0 0.0
      %6897 = vmatprep.subr.mxu0 0.0
      %6898 = vmatpush1.msra.mxu0 0.0
      %6899 = vmatprep.subr.mxu0 0.0
      %6900 = vmatpush1.msra.mxu0 0.0
      %6901 = vmatprep.subr.mxu0 0.0
      %6902 = vmatpush1.msra.mxu0 0.0
      %6903 = vmatprep.subr.mxu0 0.0
      %6904 = vmatpush1.msra.mxu0 0.0
      %6905 = vmatprep.subr.mxu0 0.0
      %6906 = vmatpush1.msra.mxu0 0.0
      %6907 = vmatprep.subr.mxu0 0.0
      %6908 = vmatpush1.msra.mxu0 0.0
      %6909 = vmatprep.subr.mxu0 0.0
      %6910 = vmatpush1.msra.mxu0 0.0
      %6911 = vmatprep.subr.mxu0 0.0
      %6912 = vmatpush1.msra.mxu0 0.0
      %6913 = vmatprep.subr.mxu0 0.0
      %6914 = vmatpush1.msra.mxu0 0.0
      %6915 = vmatprep.subr.mxu0 0.0
      %6916 = vmatpush1.msra.mxu0 0.0
      %6917 = vmatprep.subr.mxu0 0.0
      %6918 = vmatpush1.msra.mxu0 0.0
      %6919 = vmatprep.subr.mxu0 0.0
      %6920 = vmatpush1.msra.mxu0 0.0
      %6921 = vmatprep.subr.mxu0 0.0
      %6922 = vmatpush1.msra.mxu0 0.0
      %6923 = vmatprep.subr.mxu0 0.0
      %6924 = vmatpush1.msra.mxu0 0.0
      %6925 = vmatprep.subr.mxu0 0.0
      %6926 = vmatpush1.msra.mxu0 0.0
      %6927 = vmatprep.subr.mxu0 0.0
      %6928 = vmatpush1.msra.mxu0 0.0
      %6929 = vmatprep.subr.mxu0 0.0
      %6930 = vmatpush1.msra.mxu0 0.0
      %6931 = vmatprep.subr.mxu0 0.0
      %6932 = vmatpush1.msra.mxu0 0.0
      %6933 = vmatprep.subr.mxu0 0.0
      %6934 = vmatpush1.msra.mxu0 0.0
      %6935 = vmatprep.subr.mxu0 0.0
      %6936 = vmatpush1.msra.mxu0 0.0
      %6937 = vmatprep.subr.mxu0 0.0
      %6938 = vmatpush1.msra.mxu0 0.0
      %6939 = vmatprep.subr.mxu0 0.0
      %6940 = vmatpush1.msra.mxu0 0.0
      %6941 = vmatprep.subr.mxu0 0.0
      %6942 = vmatpush1.msra.mxu0 0.0
      %6943 = vmatprep.mubr.f32.mxu0 0.0
      %6944 = vmatmul.mubr.f32.gmra.mrb[0].mxu0 %v6871
      %v6945 = vpop.f32.mrb[0].mxu0
      %v6946 = vadd.f32 0.0, %v6945
      %v6947 = vpop.f32.mrb[0].mxu0
      %v6948 = vadd.f32 0.0, %v6947
      %6949 = vdwg.mxu0
      %6950 = vmatprep.subr.mxu0 0.0
      %6951 = vmatpush1.msra.mxu0 %v6877
      %6952 = vmatprep.subr.mxu0 0.0
      %6953 = vmatpush1.msra.mxu0 0.0
      %6954 = vmatprep.subr.mxu0 0.0
      %6955 = vmatpush1.msra.mxu0 0.0
      %6956 = vmatprep.subr.mxu0 0.0
      %6957 = vmatpush1.msra.mxu0 0.0
      %6958 = vmatprep.subr.mxu0 0.0
      %6959 = vmatpush1.msra.mxu0 0.0
      %6960 = vmatprep.subr.mxu0 0.0
      %6961 = vmatpush1.msra.mxu0 0.0
      %6962 = vmatprep.subr.mxu0 0.0
      %6963 = vmatpush1.msra.mxu0 0.0
      %6964 = vmatprep.subr.mxu0 0.0
      %6965 = vmatpush1.msra.mxu0 0.0
      %6966 = vmatprep.subr.mxu0 0.0
      %6967 = vmatpush1.msra.mxu0 0.0
      %6968 = vmatprep.subr.mxu0 0.0
      %6969 = vmatpush1.msra.mxu0 0.0
      %6970 = vmatprep.subr.mxu0 0.0
      %6971 = vmatpush1.msra.mxu0 0.0
      %6972 = vmatprep.subr.mxu0 0.0
      %6973 = vmatpush1.msra.mxu0 0.0
      %6974 = vmatprep.subr.mxu0 0.0
      %6975 = vmatpush1.msra.mxu0 0.0
      %6976 = vmatprep.subr.mxu0 0.0
      %6977 = vmatpush1.msra.mxu0 0.0
      %6978 = vmatprep.subr.mxu0 0.0
      %6979 = vmatpush1.msra.mxu0 0.0
      %6980 = vmatprep.subr.mxu0 0.0
      %6981 = vmatpush1.msra.mxu0 0.0
      %6982 = vmatprep.subr.mxu0 0.0
      %6983 = vmatpush1.msra.mxu0 0.0
      %6984 = vmatprep.subr.mxu0 0.0
      %6985 = vmatpush1.msra.mxu0 0.0
      %6986 = vmatprep.subr.mxu0 0.0
      %6987 = vmatpush1.msra.mxu0 0.0
      %6988 = vmatprep.subr.mxu0 0.0
      %6989 = vmatpush1.msra.mxu0 0.0
      %6990 = vmatprep.subr.mxu0 0.0
      %6991 = vmatpush1.msra.mxu0 0.0
      %6992 = vmatprep.subr.mxu0 0.0
      %6993 = vmatpush1.msra.mxu0 0.0
      %6994 = vmatprep.subr.mxu0 0.0
      %6995 = vmatpush1.msra.mxu0 0.0
      %6996 = vmatprep.subr.mxu0 0.0
      %6997 = vmatpush1.msra.mxu0 0.0
      %6998 = vmatprep.subr.mxu0 0.0
      %6999 = vmatpush1.msra.mxu0 0.0
      %7000 = vmatprep.subr.mxu0 0.0
      %7001 = vmatpush1.msra.mxu0 0.0
      %7002 = vmatprep.subr.mxu0 0.0
      %7003 = vmatpush1.msra.mxu0 0.0
      %7004 = vmatprep.subr.mxu0 0.0
      %7005 = vmatpush1.msra.mxu0 0.0
      %7006 = vmatprep.subr.mxu0 0.0
      %7007 = vmatpush1.msra.mxu0 0.0
      %7008 = vmatprep.subr.mxu0 0.0
      %7009 = vmatpush1.msra.mxu0 0.0
      %7010 = vmatprep.subr.mxu0 0.0
      %7011 = vmatpush1.msra.mxu0 0.0
      %7012 = vmatprep.subr.mxu0 0.0
      %7013 = vmatpush1.msra.mxu0 0.0
      %7014 = vmatprep.mubr.f32.mxu0 0.0
      %7015 = vmatmul.mubr.f32.gmra.mrb[0].mxu0 %v6871
      %v7016 = vpop.f32.mrb[0].mxu0
      %v7017 = vadd.f32 0.0, %v7016
      %v7018 = vpop.f32.mrb[0].mxu0
      %7019 = vdwg.mxu0
      %v7020 = vadd.f32 %v6848, %v6946
      %v7021 = vadd.f32 %v6849, %v6948
      %v7022 = vadd.f32 %v6850, %v7017
      %v7023 = vld [vmem:[%s11] sm:$0x3f]
      %7025 = vset.pattern.permute.xlu0 0
      %7026 = vperm.xlu0 %7025, %v7023
      %v7027 = vpop.permute.xlu0 %7026
      %v7029 = vadd.f32 %v7020, %v7027
      %v7030 = vadd.f32 %v7021, %v7027
      %v7031 = vadd.f32 %v7022, %v7027
      %v7032 = vmax.f32 %v7029, 0.0
      %v7033 = vmax.f32 %v7030, 0.0
      %v7034 = vmax.f32 %v7031, 0.0
      %7035 = vst [vmem:[#allocation6] sm:$0x3f] 0.0
      %7036 = vst [vmem:[#allocation6 + $0x8] sm:$0x3f] 0.0
      %7037 = vst [vmem:[#allocation6 + $0x10] sm:$0x3f] 0.0
      %vm7038 = vcmask 996352
      %7039 = vst.msk [vmem:[#allocation6 + $0x18] sm:$0x3f] %vm7038, 0.0
      %v7040 = vsel %vm871, %v7032, 0.0
      %v7041 = vsel %vm872, %v7033, 0.0
      %v7042 = vsel %vm873, %v7034, 0.0
      %7046 = vrot.lane.b32.xlu0 %v7040, 69
      %v7047 = vpop.permute.xlu0 %7046
      %7048 = vrot.lane.b32.xlu0 %v7041, 69
      %v7049 = vpop.permute.xlu0 %7048
      %7050 = vrot.lane.b32.xlu0 %v7042, 69
      %v7051 = vpop.permute.xlu0 %7050
      %v7052 = vsel %vm886, %v7047, %v7049
      %v7053 = vsel %vm886, %v7049, %v7051
      %vm7058 = vcmask 1046056
      %7059 = vst.msk [vmem:[#allocation6] sm:$0x3f] %vm7058, %v7047
      %7060 = vst [vmem:[#allocation6 + $0x8] sm:$0x3f] %v7052
      %7061 = vst [vmem:[#allocation6 + $0x10] sm:$0x3f] %v7053
      %vm7062 = vcmask 300032
      %7063 = vst.msk [vmem:[#allocation6 + $0x18] sm:$0x3f] %vm7062, %v7051
      %v7064 = vld [vmem:[#allocation6] sm:$0x3f]
      %v7065 = vld [vmem:[#allocation6 + $0x8] sm:$0x3f]
      %v7066 = vld [vmem:[#allocation6 + $0x10] sm:$0x3f]
      %v7067 = vld [vmem:[#allocation6 + $0x18] sm:$0x3f]
      %v7068 = vld [vmem:[%s12] sm:$0xff]
      %s7069 = scalar_lea.vmem %s12, 8
      %v7070 = vld [vmem:[%s7069] sm:$0xff]
      %7075 = vrot.lane.b32.xlu0 %v7064, 81
      %v7076 = vpop.permute.xlu0 %7075
      %7077 = vrot.lane.b32.xlu0 %v7065, 81
      %v7078 = vpop.permute.xlu0 %7077
      %7079 = vrot.lane.b32.xlu0 %v7066, 81
      %v7080 = vpop.permute.xlu0 %7079
      %7081 = vrot.lane.b32.xlu0 %v7067, 81
      %v7082 = vpop.permute.xlu0 %7081
      %v7083 = vsel %vm918, %v7076, %v7078
      %v7084 = vsel %vm918, %v7078, %v7080
      %v7085 = vsel %vm918, %v7080, %v7082
      %vm7086 = vcmask 48128
      %v7088 = vsel %vm7086, %v7070, 0
      %vm7090 = vcmask 1045504
      %v7091 = vsel %vm7090, %v7083, 0
      %v7093 = vsel %vm7090, %v7084, 0
      %v7095 = vsel %vm7090, %v7085, 0
      %7097 = vmatprep.subr.mxu0 %v7093
      %7098 = vmatpush1.msra.mxu0 %v7091
      %7099 = vmatprep.subr.mxu0 0.0
      %7100 = vmatpush1.msra.mxu0 0.0
      %7101 = vmatprep.subr.mxu0 0.0
      %7102 = vmatpush1.msra.mxu0 0.0
      %7103 = vmatprep.subr.mxu0 0.0
      %7104 = vmatpush1.msra.mxu0 0.0
      %7105 = vmatprep.subr.mxu0 0.0
      %7106 = vmatpush1.msra.mxu0 0.0
      %7107 = vmatprep.subr.mxu0 0.0
      %7108 = vmatpush1.msra.mxu0 0.0
      %7109 = vmatprep.subr.mxu0 0.0
      %7110 = vmatpush1.msra.mxu0 0.0
      %7111 = vmatprep.subr.mxu0 0.0
      %7112 = vmatpush1.msra.mxu0 0.0
      %7113 = vmatprep.subr.mxu0 0.0
      %7114 = vmatpush1.msra.mxu0 0.0
      %7115 = vmatprep.subr.mxu0 0.0
      %7116 = vmatpush1.msra.mxu0 0.0
      %7117 = vmatprep.subr.mxu0 0.0
      %7118 = vmatpush1.msra.mxu0 0.0
      %7119 = vmatprep.subr.mxu0 0.0
      %7120 = vmatpush1.msra.mxu0 0.0
      %7121 = vmatprep.subr.mxu0 0.0
      %7122 = vmatpush1.msra.mxu0 0.0
      %7123 = vmatprep.subr.mxu0 0.0
      %7124 = vmatpush1.msra.mxu0 0.0
      %7125 = vmatprep.subr.mxu0 0.0
      %7126 = vmatpush1.msra.mxu0 0.0
      %7127 = vmatprep.subr.mxu0 0.0
      %7128 = vmatpush1.msra.mxu0 0.0
      %7129 = vmatprep.subr.mxu0 0.0
      %7130 = vmatpush1.msra.mxu0 0.0
      %7131 = vmatprep.subr.mxu0 0.0
      %7132 = vmatpush1.msra.mxu0 0.0
      %7133 = vmatprep.subr.mxu0 0.0
      %7134 = vmatpush1.msra.mxu0 0.0
      %7135 = vmatprep.subr.mxu0 0.0
      %7136 = vmatpush1.msra.mxu0 0.0
      %7137 = vmatprep.subr.mxu0 0.0
      %7138 = vmatpush1.msra.mxu0 0.0
      %7139 = vmatprep.subr.mxu0 0.0
      %7140 = vmatpush1.msra.mxu0 0.0
      %7141 = vmatprep.subr.mxu0 0.0
      %7142 = vmatpush1.msra.mxu0 0.0
      %7143 = vmatprep.subr.mxu0 0.0
      %7144 = vmatpush1.msra.mxu0 0.0
      %7145 = vmatprep.subr.mxu0 0.0
      %7146 = vmatpush1.msra.mxu0 0.0
      %7147 = vmatprep.subr.mxu0 0.0
      %7148 = vmatpush1.msra.mxu0 0.0
      %7149 = vmatprep.subr.mxu0 0.0
      %7150 = vmatpush1.msra.mxu0 0.0
      %7151 = vmatprep.subr.mxu0 0.0
      %7152 = vmatpush1.msra.mxu0 0.0
      %7153 = vmatprep.subr.mxu0 0.0
      %7154 = vmatpush1.msra.mxu0 0.0
      %7155 = vmatprep.subr.mxu0 0.0
      %7156 = vmatpush1.msra.mxu0 0.0
      %7157 = vmatprep.subr.mxu0 0.0
      %7158 = vmatpush1.msra.mxu0 0.0
      %7159 = vmatprep.subr.mxu0 0.0
      %7160 = vmatpush1.msra.mxu0 0.0
      %7161 = vmatprep.mubr.f32.mxu0 0.0
      %7162 = vmatmul.mubr.f32.gmra.mrb[0].mxu0 %v7088
      %v7163 = vpop.f32.mrb[0].mxu0
      %v7164 = vadd.f32 0.0, %v7163
      %v7165 = vpop.f32.mrb[0].mxu0
      %v7166 = vadd.f32 0.0, %v7165
      %7167 = vdwg.mxu0
      %7168 = vmatprep.subr.mxu0 0.0
      %7169 = vmatpush1.msra.mxu0 %v7095
      %7170 = vmatprep.subr.mxu0 0.0
      %7171 = vmatpush1.msra.mxu0 0.0
      %7172 = vmatprep.subr.mxu0 0.0
      %7173 = vmatpush1.msra.mxu0 0.0
      %7174 = vmatprep.subr.mxu0 0.0
      %7175 = vmatpush1.msra.mxu0 0.0
      %7176 = vmatprep.subr.mxu0 0.0
      %7177 = vmatpush1.msra.mxu0 0.0
      %7178 = vmatprep.subr.mxu0 0.0
      %7179 = vmatpush1.msra.mxu0 0.0
      %7180 = vmatprep.subr.mxu0 0.0
      %7181 = vmatpush1.msra.mxu0 0.0
      %7182 = vmatprep.subr.mxu0 0.0
      %7183 = vmatpush1.msra.mxu0 0.0
      %7184 = vmatprep.subr.mxu0 0.0
      %7185 = vmatpush1.msra.mxu0 0.0
      %7186 = vmatprep.subr.mxu0 0.0
      %7187 = vmatpush1.msra.mxu0 0.0
      %7188 = vmatprep.subr.mxu0 0.0
      %7189 = vmatpush1.msra.mxu0 0.0
      %7190 = vmatprep.subr.mxu0 0.0
      %7191 = vmatpush1.msra.mxu0 0.0
      %7192 = vmatprep.subr.mxu0 0.0
      %7193 = vmatpush1.msra.mxu0 0.0
      %7194 = vmatprep.subr.mxu0 0.0
      %7195 = vmatpush1.msra.mxu0 0.0
      %7196 = vmatprep.subr.mxu0 0.0
      %7197 = vmatpush1.msra.mxu0 0.0
      %7198 = vmatprep.subr.mxu0 0.0
      %7199 = vmatpush1.msra.mxu0 0.0
      %7200 = vmatprep.subr.mxu0 0.0
      %7201 = vmatpush1.msra.mxu0 0.0
      %7202 = vmatprep.subr.mxu0 0.0
      %7203 = vmatpush1.msra.mxu0 0.0
      %7204 = vmatprep.subr.mxu0 0.0
      %7205 = vmatpush1.msra.mxu0 0.0
      %7206 = vmatprep.subr.mxu0 0.0
      %7207 = vmatpush1.msra.mxu0 0.0
      %7208 = vmatprep.subr.mxu0 0.0
      %7209 = vmatpush1.msra.mxu0 0.0
      %7210 = vmatprep.subr.mxu0 0.0
      %7211 = vmatpush1.msra.mxu0 0.0
      %7212 = vmatprep.subr.mxu0 0.0
      %7213 = vmatpush1.msra.mxu0 0.0
      %7214 = vmatprep.subr.mxu0 0.0
      %7215 = vmatpush1.msra.mxu0 0.0
      %7216 = vmatprep.subr.mxu0 0.0
      %7217 = vmatpush1.msra.mxu0 0.0
      %7218 = vmatprep.subr.mxu0 0.0
      %7219 = vmatpush1.msra.mxu0 0.0
      %7220 = vmatprep.subr.mxu0 0.0
      %7221 = vmatpush1.msra.mxu0 0.0
      %7222 = vmatprep.subr.mxu0 0.0
      %7223 = vmatpush1.msra.mxu0 0.0
      %7224 = vmatprep.subr.mxu0 0.0
      %7225 = vmatpush1.msra.mxu0 0.0
      %7226 = vmatprep.subr.mxu0 0.0
      %7227 = vmatpush1.msra.mxu0 0.0
      %7228 = vmatprep.subr.mxu0 0.0
      %7229 = vmatpush1.msra.mxu0 0.0
      %7230 = vmatprep.subr.mxu0 0.0
      %7231 = vmatpush1.msra.mxu0 0.0
      %7232 = vmatprep.mubr.f32.mxu0 0.0
      %7233 = vmatmul.mubr.f32.gmra.mrb[0].mxu0 %v7088
      %v7234 = vpop.f32.mrb[0].mxu0
      %v7235 = vadd.f32 0.0, %v7234
      %v7236 = vpop.f32.mrb[0].mxu0
      %7237 = vdwg.mxu0
      %7238 = vrot.lane.b32.xlu0 %v7064, 82
      %v7239 = vpop.permute.xlu0 %7238
      %7240 = vrot.lane.b32.xlu0 %v7065, 82
      %v7241 = vpop.permute.xlu0 %7240
      %7242 = vrot.lane.b32.xlu0 %v7066, 82
      %v7243 = vpop.permute.xlu0 %7242
      %7244 = vrot.lane.b32.xlu0 %v7067, 82
      %v7245 = vpop.permute.xlu0 %7244
      %v7246 = vsel %vm1078, %v7239, %v7241
      %v7247 = vsel %vm1078, %v7241, %v7243
      %v7248 = vsel %vm1078, %v7243, %v7245
      %v7250 = vsel %vm7086, %v7068, 0
      %v7252 = vsel %vm7090, %v7246, 0
      %v7254 = vsel %vm7090, %v7247, 0
      %v7256 = vsel %vm7090, %v7248, 0
      %7258 = vmatprep.subr.mxu0 %v7254
      %7259 = vmatpush1.msra.mxu0 %v7252
      %7260 = vmatprep.subr.mxu0 0.0
      %7261 = vmatpush1.msra.mxu0 0.0
      %7262 = vmatprep.subr.mxu0 0.0
      %7263 = vmatpush1.msra.mxu0 0.0
      %7264 = vmatprep.subr.mxu0 0.0
      %7265 = vmatpush1.msra.mxu0 0.0
      %7266 = vmatprep.subr.mxu0 0.0
      %7267 = vmatpush1.msra.mxu0 0.0
      %7268 = vmatprep.subr.mxu0 0.0
      %7269 = vmatpush1.msra.mxu0 0.0
      %7270 = vmatprep.subr.mxu0 0.0
      %7271 = vmatpush1.msra.mxu0 0.0
      %7272 = vmatprep.subr.mxu0 0.0
      %7273 = vmatpush1.msra.mxu0 0.0
      %7274 = vmatprep.subr.mxu0 0.0
      %7275 = vmatpush1.msra.mxu0 0.0
      %7276 = vmatprep.subr.mxu0 0.0
      %7277 = vmatpush1.msra.mxu0 0.0
      %7278 = vmatprep.subr.mxu0 0.0
      %7279 = vmatpush1.msra.mxu0 0.0
      %7280 = vmatprep.subr.mxu0 0.0
      %7281 = vmatpush1.msra.mxu0 0.0
      %7282 = vmatprep.subr.mxu0 0.0
      %7283 = vmatpush1.msra.mxu0 0.0
      %7284 = vmatprep.subr.mxu0 0.0
      %7285 = vmatpush1.msra.mxu0 0.0
      %7286 = vmatprep.subr.mxu0 0.0
      %7287 = vmatpush1.msra.mxu0 0.0
      %7288 = vmatprep.subr.mxu0 0.0
      %7289 = vmatpush1.msra.mxu0 0.0
      %7290 = vmatprep.subr.mxu0 0.0
      %7291 = vmatpush1.msra.mxu0 0.0
      %7292 = vmatprep.subr.mxu0 0.0
      %7293 = vmatpush1.msra.mxu0 0.0
      %7294 = vmatprep.subr.mxu0 0.0
      %7295 = vmatpush1.msra.mxu0 0.0
      %7296 = vmatprep.subr.mxu0 0.0
      %7297 = vmatpush1.msra.mxu0 0.0
      %7298 = vmatprep.subr.mxu0 0.0
      %7299 = vmatpush1.msra.mxu0 0.0
      %7300 = vmatprep.subr.mxu0 0.0
      %7301 = vmatpush1.msra.mxu0 0.0
      %7302 = vmatprep.subr.mxu0 0.0
      %7303 = vmatpush1.msra.mxu0 0.0
      %7304 = vmatprep.subr.mxu0 0.0
      %7305 = vmatpush1.msra.mxu0 0.0
      %7306 = vmatprep.subr.mxu0 0.0
      %7307 = vmatpush1.msra.mxu0 0.0
      %7308 = vmatprep.subr.mxu0 0.0
      %7309 = vmatpush1.msra.mxu0 0.0
      %7310 = vmatprep.subr.mxu0 0.0
      %7311 = vmatpush1.msra.mxu0 0.0
      %7312 = vmatprep.subr.mxu0 0.0
      %7313 = vmatpush1.msra.mxu0 0.0
      %7314 = vmatprep.subr.mxu0 0.0
      %7315 = vmatpush1.msra.mxu0 0.0
      %7316 = vmatprep.subr.mxu0 0.0
      %7317 = vmatpush1.msra.mxu0 0.0
      %7318 = vmatprep.subr.mxu0 0.0
      %7319 = vmatpush1.msra.mxu0 0.0
      %7320 = vmatprep.subr.mxu0 0.0
      %7321 = vmatpush1.msra.mxu0 0.0
      %7322 = vmatprep.mubr.f32.mxu0 0.0
      %7323 = vmatmul.mubr.f32.gmra.mrb[0].mxu0 %v7250
      %v7324 = vpop.f32.mrb[0].mxu0
      %v7325 = vadd.f32 %v7164, %v7324
      %v7326 = vpop.f32.mrb[0].mxu0
      %v7327 = vadd.f32 %v7166, %v7326
      %7328 = vdwg.mxu0
      %7329 = vmatprep.subr.mxu0 0.0
      %7330 = vmatpush1.msra.mxu0 %v7256
      %7331 = vmatprep.subr.mxu0 0.0
      %7332 = vmatpush1.msra.mxu0 0.0
      %7333 = vmatprep.subr.mxu0 0.0
      %7334 = vmatpush1.msra.mxu0 0.0
      %7335 = vmatprep.subr.mxu0 0.0
      %7336 = vmatpush1.msra.mxu0 0.0
      %7337 = vmatprep.subr.mxu0 0.0
      %7338 = vmatpush1.msra.mxu0 0.0
      %7339 = vmatprep.subr.mxu0 0.0
      %7340 = vmatpush1.msra.mxu0 0.0
      %7341 = vmatprep.subr.mxu0 0.0
      %7342 = vmatpush1.msra.mxu0 0.0
      %7343 = vmatprep.subr.mxu0 0.0
      %7344 = vmatpush1.msra.mxu0 0.0
      %7345 = vmatprep.subr.mxu0 0.0
      %7346 = vmatpush1.msra.mxu0 0.0
      %7347 = vmatprep.subr.mxu0 0.0
      %7348 = vmatpush1.msra.mxu0 0.0
      %7349 = vmatprep.subr.mxu0 0.0
      %7350 = vmatpush1.msra.mxu0 0.0
      %7351 = vmatprep.subr.mxu0 0.0
      %7352 = vmatpush1.msra.mxu0 0.0
      %7353 = vmatprep.subr.mxu0 0.0
      %7354 = vmatpush1.msra.mxu0 0.0
      %7355 = vmatprep.subr.mxu0 0.0
      %7356 = vmatpush1.msra.mxu0 0.0
      %7357 = vmatprep.subr.mxu0 0.0
      %7358 = vmatpush1.msra.mxu0 0.0
      %7359 = vmatprep.subr.mxu0 0.0
      %7360 = vmatpush1.msra.mxu0 0.0
      %7361 = vmatprep.subr.mxu0 0.0
      %7362 = vmatpush1.msra.mxu0 0.0
      %7363 = vmatprep.subr.mxu0 0.0
      %7364 = vmatpush1.msra.mxu0 0.0
      %7365 = vmatprep.subr.mxu0 0.0
      %7366 = vmatpush1.msra.mxu0 0.0
      %7367 = vmatprep.subr.mxu0 0.0
      %7368 = vmatpush1.msra.mxu0 0.0
      %7369 = vmatprep.subr.mxu0 0.0
      %7370 = vmatpush1.msra.mxu0 0.0
      %7371 = vmatprep.subr.mxu0 0.0
      %7372 = vmatpush1.msra.mxu0 0.0
      %7373 = vmatprep.subr.mxu0 0.0
      %7374 = vmatpush1.msra.mxu0 0.0
      %7375 = vmatprep.subr.mxu0 0.0
      %7376 = vmatpush1.msra.mxu0 0.0
      %7377 = vmatprep.subr.mxu0 0.0
      %7378 = vmatpush1.msra.mxu0 0.0
      %7379 = vmatprep.subr.mxu0 0.0
      %7380 = vmatpush1.msra.mxu0 0.0
      %7381 = vmatprep.subr.mxu0 0.0
      %7382 = vmatpush1.msra.mxu0 0.0
      %7383 = vmatprep.subr.mxu0 0.0
      %7384 = vmatpush1.msra.mxu0 0.0
      %7385 = vmatprep.subr.mxu0 0.0
      %7386 = vmatpush1.msra.mxu0 0.0
      %7387 = vmatprep.subr.mxu0 0.0
      %7388 = vmatpush1.msra.mxu0 0.0
      %7389 = vmatprep.subr.mxu0 0.0
      %7390 = vmatpush1.msra.mxu0 0.0
      %7391 = vmatprep.subr.mxu0 0.0
      %7392 = vmatpush1.msra.mxu0 0.0
      %7393 = vmatprep.mubr.f32.mxu0 0.0
      %7394 = vmatmul.mubr.f32.gmra.mrb[0].mxu0 %v7250
      %v7395 = vpop.f32.mrb[0].mxu0
      %v7396 = vadd.f32 %v7235, %v7395
      %v7397 = vpop.f32.mrb[0].mxu0
      %7398 = vdwg.mxu0
      %s7399 = scalar_lea.vmem %s12, 16
      %v7400 = vld [vmem:[%s7399] sm:$0xff]
      %7401 = vrot.lane.b32.xlu0 %v7064, 80
      %v7402 = vpop.permute.xlu0 %7401
      %7403 = vrot.lane.b32.xlu0 %v7065, 80
      %v7404 = vpop.permute.xlu0 %7403
      %7405 = vrot.lane.b32.xlu0 %v7066, 80
      %v7406 = vpop.permute.xlu0 %7405
      %7407 = vrot.lane.b32.xlu0 %v7067, 80
      %v7408 = vpop.permute.xlu0 %7407
      %v7409 = vsel %vm1239, %v7402, %v7404
      %v7410 = vsel %vm1239, %v7404, %v7406
      %v7411 = vsel %vm1239, %v7406, %v7408
      %v7413 = vsel %vm7086, %v7400, 0
      %v7415 = vsel %vm7090, %v7409, 0
      %v7417 = vsel %vm7090, %v7410, 0
      %v7419 = vsel %vm7090, %v7411, 0
      %7421 = vmatprep.subr.mxu0 %v7417
      %7422 = vmatpush1.msra.mxu0 %v7415
      %7423 = vmatprep.subr.mxu0 0.0
      %7424 = vmatpush1.msra.mxu0 0.0
      %7425 = vmatprep.subr.mxu0 0.0
      %7426 = vmatpush1.msra.mxu0 0.0
      %7427 = vmatprep.subr.mxu0 0.0
      %7428 = vmatpush1.msra.mxu0 0.0
      %7429 = vmatprep.subr.mxu0 0.0
      %7430 = vmatpush1.msra.mxu0 0.0
      %7431 = vmatprep.subr.mxu0 0.0
      %7432 = vmatpush1.msra.mxu0 0.0
      %7433 = vmatprep.subr.mxu0 0.0
      %7434 = vmatpush1.msra.mxu0 0.0
      %7435 = vmatprep.subr.mxu0 0.0
      %7436 = vmatpush1.msra.mxu0 0.0
      %7437 = vmatprep.subr.mxu0 0.0
      %7438 = vmatpush1.msra.mxu0 0.0
      %7439 = vmatprep.subr.mxu0 0.0
      %7440 = vmatpush1.msra.mxu0 0.0
      %7441 = vmatprep.subr.mxu0 0.0
      %7442 = vmatpush1.msra.mxu0 0.0
      %7443 = vmatprep.subr.mxu0 0.0
      %7444 = vmatpush1.msra.mxu0 0.0
      %7445 = vmatprep.subr.mxu0 0.0
      %7446 = vmatpush1.msra.mxu0 0.0
      %7447 = vmatprep.subr.mxu0 0.0
      %7448 = vmatpush1.msra.mxu0 0.0
      %7449 = vmatprep.subr.mxu0 0.0
      %7450 = vmatpush1.msra.mxu0 0.0
      %7451 = vmatprep.subr.mxu0 0.0
      %7452 = vmatpush1.msra.mxu0 0.0
      %7453 = vmatprep.subr.mxu0 0.0
      %7454 = vmatpush1.msra.mxu0 0.0
      %7455 = vmatprep.subr.mxu0 0.0
      %7456 = vmatpush1.msra.mxu0 0.0
      %7457 = vmatprep.subr.mxu0 0.0
      %7458 = vmatpush1.msra.mxu0 0.0
      %7459 = vmatprep.subr.mxu0 0.0
      %7460 = vmatpush1.msra.mxu0 0.0
      %7461 = vmatprep.subr.mxu0 0.0
      %7462 = vmatpush1.msra.mxu0 0.0
      %7463 = vmatprep.subr.mxu0 0.0
      %7464 = vmatpush1.msra.mxu0 0.0
      %7465 = vmatprep.subr.mxu0 0.0
      %7466 = vmatpush1.msra.mxu0 0.0
      %7467 = vmatprep.subr.mxu0 0.0
      %7468 = vmatpush1.msra.mxu0 0.0
      %7469 = vmatprep.subr.mxu0 0.0
      %7470 = vmatpush1.msra.mxu0 0.0
      %7471 = vmatprep.subr.mxu0 0.0
      %7472 = vmatpush1.msra.mxu0 0.0
      %7473 = vmatprep.subr.mxu0 0.0
      %7474 = vmatpush1.msra.mxu0 0.0
      %7475 = vmatprep.subr.mxu0 0.0
      %7476 = vmatpush1.msra.mxu0 0.0
      %7477 = vmatprep.subr.mxu0 0.0
      %7478 = vmatpush1.msra.mxu0 0.0
      %7479 = vmatprep.subr.mxu0 0.0
      %7480 = vmatpush1.msra.mxu0 0.0
      %7481 = vmatprep.subr.mxu0 0.0
      %7482 = vmatpush1.msra.mxu0 0.0
      %7483 = vmatprep.subr.mxu0 0.0
      %7484 = vmatpush1.msra.mxu0 0.0
      %7485 = vmatprep.mubr.f32.mxu0 0.0
      %7486 = vmatmul.mubr.f32.gmra.mrb[0].mxu0 %v7413
      %v7487 = vpop.f32.mrb[0].mxu0
      %v7488 = vadd.f32 0.0, %v7487
      %v7489 = vpop.f32.mrb[0].mxu0
      %v7490 = vadd.f32 0.0, %v7489
      %7491 = vdwg.mxu0
      %7492 = vmatprep.subr.mxu0 0.0
      %7493 = vmatpush1.msra.mxu0 %v7419
      %7494 = vmatprep.subr.mxu0 0.0
      %7495 = vmatpush1.msra.mxu0 0.0
      %7496 = vmatprep.subr.mxu0 0.0
      %7497 = vmatpush1.msra.mxu0 0.0
      %7498 = vmatprep.subr.mxu0 0.0
      %7499 = vmatpush1.msra.mxu0 0.0
      %7500 = vmatprep.subr.mxu0 0.0
      %7501 = vmatpush1.msra.mxu0 0.0
      %7502 = vmatprep.subr.mxu0 0.0
      %7503 = vmatpush1.msra.mxu0 0.0
      %7504 = vmatprep.subr.mxu0 0.0
      %7505 = vmatpush1.msra.mxu0 0.0
      %7506 = vmatprep.subr.mxu0 0.0
      %7507 = vmatpush1.msra.mxu0 0.0
      %7508 = vmatprep.subr.mxu0 0.0
      %7509 = vmatpush1.msra.mxu0 0.0
      %7510 = vmatprep.subr.mxu0 0.0
      %7511 = vmatpush1.msra.mxu0 0.0
      %7512 = vmatprep.subr.mxu0 0.0
      %7513 = vmatpush1.msra.mxu0 0.0
      %7514 = vmatprep.subr.mxu0 0.0
      %7515 = vmatpush1.msra.mxu0 0.0
      %7516 = vmatprep.subr.mxu0 0.0
      %7517 = vmatpush1.msra.mxu0 0.0
      %7518 = vmatprep.subr.mxu0 0.0
      %7519 = vmatpush1.msra.mxu0 0.0
      %7520 = vmatprep.subr.mxu0 0.0
      %7521 = vmatpush1.msra.mxu0 0.0
      %7522 = vmatprep.subr.mxu0 0.0
      %7523 = vmatpush1.msra.mxu0 0.0
      %7524 = vmatprep.subr.mxu0 0.0
      %7525 = vmatpush1.msra.mxu0 0.0
      %7526 = vmatprep.subr.mxu0 0.0
      %7527 = vmatpush1.msra.mxu0 0.0
      %7528 = vmatprep.subr.mxu0 0.0
      %7529 = vmatpush1.msra.mxu0 0.0
      %7530 = vmatprep.subr.mxu0 0.0
      %7531 = vmatpush1.msra.mxu0 0.0
      %7532 = vmatprep.subr.mxu0 0.0
      %7533 = vmatpush1.msra.mxu0 0.0
      %7534 = vmatprep.subr.mxu0 0.0
      %7535 = vmatpush1.msra.mxu0 0.0
      %7536 = vmatprep.subr.mxu0 0.0
      %7537 = vmatpush1.msra.mxu0 0.0
      %7538 = vmatprep.subr.mxu0 0.0
      %7539 = vmatpush1.msra.mxu0 0.0
      %7540 = vmatprep.subr.mxu0 0.0
      %7541 = vmatpush1.msra.mxu0 0.0
      %7542 = vmatprep.subr.mxu0 0.0
      %7543 = vmatpush1.msra.mxu0 0.0
      %7544 = vmatprep.subr.mxu0 0.0
      %7545 = vmatpush1.msra.mxu0 0.0
      %7546 = vmatprep.subr.mxu0 0.0
      %7547 = vmatpush1.msra.mxu0 0.0
      %7548 = vmatprep.subr.mxu0 0.0
      %7549 = vmatpush1.msra.mxu0 0.0
      %7550 = vmatprep.subr.mxu0 0.0
      %7551 = vmatpush1.msra.mxu0 0.0
      %7552 = vmatprep.subr.mxu0 0.0
      %7553 = vmatpush1.msra.mxu0 0.0
      %7554 = vmatprep.subr.mxu0 0.0
      %7555 = vmatpush1.msra.mxu0 0.0
      %7556 = vmatprep.mubr.f32.mxu0 0.0
      %7557 = vmatmul.mubr.f32.gmra.mrb[0].mxu0 %v7413
      %v7558 = vpop.f32.mrb[0].mxu0
      %v7559 = vadd.f32 0.0, %v7558
      %v7560 = vpop.f32.mrb[0].mxu0
      %7561 = vdwg.mxu0
      %v7562 = vadd.f32 %v7325, %v7488
      %v7563 = vadd.f32 %v7327, %v7490
      %v7564 = vadd.f32 %v7396, %v7559
      %s7565 = scalar_lea.vmem %s12, 24
      %v7566 = vld [vmem:[%s7565] sm:$0xff]
      %7567 = vrot.lane.b32.xlu0 %v7064, 60
      %v7568 = vpop.permute.xlu0 %7567
      %7569 = vrot.lane.b32.xlu0 %v7065, 60
      %v7570 = vpop.permute.xlu0 %7569
      %7571 = vrot.lane.b32.xlu0 %v7066, 60
      %v7572 = vpop.permute.xlu0 %7571
      %7573 = vrot.lane.b32.xlu0 %v7067, 60
      %v7574 = vpop.permute.xlu0 %7573
      %v7575 = vsel %vm1403, %v7568, %v7570
      %v7576 = vsel %vm1403, %v7570, %v7572
      %v7577 = vsel %vm1403, %v7572, %v7574
      %v7579 = vsel %vm7086, %v7566, 0
      %v7581 = vsel %vm7090, %v7575, 0
      %v7583 = vsel %vm7090, %v7576, 0
      %v7585 = vsel %vm7090, %v7577, 0
      %7587 = vmatprep.subr.mxu0 %v7583
      %7588 = vmatpush1.msra.mxu0 %v7581
      %7589 = vmatprep.subr.mxu0 0.0
      %7590 = vmatpush1.msra.mxu0 0.0
      %7591 = vmatprep.subr.mxu0 0.0
      %7592 = vmatpush1.msra.mxu0 0.0
      %7593 = vmatprep.subr.mxu0 0.0
      %7594 = vmatpush1.msra.mxu0 0.0
      %7595 = vmatprep.subr.mxu0 0.0
      %7596 = vmatpush1.msra.mxu0 0.0
      %7597 = vmatprep.subr.mxu0 0.0
      %7598 = vmatpush1.msra.mxu0 0.0
      %7599 = vmatprep.subr.mxu0 0.0
      %7600 = vmatpush1.msra.mxu0 0.0
      %7601 = vmatprep.subr.mxu0 0.0
      %7602 = vmatpush1.msra.mxu0 0.0
      %7603 = vmatprep.subr.mxu0 0.0
      %7604 = vmatpush1.msra.mxu0 0.0
      %7605 = vmatprep.subr.mxu0 0.0
      %7606 = vmatpush1.msra.mxu0 0.0
      %7607 = vmatprep.subr.mxu0 0.0
      %7608 = vmatpush1.msra.mxu0 0.0
      %7609 = vmatprep.subr.mxu0 0.0
      %7610 = vmatpush1.msra.mxu0 0.0
      %7611 = vmatprep.subr.mxu0 0.0
      %7612 = vmatpush1.msra.mxu0 0.0
      %7613 = vmatprep.subr.mxu0 0.0
      %7614 = vmatpush1.msra.mxu0 0.0
      %7615 = vmatprep.subr.mxu0 0.0
      %7616 = vmatpush1.msra.mxu0 0.0
      %7617 = vmatprep.subr.mxu0 0.0
      %7618 = vmatpush1.msra.mxu0 0.0
      %7619 = vmatprep.subr.mxu0 0.0
      %7620 = vmatpush1.msra.mxu0 0.0
      %7621 = vmatprep.subr.mxu0 0.0
      %7622 = vmatpush1.msra.mxu0 0.0
      %7623 = vmatprep.subr.mxu0 0.0
      %7624 = vmatpush1.msra.mxu0 0.0
      %7625 = vmatprep.subr.mxu0 0.0
      %7626 = vmatpush1.msra.mxu0 0.0
      %7627 = vmatprep.subr.mxu0 0.0
      %7628 = vmatpush1.msra.mxu0 0.0
      %7629 = vmatprep.subr.mxu0 0.0
      %7630 = vmatpush1.msra.mxu0 0.0
      %7631 = vmatprep.subr.mxu0 0.0
      %7632 = vmatpush1.msra.mxu0 0.0
      %7633 = vmatprep.subr.mxu0 0.0
      %7634 = vmatpush1.msra.mxu0 0.0
      %7635 = vmatprep.subr.mxu0 0.0
      %7636 = vmatpush1.msra.mxu0 0.0
      %7637 = vmatprep.subr.mxu0 0.0
      %7638 = vmatpush1.msra.mxu0 0.0
      %7639 = vmatprep.subr.mxu0 0.0
      %7640 = vmatpush1.msra.mxu0 0.0
      %7641 = vmatprep.subr.mxu0 0.0
      %7642 = vmatpush1.msra.mxu0 0.0
      %7643 = vmatprep.subr.mxu0 0.0
      %7644 = vmatpush1.msra.mxu0 0.0
      %7645 = vmatprep.subr.mxu0 0.0
      %7646 = vmatpush1.msra.mxu0 0.0
      %7647 = vmatprep.subr.mxu0 0.0
      %7648 = vmatpush1.msra.mxu0 0.0
      %7649 = vmatprep.subr.mxu0 0.0
      %7650 = vmatpush1.msra.mxu0 0.0
      %7651 = vmatprep.mubr.f32.mxu0 0.0
      %7652 = vmatmul.mubr.f32.gmra.mrb[0].mxu0 %v7579
      %v7653 = vpop.f32.mrb[0].mxu0
      %v7654 = vadd.f32 0.0, %v7653
      %v7655 = vpop.f32.mrb[0].mxu0
      %v7656 = vadd.f32 0.0, %v7655
      %7657 = vdwg.mxu0
      %7658 = vmatprep.subr.mxu0 0.0
      %7659 = vmatpush1.msra.mxu0 %v7585
      %7660 = vmatprep.subr.mxu0 0.0
      %7661 = vmatpush1.msra.mxu0 0.0
      %7662 = vmatprep.subr.mxu0 0.0
      %7663 = vmatpush1.msra.mxu0 0.0
      %7664 = vmatprep.subr.mxu0 0.0
      %7665 = vmatpush1.msra.mxu0 0.0
      %7666 = vmatprep.subr.mxu0 0.0
      %7667 = vmatpush1.msra.mxu0 0.0
      %7668 = vmatprep.subr.mxu0 0.0
      %7669 = vmatpush1.msra.mxu0 0.0
      %7670 = vmatprep.subr.mxu0 0.0
      %7671 = vmatpush1.msra.mxu0 0.0
      %7672 = vmatprep.subr.mxu0 0.0
      %7673 = vmatpush1.msra.mxu0 0.0
      %7674 = vmatprep.subr.mxu0 0.0
      %7675 = vmatpush1.msra.mxu0 0.0
      %7676 = vmatprep.subr.mxu0 0.0
      %7677 = vmatpush1.msra.mxu0 0.0
      %7678 = vmatprep.subr.mxu0 0.0
      %7679 = vmatpush1.msra.mxu0 0.0
      %7680 = vmatprep.subr.mxu0 0.0
      %7681 = vmatpush1.msra.mxu0 0.0
      %7682 = vmatprep.subr.mxu0 0.0
      %7683 = vmatpush1.msra.mxu0 0.0
      %7684 = vmatprep.subr.mxu0 0.0
      %7685 = vmatpush1.msra.mxu0 0.0
      %7686 = vmatprep.subr.mxu0 0.0
      %7687 = vmatpush1.msra.mxu0 0.0
      %7688 = vmatprep.subr.mxu0 0.0
      %7689 = vmatpush1.msra.mxu0 0.0
      %7690 = vmatprep.subr.mxu0 0.0
      %7691 = vmatpush1.msra.mxu0 0.0
      %7692 = vmatprep.subr.mxu0 0.0
      %7693 = vmatpush1.msra.mxu0 0.0
      %7694 = vmatprep.subr.mxu0 0.0
      %7695 = vmatpush1.msra.mxu0 0.0
      %7696 = vmatprep.subr.mxu0 0.0
      %7697 = vmatpush1.msra.mxu0 0.0
      %7698 = vmatprep.subr.mxu0 0.0
      %7699 = vmatpush1.msra.mxu0 0.0
      %7700 = vmatprep.subr.mxu0 0.0
      %7701 = vmatpush1.msra.mxu0 0.0
      %7702 = vmatprep.subr.mxu0 0.0
      %7703 = vmatpush1.msra.mxu0 0.0
      %7704 = vmatprep.subr.mxu0 0.0
      %7705 = vmatpush1.msra.mxu0 0.0
      %7706 = vmatprep.subr.mxu0 0.0
      %7707 = vmatpush1.msra.mxu0 0.0
      %7708 = vmatprep.subr.mxu0 0.0
      %7709 = vmatpush1.msra.mxu0 0.0
      %7710 = vmatprep.subr.mxu0 0.0
      %7711 = vmatpush1.msra.mxu0 0.0
      %7712 = vmatprep.subr.mxu0 0.0
      %7713 = vmatpush1.msra.mxu0 0.0
      %7714 = vmatprep.subr.mxu0 0.0
      %7715 = vmatpush1.msra.mxu0 0.0
      %7716 = vmatprep.subr.mxu0 0.0
      %7717 = vmatpush1.msra.mxu0 0.0
      %7718 = vmatprep.subr.mxu0 0.0
      %7719 = vmatpush1.msra.mxu0 0.0
      %7720 = vmatprep.subr.mxu0 0.0
      %7721 = vmatpush1.msra.mxu0 0.0
      %7722 = vmatprep.mubr.f32.mxu0 0.0
      %7723 = vmatmul.mubr.f32.gmra.mrb[0].mxu0 %v7579
      %v7724 = vpop.f32.mrb[0].mxu0
      %v7725 = vadd.f32 0.0, %v7724
      %v7726 = vpop.f32.mrb[0].mxu0
      %7727 = vdwg.mxu0
      %v7728 = vadd.f32 %v7562, %v7654
      %v7729 = vadd.f32 %v7563, %v7656
      %v7730 = vadd.f32 %v7564, %v7725
      %s7731 = scalar_lea.vmem %s12, 32
      %v7732 = vld [vmem:[%s7731] sm:$0xff]
      %7733 = vrot.lane.b32.xlu0 %v7064, 59
      %v7734 = vpop.permute.xlu0 %7733
      %7735 = vrot.lane.b32.xlu0 %v7065, 59
      %v7736 = vpop.permute.xlu0 %7735
      %7737 = vrot.lane.b32.xlu0 %v7066, 59
      %v7738 = vpop.permute.xlu0 %7737
      %7739 = vrot.lane.b32.xlu0 %v7067, 59
      %v7740 = vpop.permute.xlu0 %7739
      %v7741 = vsel %vm1567, %v7734, %v7736
      %v7742 = vsel %vm1567, %v7736, %v7738
      %v7743 = vsel %vm1567, %v7738, %v7740
      %v7745 = vsel %vm7086, %v7732, 0
      %v7747 = vsel %vm7090, %v7741, 0
      %v7749 = vsel %vm7090, %v7742, 0
      %v7751 = vsel %vm7090, %v7743, 0
      %7753 = vmatprep.subr.mxu0 %v7749
      %7754 = vmatpush1.msra.mxu0 %v7747
      %7755 = vmatprep.subr.mxu0 0.0
      %7756 = vmatpush1.msra.mxu0 0.0
      %7757 = vmatprep.subr.mxu0 0.0
      %7758 = vmatpush1.msra.mxu0 0.0
      %7759 = vmatprep.subr.mxu0 0.0
      %7760 = vmatpush1.msra.mxu0 0.0
      %7761 = vmatprep.subr.mxu0 0.0
      %7762 = vmatpush1.msra.mxu0 0.0
      %7763 = vmatprep.subr.mxu0 0.0
      %7764 = vmatpush1.msra.mxu0 0.0
      %7765 = vmatprep.subr.mxu0 0.0
      %7766 = vmatpush1.msra.mxu0 0.0
      %7767 = vmatprep.subr.mxu0 0.0
      %7768 = vmatpush1.msra.mxu0 0.0
      %7769 = vmatprep.subr.mxu0 0.0
      %7770 = vmatpush1.msra.mxu0 0.0
      %7771 = vmatprep.subr.mxu0 0.0
      %7772 = vmatpush1.msra.mxu0 0.0
      %7773 = vmatprep.subr.mxu0 0.0
      %7774 = vmatpush1.msra.mxu0 0.0
      %7775 = vmatprep.subr.mxu0 0.0
      %7776 = vmatpush1.msra.mxu0 0.0
      %7777 = vmatprep.subr.mxu0 0.0
      %7778 = vmatpush1.msra.mxu0 0.0
      %7779 = vmatprep.subr.mxu0 0.0
      %7780 = vmatpush1.msra.mxu0 0.0
      %7781 = vmatprep.subr.mxu0 0.0
      %7782 = vmatpush1.msra.mxu0 0.0
      %7783 = vmatprep.subr.mxu0 0.0
      %7784 = vmatpush1.msra.mxu0 0.0
      %7785 = vmatprep.subr.mxu0 0.0
      %7786 = vmatpush1.msra.mxu0 0.0
      %7787 = vmatprep.subr.mxu0 0.0
      %7788 = vmatpush1.msra.mxu0 0.0
      %7789 = vmatprep.subr.mxu0 0.0
      %7790 = vmatpush1.msra.mxu0 0.0
      %7791 = vmatprep.subr.mxu0 0.0
      %7792 = vmatpush1.msra.mxu0 0.0
      %7793 = vmatprep.subr.mxu0 0.0
      %7794 = vmatpush1.msra.mxu0 0.0
      %7795 = vmatprep.subr.mxu0 0.0
      %7796 = vmatpush1.msra.mxu0 0.0
      %7797 = vmatprep.subr.mxu0 0.0
      %7798 = vmatpush1.msra.mxu0 0.0
      %7799 = vmatprep.subr.mxu0 0.0
      %7800 = vmatpush1.msra.mxu0 0.0
      %7801 = vmatprep.subr.mxu0 0.0
      %7802 = vmatpush1.msra.mxu0 0.0
      %7803 = vmatprep.subr.mxu0 0.0
      %7804 = vmatpush1.msra.mxu0 0.0
      %7805 = vmatprep.subr.mxu0 0.0
      %7806 = vmatpush1.msra.mxu0 0.0
      %7807 = vmatprep.subr.mxu0 0.0
      %7808 = vmatpush1.msra.mxu0 0.0
      %7809 = vmatprep.subr.mxu0 0.0
      %7810 = vmatpush1.msra.mxu0 0.0
      %7811 = vmatprep.subr.mxu0 0.0
      %7812 = vmatpush1.msra.mxu0 0.0
      %7813 = vmatprep.subr.mxu0 0.0
      %7814 = vmatpush1.msra.mxu0 0.0
      %7815 = vmatprep.subr.mxu0 0.0
      %7816 = vmatpush1.msra.mxu0 0.0
      %7817 = vmatprep.mubr.f32.mxu0 0.0
      %7818 = vmatmul.mubr.f32.gmra.mrb[0].mxu0 %v7745
      %v7819 = vpop.f32.mrb[0].mxu0
      %v7820 = vadd.f32 0.0, %v7819
      %v7821 = vpop.f32.mrb[0].mxu0
      %v7822 = vadd.f32 0.0, %v7821
      %7823 = vdwg.mxu0
      %7824 = vmatprep.subr.mxu0 0.0
      %7825 = vmatpush1.msra.mxu0 %v7751
      %7826 = vmatprep.subr.mxu0 0.0
      %7827 = vmatpush1.msra.mxu0 0.0
      %7828 = vmatprep.subr.mxu0 0.0
      %7829 = vmatpush1.msra.mxu0 0.0
      %7830 = vmatprep.subr.mxu0 0.0
      %7831 = vmatpush1.msra.mxu0 0.0
      %7832 = vmatprep.subr.mxu0 0.0
      %7833 = vmatpush1.msra.mxu0 0.0
      %7834 = vmatprep.subr.mxu0 0.0
      %7835 = vmatpush1.msra.mxu0 0.0
      %7836 = vmatprep.subr.mxu0 0.0
      %7837 = vmatpush1.msra.mxu0 0.0
      %7838 = vmatprep.subr.mxu0 0.0
      %7839 = vmatpush1.msra.mxu0 0.0
      %7840 = vmatprep.subr.mxu0 0.0
      %7841 = vmatpush1.msra.mxu0 0.0
      %7842 = vmatprep.subr.mxu0 0.0
      %7843 = vmatpush1.msra.mxu0 0.0
      %7844 = vmatprep.subr.mxu0 0.0
      %7845 = vmatpush1.msra.mxu0 0.0
      %7846 = vmatprep.subr.mxu0 0.0
      %7847 = vmatpush1.msra.mxu0 0.0
      %7848 = vmatprep.subr.mxu0 0.0
      %7849 = vmatpush1.msra.mxu0 0.0
      %7850 = vmatprep.subr.mxu0 0.0
      %7851 = vmatpush1.msra.mxu0 0.0
      %7852 = vmatprep.subr.mxu0 0.0
      %7853 = vmatpush1.msra.mxu0 0.0
      %7854 = vmatprep.subr.mxu0 0.0
      %7855 = vmatpush1.msra.mxu0 0.0
      %7856 = vmatprep.subr.mxu0 0.0
      %7857 = vmatpush1.msra.mxu0 0.0
      %7858 = vmatprep.subr.mxu0 0.0
      %7859 = vmatpush1.msra.mxu0 0.0
      %7860 = vmatprep.subr.mxu0 0.0
      %7861 = vmatpush1.msra.mxu0 0.0
      %7862 = vmatprep.subr.mxu0 0.0
      %7863 = vmatpush1.msra.mxu0 0.0
      %7864 = vmatprep.subr.mxu0 0.0
      %7865 = vmatpush1.msra.mxu0 0.0
      %7866 = vmatprep.subr.mxu0 0.0
      %7867 = vmatpush1.msra.mxu0 0.0
      %7868 = vmatprep.subr.mxu0 0.0
      %7869 = vmatpush1.msra.mxu0 0.0
      %7870 = vmatprep.subr.mxu0 0.0
      %7871 = vmatpush1.msra.mxu0 0.0
      %7872 = vmatprep.subr.mxu0 0.0
      %7873 = vmatpush1.msra.mxu0 0.0
      %7874 = vmatprep.subr.mxu0 0.0
      %7875 = vmatpush1.msra.mxu0 0.0
      %7876 = vmatprep.subr.mxu0 0.0
      %7877 = vmatpush1.msra.mxu0 0.0
      %7878 = vmatprep.subr.mxu0 0.0
      %7879 = vmatpush1.msra.mxu0 0.0
      %7880 = vmatprep.subr.mxu0 0.0
      %7881 = vmatpush1.msra.mxu0 0.0
      %7882 = vmatprep.subr.mxu0 0.0
      %7883 = vmatpush1.msra.mxu0 0.0
      %7884 = vmatprep.subr.mxu0 0.0
      %7885 = vmatpush1.msra.mxu0 0.0
      %7886 = vmatprep.subr.mxu0 0.0
      %7887 = vmatpush1.msra.mxu0 0.0
      %7888 = vmatprep.mubr.f32.mxu0 0.0
      %7889 = vmatmul.mubr.f32.gmra.mrb[0].mxu0 %v7745
      %v7890 = vpop.f32.mrb[0].mxu0
      %v7891 = vadd.f32 0.0, %v7890
      %v7892 = vpop.f32.mrb[0].mxu0
      %7893 = vdwg.mxu0
      %v7894 = vadd.f32 %v7728, %v7820
      %v7895 = vadd.f32 %v7729, %v7822
      %v7896 = vadd.f32 %v7730, %v7891
      %s7897 = scalar_lea.vmem %s12, 40
      %v7898 = vld [vmem:[%s7897] sm:$0xff]
      %7899 = vrot.lane.b32.xlu0 %v7064, 58
      %v7900 = vpop.permute.xlu0 %7899
      %7901 = vrot.lane.b32.xlu0 %v7065, 58
      %v7902 = vpop.permute.xlu0 %7901
      %7903 = vrot.lane.b32.xlu0 %v7066, 58
      %v7904 = vpop.permute.xlu0 %7903
      %7905 = vrot.lane.b32.xlu0 %v7067, 58
      %v7906 = vpop.permute.xlu0 %7905
      %v7907 = vsel %vm1731, %v7900, %v7902
      %v7908 = vsel %vm1731, %v7902, %v7904
      %v7909 = vsel %vm1731, %v7904, %v7906
      %v7911 = vsel %vm7086, %v7898, 0
      %v7913 = vsel %vm7090, %v7907, 0
      %v7915 = vsel %vm7090, %v7908, 0
      %v7917 = vsel %vm7090, %v7909, 0
      %7919 = vmatprep.subr.mxu0 %v7915
      %7920 = vmatpush1.msra.mxu0 %v7913
      %7921 = vmatprep.subr.mxu0 0.0
      %7922 = vmatpush1.msra.mxu0 0.0
      %7923 = vmatprep.subr.mxu0 0.0
      %7924 = vmatpush1.msra.mxu0 0.0
      %7925 = vmatprep.subr.mxu0 0.0
      %7926 = vmatpush1.msra.mxu0 0.0
      %7927 = vmatprep.subr.mxu0 0.0
      %7928 = vmatpush1.msra.mxu0 0.0
      %7929 = vmatprep.subr.mxu0 0.0
      %7930 = vmatpush1.msra.mxu0 0.0
      %7931 = vmatprep.subr.mxu0 0.0
      %7932 = vmatpush1.msra.mxu0 0.0
      %7933 = vmatprep.subr.mxu0 0.0
      %7934 = vmatpush1.msra.mxu0 0.0
      %7935 = vmatprep.subr.mxu0 0.0
      %7936 = vmatpush1.msra.mxu0 0.0
      %7937 = vmatprep.subr.mxu0 0.0
      %7938 = vmatpush1.msra.mxu0 0.0
      %7939 = vmatprep.subr.mxu0 0.0
      %7940 = vmatpush1.msra.mxu0 0.0
      %7941 = vmatprep.subr.mxu0 0.0
      %7942 = vmatpush1.msra.mxu0 0.0
      %7943 = vmatprep.subr.mxu0 0.0
      %7944 = vmatpush1.msra.mxu0 0.0
      %7945 = vmatprep.subr.mxu0 0.0
      %7946 = vmatpush1.msra.mxu0 0.0
      %7947 = vmatprep.subr.mxu0 0.0
      %7948 = vmatpush1.msra.mxu0 0.0
      %7949 = vmatprep.subr.mxu0 0.0
      %7950 = vmatpush1.msra.mxu0 0.0
      %7951 = vmatprep.subr.mxu0 0.0
      %7952 = vmatpush1.msra.mxu0 0.0
      %7953 = vmatprep.subr.mxu0 0.0
      %7954 = vmatpush1.msra.mxu0 0.0
      %7955 = vmatprep.subr.mxu0 0.0
      %7956 = vmatpush1.msra.mxu0 0.0
      %7957 = vmatprep.subr.mxu0 0.0
      %7958 = vmatpush1.msra.mxu0 0.0
      %7959 = vmatprep.subr.mxu0 0.0
      %7960 = vmatpush1.msra.mxu0 0.0
      %7961 = vmatprep.subr.mxu0 0.0
      %7962 = vmatpush1.msra.mxu0 0.0
      %7963 = vmatprep.subr.mxu0 0.0
      %7964 = vmatpush1.msra.mxu0 0.0
      %7965 = vmatprep.subr.mxu0 0.0
      %7966 = vmatpush1.msra.mxu0 0.0
      %7967 = vmatprep.subr.mxu0 0.0
      %7968 = vmatpush1.msra.mxu0 0.0
      %7969 = vmatprep.subr.mxu0 0.0
      %7970 = vmatpush1.msra.mxu0 0.0
      %7971 = vmatprep.subr.mxu0 0.0
      %7972 = vmatpush1.msra.mxu0 0.0
      %7973 = vmatprep.subr.mxu0 0.0
      %7974 = vmatpush1.msra.mxu0 0.0
      %7975 = vmatprep.subr.mxu0 0.0
      %7976 = vmatpush1.msra.mxu0 0.0
      %7977 = vmatprep.subr.mxu0 0.0
      %7978 = vmatpush1.msra.mxu0 0.0
      %7979 = vmatprep.subr.mxu0 0.0
      %7980 = vmatpush1.msra.mxu0 0.0
      %7981 = vmatprep.subr.mxu0 0.0
      %7982 = vmatpush1.msra.mxu0 0.0
      %7983 = vmatprep.mubr.f32.mxu0 0.0
      %7984 = vmatmul.mubr.f32.gmra.mrb[0].mxu0 %v7911
      %v7985 = vpop.f32.mrb[0].mxu0
      %v7986 = vadd.f32 0.0, %v7985
      %v7987 = vpop.f32.mrb[0].mxu0
      %v7988 = vadd.f32 0.0, %v7987
      %7989 = vdwg.mxu0
      %7990 = vmatprep.subr.mxu0 0.0
      %7991 = vmatpush1.msra.mxu0 %v7917
      %7992 = vmatprep.subr.mxu0 0.0
      %7993 = vmatpush1.msra.mxu0 0.0
      %7994 = vmatprep.subr.mxu0 0.0
      %7995 = vmatpush1.msra.mxu0 0.0
      %7996 = vmatprep.subr.mxu0 0.0
      %7997 = vmatpush1.msra.mxu0 0.0
      %7998 = vmatprep.subr.mxu0 0.0
      %7999 = vmatpush1.msra.mxu0 0.0
      %8000 = vmatprep.subr.mxu0 0.0
      %8001 = vmatpush1.msra.mxu0 0.0
      %8002 = vmatprep.subr.mxu0 0.0
      %8003 = vmatpush1.msra.mxu0 0.0
      %8004 = vmatprep.subr.mxu0 0.0
      %8005 = vmatpush1.msra.mxu0 0.0
      %8006 = vmatprep.subr.mxu0 0.0
      %8007 = vmatpush1.msra.mxu0 0.0
      %8008 = vmatprep.subr.mxu0 0.0
      %8009 = vmatpush1.msra.mxu0 0.0
      %8010 = vmatprep.subr.mxu0 0.0
      %8011 = vmatpush1.msra.mxu0 0.0
      %8012 = vmatprep.subr.mxu0 0.0
      %8013 = vmatpush1.msra.mxu0 0.0
      %8014 = vmatprep.subr.mxu0 0.0
      %8015 = vmatpush1.msra.mxu0 0.0
      %8016 = vmatprep.subr.mxu0 0.0
      %8017 = vmatpush1.msra.mxu0 0.0
      %8018 = vmatprep.subr.mxu0 0.0
      %8019 = vmatpush1.msra.mxu0 0.0
      %8020 = vmatprep.subr.mxu0 0.0
      %8021 = vmatpush1.msra.mxu0 0.0
      %8022 = vmatprep.subr.mxu0 0.0
      %8023 = vmatpush1.msra.mxu0 0.0
      %8024 = vmatprep.subr.mxu0 0.0
      %8025 = vmatpush1.msra.mxu0 0.0
      %8026 = vmatprep.subr.mxu0 0.0
      %8027 = vmatpush1.msra.mxu0 0.0
      %8028 = vmatprep.subr.mxu0 0.0
      %8029 = vmatpush1.msra.mxu0 0.0
      %8030 = vmatprep.subr.mxu0 0.0
      %8031 = vmatpush1.msra.mxu0 0.0
      %8032 = vmatprep.subr.mxu0 0.0
      %8033 = vmatpush1.msra.mxu0 0.0
      %8034 = vmatprep.subr.mxu0 0.0
      %8035 = vmatpush1.msra.mxu0 0.0
      %8036 = vmatprep.subr.mxu0 0.0
      %8037 = vmatpush1.msra.mxu0 0.0
      %8038 = vmatprep.subr.mxu0 0.0
      %8039 = vmatpush1.msra.mxu0 0.0
      %8040 = vmatprep.subr.mxu0 0.0
      %8041 = vmatpush1.msra.mxu0 0.0
      %8042 = vmatprep.subr.mxu0 0.0
      %8043 = vmatpush1.msra.mxu0 0.0
      %8044 = vmatprep.subr.mxu0 0.0
      %8045 = vmatpush1.msra.mxu0 0.0
      %8046 = vmatprep.subr.mxu0 0.0
      %8047 = vmatpush1.msra.mxu0 0.0
      %8048 = vmatprep.subr.mxu0 0.0
      %8049 = vmatpush1.msra.mxu0 0.0
      %8050 = vmatprep.subr.mxu0 0.0
      %8051 = vmatpush1.msra.mxu0 0.0
      %8052 = vmatprep.subr.mxu0 0.0
      %8053 = vmatpush1.msra.mxu0 0.0
      %8054 = vmatprep.mubr.f32.mxu0 0.0
      %8055 = vmatmul.mubr.f32.gmra.mrb[0].mxu0 %v7911
      %v8056 = vpop.f32.mrb[0].mxu0
      %v8057 = vadd.f32 0.0, %v8056
      %v8058 = vpop.f32.mrb[0].mxu0
      %8059 = vdwg.mxu0
      %v8060 = vadd.f32 %v7894, %v7986
      %v8061 = vadd.f32 %v7895, %v7988
      %v8062 = vadd.f32 %v7896, %v8057
      %s8063 = scalar_lea.vmem %s12, 48
      %v8064 = vld [vmem:[%s8063] sm:$0xff]
      %8065 = vrot.lane.b32.xlu0 %v7064, 38
      %v8066 = vpop.permute.xlu0 %8065
      %8067 = vrot.lane.b32.xlu0 %v7065, 38
      %v8068 = vpop.permute.xlu0 %8067
      %8069 = vrot.lane.b32.xlu0 %v7066, 38
      %v8070 = vpop.permute.xlu0 %8069
      %8071 = vrot.lane.b32.xlu0 %v7067, 38
      %v8072 = vpop.permute.xlu0 %8071
      %v8073 = vsel %vm1895, %v8066, %v8068
      %v8074 = vsel %vm1895, %v8068, %v8070
      %v8075 = vsel %vm1895, %v8070, %v8072
      %v8077 = vsel %vm7086, %v8064, 0
      %v8079 = vsel %vm7090, %v8073, 0
      %v8081 = vsel %vm7090, %v8074, 0
      %v8083 = vsel %vm7090, %v8075, 0
      %8085 = vmatprep.subr.mxu0 %v8081
      %8086 = vmatpush1.msra.mxu0 %v8079
      %8087 = vmatprep.subr.mxu0 0.0
      %8088 = vmatpush1.msra.mxu0 0.0
      %8089 = vmatprep.subr.mxu0 0.0
      %8090 = vmatpush1.msra.mxu0 0.0
      %8091 = vmatprep.subr.mxu0 0.0
      %8092 = vmatpush1.msra.mxu0 0.0
      %8093 = vmatprep.subr.mxu0 0.0
      %8094 = vmatpush1.msra.mxu0 0.0
      %8095 = vmatprep.subr.mxu0 0.0
      %8096 = vmatpush1.msra.mxu0 0.0
      %8097 = vmatprep.subr.mxu0 0.0
      %8098 = vmatpush1.msra.mxu0 0.0
      %8099 = vmatprep.subr.mxu0 0.0
      %8100 = vmatpush1.msra.mxu0 0.0
      %8101 = vmatprep.subr.mxu0 0.0
      %8102 = vmatpush1.msra.mxu0 0.0
      %8103 = vmatprep.subr.mxu0 0.0
      %8104 = vmatpush1.msra.mxu0 0.0
      %8105 = vmatprep.subr.mxu0 0.0
      %8106 = vmatpush1.msra.mxu0 0.0
      %8107 = vmatprep.subr.mxu0 0.0
      %8108 = vmatpush1.msra.mxu0 0.0
      %8109 = vmatprep.subr.mxu0 0.0
      %8110 = vmatpush1.msra.mxu0 0.0
      %8111 = vmatprep.subr.mxu0 0.0
      %8112 = vmatpush1.msra.mxu0 0.0
      %8113 = vmatprep.subr.mxu0 0.0
      %8114 = vmatpush1.msra.mxu0 0.0
      %8115 = vmatprep.subr.mxu0 0.0
      %8116 = vmatpush1.msra.mxu0 0.0
      %8117 = vmatprep.subr.mxu0 0.0
      %8118 = vmatpush1.msra.mxu0 0.0
      %8119 = vmatprep.subr.mxu0 0.0
      %8120 = vmatpush1.msra.mxu0 0.0
      %8121 = vmatprep.subr.mxu0 0.0
      %8122 = vmatpush1.msra.mxu0 0.0
      %8123 = vmatprep.subr.mxu0 0.0
      %8124 = vmatpush1.msra.mxu0 0.0
      %8125 = vmatprep.subr.mxu0 0.0
      %8126 = vmatpush1.msra.mxu0 0.0
      %8127 = vmatprep.subr.mxu0 0.0
      %8128 = vmatpush1.msra.mxu0 0.0
      %8129 = vmatprep.subr.mxu0 0.0
      %8130 = vmatpush1.msra.mxu0 0.0
      %8131 = vmatprep.subr.mxu0 0.0
      %8132 = vmatpush1.msra.mxu0 0.0
      %8133 = vmatprep.subr.mxu0 0.0
      %8134 = vmatpush1.msra.mxu0 0.0
      %8135 = vmatprep.subr.mxu0 0.0
      %8136 = vmatpush1.msra.mxu0 0.0
      %8137 = vmatprep.subr.mxu0 0.0
      %8138 = vmatpush1.msra.mxu0 0.0
      %8139 = vmatprep.subr.mxu0 0.0
      %8140 = vmatpush1.msra.mxu0 0.0
      %8141 = vmatprep.subr.mxu0 0.0
      %8142 = vmatpush1.msra.mxu0 0.0
      %8143 = vmatprep.subr.mxu0 0.0
      %8144 = vmatpush1.msra.mxu0 0.0
      %8145 = vmatprep.subr.mxu0 0.0
      %8146 = vmatpush1.msra.mxu0 0.0
      %8147 = vmatprep.subr.mxu0 0.0
      %8148 = vmatpush1.msra.mxu0 0.0
      %8149 = vmatprep.mubr.f32.mxu0 0.0
      %8150 = vmatmul.mubr.f32.gmra.mrb[0].mxu0 %v8077
      %v8151 = vpop.f32.mrb[0].mxu0
      %v8152 = vadd.f32 0.0, %v8151
      %v8153 = vpop.f32.mrb[0].mxu0
      %v8154 = vadd.f32 0.0, %v8153
      %8155 = vdwg.mxu0
      %8156 = vmatprep.subr.mxu0 0.0
      %8157 = vmatpush1.msra.mxu0 %v8083
      %8158 = vmatprep.subr.mxu0 0.0
      %8159 = vmatpush1.msra.mxu0 0.0
      %8160 = vmatprep.subr.mxu0 0.0
      %8161 = vmatpush1.msra.mxu0 0.0
      %8162 = vmatprep.subr.mxu0 0.0
      %8163 = vmatpush1.msra.mxu0 0.0
      %8164 = vmatprep.subr.mxu0 0.0
      %8165 = vmatpush1.msra.mxu0 0.0
      %8166 = vmatprep.subr.mxu0 0.0
      %8167 = vmatpush1.msra.mxu0 0.0
      %8168 = vmatprep.subr.mxu0 0.0
      %8169 = vmatpush1.msra.mxu0 0.0
      %8170 = vmatprep.subr.mxu0 0.0
      %8171 = vmatpush1.msra.mxu0 0.0
      %8172 = vmatprep.subr.mxu0 0.0
      %8173 = vmatpush1.msra.mxu0 0.0
      %8174 = vmatprep.subr.mxu0 0.0
      %8175 = vmatpush1.msra.mxu0 0.0
      %8176 = vmatprep.subr.mxu0 0.0
      %8177 = vmatpush1.msra.mxu0 0.0
      %8178 = vmatprep.subr.mxu0 0.0
      %8179 = vmatpush1.msra.mxu0 0.0
      %8180 = vmatprep.subr.mxu0 0.0
      %8181 = vmatpush1.msra.mxu0 0.0
      %8182 = vmatprep.subr.mxu0 0.0
      %8183 = vmatpush1.msra.mxu0 0.0
      %8184 = vmatprep.subr.mxu0 0.0
      %8185 = vmatpush1.msra.mxu0 0.0
      %8186 = vmatprep.subr.mxu0 0.0
      %8187 = vmatpush1.msra.mxu0 0.0
      %8188 = vmatprep.subr.mxu0 0.0
      %8189 = vmatpush1.msra.mxu0 0.0
      %8190 = vmatprep.subr.mxu0 0.0
      %8191 = vmatpush1.msra.mxu0 0.0
      %8192 = vmatprep.subr.mxu0 0.0
      %8193 = vmatpush1.msra.mxu0 0.0
      %8194 = vmatprep.subr.mxu0 0.0
      %8195 = vmatpush1.msra.mxu0 0.0
      %8196 = vmatprep.subr.mxu0 0.0
      %8197 = vmatpush1.msra.mxu0 0.0
      %8198 = vmatprep.subr.mxu0 0.0
      %8199 = vmatpush1.msra.mxu0 0.0
      %8200 = vmatprep.subr.mxu0 0.0
      %8201 = vmatpush1.msra.mxu0 0.0
      %8202 = vmatprep.subr.mxu0 0.0
      %8203 = vmatpush1.msra.mxu0 0.0
      %8204 = vmatprep.subr.mxu0 0.0
      %8205 = vmatpush1.msra.mxu0 0.0
      %8206 = vmatprep.subr.mxu0 0.0
      %8207 = vmatpush1.msra.mxu0 0.0
      %8208 = vmatprep.subr.mxu0 0.0
      %8209 = vmatpush1.msra.mxu0 0.0
      %8210 = vmatprep.subr.mxu0 0.0
      %8211 = vmatpush1.msra.mxu0 0.0
      %8212 = vmatprep.subr.mxu0 0.0
      %8213 = vmatpush1.msra.mxu0 0.0
      %8214 = vmatprep.subr.mxu0 0.0
      %8215 = vmatpush1.msra.mxu0 0.0
      %8216 = vmatprep.subr.mxu0 0.0
      %8217 = vmatpush1.msra.mxu0 0.0
      %8218 = vmatprep.subr.mxu0 0.0
      %8219 = vmatpush1.msra.mxu0 0.0
      %8220 = vmatprep.mubr.f32.mxu0 0.0
      %8221 = vmatmul.mubr.f32.gmra.mrb[0].mxu0 %v8077
      %v8222 = vpop.f32.mrb[0].mxu0
      %v8223 = vadd.f32 0.0, %v8222
      %v8224 = vpop.f32.mrb[0].mxu0
      %8225 = vdwg.mxu0
      %v8226 = vadd.f32 %v8060, %v8152
      %v8227 = vadd.f32 %v8061, %v8154
      %v8228 = vadd.f32 %v8062, %v8223
      %s8229 = scalar_lea.vmem %s12, 56
      %v8230 = vld [vmem:[%s8229] sm:$0xff]
      %8231 = vrot.lane.b32.xlu0 %v7064, 37
      %v8232 = vpop.permute.xlu0 %8231
      %8233 = vrot.lane.b32.xlu0 %v7065, 37
      %v8234 = vpop.permute.xlu0 %8233
      %8235 = vrot.lane.b32.xlu0 %v7066, 37
      %v8236 = vpop.permute.xlu0 %8235
      %8237 = vrot.lane.b32.xlu0 %v7067, 37
      %v8238 = vpop.permute.xlu0 %8237
      %v8239 = vsel %vm897, %v8232, %v8234
      %v8240 = vsel %vm897, %v8234, %v8236
      %v8241 = vsel %vm897, %v8236, %v8238
      %v8243 = vsel %vm7086, %v8230, 0
      %v8245 = vsel %vm7090, %v8239, 0
      %v8247 = vsel %vm7090, %v8240, 0
      %v8249 = vsel %vm7090, %v8241, 0
      %8251 = vmatprep.subr.mxu0 %v8247
      %8252 = vmatpush1.msra.mxu0 %v8245
      %8253 = vmatprep.subr.mxu0 0.0
      %8254 = vmatpush1.msra.mxu0 0.0
      %8255 = vmatprep.subr.mxu0 0.0
      %8256 = vmatpush1.msra.mxu0 0.0
      %8257 = vmatprep.subr.mxu0 0.0
      %8258 = vmatpush1.msra.mxu0 0.0
      %8259 = vmatprep.subr.mxu0 0.0
      %8260 = vmatpush1.msra.mxu0 0.0
      %8261 = vmatprep.subr.mxu0 0.0
      %8262 = vmatpush1.msra.mxu0 0.0
      %8263 = vmatprep.subr.mxu0 0.0
      %8264 = vmatpush1.msra.mxu0 0.0
      %8265 = vmatprep.subr.mxu0 0.0
      %8266 = vmatpush1.msra.mxu0 0.0
      %8267 = vmatprep.subr.mxu0 0.0
      %8268 = vmatpush1.msra.mxu0 0.0
      %8269 = vmatprep.subr.mxu0 0.0
      %8270 = vmatpush1.msra.mxu0 0.0
      %8271 = vmatprep.subr.mxu0 0.0
      %8272 = vmatpush1.msra.mxu0 0.0
      %8273 = vmatprep.subr.mxu0 0.0
      %8274 = vmatpush1.msra.mxu0 0.0
      %8275 = vmatprep.subr.mxu0 0.0
      %8276 = vmatpush1.msra.mxu0 0.0
      %8277 = vmatprep.subr.mxu0 0.0
      %8278 = vmatpush1.msra.mxu0 0.0
      %8279 = vmatprep.subr.mxu0 0.0
      %8280 = vmatpush1.msra.mxu0 0.0
      %8281 = vmatprep.subr.mxu0 0.0
      %8282 = vmatpush1.msra.mxu0 0.0
      %8283 = vmatprep.subr.mxu0 0.0
      %8284 = vmatpush1.msra.mxu0 0.0
      %8285 = vmatprep.subr.mxu0 0.0
      %8286 = vmatpush1.msra.mxu0 0.0
      %8287 = vmatprep.subr.mxu0 0.0
      %8288 = vmatpush1.msra.mxu0 0.0
      %8289 = vmatprep.subr.mxu0 0.0
      %8290 = vmatpush1.msra.mxu0 0.0
      %8291 = vmatprep.subr.mxu0 0.0
      %8292 = vmatpush1.msra.mxu0 0.0
      %8293 = vmatprep.subr.mxu0 0.0
      %8294 = vmatpush1.msra.mxu0 0.0
      %8295 = vmatprep.subr.mxu0 0.0
      %8296 = vmatpush1.msra.mxu0 0.0
      %8297 = vmatprep.subr.mxu0 0.0
      %8298 = vmatpush1.msra.mxu0 0.0
      %8299 = vmatprep.subr.mxu0 0.0
      %8300 = vmatpush1.msra.mxu0 0.0
      %8301 = vmatprep.subr.mxu0 0.0
      %8302 = vmatpush1.msra.mxu0 0.0
      %8303 = vmatprep.subr.mxu0 0.0
      %8304 = vmatpush1.msra.mxu0 0.0
      %8305 = vmatprep.subr.mxu0 0.0
      %8306 = vmatpush1.msra.mxu0 0.0
      %8307 = vmatprep.subr.mxu0 0.0
      %8308 = vmatpush1.msra.mxu0 0.0
      %8309 = vmatprep.subr.mxu0 0.0
      %8310 = vmatpush1.msra.mxu0 0.0
      %8311 = vmatprep.subr.mxu0 0.0
      %8312 = vmatpush1.msra.mxu0 0.0
      %8313 = vmatprep.subr.mxu0 0.0
      %8314 = vmatpush1.msra.mxu0 0.0
      %8315 = vmatprep.mubr.f32.mxu0 0.0
      %8316 = vmatmul.mubr.f32.gmra.mrb[0].mxu0 %v8243
      %v8317 = vpop.f32.mrb[0].mxu0
      %v8318 = vadd.f32 0.0, %v8317
      %v8319 = vpop.f32.mrb[0].mxu0
      %v8320 = vadd.f32 0.0, %v8319
      %8321 = vdwg.mxu0
      %8322 = vmatprep.subr.mxu0 0.0
      %8323 = vmatpush1.msra.mxu0 %v8249
      %8324 = vmatprep.subr.mxu0 0.0
      %8325 = vmatpush1.msra.mxu0 0.0
      %8326 = vmatprep.subr.mxu0 0.0
      %8327 = vmatpush1.msra.mxu0 0.0
      %8328 = vmatprep.subr.mxu0 0.0
      %8329 = vmatpush1.msra.mxu0 0.0
      %8330 = vmatprep.subr.mxu0 0.0
      %8331 = vmatpush1.msra.mxu0 0.0
      %8332 = vmatprep.subr.mxu0 0.0
      %8333 = vmatpush1.msra.mxu0 0.0
      %8334 = vmatprep.subr.mxu0 0.0
      %8335 = vmatpush1.msra.mxu0 0.0
      %8336 = vmatprep.subr.mxu0 0.0
      %8337 = vmatpush1.msra.mxu0 0.0
      %8338 = vmatprep.subr.mxu0 0.0
      %8339 = vmatpush1.msra.mxu0 0.0
      %8340 = vmatprep.subr.mxu0 0.0
      %8341 = vmatpush1.msra.mxu0 0.0
      %8342 = vmatprep.subr.mxu0 0.0
      %8343 = vmatpush1.msra.mxu0 0.0
      %8344 = vmatprep.subr.mxu0 0.0
      %8345 = vmatpush1.msra.mxu0 0.0
      %8346 = vmatprep.subr.mxu0 0.0
      %8347 = vmatpush1.msra.mxu0 0.0
      %8348 = vmatprep.subr.mxu0 0.0
      %8349 = vmatpush1.msra.mxu0 0.0
      %8350 = vmatprep.subr.mxu0 0.0
      %8351 = vmatpush1.msra.mxu0 0.0
      %8352 = vmatprep.subr.mxu0 0.0
      %8353 = vmatpush1.msra.mxu0 0.0
      %8354 = vmatprep.subr.mxu0 0.0
      %8355 = vmatpush1.msra.mxu0 0.0
      %8356 = vmatprep.subr.mxu0 0.0
      %8357 = vmatpush1.msra.mxu0 0.0
      %8358 = vmatprep.subr.mxu0 0.0
      %8359 = vmatpush1.msra.mxu0 0.0
      %8360 = vmatprep.subr.mxu0 0.0
      %8361 = vmatpush1.msra.mxu0 0.0
      %8362 = vmatprep.subr.mxu0 0.0
      %8363 = vmatpush1.msra.mxu0 0.0
      %8364 = vmatprep.subr.mxu0 0.0
      %8365 = vmatpush1.msra.mxu0 0.0
      %8366 = vmatprep.subr.mxu0 0.0
      %8367 = vmatpush1.msra.mxu0 0.0
      %8368 = vmatprep.subr.mxu0 0.0
      %8369 = vmatpush1.msra.mxu0 0.0
      %8370 = vmatprep.subr.mxu0 0.0
      %8371 = vmatpush1.msra.mxu0 0.0
      %8372 = vmatprep.subr.mxu0 0.0
      %8373 = vmatpush1.msra.mxu0 0.0
      %8374 = vmatprep.subr.mxu0 0.0
      %8375 = vmatpush1.msra.mxu0 0.0
      %8376 = vmatprep.subr.mxu0 0.0
      %8377 = vmatpush1.msra.mxu0 0.0
      %8378 = vmatprep.subr.mxu0 0.0
      %8379 = vmatpush1.msra.mxu0 0.0
      %8380 = vmatprep.subr.mxu0 0.0
      %8381 = vmatpush1.msra.mxu0 0.0
      %8382 = vmatprep.subr.mxu0 0.0
      %8383 = vmatpush1.msra.mxu0 0.0
      %8384 = vmatprep.subr.mxu0 0.0
      %8385 = vmatpush1.msra.mxu0 0.0
      %8386 = vmatprep.mubr.f32.mxu0 0.0
      %8387 = vmatmul.mubr.f32.gmra.mrb[0].mxu0 %v8243
      %v8388 = vpop.f32.mrb[0].mxu0
      %v8389 = vadd.f32 0.0, %v8388
      %v8390 = vpop.f32.mrb[0].mxu0
      %8391 = vdwg.mxu0
      %v8392 = vadd.f32 %v8226, %v8318
      %v8393 = vadd.f32 %v8227, %v8320
      %v8394 = vadd.f32 %v8228, %v8389
      %s8395 = scalar_lea.vmem %s12, 64
      %v8396 = vld [vmem:[%s8395] sm:$0xff]
      %8397 = vrot.lane.b32.xlu0 %v7064, 36
      %v8398 = vpop.permute.xlu0 %8397
      %8399 = vrot.lane.b32.xlu0 %v7065, 36
      %v8400 = vpop.permute.xlu0 %8399
      %8401 = vrot.lane.b32.xlu0 %v7066, 36
      %v8402 = vpop.permute.xlu0 %8401
      %8403 = vrot.lane.b32.xlu0 %v7067, 36
      %v8404 = vpop.permute.xlu0 %8403
      %v8405 = vsel %vm2222, %v8398, %v8400
      %v8406 = vsel %vm2222, %v8400, %v8402
      %v8407 = vsel %vm2222, %v8402, %v8404
      %v8409 = vsel %vm7086, %v8396, 0
      %v8411 = vsel %vm7090, %v8405, 0
      %v8413 = vsel %vm7090, %v8406, 0
      %v8415 = vsel %vm7090, %v8407, 0
      %8417 = vmatprep.subr.mxu0 %v8413
      %8418 = vmatpush1.msra.mxu0 %v8411
      %8419 = vmatprep.subr.mxu0 0.0
      %8420 = vmatpush1.msra.mxu0 0.0
      %8421 = vmatprep.subr.mxu0 0.0
      %8422 = vmatpush1.msra.mxu0 0.0
      %8423 = vmatprep.subr.mxu0 0.0
      %8424 = vmatpush1.msra.mxu0 0.0
      %8425 = vmatprep.subr.mxu0 0.0
      %8426 = vmatpush1.msra.mxu0 0.0
      %8427 = vmatprep.subr.mxu0 0.0
      %8428 = vmatpush1.msra.mxu0 0.0
      %8429 = vmatprep.subr.mxu0 0.0
      %8430 = vmatpush1.msra.mxu0 0.0
      %8431 = vmatprep.subr.mxu0 0.0
      %8432 = vmatpush1.msra.mxu0 0.0
      %8433 = vmatprep.subr.mxu0 0.0
      %8434 = vmatpush1.msra.mxu0 0.0
      %8435 = vmatprep.subr.mxu0 0.0
      %8436 = vmatpush1.msra.mxu0 0.0
      %8437 = vmatprep.subr.mxu0 0.0
      %8438 = vmatpush1.msra.mxu0 0.0
      %8439 = vmatprep.subr.mxu0 0.0
      %8440 = vmatpush1.msra.mxu0 0.0
      %8441 = vmatprep.subr.mxu0 0.0
      %8442 = vmatpush1.msra.mxu0 0.0
      %8443 = vmatprep.subr.mxu0 0.0
      %8444 = vmatpush1.msra.mxu0 0.0
      %8445 = vmatprep.subr.mxu0 0.0
      %8446 = vmatpush1.msra.mxu0 0.0
      %8447 = vmatprep.subr.mxu0 0.0
      %8448 = vmatpush1.msra.mxu0 0.0
      %8449 = vmatprep.subr.mxu0 0.0
      %8450 = vmatpush1.msra.mxu0 0.0
      %8451 = vmatprep.subr.mxu0 0.0
      %8452 = vmatpush1.msra.mxu0 0.0
      %8453 = vmatprep.subr.mxu0 0.0
      %8454 = vmatpush1.msra.mxu0 0.0
      %8455 = vmatprep.subr.mxu0 0.0
      %8456 = vmatpush1.msra.mxu0 0.0
      %8457 = vmatprep.subr.mxu0 0.0
      %8458 = vmatpush1.msra.mxu0 0.0
      %8459 = vmatprep.subr.mxu0 0.0
      %8460 = vmatpush1.msra.mxu0 0.0
      %8461 = vmatprep.subr.mxu0 0.0
      %8462 = vmatpush1.msra.mxu0 0.0
      %8463 = vmatprep.subr.mxu0 0.0
      %8464 = vmatpush1.msra.mxu0 0.0
      %8465 = vmatprep.subr.mxu0 0.0
      %8466 = vmatpush1.msra.mxu0 0.0
      %8467 = vmatprep.subr.mxu0 0.0
      %8468 = vmatpush1.msra.mxu0 0.0
      %8469 = vmatprep.subr.mxu0 0.0
      %8470 = vmatpush1.msra.mxu0 0.0
      %8471 = vmatprep.subr.mxu0 0.0
      %8472 = vmatpush1.msra.mxu0 0.0
      %8473 = vmatprep.subr.mxu0 0.0
      %8474 = vmatpush1.msra.mxu0 0.0
      %8475 = vmatprep.subr.mxu0 0.0
      %8476 = vmatpush1.msra.mxu0 0.0
      %8477 = vmatprep.subr.mxu0 0.0
      %8478 = vmatpush1.msra.mxu0 0.0
      %8479 = vmatprep.subr.mxu0 0.0
      %8480 = vmatpush1.msra.mxu0 0.0
      %8481 = vmatprep.mubr.f32.mxu0 0.0
      %8482 = vmatmul.mubr.f32.gmra.mrb[0].mxu0 %v8409
      %v8483 = vpop.f32.mrb[0].mxu0
      %v8484 = vadd.f32 0.0, %v8483
      %v8485 = vpop.f32.mrb[0].mxu0
      %v8486 = vadd.f32 0.0, %v8485
      %8487 = vdwg.mxu0
      %8488 = vmatprep.subr.mxu0 0.0
      %8489 = vmatpush1.msra.mxu0 %v8415
      %8490 = vmatprep.subr.mxu0 0.0
      %8491 = vmatpush1.msra.mxu0 0.0
      %8492 = vmatprep.subr.mxu0 0.0
      %8493 = vmatpush1.msra.mxu0 0.0
      %8494 = vmatprep.subr.mxu0 0.0
      %8495 = vmatpush1.msra.mxu0 0.0
      %8496 = vmatprep.subr.mxu0 0.0
      %8497 = vmatpush1.msra.mxu0 0.0
      %8498 = vmatprep.subr.mxu0 0.0
      %8499 = vmatpush1.msra.mxu0 0.0
      %8500 = vmatprep.subr.mxu0 0.0
      %8501 = vmatpush1.msra.mxu0 0.0
      %8502 = vmatprep.subr.mxu0 0.0
      %8503 = vmatpush1.msra.mxu0 0.0
      %8504 = vmatprep.subr.mxu0 0.0
      %8505 = vmatpush1.msra.mxu0 0.0
      %8506 = vmatprep.subr.mxu0 0.0
      %8507 = vmatpush1.msra.mxu0 0.0
      %8508 = vmatprep.subr.mxu0 0.0
      %8509 = vmatpush1.msra.mxu0 0.0
      %8510 = vmatprep.subr.mxu0 0.0
      %8511 = vmatpush1.msra.mxu0 0.0
      %8512 = vmatprep.subr.mxu0 0.0
      %8513 = vmatpush1.msra.mxu0 0.0
      %8514 = vmatprep.subr.mxu0 0.0
      %8515 = vmatpush1.msra.mxu0 0.0
      %8516 = vmatprep.subr.mxu0 0.0
      %8517 = vmatpush1.msra.mxu0 0.0
      %8518 = vmatprep.subr.mxu0 0.0
      %8519 = vmatpush1.msra.mxu0 0.0
      %8520 = vmatprep.subr.mxu0 0.0
      %8521 = vmatpush1.msra.mxu0 0.0
      %8522 = vmatprep.subr.mxu0 0.0
      %8523 = vmatpush1.msra.mxu0 0.0
      %8524 = vmatprep.subr.mxu0 0.0
      %8525 = vmatpush1.msra.mxu0 0.0
      %8526 = vmatprep.subr.mxu0 0.0
      %8527 = vmatpush1.msra.mxu0 0.0
      %8528 = vmatprep.subr.mxu0 0.0
      %8529 = vmatpush1.msra.mxu0 0.0
      %8530 = vmatprep.subr.mxu0 0.0
      %8531 = vmatpush1.msra.mxu0 0.0
      %8532 = vmatprep.subr.mxu0 0.0
      %8533 = vmatpush1.msra.mxu0 0.0
      %8534 = vmatprep.subr.mxu0 0.0
      %8535 = vmatpush1.msra.mxu0 0.0
      %8536 = vmatprep.subr.mxu0 0.0
      %8537 = vmatpush1.msra.mxu0 0.0
      %8538 = vmatprep.subr.mxu0 0.0
      %8539 = vmatpush1.msra.mxu0 0.0
      %8540 = vmatprep.subr.mxu0 0.0
      %8541 = vmatpush1.msra.mxu0 0.0
      %8542 = vmatprep.subr.mxu0 0.0
      %8543 = vmatpush1.msra.mxu0 0.0
      %8544 = vmatprep.subr.mxu0 0.0
      %8545 = vmatpush1.msra.mxu0 0.0
      %8546 = vmatprep.subr.mxu0 0.0
      %8547 = vmatpush1.msra.mxu0 0.0
      %8548 = vmatprep.subr.mxu0 0.0
      %8549 = vmatpush1.msra.mxu0 0.0
      %8550 = vmatprep.subr.mxu0 0.0
      %8551 = vmatpush1.msra.mxu0 0.0
      %8552 = vmatprep.mubr.f32.mxu0 0.0
      %8553 = vmatmul.mubr.f32.gmra.mrb[0].mxu0 %v8409
      %v8554 = vpop.f32.mrb[0].mxu0
      %v8555 = vadd.f32 0.0, %v8554
      %v8556 = vpop.f32.mrb[0].mxu0
      %8557 = vdwg.mxu0
      %v8558 = vadd.f32 %v8392, %v8484
      %v8559 = vadd.f32 %v8393, %v8486
      %v8560 = vadd.f32 %v8394, %v8555
      %v8561 = vld [vmem:[%s13] sm:$0xff]
      %8563 = vset.pattern.permute.xlu0 0
      %8564 = vperm.xlu0 %8563, %v8561
      %v8565 = vpop.permute.xlu0 %8564
      %v8567 = vadd.f32 %v8558, %v8565
      %v8568 = vadd.f32 %v8559, %v8565
      %v8569 = vadd.f32 %v8560, %v8565
      %v8570 = vmax.f32 %v8567, 0.0
      %v8571 = vmax.f32 %v8568, 0.0
      %v8572 = vmax.f32 %v8569, 0.0
      %8573 = vst [vmem:[#allocation7] sm:$0xff] 0.0
      %8574 = vst [vmem:[#allocation7 + $0x8] sm:$0xff] 0.0
      %8575 = vst [vmem:[#allocation7 + $0x10] sm:$0xff] 0.0
      %8576 = vst.msk [vmem:[#allocation7 + $0x18] sm:$0xff] %vm856, 0.0
      %v8577 = vsel %vm871, %v8570, 0.0
      %v8578 = vsel %vm872, %v8571, 0.0
      %v8579 = vsel %vm873, %v8572, 0.0
      %8583 = vrot.lane.b32.xlu0 %v8577, 69
      %v8584 = vpop.permute.xlu0 %8583
      %8585 = vrot.lane.b32.xlu0 %v8578, 69
      %v8586 = vpop.permute.xlu0 %8585
      %8587 = vrot.lane.b32.xlu0 %v8579, 69
      %v8588 = vpop.permute.xlu0 %8587
      %v8589 = vsel %vm886, %v8584, %v8586
      %v8590 = vsel %vm886, %v8586, %v8588
      %8595 = vst.msk [vmem:[#allocation7] sm:$0xff] %vm893, %v8584
      %8596 = vst [vmem:[#allocation7 + $0x8] sm:$0xff] %v8589
      %8597 = vst [vmem:[#allocation7 + $0x10] sm:$0xff] %v8590
      %8598 = vst.msk [vmem:[#allocation7 + $0x18] sm:$0xff] %vm897, %v8588
      %v8599 = vld [vmem:[#allocation7] sm:$0xff]
      %v8600 = vld [vmem:[#allocation7 + $0x8] sm:$0xff]
      %v8601 = vld [vmem:[#allocation7 + $0x10] sm:$0xff]
      %v8602 = vld [vmem:[%s14] sm:$0xff]
      %s8603 = scalar_lea.vmem %s14, 8
      %v8604 = vld [vmem:[%s8603] sm:$0xff]
      %8608 = vrot.lane.b32.xlu0 %v8599, 125
      %v8609 = vpop.permute.xlu0 %8608
      %8610 = vrot.lane.b32.xlu0 %v8600, 125
      %v8611 = vpop.permute.xlu0 %8610
      %8612 = vrot.lane.b32.xlu0 %v8601, 125
      %v8613 = vpop.permute.xlu0 %8612
      %vm8614 = vcmask 1022976
      %v8615 = vsel %vm8614, %v8609, %v8611
      %v8616 = vsel %vm8614, %v8611, %v8613
      %v8621 = vsel %vm925, %v8604, 0
      %8623 = vmatprep.subr.mxu0 %v8616
      %8624 = vmatpush1.msra.mxu0 %v8615
      %8625 = vmatprep.subr.mxu0 0.0
      %8626 = vmatpush1.msra.mxu0 0.0
      %8627 = vmatprep.subr.mxu0 0.0
      %8628 = vmatpush1.msra.mxu0 0.0
      %8629 = vmatprep.subr.mxu0 0.0
      %8630 = vmatpush1.msra.mxu0 0.0
      %8631 = vmatprep.subr.mxu0 0.0
      %8632 = vmatpush1.msra.mxu0 0.0
      %8633 = vmatprep.subr.mxu0 0.0
      %8634 = vmatpush1.msra.mxu0 0.0
      %8635 = vmatprep.subr.mxu0 0.0
      %8636 = vmatpush1.msra.mxu0 0.0
      %8637 = vmatprep.subr.mxu0 0.0
      %8638 = vmatpush1.msra.mxu0 0.0
      %8639 = vmatprep.subr.mxu0 0.0
      %8640 = vmatpush1.msra.mxu0 0.0
      %8641 = vmatprep.subr.mxu0 0.0
      %8642 = vmatpush1.msra.mxu0 0.0
      %8643 = vmatprep.subr.mxu0 0.0
      %8644 = vmatpush1.msra.mxu0 0.0
      %8645 = vmatprep.subr.mxu0 0.0
      %8646 = vmatpush1.msra.mxu0 0.0
      %8647 = vmatprep.subr.mxu0 0.0
      %8648 = vmatpush1.msra.mxu0 0.0
      %8649 = vmatprep.subr.mxu0 0.0
      %8650 = vmatpush1.msra.mxu0 0.0
      %8651 = vmatprep.subr.mxu0 0.0
      %8652 = vmatpush1.msra.mxu0 0.0
      %8653 = vmatprep.subr.mxu0 0.0
      %8654 = vmatpush1.msra.mxu0 0.0
      %8655 = vmatprep.subr.mxu0 0.0
      %8656 = vmatpush1.msra.mxu0 0.0
      %8657 = vmatprep.subr.mxu0 0.0
      %8658 = vmatpush1.msra.mxu0 0.0
      %8659 = vmatprep.subr.mxu0 0.0
      %8660 = vmatpush1.msra.mxu0 0.0
      %8661 = vmatprep.subr.mxu0 0.0
      %8662 = vmatpush1.msra.mxu0 0.0
      %8663 = vmatprep.subr.mxu0 0.0
      %8664 = vmatpush1.msra.mxu0 0.0
      %8665 = vmatprep.subr.mxu0 0.0
      %8666 = vmatpush1.msra.mxu0 0.0
      %8667 = vmatprep.subr.mxu0 0.0
      %8668 = vmatpush1.msra.mxu0 0.0
      %8669 = vmatprep.subr.mxu0 0.0
      %8670 = vmatpush1.msra.mxu0 0.0
      %8671 = vmatprep.subr.mxu0 0.0
      %8672 = vmatpush1.msra.mxu0 0.0
      %8673 = vmatprep.subr.mxu0 0.0
      %8674 = vmatpush1.msra.mxu0 0.0
      %8675 = vmatprep.subr.mxu0 0.0
      %8676 = vmatpush1.msra.mxu0 0.0
      %8677 = vmatprep.subr.mxu0 0.0
      %8678 = vmatpush1.msra.mxu0 0.0
      %8679 = vmatprep.subr.mxu0 0.0
      %8680 = vmatpush1.msra.mxu0 0.0
      %8681 = vmatprep.subr.mxu0 0.0
      %8682 = vmatpush1.msra.mxu0 0.0
      %8683 = vmatprep.subr.mxu0 0.0
      %8684 = vmatpush1.msra.mxu0 0.0
      %8685 = vmatprep.subr.mxu0 0.0
      %8686 = vmatpush1.msra.mxu0 0.0
      %8687 = vmatprep.mubr.f32.mxu0 0.0
      %8688 = vmatmul.mubr.f32.gmra.mrb[0].mxu0 %v8621
      %v8689 = vpop.f32.mrb[0].mxu0
      %v8690 = vadd.f32 0.0, %v8689
      %v8691 = vpop.f32.mrb[0].mxu0
      %v8692 = vadd.f32 0.0, %v8691
      %8693 = vdwg.mxu0
      %8694 = vmatprep.subr.mxu0 0.0
      %8695 = vmatpush1.msra.mxu0 %v8613
      %8696 = vmatprep.subr.mxu0 0.0
      %8697 = vmatpush1.msra.mxu0 0.0
      %8698 = vmatprep.subr.mxu0 0.0
      %8699 = vmatpush1.msra.mxu0 0.0
      %8700 = vmatprep.subr.mxu0 0.0
      %8701 = vmatpush1.msra.mxu0 0.0
      %8702 = vmatprep.subr.mxu0 0.0
      %8703 = vmatpush1.msra.mxu0 0.0
      %8704 = vmatprep.subr.mxu0 0.0
      %8705 = vmatpush1.msra.mxu0 0.0
      %8706 = vmatprep.subr.mxu0 0.0
      %8707 = vmatpush1.msra.mxu0 0.0
      %8708 = vmatprep.subr.mxu0 0.0
      %8709 = vmatpush1.msra.mxu0 0.0
      %8710 = vmatprep.subr.mxu0 0.0
      %8711 = vmatpush1.msra.mxu0 0.0
      %8712 = vmatprep.subr.mxu0 0.0
      %8713 = vmatpush1.msra.mxu0 0.0
      %8714 = vmatprep.subr.mxu0 0.0
      %8715 = vmatpush1.msra.mxu0 0.0
      %8716 = vmatprep.subr.mxu0 0.0
      %8717 = vmatpush1.msra.mxu0 0.0
      %8718 = vmatprep.subr.mxu0 0.0
      %8719 = vmatpush1.msra.mxu0 0.0
      %8720 = vmatprep.subr.mxu0 0.0
      %8721 = vmatpush1.msra.mxu0 0.0
      %8722 = vmatprep.subr.mxu0 0.0
      %8723 = vmatpush1.msra.mxu0 0.0
      %8724 = vmatprep.subr.mxu0 0.0
      %8725 = vmatpush1.msra.mxu0 0.0
      %8726 = vmatprep.subr.mxu0 0.0
      %8727 = vmatpush1.msra.mxu0 0.0
      %8728 = vmatprep.subr.mxu0 0.0
      %8729 = vmatpush1.msra.mxu0 0.0
      %8730 = vmatprep.subr.mxu0 0.0
      %8731 = vmatpush1.msra.mxu0 0.0
      %8732 = vmatprep.subr.mxu0 0.0
      %8733 = vmatpush1.msra.mxu0 0.0
      %8734 = vmatprep.subr.mxu0 0.0
      %8735 = vmatpush1.msra.mxu0 0.0
      %8736 = vmatprep.subr.mxu0 0.0
      %8737 = vmatpush1.msra.mxu0 0.0
      %8738 = vmatprep.subr.mxu0 0.0
      %8739 = vmatpush1.msra.mxu0 0.0
      %8740 = vmatprep.subr.mxu0 0.0
      %8741 = vmatpush1.msra.mxu0 0.0
      %8742 = vmatprep.subr.mxu0 0.0
      %8743 = vmatpush1.msra.mxu0 0.0
      %8744 = vmatprep.subr.mxu0 0.0
      %8745 = vmatpush1.msra.mxu0 0.0
      %8746 = vmatprep.subr.mxu0 0.0
      %8747 = vmatpush1.msra.mxu0 0.0
      %8748 = vmatprep.subr.mxu0 0.0
      %8749 = vmatpush1.msra.mxu0 0.0
      %8750 = vmatprep.subr.mxu0 0.0
      %8751 = vmatpush1.msra.mxu0 0.0
      %8752 = vmatprep.subr.mxu0 0.0
      %8753 = vmatpush1.msra.mxu0 0.0
      %8754 = vmatprep.subr.mxu0 0.0
      %8755 = vmatpush1.msra.mxu0 0.0
      %8756 = vmatprep.subr.mxu0 0.0
      %8757 = vmatpush1.msra.mxu0 0.0
      %8758 = vmatprep.mubr.f32.mxu0 0.0
      %8759 = vmatmul.mubr.f32.gmra.mrb[0].mxu0 %v8621
      %v8760 = vpop.f32.mrb[0].mxu0
      %v8761 = vadd.f32 0.0, %v8760
      %v8762 = vpop.f32.mrb[0].mxu0
      %8763 = vdwg.mxu0
      %v8765 = vsel %vm925, %v8602, 0
      %8767 = vmatprep.subr.mxu0 %v8600
      %8768 = vmatpush1.msra.mxu0 %v8599
      %8769 = vmatprep.subr.mxu0 0.0
      %8770 = vmatpush1.msra.mxu0 0.0
      %8771 = vmatprep.subr.mxu0 0.0
      %8772 = vmatpush1.msra.mxu0 0.0
      %8773 = vmatprep.subr.mxu0 0.0
      %8774 = vmatpush1.msra.mxu0 0.0
      %8775 = vmatprep.subr.mxu0 0.0
      %8776 = vmatpush1.msra.mxu0 0.0
      %8777 = vmatprep.subr.mxu0 0.0
      %8778 = vmatpush1.msra.mxu0 0.0
      %8779 = vmatprep.subr.mxu0 0.0
      %8780 = vmatpush1.msra.mxu0 0.0
      %8781 = vmatprep.subr.mxu0 0.0
      %8782 = vmatpush1.msra.mxu0 0.0
      %8783 = vmatprep.subr.mxu0 0.0
      %8784 = vmatpush1.msra.mxu0 0.0
      %8785 = vmatprep.subr.mxu0 0.0
      %8786 = vmatpush1.msra.mxu0 0.0
      %8787 = vmatprep.subr.mxu0 0.0
      %8788 = vmatpush1.msra.mxu0 0.0
      %8789 = vmatprep.subr.mxu0 0.0
      %8790 = vmatpush1.msra.mxu0 0.0
      %8791 = vmatprep.subr.mxu0 0.0
      %8792 = vmatpush1.msra.mxu0 0.0
      %8793 = vmatprep.subr.mxu0 0.0
      %8794 = vmatpush1.msra.mxu0 0.0
      %8795 = vmatprep.subr.mxu0 0.0
      %8796 = vmatpush1.msra.mxu0 0.0
      %8797 = vmatprep.subr.mxu0 0.0
      %8798 = vmatpush1.msra.mxu0 0.0
      %8799 = vmatprep.subr.mxu0 0.0
      %8800 = vmatpush1.msra.mxu0 0.0
      %8801 = vmatprep.subr.mxu0 0.0
      %8802 = vmatpush1.msra.mxu0 0.0
      %8803 = vmatprep.subr.mxu0 0.0
      %8804 = vmatpush1.msra.mxu0 0.0
      %8805 = vmatprep.subr.mxu0 0.0
      %8806 = vmatpush1.msra.mxu0 0.0
      %8807 = vmatprep.subr.mxu0 0.0
      %8808 = vmatpush1.msra.mxu0 0.0
      %8809 = vmatprep.subr.mxu0 0.0
      %8810 = vmatpush1.msra.mxu0 0.0
      %8811 = vmatprep.subr.mxu0 0.0
      %8812 = vmatpush1.msra.mxu0 0.0
      %8813 = vmatprep.subr.mxu0 0.0
      %8814 = vmatpush1.msra.mxu0 0.0
      %8815 = vmatprep.subr.mxu0 0.0
      %8816 = vmatpush1.msra.mxu0 0.0
      %8817 = vmatprep.subr.mxu0 0.0
      %8818 = vmatpush1.msra.mxu0 0.0
      %8819 = vmatprep.subr.mxu0 0.0
      %8820 = vmatpush1.msra.mxu0 0.0
      %8821 = vmatprep.subr.mxu0 0.0
      %8822 = vmatpush1.msra.mxu0 0.0
      %8823 = vmatprep.subr.mxu0 0.0
      %8824 = vmatpush1.msra.mxu0 0.0
      %8825 = vmatprep.subr.mxu0 0.0
      %8826 = vmatpush1.msra.mxu0 0.0
      %8827 = vmatprep.subr.mxu0 0.0
      %8828 = vmatpush1.msra.mxu0 0.0
      %8829 = vmatprep.subr.mxu0 0.0
      %8830 = vmatpush1.msra.mxu0 0.0
      %8831 = vmatprep.mubr.f32.mxu0 0.0
      %8832 = vmatmul.mubr.f32.gmra.mrb[0].mxu0 %v8765
      %v8833 = vpop.f32.mrb[0].mxu0
      %v8834 = vadd.f32 %v8690, %v8833
      %v8835 = vpop.f32.mrb[0].mxu0
      %v8836 = vadd.f32 %v8692, %v8835
      %8837 = vdwg.mxu0
      %8838 = vmatprep.subr.mxu0 0.0
      %8839 = vmatpush1.msra.mxu0 %v8601
      %8840 = vmatprep.subr.mxu0 0.0
      %8841 = vmatpush1.msra.mxu0 0.0
      %8842 = vmatprep.subr.mxu0 0.0
      %8843 = vmatpush1.msra.mxu0 0.0
      %8844 = vmatprep.subr.mxu0 0.0
      %8845 = vmatpush1.msra.mxu0 0.0
      %8846 = vmatprep.subr.mxu0 0.0
      %8847 = vmatpush1.msra.mxu0 0.0
      %8848 = vmatprep.subr.mxu0 0.0
      %8849 = vmatpush1.msra.mxu0 0.0
      %8850 = vmatprep.subr.mxu0 0.0
      %8851 = vmatpush1.msra.mxu0 0.0
      %8852 = vmatprep.subr.mxu0 0.0
      %8853 = vmatpush1.msra.mxu0 0.0
      %8854 = vmatprep.subr.mxu0 0.0
      %8855 = vmatpush1.msra.mxu0 0.0
      %8856 = vmatprep.subr.mxu0 0.0
      %8857 = vmatpush1.msra.mxu0 0.0
      %8858 = vmatprep.subr.mxu0 0.0
      %8859 = vmatpush1.msra.mxu0 0.0
      %8860 = vmatprep.subr.mxu0 0.0
      %8861 = vmatpush1.msra.mxu0 0.0
      %8862 = vmatprep.subr.mxu0 0.0
      %8863 = vmatpush1.msra.mxu0 0.0
      %8864 = vmatprep.subr.mxu0 0.0
      %8865 = vmatpush1.msra.mxu0 0.0
      %8866 = vmatprep.subr.mxu0 0.0
      %8867 = vmatpush1.msra.mxu0 0.0
      %8868 = vmatprep.subr.mxu0 0.0
      %8869 = vmatpush1.msra.mxu0 0.0
      %8870 = vmatprep.subr.mxu0 0.0
      %8871 = vmatpush1.msra.mxu0 0.0
      %8872 = vmatprep.subr.mxu0 0.0
      %8873 = vmatpush1.msra.mxu0 0.0
      %8874 = vmatprep.subr.mxu0 0.0
      %8875 = vmatpush1.msra.mxu0 0.0
      %8876 = vmatprep.subr.mxu0 0.0
      %8877 = vmatpush1.msra.mxu0 0.0
      %8878 = vmatprep.subr.mxu0 0.0
      %8879 = vmatpush1.msra.mxu0 0.0
      %8880 = vmatprep.subr.mxu0 0.0
      %8881 = vmatpush1.msra.mxu0 0.0
      %8882 = vmatprep.subr.mxu0 0.0
      %8883 = vmatpush1.msra.mxu0 0.0
      %8884 = vmatprep.subr.mxu0 0.0
      %8885 = vmatpush1.msra.mxu0 0.0
      %8886 = vmatprep.subr.mxu0 0.0
      %8887 = vmatpush1.msra.mxu0 0.0
      %8888 = vmatprep.subr.mxu0 0.0
      %8889 = vmatpush1.msra.mxu0 0.0
      %8890 = vmatprep.subr.mxu0 0.0
      %8891 = vmatpush1.msra.mxu0 0.0
      %8892 = vmatprep.subr.mxu0 0.0
      %8893 = vmatpush1.msra.mxu0 0.0
      %8894 = vmatprep.subr.mxu0 0.0
      %8895 = vmatpush1.msra.mxu0 0.0
      %8896 = vmatprep.subr.mxu0 0.0
      %8897 = vmatpush1.msra.mxu0 0.0
      %8898 = vmatprep.subr.mxu0 0.0
      %8899 = vmatpush1.msra.mxu0 0.0
      %8900 = vmatprep.subr.mxu0 0.0
      %8901 = vmatpush1.msra.mxu0 0.0
      %8902 = vmatprep.mubr.f32.mxu0 0.0
      %8903 = vmatmul.mubr.f32.gmra.mrb[0].mxu0 %v8765
      %v8904 = vpop.f32.mrb[0].mxu0
      %v8905 = vadd.f32 %v8761, %v8904
      %v8906 = vpop.f32.mrb[0].mxu0
      %8907 = vdwg.mxu0
      %s8908 = scalar_lea.vmem %s14, 16
      %v8909 = vld [vmem:[%s8908] sm:$0xff]
      %8910 = vrot.lane.b32.xlu0 %v8599, 122
      %v8911 = vpop.permute.xlu0 %8910
      %8912 = vrot.lane.b32.xlu0 %v8600, 122
      %v8913 = vpop.permute.xlu0 %8912
      %8914 = vrot.lane.b32.xlu0 %v8601, 122
      %v8915 = vpop.permute.xlu0 %8914
      %v8916 = vsel %vm856, %v8911, %v8913
      %v8917 = vsel %vm856, %v8913, %v8915
      %v8922 = vsel %vm925, %v8909, 0
      %8924 = vmatprep.subr.mxu0 %v8917
      %8925 = vmatpush1.msra.mxu0 %v8916
      %8926 = vmatprep.subr.mxu0 0.0
      %8927 = vmatpush1.msra.mxu0 0.0
      %8928 = vmatprep.subr.mxu0 0.0
      %8929 = vmatpush1.msra.mxu0 0.0
      %8930 = vmatprep.subr.mxu0 0.0
      %8931 = vmatpush1.msra.mxu0 0.0
      %8932 = vmatprep.subr.mxu0 0.0
      %8933 = vmatpush1.msra.mxu0 0.0
      %8934 = vmatprep.subr.mxu0 0.0
      %8935 = vmatpush1.msra.mxu0 0.0
      %8936 = vmatprep.subr.mxu0 0.0
      %8937 = vmatpush1.msra.mxu0 0.0
      %8938 = vmatprep.subr.mxu0 0.0
      %8939 = vmatpush1.msra.mxu0 0.0
      %8940 = vmatprep.subr.mxu0 0.0
      %8941 = vmatpush1.msra.mxu0 0.0
      %8942 = vmatprep.subr.mxu0 0.0
      %8943 = vmatpush1.msra.mxu0 0.0
      %8944 = vmatprep.subr.mxu0 0.0
      %8945 = vmatpush1.msra.mxu0 0.0
      %8946 = vmatprep.subr.mxu0 0.0
      %8947 = vmatpush1.msra.mxu0 0.0
      %8948 = vmatprep.subr.mxu0 0.0
      %8949 = vmatpush1.msra.mxu0 0.0
      %8950 = vmatprep.subr.mxu0 0.0
      %8951 = vmatpush1.msra.mxu0 0.0
      %8952 = vmatprep.subr.mxu0 0.0
      %8953 = vmatpush1.msra.mxu0 0.0
      %8954 = vmatprep.subr.mxu0 0.0
      %8955 = vmatpush1.msra.mxu0 0.0
      %8956 = vmatprep.subr.mxu0 0.0
      %8957 = vmatpush1.msra.mxu0 0.0
      %8958 = vmatprep.subr.mxu0 0.0
      %8959 = vmatpush1.msra.mxu0 0.0
      %8960 = vmatprep.subr.mxu0 0.0
      %8961 = vmatpush1.msra.mxu0 0.0
      %8962 = vmatprep.subr.mxu0 0.0
      %8963 = vmatpush1.msra.mxu0 0.0
      %8964 = vmatprep.subr.mxu0 0.0
      %8965 = vmatpush1.msra.mxu0 0.0
      %8966 = vmatprep.subr.mxu0 0.0
      %8967 = vmatpush1.msra.mxu0 0.0
      %8968 = vmatprep.subr.mxu0 0.0
      %8969 = vmatpush1.msra.mxu0 0.0
      %8970 = vmatprep.subr.mxu0 0.0
      %8971 = vmatpush1.msra.mxu0 0.0
      %8972 = vmatprep.subr.mxu0 0.0
      %8973 = vmatpush1.msra.mxu0 0.0
      %8974 = vmatprep.subr.mxu0 0.0
      %8975 = vmatpush1.msra.mxu0 0.0
      %8976 = vmatprep.subr.mxu0 0.0
      %8977 = vmatpush1.msra.mxu0 0.0
      %8978 = vmatprep.subr.mxu0 0.0
      %8979 = vmatpush1.msra.mxu0 0.0
      %8980 = vmatprep.subr.mxu0 0.0
      %8981 = vmatpush1.msra.mxu0 0.0
      %8982 = vmatprep.subr.mxu0 0.0
      %8983 = vmatpush1.msra.mxu0 0.0
      %8984 = vmatprep.subr.mxu0 0.0
      %8985 = vmatpush1.msra.mxu0 0.0
      %8986 = vmatprep.subr.mxu0 0.0
      %8987 = vmatpush1.msra.mxu0 0.0
      %8988 = vmatprep.mubr.f32.mxu0 0.0
      %8989 = vmatmul.mubr.f32.gmra.mrb[0].mxu0 %v8922
      %v8990 = vpop.f32.mrb[0].mxu0
      %v8991 = vadd.f32 0.0, %v8990
      %v8992 = vpop.f32.mrb[0].mxu0
      %v8993 = vadd.f32 0.0, %v8992
      %8994 = vdwg.mxu0
      %8995 = vmatprep.subr.mxu0 0.0
      %8996 = vmatpush1.msra.mxu0 %v8915
      %8997 = vmatprep.subr.mxu0 0.0
      %8998 = vmatpush1.msra.mxu0 0.0
      %8999 = vmatprep.subr.mxu0 0.0
      %9000 = vmatpush1.msra.mxu0 0.0
      %9001 = vmatprep.subr.mxu0 0.0
      %9002 = vmatpush1.msra.mxu0 0.0
      %9003 = vmatprep.subr.mxu0 0.0
      %9004 = vmatpush1.msra.mxu0 0.0
      %9005 = vmatprep.subr.mxu0 0.0
      %9006 = vmatpush1.msra.mxu0 0.0
      %9007 = vmatprep.subr.mxu0 0.0
      %9008 = vmatpush1.msra.mxu0 0.0
      %9009 = vmatprep.subr.mxu0 0.0
      %9010 = vmatpush1.msra.mxu0 0.0
      %9011 = vmatprep.subr.mxu0 0.0
      %9012 = vmatpush1.msra.mxu0 0.0
      %9013 = vmatprep.subr.mxu0 0.0
      %9014 = vmatpush1.msra.mxu0 0.0
      %9015 = vmatprep.subr.mxu0 0.0
      %9016 = vmatpush1.msra.mxu0 0.0
      %9017 = vmatprep.subr.mxu0 0.0
      %9018 = vmatpush1.msra.mxu0 0.0
      %9019 = vmatprep.subr.mxu0 0.0
      %9020 = vmatpush1.msra.mxu0 0.0
      %9021 = vmatprep.subr.mxu0 0.0
      %9022 = vmatpush1.msra.mxu0 0.0
      %9023 = vmatprep.subr.mxu0 0.0
      %9024 = vmatpush1.msra.mxu0 0.0
      %9025 = vmatprep.subr.mxu0 0.0
      %9026 = vmatpush1.msra.mxu0 0.0
      %9027 = vmatprep.subr.mxu0 0.0
      %9028 = vmatpush1.msra.mxu0 0.0
      %9029 = vmatprep.subr.mxu0 0.0
      %9030 = vmatpush1.msra.mxu0 0.0
      %9031 = vmatprep.subr.mxu0 0.0
      %9032 = vmatpush1.msra.mxu0 0.0
      %9033 = vmatprep.subr.mxu0 0.0
      %9034 = vmatpush1.msra.mxu0 0.0
      %9035 = vmatprep.subr.mxu0 0.0
      %9036 = vmatpush1.msra.mxu0 0.0
      %9037 = vmatprep.subr.mxu0 0.0
      %9038 = vmatpush1.msra.mxu0 0.0
      %9039 = vmatprep.subr.mxu0 0.0
      %9040 = vmatpush1.msra.mxu0 0.0
      %9041 = vmatprep.subr.mxu0 0.0
      %9042 = vmatpush1.msra.mxu0 0.0
      %9043 = vmatprep.subr.mxu0 0.0
      %9044 = vmatpush1.msra.mxu0 0.0
      %9045 = vmatprep.subr.mxu0 0.0
      %9046 = vmatpush1.msra.mxu0 0.0
      %9047 = vmatprep.subr.mxu0 0.0
      %9048 = vmatpush1.msra.mxu0 0.0
      %9049 = vmatprep.subr.mxu0 0.0
      %9050 = vmatpush1.msra.mxu0 0.0
      %9051 = vmatprep.subr.mxu0 0.0
      %9052 = vmatpush1.msra.mxu0 0.0
      %9053 = vmatprep.subr.mxu0 0.0
      %9054 = vmatpush1.msra.mxu0 0.0
      %9055 = vmatprep.subr.mxu0 0.0
      %9056 = vmatpush1.msra.mxu0 0.0
      %9057 = vmatprep.subr.mxu0 0.0
      %9058 = vmatpush1.msra.mxu0 0.0
      %9059 = vmatprep.mubr.f32.mxu0 0.0
      %9060 = vmatmul.mubr.f32.gmra.mrb[0].mxu0 %v8922
      %v9061 = vpop.f32.mrb[0].mxu0
      %v9062 = vadd.f32 0.0, %v9061
      %v9063 = vpop.f32.mrb[0].mxu0
      %9064 = vdwg.mxu0
      %v9065 = vadd.f32 %v8834, %v8991
      %v9066 = vadd.f32 %v8836, %v8993
      %v9067 = vadd.f32 %v8905, %v9062
      %v9068 = vld [vmem:[#allocation7] sm:$0xff]
      %v9069 = vld [vmem:[#allocation7 + $0x8] sm:$0xff]
      %v9070 = vld [vmem:[#allocation7 + $0x10] sm:$0xff]
      %v9071 = vld [vmem:[#allocation7 + $0x18] sm:$0xff]
      %s9072 = scalar_lea.vmem %s14, 24
      %v9073 = vld [vmem:[%s9072] sm:$0xff]
      %9078 = vrot.lane.b32.xlu0 %v9068, 62
      %v9079 = vpop.permute.xlu0 %9078
      %9080 = vrot.lane.b32.xlu0 %v9069, 62
      %v9081 = vpop.permute.xlu0 %9080
      %9082 = vrot.lane.b32.xlu0 %v9070, 62
      %v9083 = vpop.permute.xlu0 %9082
      %9084 = vrot.lane.b32.xlu0 %v9071, 62
      %v9085 = vpop.permute.xlu0 %9084
      %vm9086 = vcmask 506880
      %v9087 = vsel %vm9086, %v9079, %v9081
      %v9088 = vsel %vm9086, %v9081, %v9083
      %v9089 = vsel %vm9086, %v9083, %v9085
      %v9094 = vsel %vm925, %v9073, 0
      %9096 = vmatprep.subr.mxu0 %v9088
      %9097 = vmatpush1.msra.mxu0 %v9087
      %9098 = vmatprep.subr.mxu0 0.0
      %9099 = vmatpush1.msra.mxu0 0.0
      %9100 = vmatprep.subr.mxu0 0.0
      %9101 = vmatpush1.msra.mxu0 0.0
      %9102 = vmatprep.subr.mxu0 0.0
      %9103 = vmatpush1.msra.mxu0 0.0
      %9104 = vmatprep.subr.mxu0 0.0
      %9105 = vmatpush1.msra.mxu0 0.0
      %9106 = vmatprep.subr.mxu0 0.0
      %9107 = vmatpush1.msra.mxu0 0.0
      %9108 = vmatprep.subr.mxu0 0.0
      %9109 = vmatpush1.msra.mxu0 0.0
      %9110 = vmatprep.subr.mxu0 0.0
      %9111 = vmatpush1.msra.mxu0 0.0
      %9112 = vmatprep.subr.mxu0 0.0
      %9113 = vmatpush1.msra.mxu0 0.0
      %9114 = vmatprep.subr.mxu0 0.0
      %9115 = vmatpush1.msra.mxu0 0.0
      %9116 = vmatprep.subr.mxu0 0.0
      %9117 = vmatpush1.msra.mxu0 0.0
      %9118 = vmatprep.subr.mxu0 0.0
      %9119 = vmatpush1.msra.mxu0 0.0
      %9120 = vmatprep.subr.mxu0 0.0
      %9121 = vmatpush1.msra.mxu0 0.0
      %9122 = vmatprep.subr.mxu0 0.0
      %9123 = vmatpush1.msra.mxu0 0.0
      %9124 = vmatprep.subr.mxu0 0.0
      %9125 = vmatpush1.msra.mxu0 0.0
      %9126 = vmatprep.subr.mxu0 0.0
      %9127 = vmatpush1.msra.mxu0 0.0
      %9128 = vmatprep.subr.mxu0 0.0
      %9129 = vmatpush1.msra.mxu0 0.0
      %9130 = vmatprep.subr.mxu0 0.0
      %9131 = vmatpush1.msra.mxu0 0.0
      %9132 = vmatprep.subr.mxu0 0.0
      %9133 = vmatpush1.msra.mxu0 0.0
      %9134 = vmatprep.subr.mxu0 0.0
      %9135 = vmatpush1.msra.mxu0 0.0
      %9136 = vmatprep.subr.mxu0 0.0
      %9137 = vmatpush1.msra.mxu0 0.0
      %9138 = vmatprep.subr.mxu0 0.0
      %9139 = vmatpush1.msra.mxu0 0.0
      %9140 = vmatprep.subr.mxu0 0.0
      %9141 = vmatpush1.msra.mxu0 0.0
      %9142 = vmatprep.subr.mxu0 0.0
      %9143 = vmatpush1.msra.mxu0 0.0
      %9144 = vmatprep.subr.mxu0 0.0
      %9145 = vmatpush1.msra.mxu0 0.0
      %9146 = vmatprep.subr.mxu0 0.0
      %9147 = vmatpush1.msra.mxu0 0.0
      %9148 = vmatprep.subr.mxu0 0.0
      %9149 = vmatpush1.msra.mxu0 0.0
      %9150 = vmatprep.subr.mxu0 0.0
      %9151 = vmatpush1.msra.mxu0 0.0
      %9152 = vmatprep.subr.mxu0 0.0
      %9153 = vmatpush1.msra.mxu0 0.0
      %9154 = vmatprep.subr.mxu0 0.0
      %9155 = vmatpush1.msra.mxu0 0.0
      %9156 = vmatprep.subr.mxu0 0.0
      %9157 = vmatpush1.msra.mxu0 0.0
      %9158 = vmatprep.subr.mxu0 0.0
      %9159 = vmatpush1.msra.mxu0 0.0
      %9160 = vmatprep.mubr.f32.mxu0 0.0
      %9161 = vmatmul.mubr.f32.gmra.mrb[0].mxu0 %v9094
      %v9162 = vpop.f32.mrb[0].mxu0
      %v9163 = vadd.f32 0.0, %v9162
      %v9164 = vpop.f32.mrb[0].mxu0
      %v9165 = vadd.f32 0.0, %v9164
      %9166 = vdwg.mxu0
      %9167 = vmatprep.subr.mxu0 0.0
      %9168 = vmatpush1.msra.mxu0 %v9089
      %9169 = vmatprep.subr.mxu0 0.0
      %9170 = vmatpush1.msra.mxu0 0.0
      %9171 = vmatprep.subr.mxu0 0.0
      %9172 = vmatpush1.msra.mxu0 0.0
      %9173 = vmatprep.subr.mxu0 0.0
      %9174 = vmatpush1.msra.mxu0 0.0
      %9175 = vmatprep.subr.mxu0 0.0
      %9176 = vmatpush1.msra.mxu0 0.0
      %9177 = vmatprep.subr.mxu0 0.0
      %9178 = vmatpush1.msra.mxu0 0.0
      %9179 = vmatprep.subr.mxu0 0.0
      %9180 = vmatpush1.msra.mxu0 0.0
      %9181 = vmatprep.subr.mxu0 0.0
      %9182 = vmatpush1.msra.mxu0 0.0
      %9183 = vmatprep.subr.mxu0 0.0
      %9184 = vmatpush1.msra.mxu0 0.0
      %9185 = vmatprep.subr.mxu0 0.0
      %9186 = vmatpush1.msra.mxu0 0.0
      %9187 = vmatprep.subr.mxu0 0.0
      %9188 = vmatpush1.msra.mxu0 0.0
      %9189 = vmatprep.subr.mxu0 0.0
      %9190 = vmatpush1.msra.mxu0 0.0
      %9191 = vmatprep.subr.mxu0 0.0
      %9192 = vmatpush1.msra.mxu0 0.0
      %9193 = vmatprep.subr.mxu0 0.0
      %9194 = vmatpush1.msra.mxu0 0.0
      %9195 = vmatprep.subr.mxu0 0.0
      %9196 = vmatpush1.msra.mxu0 0.0
      %9197 = vmatprep.subr.mxu0 0.0
      %9198 = vmatpush1.msra.mxu0 0.0
      %9199 = vmatprep.subr.mxu0 0.0
      %9200 = vmatpush1.msra.mxu0 0.0
      %9201 = vmatprep.subr.mxu0 0.0
      %9202 = vmatpush1.msra.mxu0 0.0
      %9203 = vmatprep.subr.mxu0 0.0
      %9204 = vmatpush1.msra.mxu0 0.0
      %9205 = vmatprep.subr.mxu0 0.0
      %9206 = vmatpush1.msra.mxu0 0.0
      %9207 = vmatprep.subr.mxu0 0.0
      %9208 = vmatpush1.msra.mxu0 0.0
      %9209 = vmatprep.subr.mxu0 0.0
      %9210 = vmatpush1.msra.mxu0 0.0
      %9211 = vmatprep.subr.mxu0 0.0
      %9212 = vmatpush1.msra.mxu0 0.0
      %9213 = vmatprep.subr.mxu0 0.0
      %9214 = vmatpush1.msra.mxu0 0.0
      %9215 = vmatprep.subr.mxu0 0.0
      %9216 = vmatpush1.msra.mxu0 0.0
      %9217 = vmatprep.subr.mxu0 0.0
      %9218 = vmatpush1.msra.mxu0 0.0
      %9219 = vmatprep.subr.mxu0 0.0
      %9220 = vmatpush1.msra.mxu0 0.0
      %9221 = vmatprep.subr.mxu0 0.0
      %9222 = vmatpush1.msra.mxu0 0.0
      %9223 = vmatprep.subr.mxu0 0.0
      %9224 = vmatpush1.msra.mxu0 0.0
      %9225 = vmatprep.subr.mxu0 0.0
      %9226 = vmatpush1.msra.mxu0 0.0
      %9227 = vmatprep.subr.mxu0 0.0
      %9228 = vmatpush1.msra.mxu0 0.0
      %9229 = vmatprep.subr.mxu0 0.0
      %9230 = vmatpush1.msra.mxu0 0.0
      %9231 = vmatprep.mubr.f32.mxu0 0.0
      %9232 = vmatmul.mubr.f32.gmra.mrb[0].mxu0 %v9094
      %v9233 = vpop.f32.mrb[0].mxu0
      %v9234 = vadd.f32 0.0, %v9233
      %v9235 = vpop.f32.mrb[0].mxu0
      %9236 = vdwg.mxu0
      %v9237 = vadd.f32 %v9065, %v9163
      %v9238 = vadd.f32 %v9066, %v9165
      %v9239 = vadd.f32 %v9067, %v9234
      %s9240 = scalar_lea.vmem %s14, 32
      %v9241 = vld [vmem:[%s9240] sm:$0xff]
      %9242 = vrot.lane.b32.xlu0 %v9068, 59
      %v9243 = vpop.permute.xlu0 %9242
      %9244 = vrot.lane.b32.xlu0 %v9069, 59
      %v9245 = vpop.permute.xlu0 %9244
      %9246 = vrot.lane.b32.xlu0 %v9070, 59
      %v9247 = vpop.permute.xlu0 %9246
      %9248 = vrot.lane.b32.xlu0 %v9071, 59
      %v9249 = vpop.permute.xlu0 %9248
      %v9250 = vsel %vm1567, %v9243, %v9245
      %v9251 = vsel %vm1567, %v9245, %v9247
      %v9252 = vsel %vm1567, %v9247, %v9249
      %v9257 = vsel %vm925, %v9241, 0
      %9259 = vmatprep.subr.mxu0 %v9251
      %9260 = vmatpush1.msra.mxu0 %v9250
      %9261 = vmatprep.subr.mxu0 0.0
      %9262 = vmatpush1.msra.mxu0 0.0
      %9263 = vmatprep.subr.mxu0 0.0
      %9264 = vmatpush1.msra.mxu0 0.0
      %9265 = vmatprep.subr.mxu0 0.0
      %9266 = vmatpush1.msra.mxu0 0.0
      %9267 = vmatprep.subr.mxu0 0.0
      %9268 = vmatpush1.msra.mxu0 0.0
      %9269 = vmatprep.subr.mxu0 0.0
      %9270 = vmatpush1.msra.mxu0 0.0
      %9271 = vmatprep.subr.mxu0 0.0
      %9272 = vmatpush1.msra.mxu0 0.0
      %9273 = vmatprep.subr.mxu0 0.0
      %9274 = vmatpush1.msra.mxu0 0.0
      %9275 = vmatprep.subr.mxu0 0.0
      %9276 = vmatpush1.msra.mxu0 0.0
      %9277 = vmatprep.subr.mxu0 0.0
      %9278 = vmatpush1.msra.mxu0 0.0
      %9279 = vmatprep.subr.mxu0 0.0
      %9280 = vmatpush1.msra.mxu0 0.0
      %9281 = vmatprep.subr.mxu0 0.0
      %9282 = vmatpush1.msra.mxu0 0.0
      %9283 = vmatprep.subr.mxu0 0.0
      %9284 = vmatpush1.msra.mxu0 0.0
      %9285 = vmatprep.subr.mxu0 0.0
      %9286 = vmatpush1.msra.mxu0 0.0
      %9287 = vmatprep.subr.mxu0 0.0
      %9288 = vmatpush1.msra.mxu0 0.0
      %9289 = vmatprep.subr.mxu0 0.0
      %9290 = vmatpush1.msra.mxu0 0.0
      %9291 = vmatprep.subr.mxu0 0.0
      %9292 = vmatpush1.msra.mxu0 0.0
      %9293 = vmatprep.subr.mxu0 0.0
      %9294 = vmatpush1.msra.mxu0 0.0
      %9295 = vmatprep.subr.mxu0 0.0
      %9296 = vmatpush1.msra.mxu0 0.0
      %9297 = vmatprep.subr.mxu0 0.0
      %9298 = vmatpush1.msra.mxu0 0.0
      %9299 = vmatprep.subr.mxu0 0.0
      %9300 = vmatpush1.msra.mxu0 0.0
      %9301 = vmatprep.subr.mxu0 0.0
      %9302 = vmatpush1.msra.mxu0 0.0
      %9303 = vmatprep.subr.mxu0 0.0
      %9304 = vmatpush1.msra.mxu0 0.0
      %9305 = vmatprep.subr.mxu0 0.0
      %9306 = vmatpush1.msra.mxu0 0.0
      %9307 = vmatprep.subr.mxu0 0.0
      %9308 = vmatpush1.msra.mxu0 0.0
      %9309 = vmatprep.subr.mxu0 0.0
      %9310 = vmatpush1.msra.mxu0 0.0
      %9311 = vmatprep.subr.mxu0 0.0
      %9312 = vmatpush1.msra.mxu0 0.0
      %9313 = vmatprep.subr.mxu0 0.0
      %9314 = vmatpush1.msra.mxu0 0.0
      %9315 = vmatprep.subr.mxu0 0.0
      %9316 = vmatpush1.msra.mxu0 0.0
      %9317 = vmatprep.subr.mxu0 0.0
      %9318 = vmatpush1.msra.mxu0 0.0
      %9319 = vmatprep.subr.mxu0 0.0
      %9320 = vmatpush1.msra.mxu0 0.0
      %9321 = vmatprep.subr.mxu0 0.0
      %9322 = vmatpush1.msra.mxu0 0.0
      %9323 = vmatprep.mubr.f32.mxu0 0.0
      %9324 = vmatmul.mubr.f32.gmra.mrb[0].mxu0 %v9257
      %v9325 = vpop.f32.mrb[0].mxu0
      %v9326 = vadd.f32 0.0, %v9325
      %v9327 = vpop.f32.mrb[0].mxu0
      %v9328 = vadd.f32 0.0, %v9327
      %9329 = vdwg.mxu0
      %9330 = vmatprep.subr.mxu0 0.0
      %9331 = vmatpush1.msra.mxu0 %v9252
      %9332 = vmatprep.subr.mxu0 0.0
      %9333 = vmatpush1.msra.mxu0 0.0
      %9334 = vmatprep.subr.mxu0 0.0
      %9335 = vmatpush1.msra.mxu0 0.0
      %9336 = vmatprep.subr.mxu0 0.0
      %9337 = vmatpush1.msra.mxu0 0.0
      %9338 = vmatprep.subr.mxu0 0.0
      %9339 = vmatpush1.msra.mxu0 0.0
      %9340 = vmatprep.subr.mxu0 0.0
      %9341 = vmatpush1.msra.mxu0 0.0
      %9342 = vmatprep.subr.mxu0 0.0
      %9343 = vmatpush1.msra.mxu0 0.0
      %9344 = vmatprep.subr.mxu0 0.0
      %9345 = vmatpush1.msra.mxu0 0.0
      %9346 = vmatprep.subr.mxu0 0.0
      %9347 = vmatpush1.msra.mxu0 0.0
      %9348 = vmatprep.subr.mxu0 0.0
      %9349 = vmatpush1.msra.mxu0 0.0
      %9350 = vmatprep.subr.mxu0 0.0
      %9351 = vmatpush1.msra.mxu0 0.0
      %9352 = vmatprep.subr.mxu0 0.0
      %9353 = vmatpush1.msra.mxu0 0.0
      %9354 = vmatprep.subr.mxu0 0.0
      %9355 = vmatpush1.msra.mxu0 0.0
      %9356 = vmatprep.subr.mxu0 0.0
      %9357 = vmatpush1.msra.mxu0 0.0
      %9358 = vmatprep.subr.mxu0 0.0
      %9359 = vmatpush1.msra.mxu0 0.0
      %9360 = vmatprep.subr.mxu0 0.0
      %9361 = vmatpush1.msra.mxu0 0.0
      %9362 = vmatprep.subr.mxu0 0.0
      %9363 = vmatpush1.msra.mxu0 0.0
      %9364 = vmatprep.subr.mxu0 0.0
      %9365 = vmatpush1.msra.mxu0 0.0
      %9366 = vmatprep.subr.mxu0 0.0
      %9367 = vmatpush1.msra.mxu0 0.0
      %9368 = vmatprep.subr.mxu0 0.0
      %9369 = vmatpush1.msra.mxu0 0.0
      %9370 = vmatprep.subr.mxu0 0.0
      %9371 = vmatpush1.msra.mxu0 0.0
      %9372 = vmatprep.subr.mxu0 0.0
      %9373 = vmatpush1.msra.mxu0 0.0
      %9374 = vmatprep.subr.mxu0 0.0
      %9375 = vmatpush1.msra.mxu0 0.0
      %9376 = vmatprep.subr.mxu0 0.0
      %9377 = vmatpush1.msra.mxu0 0.0
      %9378 = vmatprep.subr.mxu0 0.0
      %9379 = vmatpush1.msra.mxu0 0.0
      %9380 = vmatprep.subr.mxu0 0.0
      %9381 = vmatpush1.msra.mxu0 0.0
      %9382 = vmatprep.subr.mxu0 0.0
      %9383 = vmatpush1.msra.mxu0 0.0
      %9384 = vmatprep.subr.mxu0 0.0
      %9385 = vmatpush1.msra.mxu0 0.0
      %9386 = vmatprep.subr.mxu0 0.0
      %9387 = vmatpush1.msra.mxu0 0.0
      %9388 = vmatprep.subr.mxu0 0.0
      %9389 = vmatpush1.msra.mxu0 0.0
      %9390 = vmatprep.subr.mxu0 0.0
      %9391 = vmatpush1.msra.mxu0 0.0
      %9392 = vmatprep.subr.mxu0 0.0
      %9393 = vmatpush1.msra.mxu0 0.0
      %9394 = vmatprep.mubr.f32.mxu0 0.0
      %9395 = vmatmul.mubr.f32.gmra.mrb[0].mxu0 %v9257
      %v9396 = vpop.f32.mrb[0].mxu0
      %v9397 = vadd.f32 0.0, %v9396
      %v9398 = vpop.f32.mrb[0].mxu0
      %9399 = vdwg.mxu0
      %v9400 = vadd.f32 %v9237, %v9326
      %v9401 = vadd.f32 %v9238, %v9328
      %v9402 = vadd.f32 %v9239, %v9397
      %s9403 = scalar_lea.vmem %s14, 40
      %v9404 = vld [vmem:[%s9403] sm:$0xff]
      %9405 = vrot.lane.b32.xlu0 %v9068, 56
      %v9406 = vpop.permute.xlu0 %9405
      %9407 = vrot.lane.b32.xlu0 %v9069, 56
      %v9408 = vpop.permute.xlu0 %9407
      %9409 = vrot.lane.b32.xlu0 %v9070, 56
      %v9410 = vpop.permute.xlu0 %9409
      %9411 = vrot.lane.b32.xlu0 %v9071, 56
      %v9412 = vpop.permute.xlu0 %9411
      %vm9413 = vcmask 457728
      %v9414 = vsel %vm9413, %v9406, %v9408
      %v9415 = vsel %vm9413, %v9408, %v9410
      %v9416 = vsel %vm9413, %v9410, %v9412
      %v9421 = vsel %vm925, %v9404, 0
      %9423 = vmatprep.subr.mxu0 %v9415
      %9424 = vmatpush1.msra.mxu0 %v9414
      %9425 = vmatprep.subr.mxu0 0.0
      %9426 = vmatpush1.msra.mxu0 0.0
      %9427 = vmatprep.subr.mxu0 0.0
      %9428 = vmatpush1.msra.mxu0 0.0
      %9429 = vmatprep.subr.mxu0 0.0
      %9430 = vmatpush1.msra.mxu0 0.0
      %9431 = vmatprep.subr.mxu0 0.0
      %9432 = vmatpush1.msra.mxu0 0.0
      %9433 = vmatprep.subr.mxu0 0.0
      %9434 = vmatpush1.msra.mxu0 0.0
      %9435 = vmatprep.subr.mxu0 0.0
      %9436 = vmatpush1.msra.mxu0 0.0
      %9437 = vmatprep.subr.mxu0 0.0
      %9438 = vmatpush1.msra.mxu0 0.0
      %9439 = vmatprep.subr.mxu0 0.0
      %9440 = vmatpush1.msra.mxu0 0.0
      %9441 = vmatprep.subr.mxu0 0.0
      %9442 = vmatpush1.msra.mxu0 0.0
      %9443 = vmatprep.subr.mxu0 0.0
      %9444 = vmatpush1.msra.mxu0 0.0
      %9445 = vmatprep.subr.mxu0 0.0
      %9446 = vmatpush1.msra.mxu0 0.0
      %9447 = vmatprep.subr.mxu0 0.0
      %9448 = vmatpush1.msra.mxu0 0.0
      %9449 = vmatprep.subr.mxu0 0.0
      %9450 = vmatpush1.msra.mxu0 0.0
      %9451 = vmatprep.subr.mxu0 0.0
      %9452 = vmatpush1.msra.mxu0 0.0
      %9453 = vmatprep.subr.mxu0 0.0
      %9454 = vmatpush1.msra.mxu0 0.0
      %9455 = vmatprep.subr.mxu0 0.0
      %9456 = vmatpush1.msra.mxu0 0.0
      %9457 = vmatprep.subr.mxu0 0.0
      %9458 = vmatpush1.msra.mxu0 0.0
      %9459 = vmatprep.subr.mxu0 0.0
      %9460 = vmatpush1.msra.mxu0 0.0
      %9461 = vmatprep.subr.mxu0 0.0
      %9462 = vmatpush1.msra.mxu0 0.0
      %9463 = vmatprep.subr.mxu0 0.0
      %9464 = vmatpush1.msra.mxu0 0.0
      %9465 = vmatprep.subr.mxu0 0.0
      %9466 = vmatpush1.msra.mxu0 0.0
      %9467 = vmatprep.subr.mxu0 0.0
      %9468 = vmatpush1.msra.mxu0 0.0
      %9469 = vmatprep.subr.mxu0 0.0
      %9470 = vmatpush1.msra.mxu0 0.0
      %9471 = vmatprep.subr.mxu0 0.0
      %9472 = vmatpush1.msra.mxu0 0.0
      %9473 = vmatprep.subr.mxu0 0.0
      %9474 = vmatpush1.msra.mxu0 0.0
      %9475 = vmatprep.subr.mxu0 0.0
      %9476 = vmatpush1.msra.mxu0 0.0
      %9477 = vmatprep.subr.mxu0 0.0
      %9478 = vmatpush1.msra.mxu0 0.0
      %9479 = vmatprep.subr.mxu0 0.0
      %9480 = vmatpush1.msra.mxu0 0.0
      %9481 = vmatprep.subr.mxu0 0.0
      %9482 = vmatpush1.msra.mxu0 0.0
      %9483 = vmatprep.subr.mxu0 0.0
      %9484 = vmatpush1.msra.mxu0 0.0
      %9485 = vmatprep.subr.mxu0 0.0
      %9486 = vmatpush1.msra.mxu0 0.0
      %9487 = vmatprep.mubr.f32.mxu0 0.0
      %9488 = vmatmul.mubr.f32.gmra.mrb[0].mxu0 %v9421
      %v9489 = vpop.f32.mrb[0].mxu0
      %v9490 = vadd.f32 0.0, %v9489
      %v9491 = vpop.f32.mrb[0].mxu0
      %v9492 = vadd.f32 0.0, %v9491
      %9493 = vdwg.mxu0
      %9494 = vmatprep.subr.mxu0 0.0
      %9495 = vmatpush1.msra.mxu0 %v9416
      %9496 = vmatprep.subr.mxu0 0.0
      %9497 = vmatpush1.msra.mxu0 0.0
      %9498 = vmatprep.subr.mxu0 0.0
      %9499 = vmatpush1.msra.mxu0 0.0
      %9500 = vmatprep.subr.mxu0 0.0
      %9501 = vmatpush1.msra.mxu0 0.0
      %9502 = vmatprep.subr.mxu0 0.0
      %9503 = vmatpush1.msra.mxu0 0.0
      %9504 = vmatprep.subr.mxu0 0.0
      %9505 = vmatpush1.msra.mxu0 0.0
      %9506 = vmatprep.subr.mxu0 0.0
      %9507 = vmatpush1.msra.mxu0 0.0
      %9508 = vmatprep.subr.mxu0 0.0
      %9509 = vmatpush1.msra.mxu0 0.0
      %9510 = vmatprep.subr.mxu0 0.0
      %9511 = vmatpush1.msra.mxu0 0.0
      %9512 = vmatprep.subr.mxu0 0.0
      %9513 = vmatpush1.msra.mxu0 0.0
      %9514 = vmatprep.subr.mxu0 0.0
      %9515 = vmatpush1.msra.mxu0 0.0
      %9516 = vmatprep.subr.mxu0 0.0
      %9517 = vmatpush1.msra.mxu0 0.0
      %9518 = vmatprep.subr.mxu0 0.0
      %9519 = vmatpush1.msra.mxu0 0.0
      %9520 = vmatprep.subr.mxu0 0.0
      %9521 = vmatpush1.msra.mxu0 0.0
      %9522 = vmatprep.subr.mxu0 0.0
      %9523 = vmatpush1.msra.mxu0 0.0
      %9524 = vmatprep.subr.mxu0 0.0
      %9525 = vmatpush1.msra.mxu0 0.0
      %9526 = vmatprep.subr.mxu0 0.0
      %9527 = vmatpush1.msra.mxu0 0.0
      %9528 = vmatprep.subr.mxu0 0.0
      %9529 = vmatpush1.msra.mxu0 0.0
      %9530 = vmatprep.subr.mxu0 0.0
      %9531 = vmatpush1.msra.mxu0 0.0
      %9532 = vmatprep.subr.mxu0 0.0
      %9533 = vmatpush1.msra.mxu0 0.0
      %9534 = vmatprep.subr.mxu0 0.0
      %9535 = vmatpush1.msra.mxu0 0.0
      %9536 = vmatprep.subr.mxu0 0.0
      %9537 = vmatpush1.msra.mxu0 0.0
      %9538 = vmatprep.subr.mxu0 0.0
      %9539 = vmatpush1.msra.mxu0 0.0
      %9540 = vmatprep.subr.mxu0 0.0
      %9541 = vmatpush1.msra.mxu0 0.0
      %9542 = vmatprep.subr.mxu0 0.0
      %9543 = vmatpush1.msra.mxu0 0.0
      %9544 = vmatprep.subr.mxu0 0.0
      %9545 = vmatpush1.msra.mxu0 0.0
      %9546 = vmatprep.subr.mxu0 0.0
      %9547 = vmatpush1.msra.mxu0 0.0
      %9548 = vmatprep.subr.mxu0 0.0
      %9549 = vmatpush1.msra.mxu0 0.0
      %9550 = vmatprep.subr.mxu0 0.0
      %9551 = vmatpush1.msra.mxu0 0.0
      %9552 = vmatprep.subr.mxu0 0.0
      %9553 = vmatpush1.msra.mxu0 0.0
      %9554 = vmatprep.subr.mxu0 0.0
      %9555 = vmatpush1.msra.mxu0 0.0
      %9556 = vmatprep.subr.mxu0 0.0
      %9557 = vmatpush1.msra.mxu0 0.0
      %9558 = vmatprep.mubr.f32.mxu0 0.0
      %9559 = vmatmul.mubr.f32.gmra.mrb[0].mxu0 %v9421
      %v9560 = vpop.f32.mrb[0].mxu0
      %v9561 = vadd.f32 0.0, %v9560
      %v9562 = vpop.f32.mrb[0].mxu0
      %9563 = vdwg.mxu0
      %v9564 = vadd.f32 %v9400, %v9490
      %v9565 = vadd.f32 %v9401, %v9492
      %v9566 = vadd.f32 %v9402, %v9561
      %s9567 = scalar_lea.vmem %s14, 48
      %v9568 = vld [vmem:[%s9567] sm:$0xff]
      %9569 = vrot.lane.b32.xlu0 %v9069, 124
      %v9570 = vpop.permute.xlu0 %9569
      %9571 = vrot.lane.b32.xlu0 %v9070, 124
      %v9572 = vpop.permute.xlu0 %9571
      %9573 = vrot.lane.b32.xlu0 %v9071, 124
      %v9574 = vpop.permute.xlu0 %9573
      %vm9575 = vcmask 1014784
      %v9576 = vsel %vm9575, %v9570, %v9572
      %v9577 = vsel %vm9575, %v9572, %v9574
      %v9582 = vsel %vm925, %v9568, 0
      %9584 = vmatprep.subr.mxu0 %v9577
      %9585 = vmatpush1.msra.mxu0 %v9576
      %9586 = vmatprep.subr.mxu0 0.0
      %9587 = vmatpush1.msra.mxu0 0.0
      %9588 = vmatprep.subr.mxu0 0.0
      %9589 = vmatpush1.msra.mxu0 0.0
      %9590 = vmatprep.subr.mxu0 0.0
      %9591 = vmatpush1.msra.mxu0 0.0
      %9592 = vmatprep.subr.mxu0 0.0
      %9593 = vmatpush1.msra.mxu0 0.0
      %9594 = vmatprep.subr.mxu0 0.0
      %9595 = vmatpush1.msra.mxu0 0.0
      %9596 = vmatprep.subr.mxu0 0.0
      %9597 = vmatpush1.msra.mxu0 0.0
      %9598 = vmatprep.subr.mxu0 0.0
      %9599 = vmatpush1.msra.mxu0 0.0
      %9600 = vmatprep.subr.mxu0 0.0
      %9601 = vmatpush1.msra.mxu0 0.0
      %9602 = vmatprep.subr.mxu0 0.0
      %9603 = vmatpush1.msra.mxu0 0.0
      %9604 = vmatprep.subr.mxu0 0.0
      %9605 = vmatpush1.msra.mxu0 0.0
      %9606 = vmatprep.subr.mxu0 0.0
      %9607 = vmatpush1.msra.mxu0 0.0
      %9608 = vmatprep.subr.mxu0 0.0
      %9609 = vmatpush1.msra.mxu0 0.0
      %9610 = vmatprep.subr.mxu0 0.0
      %9611 = vmatpush1.msra.mxu0 0.0
      %9612 = vmatprep.subr.mxu0 0.0
      %9613 = vmatpush1.msra.mxu0 0.0
      %9614 = vmatprep.subr.mxu0 0.0
      %9615 = vmatpush1.msra.mxu0 0.0
      %9616 = vmatprep.subr.mxu0 0.0
      %9617 = vmatpush1.msra.mxu0 0.0
      %9618 = vmatprep.subr.mxu0 0.0
      %9619 = vmatpush1.msra.mxu0 0.0
      %9620 = vmatprep.subr.mxu0 0.0
      %9621 = vmatpush1.msra.mxu0 0.0
      %9622 = vmatprep.subr.mxu0 0.0
      %9623 = vmatpush1.msra.mxu0 0.0
      %9624 = vmatprep.subr.mxu0 0.0
      %9625 = vmatpush1.msra.mxu0 0.0
      %9626 = vmatprep.subr.mxu0 0.0
      %9627 = vmatpush1.msra.mxu0 0.0
      %9628 = vmatprep.subr.mxu0 0.0
      %9629 = vmatpush1.msra.mxu0 0.0
      %9630 = vmatprep.subr.mxu0 0.0
      %9631 = vmatpush1.msra.mxu0 0.0
      %9632 = vmatprep.subr.mxu0 0.0
      %9633 = vmatpush1.msra.mxu0 0.0
      %9634 = vmatprep.subr.mxu0 0.0
      %9635 = vmatpush1.msra.mxu0 0.0
      %9636 = vmatprep.subr.mxu0 0.0
      %9637 = vmatpush1.msra.mxu0 0.0
      %9638 = vmatprep.subr.mxu0 0.0
      %9639 = vmatpush1.msra.mxu0 0.0
      %9640 = vmatprep.subr.mxu0 0.0
      %9641 = vmatpush1.msra.mxu0 0.0
      %9642 = vmatprep.subr.mxu0 0.0
      %9643 = vmatpush1.msra.mxu0 0.0
      %9644 = vmatprep.subr.mxu0 0.0
      %9645 = vmatpush1.msra.mxu0 0.0
      %9646 = vmatprep.subr.mxu0 0.0
      %9647 = vmatpush1.msra.mxu0 0.0
      %9648 = vmatprep.mubr.f32.mxu0 0.0
      %9649 = vmatmul.mubr.f32.gmra.mrb[0].mxu0 %v9582
      %v9650 = vpop.f32.mrb[0].mxu0
      %v9651 = vadd.f32 0.0, %v9650
      %v9652 = vpop.f32.mrb[0].mxu0
      %v9653 = vadd.f32 0.0, %v9652
      %9654 = vdwg.mxu0
      %9655 = vmatprep.subr.mxu0 0.0
      %9656 = vmatpush1.msra.mxu0 %v9574
      %9657 = vmatprep.subr.mxu0 0.0
      %9658 = vmatpush1.msra.mxu0 0.0
      %9659 = vmatprep.subr.mxu0 0.0
      %9660 = vmatpush1.msra.mxu0 0.0
      %9661 = vmatprep.subr.mxu0 0.0
      %9662 = vmatpush1.msra.mxu0 0.0
      %9663 = vmatprep.subr.mxu0 0.0
      %9664 = vmatpush1.msra.mxu0 0.0
      %9665 = vmatprep.subr.mxu0 0.0
      %9666 = vmatpush1.msra.mxu0 0.0
      %9667 = vmatprep.subr.mxu0 0.0
      %9668 = vmatpush1.msra.mxu0 0.0
      %9669 = vmatprep.subr.mxu0 0.0
      %9670 = vmatpush1.msra.mxu0 0.0
      %9671 = vmatprep.subr.mxu0 0.0
      %9672 = vmatpush1.msra.mxu0 0.0
      %9673 = vmatprep.subr.mxu0 0.0
      %9674 = vmatpush1.msra.mxu0 0.0
      %9675 = vmatprep.subr.mxu0 0.0
      %9676 = vmatpush1.msra.mxu0 0.0
      %9677 = vmatprep.subr.mxu0 0.0
      %9678 = vmatpush1.msra.mxu0 0.0
      %9679 = vmatprep.subr.mxu0 0.0
      %9680 = vmatpush1.msra.mxu0 0.0
      %9681 = vmatprep.subr.mxu0 0.0
      %9682 = vmatpush1.msra.mxu0 0.0
      %9683 = vmatprep.subr.mxu0 0.0
      %9684 = vmatpush1.msra.mxu0 0.0
      %9685 = vmatprep.subr.mxu0 0.0
      %9686 = vmatpush1.msra.mxu0 0.0
      %9687 = vmatprep.subr.mxu0 0.0
      %9688 = vmatpush1.msra.mxu0 0.0
      %9689 = vmatprep.subr.mxu0 0.0
      %9690 = vmatpush1.msra.mxu0 0.0
      %9691 = vmatprep.subr.mxu0 0.0
      %9692 = vmatpush1.msra.mxu0 0.0
      %9693 = vmatprep.subr.mxu0 0.0
      %9694 = vmatpush1.msra.mxu0 0.0
      %9695 = vmatprep.subr.mxu0 0.0
      %9696 = vmatpush1.msra.mxu0 0.0
      %9697 = vmatprep.subr.mxu0 0.0
      %9698 = vmatpush1.msra.mxu0 0.0
      %9699 = vmatprep.subr.mxu0 0.0
      %9700 = vmatpush1.msra.mxu0 0.0
      %9701 = vmatprep.subr.mxu0 0.0
      %9702 = vmatpush1.msra.mxu0 0.0
      %9703 = vmatprep.subr.mxu0 0.0
      %9704 = vmatpush1.msra.mxu0 0.0
      %9705 = vmatprep.subr.mxu0 0.0
      %9706 = vmatpush1.msra.mxu0 0.0
      %9707 = vmatprep.subr.mxu0 0.0
      %9708 = vmatpush1.msra.mxu0 0.0
      %9709 = vmatprep.subr.mxu0 0.0
      %9710 = vmatpush1.msra.mxu0 0.0
      %9711 = vmatprep.subr.mxu0 0.0
      %9712 = vmatpush1.msra.mxu0 0.0
      %9713 = vmatprep.subr.mxu0 0.0
      %9714 = vmatpush1.msra.mxu0 0.0
      %9715 = vmatprep.subr.mxu0 0.0
      %9716 = vmatpush1.msra.mxu0 0.0
      %9717 = vmatprep.subr.mxu0 0.0
      %9718 = vmatpush1.msra.mxu0 0.0
      %9719 = vmatprep.mubr.f32.mxu0 0.0
      %9720 = vmatmul.mubr.f32.gmra.mrb[0].mxu0 %v9582
      %v9721 = vpop.f32.mrb[0].mxu0
      %v9722 = vadd.f32 0.0, %v9721
      %v9723 = vpop.f32.mrb[0].mxu0
      %9724 = vdwg.mxu0
      %v9725 = vadd.f32 %v9564, %v9651
      %v9726 = vadd.f32 %v9565, %v9653
      %v9727 = vadd.f32 %v9566, %v9722
      %s9728 = scalar_lea.vmem %s14, 56
      %v9729 = vld [vmem:[%s9728] sm:$0xff]
      %9730 = vrot.lane.b32.xlu0 %v9069, 121
      %v9731 = vpop.permute.xlu0 %9730
      %9732 = vrot.lane.b32.xlu0 %v9070, 121
      %v9733 = vpop.permute.xlu0 %9732
      %9734 = vrot.lane.b32.xlu0 %v9071, 121
      %v9735 = vpop.permute.xlu0 %9734
      %vm9736 = vcmask 990208
      %v9737 = vsel %vm9736, %v9731, %v9733
      %v9738 = vsel %vm9736, %v9733, %v9735
      %v9743 = vsel %vm925, %v9729, 0
      %9745 = vmatprep.subr.mxu0 %v9738
      %9746 = vmatpush1.msra.mxu0 %v9737
      %9747 = vmatprep.subr.mxu0 0.0
      %9748 = vmatpush1.msra.mxu0 0.0
      %9749 = vmatprep.subr.mxu0 0.0
      %9750 = vmatpush1.msra.mxu0 0.0
      %9751 = vmatprep.subr.mxu0 0.0
      %9752 = vmatpush1.msra.mxu0 0.0
      %9753 = vmatprep.subr.mxu0 0.0
      %9754 = vmatpush1.msra.mxu0 0.0
      %9755 = vmatprep.subr.mxu0 0.0
      %9756 = vmatpush1.msra.mxu0 0.0
      %9757 = vmatprep.subr.mxu0 0.0
      %9758 = vmatpush1.msra.mxu0 0.0
      %9759 = vmatprep.subr.mxu0 0.0
      %9760 = vmatpush1.msra.mxu0 0.0
      %9761 = vmatprep.subr.mxu0 0.0
      %9762 = vmatpush1.msra.mxu0 0.0
      %9763 = vmatprep.subr.mxu0 0.0
      %9764 = vmatpush1.msra.mxu0 0.0
      %9765 = vmatprep.subr.mxu0 0.0
      %9766 = vmatpush1.msra.mxu0 0.0
      %9767 = vmatprep.subr.mxu0 0.0
      %9768 = vmatpush1.msra.mxu0 0.0
      %9769 = vmatprep.subr.mxu0 0.0
      %9770 = vmatpush1.msra.mxu0 0.0
      %9771 = vmatprep.subr.mxu0 0.0
      %9772 = vmatpush1.msra.mxu0 0.0
      %9773 = vmatprep.subr.mxu0 0.0
      %9774 = vmatpush1.msra.mxu0 0.0
      %9775 = vmatprep.subr.mxu0 0.0
      %9776 = vmatpush1.msra.mxu0 0.0
      %9777 = vmatprep.subr.mxu0 0.0
      %9778 = vmatpush1.msra.mxu0 0.0
      %9779 = vmatprep.subr.mxu0 0.0
      %9780 = vmatpush1.msra.mxu0 0.0
      %9781 = vmatprep.subr.mxu0 0.0
      %9782 = vmatpush1.msra.mxu0 0.0
      %9783 = vmatprep.subr.mxu0 0.0
      %9784 = vmatpush1.msra.mxu0 0.0
      %9785 = vmatprep.subr.mxu0 0.0
      %9786 = vmatpush1.msra.mxu0 0.0
      %9787 = vmatprep.subr.mxu0 0.0
      %9788 = vmatpush1.msra.mxu0 0.0
      %9789 = vmatprep.subr.mxu0 0.0
      %9790 = vmatpush1.msra.mxu0 0.0
      %9791 = vmatprep.subr.mxu0 0.0
      %9792 = vmatpush1.msra.mxu0 0.0
      %9793 = vmatprep.subr.mxu0 0.0
      %9794 = vmatpush1.msra.mxu0 0.0
      %9795 = vmatprep.subr.mxu0 0.0
      %9796 = vmatpush1.msra.mxu0 0.0
      %9797 = vmatprep.subr.mxu0 0.0
      %9798 = vmatpush1.msra.mxu0 0.0
      %9799 = vmatprep.subr.mxu0 0.0
      %9800 = vmatpush1.msra.mxu0 0.0
      %9801 = vmatprep.subr.mxu0 0.0
      %9802 = vmatpush1.msra.mxu0 0.0
      %9803 = vmatprep.subr.mxu0 0.0
      %9804 = vmatpush1.msra.mxu0 0.0
      %9805 = vmatprep.subr.mxu0 0.0
      %9806 = vmatpush1.msra.mxu0 0.0
      %9807 = vmatprep.subr.mxu0 0.0
      %9808 = vmatpush1.msra.mxu0 0.0
      %9809 = vmatprep.mubr.f32.mxu0 0.0
      %9810 = vmatmul.mubr.f32.gmra.mrb[0].mxu0 %v9743
      %v9811 = vpop.f32.mrb[0].mxu0
      %v9812 = vadd.f32 0.0, %v9811
      %v9813 = vpop.f32.mrb[0].mxu0
      %v9814 = vadd.f32 0.0, %v9813
      %9815 = vdwg.mxu0
      %9816 = vmatprep.subr.mxu0 0.0
      %9817 = vmatpush1.msra.mxu0 %v9735
      %9818 = vmatprep.subr.mxu0 0.0
      %9819 = vmatpush1.msra.mxu0 0.0
      %9820 = vmatprep.subr.mxu0 0.0
      %9821 = vmatpush1.msra.mxu0 0.0
      %9822 = vmatprep.subr.mxu0 0.0
      %9823 = vmatpush1.msra.mxu0 0.0
      %9824 = vmatprep.subr.mxu0 0.0
      %9825 = vmatpush1.msra.mxu0 0.0
      %9826 = vmatprep.subr.mxu0 0.0
      %9827 = vmatpush1.msra.mxu0 0.0
      %9828 = vmatprep.subr.mxu0 0.0
      %9829 = vmatpush1.msra.mxu0 0.0
      %9830 = vmatprep.subr.mxu0 0.0
      %9831 = vmatpush1.msra.mxu0 0.0
      %9832 = vmatprep.subr.mxu0 0.0
      %9833 = vmatpush1.msra.mxu0 0.0
      %9834 = vmatprep.subr.mxu0 0.0
      %9835 = vmatpush1.msra.mxu0 0.0
      %9836 = vmatprep.subr.mxu0 0.0
      %9837 = vmatpush1.msra.mxu0 0.0
      %9838 = vmatprep.subr.mxu0 0.0
      %9839 = vmatpush1.msra.mxu0 0.0
      %9840 = vmatprep.subr.mxu0 0.0
      %9841 = vmatpush1.msra.mxu0 0.0
      %9842 = vmatprep.subr.mxu0 0.0
      %9843 = vmatpush1.msra.mxu0 0.0
      %9844 = vmatprep.subr.mxu0 0.0
      %9845 = vmatpush1.msra.mxu0 0.0
      %9846 = vmatprep.subr.mxu0 0.0
      %9847 = vmatpush1.msra.mxu0 0.0
      %9848 = vmatprep.subr.mxu0 0.0
      %9849 = vmatpush1.msra.mxu0 0.0
      %9850 = vmatprep.subr.mxu0 0.0
      %9851 = vmatpush1.msra.mxu0 0.0
      %9852 = vmatprep.subr.mxu0 0.0
      %9853 = vmatpush1.msra.mxu0 0.0
      %9854 = vmatprep.subr.mxu0 0.0
      %9855 = vmatpush1.msra.mxu0 0.0
      %9856 = vmatprep.subr.mxu0 0.0
      %9857 = vmatpush1.msra.mxu0 0.0
      %9858 = vmatprep.subr.mxu0 0.0
      %9859 = vmatpush1.msra.mxu0 0.0
      %9860 = vmatprep.subr.mxu0 0.0
      %9861 = vmatpush1.msra.mxu0 0.0
      %9862 = vmatprep.subr.mxu0 0.0
      %9863 = vmatpush1.msra.mxu0 0.0
      %9864 = vmatprep.subr.mxu0 0.0
      %9865 = vmatpush1.msra.mxu0 0.0
      %9866 = vmatprep.subr.mxu0 0.0
      %9867 = vmatpush1.msra.mxu0 0.0
      %9868 = vmatprep.subr.mxu0 0.0
      %9869 = vmatpush1.msra.mxu0 0.0
      %9870 = vmatprep.subr.mxu0 0.0
      %9871 = vmatpush1.msra.mxu0 0.0
      %9872 = vmatprep.subr.mxu0 0.0
      %9873 = vmatpush1.msra.mxu0 0.0
      %9874 = vmatprep.subr.mxu0 0.0
      %9875 = vmatpush1.msra.mxu0 0.0
      %9876 = vmatprep.subr.mxu0 0.0
      %9877 = vmatpush1.msra.mxu0 0.0
      %9878 = vmatprep.subr.mxu0 0.0
      %9879 = vmatpush1.msra.mxu0 0.0
      %9880 = vmatprep.mubr.f32.mxu0 0.0
      %9881 = vmatmul.mubr.f32.gmra.mrb[0].mxu0 %v9743
      %v9882 = vpop.f32.mrb[0].mxu0
      %v9883 = vadd.f32 0.0, %v9882
      %v9884 = vpop.f32.mrb[0].mxu0
      %9885 = vdwg.mxu0
      %v9886 = vadd.f32 %v9725, %v9812
      %v9887 = vadd.f32 %v9726, %v9814
      %v9888 = vadd.f32 %v9727, %v9883
      %s9889 = scalar_lea.vmem %s14, 64
      %v9890 = vld [vmem:[%s9889] sm:$0xff]
      %9891 = vrot.lane.b32.xlu0 %v9069, 118
      %v9892 = vpop.permute.xlu0 %9891
      %9893 = vrot.lane.b32.xlu0 %v9070, 118
      %v9894 = vpop.permute.xlu0 %9893
      %9895 = vrot.lane.b32.xlu0 %v9071, 118
      %v9896 = vpop.permute.xlu0 %9895
      %vm9897 = vcmask 965632
      %v9898 = vsel %vm9897, %v9892, %v9894
      %v9899 = vsel %vm9897, %v9894, %v9896
      %v9904 = vsel %vm925, %v9890, 0
      %9906 = vmatprep.subr.mxu0 %v9899
      %9907 = vmatpush1.msra.mxu0 %v9898
      %9908 = vmatprep.subr.mxu0 0.0
      %9909 = vmatpush1.msra.mxu0 0.0
      %9910 = vmatprep.subr.mxu0 0.0
      %9911 = vmatpush1.msra.mxu0 0.0
      %9912 = vmatprep.subr.mxu0 0.0
      %9913 = vmatpush1.msra.mxu0 0.0
      %9914 = vmatprep.subr.mxu0 0.0
      %9915 = vmatpush1.msra.mxu0 0.0
      %9916 = vmatprep.subr.mxu0 0.0
      %9917 = vmatpush1.msra.mxu0 0.0
      %9918 = vmatprep.subr.mxu0 0.0
      %9919 = vmatpush1.msra.mxu0 0.0
      %9920 = vmatprep.subr.mxu0 0.0
      %9921 = vmatpush1.msra.mxu0 0.0
      %9922 = vmatprep.subr.mxu0 0.0
      %9923 = vmatpush1.msra.mxu0 0.0
      %9924 = vmatprep.subr.mxu0 0.0
      %9925 = vmatpush1.msra.mxu0 0.0
      %9926 = vmatprep.subr.mxu0 0.0
      %9927 = vmatpush1.msra.mxu0 0.0
      %9928 = vmatprep.subr.mxu0 0.0
      %9929 = vmatpush1.msra.mxu0 0.0
      %9930 = vmatprep.subr.mxu0 0.0
      %9931 = vmatpush1.msra.mxu0 0.0
      %9932 = vmatprep.subr.mxu0 0.0
      %9933 = vmatpush1.msra.mxu0 0.0
      %9934 = vmatprep.subr.mxu0 0.0
      %9935 = vmatpush1.msra.mxu0 0.0
      %9936 = vmatprep.subr.mxu0 0.0
      %9937 = vmatpush1.msra.mxu0 0.0
      %9938 = vmatprep.subr.mxu0 0.0
      %9939 = vmatpush1.msra.mxu0 0.0
      %9940 = vmatprep.subr.mxu0 0.0
      %9941 = vmatpush1.msra.mxu0 0.0
      %9942 = vmatprep.subr.mxu0 0.0
      %9943 = vmatpush1.msra.mxu0 0.0
      %9944 = vmatprep.subr.mxu0 0.0
      %9945 = vmatpush1.msra.mxu0 0.0
      %9946 = vmatprep.subr.mxu0 0.0
      %9947 = vmatpush1.msra.mxu0 0.0
      %9948 = vmatprep.subr.mxu0 0.0
      %9949 = vmatpush1.msra.mxu0 0.0
      %9950 = vmatprep.subr.mxu0 0.0
      %9951 = vmatpush1.msra.mxu0 0.0
      %9952 = vmatprep.subr.mxu0 0.0
      %9953 = vmatpush1.msra.mxu0 0.0
      %9954 = vmatprep.subr.mxu0 0.0
      %9955 = vmatpush1.msra.mxu0 0.0
      %9956 = vmatprep.subr.mxu0 0.0
      %9957 = vmatpush1.msra.mxu0 0.0
      %9958 = vmatprep.subr.mxu0 0.0
      %9959 = vmatpush1.msra.mxu0 0.0
      %9960 = vmatprep.subr.mxu0 0.0
      %9961 = vmatpush1.msra.mxu0 0.0
      %9962 = vmatprep.subr.mxu0 0.0
      %9963 = vmatpush1.msra.mxu0 0.0
      %9964 = vmatprep.subr.mxu0 0.0
      %9965 = vmatpush1.msra.mxu0 0.0
      %9966 = vmatprep.subr.mxu0 0.0
      %9967 = vmatpush1.msra.mxu0 0.0
      %9968 = vmatprep.subr.mxu0 0.0
      %9969 = vmatpush1.msra.mxu0 0.0
      %9970 = vmatprep.mubr.f32.mxu0 0.0
      %9971 = vmatmul.mubr.f32.gmra.mrb[0].mxu0 %v9904
      %v9972 = vpop.f32.mrb[0].mxu0
      %v9973 = vadd.f32 0.0, %v9972
      %v9974 = vpop.f32.mrb[0].mxu0
      %v9975 = vadd.f32 0.0, %v9974
      %9976 = vdwg.mxu0
      %9977 = vmatprep.subr.mxu0 0.0
      %9978 = vmatpush1.msra.mxu0 %v9896
      %9979 = vmatprep.subr.mxu0 0.0
      %9980 = vmatpush1.msra.mxu0 0.0
      %9981 = vmatprep.subr.mxu0 0.0
      %9982 = vmatpush1.msra.mxu0 0.0
      %9983 = vmatprep.subr.mxu0 0.0
      %9984 = vmatpush1.msra.mxu0 0.0
      %9985 = vmatprep.subr.mxu0 0.0
      %9986 = vmatpush1.msra.mxu0 0.0
      %9987 = vmatprep.subr.mxu0 0.0
      %9988 = vmatpush1.msra.mxu0 0.0
      %9989 = vmatprep.subr.mxu0 0.0
      %9990 = vmatpush1.msra.mxu0 0.0
      %9991 = vmatprep.subr.mxu0 0.0
      %9992 = vmatpush1.msra.mxu0 0.0
      %9993 = vmatprep.subr.mxu0 0.0
      %9994 = vmatpush1.msra.mxu0 0.0
      %9995 = vmatprep.subr.mxu0 0.0
      %9996 = vmatpush1.msra.mxu0 0.0
      %9997 = vmatprep.subr.mxu0 0.0
      %9998 = vmatpush1.msra.mxu0 0.0
      %9999 = vmatprep.subr.mxu0 0.0
      %10000 = vmatpush1.msra.mxu0 0.0
      %10001 = vmatprep.subr.mxu0 0.0
      %10002 = vmatpush1.msra.mxu0 0.0
      %10003 = vmatprep.subr.mxu0 0.0
      %10004 = vmatpush1.msra.mxu0 0.0
      %10005 = vmatprep.subr.mxu0 0.0
      %10006 = vmatpush1.msra.mxu0 0.0
      %10007 = vmatprep.subr.mxu0 0.0
      %10008 = vmatpush1.msra.mxu0 0.0
      %10009 = vmatprep.subr.mxu0 0.0
      %10010 = vmatpush1.msra.mxu0 0.0
      %10011 = vmatprep.subr.mxu0 0.0
      %10012 = vmatpush1.msra.mxu0 0.0
      %10013 = vmatprep.subr.mxu0 0.0
      %10014 = vmatpush1.msra.mxu0 0.0
      %10015 = vmatprep.subr.mxu0 0.0
      %10016 = vmatpush1.msra.mxu0 0.0
      %10017 = vmatprep.subr.mxu0 0.0
      %10018 = vmatpush1.msra.mxu0 0.0
      %10019 = vmatprep.subr.mxu0 0.0
      %10020 = vmatpush1.msra.mxu0 0.0
      %10021 = vmatprep.subr.mxu0 0.0
      %10022 = vmatpush1.msra.mxu0 0.0
      %10023 = vmatprep.subr.mxu0 0.0
      %10024 = vmatpush1.msra.mxu0 0.0
      %10025 = vmatprep.subr.mxu0 0.0
      %10026 = vmatpush1.msra.mxu0 0.0
      %10027 = vmatprep.subr.mxu0 0.0
      %10028 = vmatpush1.msra.mxu0 0.0
      %10029 = vmatprep.subr.mxu0 0.0
      %10030 = vmatpush1.msra.mxu0 0.0
      %10031 = vmatprep.subr.mxu0 0.0
      %10032 = vmatpush1.msra.mxu0 0.0
      %10033 = vmatprep.subr.mxu0 0.0
      %10034 = vmatpush1.msra.mxu0 0.0
      %10035 = vmatprep.subr.mxu0 0.0
      %10036 = vmatpush1.msra.mxu0 0.0
      %10037 = vmatprep.subr.mxu0 0.0
      %10038 = vmatpush1.msra.mxu0 0.0
      %10039 = vmatprep.subr.mxu0 0.0
      %10040 = vmatpush1.msra.mxu0 0.0
      %10041 = vmatprep.mubr.f32.mxu0 0.0
      %10042 = vmatmul.mubr.f32.gmra.mrb[0].mxu0 %v9904
      %v10043 = vpop.f32.mrb[0].mxu0
      %v10044 = vadd.f32 0.0, %v10043
      %v10045 = vpop.f32.mrb[0].mxu0
      %10046 = vdwg.mxu0
      %v10047 = vadd.f32 %v9886, %v9973
      %v10048 = vadd.f32 %v9887, %v9975
      %v10049 = vadd.f32 %v9888, %v10044
      %v10050 = vld [vmem:[%s15] sm:$0xff]
      %10052 = vset.pattern.permute.xlu0 0
      %10053 = vperm.xlu0 %10052, %v10050
      %v10054 = vpop.permute.xlu0 %10053
      %v10056 = vadd.f32 %v10047, %v10054
      %v10057 = vadd.f32 %v10048, %v10054
      %v10058 = vadd.f32 %v10049, %v10054
      %v10059 = vld [vmem:[%s16] sm:$0xff]
      %v10060 = vld [vmem:[%s16 + $0x8] sm:$0xff]
      %v10061 = vld [vmem:[%s16 + $0x10] sm:$0xff]
      %v10062 = vld [vmem:[%s16 + $0x18] sm:$0xff]
      %10067 = vrot.lane.b32.xlu0 %v10059, 120
      %v10068 = vpop.permute.xlu0 %10067
      %10069 = vrot.lane.b32.xlu0 %v10060, 120
      %v10070 = vpop.permute.xlu0 %10069
      %10071 = vrot.lane.b32.xlu0 %v10061, 120
      %v10072 = vpop.permute.xlu0 %10071
      %10073 = vrot.lane.b32.xlu0 %v10062, 120
      %v10074 = vpop.permute.xlu0 %10073
      %v10075 = vsel %vm925, %v10068, 0
      %v10077 = vsel %vm925, %v10070, 0
      %v10079 = vsel %vm925, %v10072, 0
      %v10081 = vsel %vm925, %v10074, 0
      %10083 = vmatprep.subr.mxu0 %v5469
      %10084 = vmatpush1.msra.mxu0 %v5468
      %10085 = vmatprep.subr.mxu0 0.0
      %10086 = vmatpush1.msra.mxu0 0.0
      %10087 = vmatprep.subr.mxu0 0.0
      %10088 = vmatpush1.msra.mxu0 0.0
      %10089 = vmatprep.subr.mxu0 0.0
      %10090 = vmatpush1.msra.mxu0 0.0
      %10091 = vmatprep.subr.mxu0 0.0
      %10092 = vmatpush1.msra.mxu0 0.0
      %10093 = vmatprep.subr.mxu0 0.0
      %10094 = vmatpush1.msra.mxu0 0.0
      %10095 = vmatprep.subr.mxu0 0.0
      %10096 = vmatpush1.msra.mxu0 0.0
      %10097 = vmatprep.subr.mxu0 0.0
      %10098 = vmatpush1.msra.mxu0 0.0
      %10099 = vmatprep.subr.mxu0 0.0
      %10100 = vmatpush1.msra.mxu0 0.0
      %10101 = vmatprep.subr.mxu0 0.0
      %10102 = vmatpush1.msra.mxu0 0.0
      %10103 = vmatprep.subr.mxu0 0.0
      %10104 = vmatpush1.msra.mxu0 0.0
      %10105 = vmatprep.subr.mxu0 0.0
      %10106 = vmatpush1.msra.mxu0 0.0
      %10107 = vmatprep.subr.mxu0 0.0
      %10108 = vmatpush1.msra.mxu0 0.0
      %10109 = vmatprep.subr.mxu0 0.0
      %10110 = vmatpush1.msra.mxu0 0.0
      %10111 = vmatprep.subr.mxu0 0.0
      %10112 = vmatpush1.msra.mxu0 0.0
      %10113 = vmatprep.subr.mxu0 0.0
      %10114 = vmatpush1.msra.mxu0 0.0
      %10115 = vmatprep.subr.mxu0 0.0
      %10116 = vmatpush1.msra.mxu0 0.0
      %10117 = vmatprep.subr.mxu0 0.0
      %10118 = vmatpush1.msra.mxu0 0.0
      %10119 = vmatprep.subr.mxu0 0.0
      %10120 = vmatpush1.msra.mxu0 0.0
      %10121 = vmatprep.subr.mxu0 0.0
      %10122 = vmatpush1.msra.mxu0 0.0
      %10123 = vmatprep.subr.mxu0 0.0
      %10124 = vmatpush1.msra.mxu0 0.0
      %10125 = vmatprep.subr.mxu0 0.0
      %10126 = vmatpush1.msra.mxu0 0.0
      %10127 = vmatprep.subr.mxu0 0.0
      %10128 = vmatpush1.msra.mxu0 0.0
      %10129 = vmatprep.subr.mxu0 0.0
      %10130 = vmatpush1.msra.mxu0 0.0
      %10131 = vmatprep.subr.mxu0 0.0
      %10132 = vmatpush1.msra.mxu0 0.0
      %10133 = vmatprep.subr.mxu0 0.0
      %10134 = vmatpush1.msra.mxu0 0.0
      %10135 = vmatprep.subr.mxu0 0.0
      %10136 = vmatpush1.msra.mxu0 0.0
      %10137 = vmatprep.subr.mxu0 0.0
      %10138 = vmatpush1.msra.mxu0 0.0
      %10139 = vmatprep.subr.mxu0 0.0
      %10140 = vmatpush1.msra.mxu0 0.0
      %10141 = vmatprep.subr.mxu0 0.0
      %10142 = vmatpush1.msra.mxu0 0.0
      %10143 = vmatprep.subr.mxu0 0.0
      %10144 = vmatpush1.msra.mxu0 0.0
      %10145 = vmatprep.subr.mxu0 0.0
      %10146 = vmatpush1.msra.mxu0 0.0
      %10147 = vmatprep.mubr.f32.mxu0 0.0
      %10148 = vmatmul.mubr.f32.gmra.mrb[0].mxu0 %v10075
      %v10149 = vpop.f32.mrb[0].mxu0
      %v10150 = vadd.f32 0.0, %v10149
      %v10151 = vpop.f32.mrb[0].mxu0
      %v10152 = vadd.f32 0.0, %v10151
      %10153 = vmatprep.mubr.f32.mxu0 0.0
      %10154 = vmatmul.mubr.f32.gmra.mrb[0].mxu0 %v10077
      %v10155 = vpop.f32.mrb[0].mxu0
      %v10156 = vadd.f32 0.0, %v10155
      %v10157 = vpop.f32.mrb[0].mxu0
      %v10158 = vadd.f32 0.0, %v10157
      %10159 = vmatprep.mubr.f32.mxu0 0.0
      %10160 = vmatmul.mubr.f32.gmra.mrb[0].mxu0 %v10079
      %v10161 = vpop.f32.mrb[0].mxu0
      %v10162 = vadd.f32 0.0, %v10161
      %v10163 = vpop.f32.mrb[0].mxu0
      %v10164 = vadd.f32 0.0, %v10163
      %10165 = vmatprep.mubr.f32.mxu0 0.0
      %10166 = vmatmul.mubr.f32.gmra.mrb[0].mxu0 %v10081
      %v10167 = vpop.f32.mrb[0].mxu0
      %v10168 = vadd.f32 0.0, %v10167
      %v10169 = vpop.f32.mrb[0].mxu0
      %v10170 = vadd.f32 0.0, %v10169
      %10171 = vdwg.mxu0
      %10172 = vmatprep.subr.mxu0 0.0
      %10173 = vmatpush1.msra.mxu0 %v5470
      %10174 = vmatprep.subr.mxu0 0.0
      %10175 = vmatpush1.msra.mxu0 0.0
      %10176 = vmatprep.subr.mxu0 0.0
      %10177 = vmatpush1.msra.mxu0 0.0
      %10178 = vmatprep.subr.mxu0 0.0
      %10179 = vmatpush1.msra.mxu0 0.0
      %10180 = vmatprep.subr.mxu0 0.0
      %10181 = vmatpush1.msra.mxu0 0.0
      %10182 = vmatprep.subr.mxu0 0.0
      %10183 = vmatpush1.msra.mxu0 0.0
      %10184 = vmatprep.subr.mxu0 0.0
      %10185 = vmatpush1.msra.mxu0 0.0
      %10186 = vmatprep.subr.mxu0 0.0
      %10187 = vmatpush1.msra.mxu0 0.0
      %10188 = vmatprep.subr.mxu0 0.0
      %10189 = vmatpush1.msra.mxu0 0.0
      %10190 = vmatprep.subr.mxu0 0.0
      %10191 = vmatpush1.msra.mxu0 0.0
      %10192 = vmatprep.subr.mxu0 0.0
      %10193 = vmatpush1.msra.mxu0 0.0
      %10194 = vmatprep.subr.mxu0 0.0
      %10195 = vmatpush1.msra.mxu0 0.0
      %10196 = vmatprep.subr.mxu0 0.0
      %10197 = vmatpush1.msra.mxu0 0.0
      %10198 = vmatprep.subr.mxu0 0.0
      %10199 = vmatpush1.msra.mxu0 0.0
      %10200 = vmatprep.subr.mxu0 0.0
      %10201 = vmatpush1.msra.mxu0 0.0
      %10202 = vmatprep.subr.mxu0 0.0
      %10203 = vmatpush1.msra.mxu0 0.0
      %10204 = vmatprep.subr.mxu0 0.0
      %10205 = vmatpush1.msra.mxu0 0.0
      %10206 = vmatprep.subr.mxu0 0.0
      %10207 = vmatpush1.msra.mxu0 0.0
      %10208 = vmatprep.subr.mxu0 0.0
      %10209 = vmatpush1.msra.mxu0 0.0
      %10210 = vmatprep.subr.mxu0 0.0
      %10211 = vmatpush1.msra.mxu0 0.0
      %10212 = vmatprep.subr.mxu0 0.0
      %10213 = vmatpush1.msra.mxu0 0.0
      %10214 = vmatprep.subr.mxu0 0.0
      %10215 = vmatpush1.msra.mxu0 0.0
      %10216 = vmatprep.subr.mxu0 0.0
      %10217 = vmatpush1.msra.mxu0 0.0
      %10218 = vmatprep.subr.mxu0 0.0
      %10219 = vmatpush1.msra.mxu0 0.0
      %10220 = vmatprep.subr.mxu0 0.0
      %10221 = vmatpush1.msra.mxu0 0.0
      %10222 = vmatprep.subr.mxu0 0.0
      %10223 = vmatpush1.msra.mxu0 0.0
      %10224 = vmatprep.subr.mxu0 0.0
      %10225 = vmatpush1.msra.mxu0 0.0
      %10226 = vmatprep.subr.mxu0 0.0
      %10227 = vmatpush1.msra.mxu0 0.0
      %10228 = vmatprep.subr.mxu0 0.0
      %10229 = vmatpush1.msra.mxu0 0.0
      %10230 = vmatprep.subr.mxu0 0.0
      %10231 = vmatpush1.msra.mxu0 0.0
      %10232 = vmatprep.subr.mxu0 0.0
      %10233 = vmatpush1.msra.mxu0 0.0
      %10234 = vmatprep.subr.mxu0 0.0
      %10235 = vmatpush1.msra.mxu0 0.0
      %10236 = vmatprep.mubr.f32.mxu0 0.0
      %10237 = vmatmul.mubr.f32.gmra.mrb[0].mxu0 %v10075
      %v10238 = vpop.f32.mrb[0].mxu0
      %v10239 = vadd.f32 0.0, %v10238
      %v10240 = vpop.f32.mrb[0].mxu0
      %10241 = vmatprep.mubr.f32.mxu0 0.0
      %10242 = vmatmul.mubr.f32.gmra.mrb[0].mxu0 %v10077
      %v10243 = vpop.f32.mrb[0].mxu0
      %v10244 = vadd.f32 0.0, %v10243
      %v10245 = vpop.f32.mrb[0].mxu0
      %10246 = vmatprep.mubr.f32.mxu0 0.0
      %10247 = vmatmul.mubr.f32.gmra.mrb[0].mxu0 %v10079
      %v10248 = vpop.f32.mrb[0].mxu0
      %v10249 = vadd.f32 0.0, %v10248
      %v10250 = vpop.f32.mrb[0].mxu0
      %10251 = vmatprep.mubr.f32.mxu0 0.0
      %10252 = vmatmul.mubr.f32.gmra.mrb[0].mxu0 %v10081
      %v10253 = vpop.f32.mrb[0].mxu0
      %v10254 = vadd.f32 0.0, %v10253
      %v10255 = vpop.f32.mrb[0].mxu0
      %10256 = vdwg.mxu0
      %v10257 = vsel %vm925, %v10059, 0
      %v10259 = vsel %vm925, %v10060, 0
      %v10261 = vsel %vm925, %v10061, 0
      %v10263 = vsel %vm925, %v10062, 0
      %10265 = vmatprep.subr.mxu0 %v2383
      %10266 = vmatpush1.msra.mxu0 %v2382
      %10267 = vmatprep.subr.mxu0 0.0
      %10268 = vmatpush1.msra.mxu0 0.0
      %10269 = vmatprep.subr.mxu0 0.0
      %10270 = vmatpush1.msra.mxu0 0.0
      %10271 = vmatprep.subr.mxu0 0.0
      %10272 = vmatpush1.msra.mxu0 0.0
      %10273 = vmatprep.subr.mxu0 0.0
      %10274 = vmatpush1.msra.mxu0 0.0
      %10275 = vmatprep.subr.mxu0 0.0
      %10276 = vmatpush1.msra.mxu0 0.0
      %10277 = vmatprep.subr.mxu0 0.0
      %10278 = vmatpush1.msra.mxu0 0.0
      %10279 = vmatprep.subr.mxu0 0.0
      %10280 = vmatpush1.msra.mxu0 0.0
      %10281 = vmatprep.subr.mxu0 0.0
      %10282 = vmatpush1.msra.mxu0 0.0
      %10283 = vmatprep.subr.mxu0 0.0
      %10284 = vmatpush1.msra.mxu0 0.0
      %10285 = vmatprep.subr.mxu0 0.0
      %10286 = vmatpush1.msra.mxu0 0.0
      %10287 = vmatprep.subr.mxu0 0.0
      %10288 = vmatpush1.msra.mxu0 0.0
      %10289 = vmatprep.subr.mxu0 0.0
      %10290 = vmatpush1.msra.mxu0 0.0
      %10291 = vmatprep.subr.mxu0 0.0
      %10292 = vmatpush1.msra.mxu0 0.0
      %10293 = vmatprep.subr.mxu0 0.0
      %10294 = vmatpush1.msra.mxu0 0.0
      %10295 = vmatprep.subr.mxu0 0.0
      %10296 = vmatpush1.msra.mxu0 0.0
      %10297 = vmatprep.subr.mxu0 0.0
      %10298 = vmatpush1.msra.mxu0 0.0
      %10299 = vmatprep.subr.mxu0 0.0
      %10300 = vmatpush1.msra.mxu0 0.0
      %10301 = vmatprep.subr.mxu0 0.0
      %10302 = vmatpush1.msra.mxu0 0.0
      %10303 = vmatprep.subr.mxu0 0.0
      %10304 = vmatpush1.msra.mxu0 0.0
      %10305 = vmatprep.subr.mxu0 0.0
      %10306 = vmatpush1.msra.mxu0 0.0
      %10307 = vmatprep.subr.mxu0 0.0
      %10308 = vmatpush1.msra.mxu0 0.0
      %10309 = vmatprep.subr.mxu0 0.0
      %10310 = vmatpush1.msra.mxu0 0.0
      %10311 = vmatprep.subr.mxu0 0.0
      %10312 = vmatpush1.msra.mxu0 0.0
      %10313 = vmatprep.subr.mxu0 0.0
      %10314 = vmatpush1.msra.mxu0 0.0
      %10315 = vmatprep.subr.mxu0 0.0
      %10316 = vmatpush1.msra.mxu0 0.0
      %10317 = vmatprep.subr.mxu0 0.0
      %10318 = vmatpush1.msra.mxu0 0.0
      %10319 = vmatprep.subr.mxu0 0.0
      %10320 = vmatpush1.msra.mxu0 0.0
      %10321 = vmatprep.subr.mxu0 0.0
      %10322 = vmatpush1.msra.mxu0 0.0
      %10323 = vmatprep.subr.mxu0 0.0
      %10324 = vmatpush1.msra.mxu0 0.0
      %10325 = vmatprep.subr.mxu0 0.0
      %10326 = vmatpush1.msra.mxu0 0.0
      %10327 = vmatprep.subr.mxu0 0.0
      %10328 = vmatpush1.msra.mxu0 0.0
      %10329 = vmatprep.mubr.f32.mxu0 0.0
      %10330 = vmatmul.mubr.f32.gmra.mrb[0].mxu0 %v10257
      %v10331 = vpop.f32.mrb[0].mxu0
      %v10332 = vadd.f32 %v10150, %v10331
      %v10333 = vpop.f32.mrb[0].mxu0
      %v10334 = vadd.f32 %v10152, %v10333
      %10335 = vmatprep.mubr.f32.mxu0 0.0
      %10336 = vmatmul.mubr.f32.gmra.mrb[0].mxu0 %v10259
      %v10337 = vpop.f32.mrb[0].mxu0
      %v10338 = vadd.f32 %v10156, %v10337
      %v10339 = vpop.f32.mrb[0].mxu0
      %v10340 = vadd.f32 %v10158, %v10339
      %10341 = vmatprep.mubr.f32.mxu0 0.0
      %10342 = vmatmul.mubr.f32.gmra.mrb[0].mxu0 %v10261
      %v10343 = vpop.f32.mrb[0].mxu0
      %v10344 = vadd.f32 %v10162, %v10343
      %v10345 = vpop.f32.mrb[0].mxu0
      %v10346 = vadd.f32 %v10164, %v10345
      %10347 = vmatprep.mubr.f32.mxu0 0.0
      %10348 = vmatmul.mubr.f32.gmra.mrb[0].mxu0 %v10263
      %v10349 = vpop.f32.mrb[0].mxu0
      %v10350 = vadd.f32 %v10168, %v10349
      %v10351 = vpop.f32.mrb[0].mxu0
      %v10352 = vadd.f32 %v10170, %v10351
      %10353 = vdwg.mxu0
      %10354 = vmatprep.subr.mxu0 0.0
      %10355 = vmatpush1.msra.mxu0 %v2384
      %10356 = vmatprep.subr.mxu0 0.0
      %10357 = vmatpush1.msra.mxu0 0.0
      %10358 = vmatprep.subr.mxu0 0.0
      %10359 = vmatpush1.msra.mxu0 0.0
      %10360 = vmatprep.subr.mxu0 0.0
      %10361 = vmatpush1.msra.mxu0 0.0
      %10362 = vmatprep.subr.mxu0 0.0
      %10363 = vmatpush1.msra.mxu0 0.0
      %10364 = vmatprep.subr.mxu0 0.0
      %10365 = vmatpush1.msra.mxu0 0.0
      %10366 = vmatprep.subr.mxu0 0.0
      %10367 = vmatpush1.msra.mxu0 0.0
      %10368 = vmatprep.subr.mxu0 0.0
      %10369 = vmatpush1.msra.mxu0 0.0
      %10370 = vmatprep.subr.mxu0 0.0
      %10371 = vmatpush1.msra.mxu0 0.0
      %10372 = vmatprep.subr.mxu0 0.0
      %10373 = vmatpush1.msra.mxu0 0.0
      %10374 = vmatprep.subr.mxu0 0.0
      %10375 = vmatpush1.msra.mxu0 0.0
      %10376 = vmatprep.subr.mxu0 0.0
      %10377 = vmatpush1.msra.mxu0 0.0
      %10378 = vmatprep.subr.mxu0 0.0
      %10379 = vmatpush1.msra.mxu0 0.0
      %10380 = vmatprep.subr.mxu0 0.0
      %10381 = vmatpush1.msra.mxu0 0.0
      %10382 = vmatprep.subr.mxu0 0.0
      %10383 = vmatpush1.msra.mxu0 0.0
      %10384 = vmatprep.subr.mxu0 0.0
      %10385 = vmatpush1.msra.mxu0 0.0
      %10386 = vmatprep.subr.mxu0 0.0
      %10387 = vmatpush1.msra.mxu0 0.0
      %10388 = vmatprep.subr.mxu0 0.0
      %10389 = vmatpush1.msra.mxu0 0.0
      %10390 = vmatprep.subr.mxu0 0.0
      %10391 = vmatpush1.msra.mxu0 0.0
      %10392 = vmatprep.subr.mxu0 0.0
      %10393 = vmatpush1.msra.mxu0 0.0
      %10394 = vmatprep.subr.mxu0 0.0
      %10395 = vmatpush1.msra.mxu0 0.0
      %10396 = vmatprep.subr.mxu0 0.0
      %10397 = vmatpush1.msra.mxu0 0.0
      %10398 = vmatprep.subr.mxu0 0.0
      %10399 = vmatpush1.msra.mxu0 0.0
      %10400 = vmatprep.subr.mxu0 0.0
      %10401 = vmatpush1.msra.mxu0 0.0
      %10402 = vmatprep.subr.mxu0 0.0
      %10403 = vmatpush1.msra.mxu0 0.0
      %10404 = vmatprep.subr.mxu0 0.0
      %10405 = vmatpush1.msra.mxu0 0.0
      %10406 = vmatprep.subr.mxu0 0.0
      %10407 = vmatpush1.msra.mxu0 0.0
      %10408 = vmatprep.subr.mxu0 0.0
      %10409 = vmatpush1.msra.mxu0 0.0
      %10410 = vmatprep.subr.mxu0 0.0
      %10411 = vmatpush1.msra.mxu0 0.0
      %10412 = vmatprep.subr.mxu0 0.0
      %10413 = vmatpush1.msra.mxu0 0.0
      %10414 = vmatprep.subr.mxu0 0.0
      %10415 = vmatpush1.msra.mxu0 0.0
      %10416 = vmatprep.subr.mxu0 0.0
      %10417 = vmatpush1.msra.mxu0 0.0
      %10418 = vmatprep.mubr.f32.mxu0 0.0
      %10419 = vmatmul.mubr.f32.gmra.mrb[0].mxu0 %v10257
      %v10420 = vpop.f32.mrb[0].mxu0
      %v10421 = vadd.f32 %v10239, %v10420
      %v10422 = vpop.f32.mrb[0].mxu0
      %10423 = vmatprep.mubr.f32.mxu0 0.0
      %10424 = vmatmul.mubr.f32.gmra.mrb[0].mxu0 %v10259
      %v10425 = vpop.f32.mrb[0].mxu0
      %v10426 = vadd.f32 %v10244, %v10425
      %v10427 = vpop.f32.mrb[0].mxu0
      %10428 = vmatprep.mubr.f32.mxu0 0.0
      %10429 = vmatmul.mubr.f32.gmra.mrb[0].mxu0 %v10261
      %v10430 = vpop.f32.mrb[0].mxu0
      %v10431 = vadd.f32 %v10249, %v10430
      %v10432 = vpop.f32.mrb[0].mxu0
      %10433 = vmatprep.mubr.f32.mxu0 0.0
      %10434 = vmatmul.mubr.f32.gmra.mrb[0].mxu0 %v10263
      %v10435 = vpop.f32.mrb[0].mxu0
      %v10436 = vadd.f32 %v10254, %v10435
      %v10437 = vpop.f32.mrb[0].mxu0
      %10438 = vdwg.mxu0
      %10439 = vrot.lane.b32.xlu0 %v10059, 112
      %v10440 = vpop.permute.xlu0 %10439
      %10441 = vrot.lane.b32.xlu0 %v10060, 112
      %v10442 = vpop.permute.xlu0 %10441
      %10443 = vrot.lane.b32.xlu0 %v10061, 112
      %v10444 = vpop.permute.xlu0 %10443
      %10445 = vrot.lane.b32.xlu0 %v10062, 112
      %v10446 = vpop.permute.xlu0 %10445
      %v10447 = vsel %vm925, %v10440, 0
      %v10449 = vsel %vm925, %v10442, 0
      %v10451 = vsel %vm925, %v10444, 0
      %v10453 = vsel %vm925, %v10446, 0
      %10455 = vmatprep.subr.mxu0 %v10057
      %10456 = vmatpush1.msra.mxu0 %v10056
      %10457 = vmatprep.subr.mxu0 0.0
      %10458 = vmatpush1.msra.mxu0 0.0
      %10459 = vmatprep.subr.mxu0 0.0
      %10460 = vmatpush1.msra.mxu0 0.0
      %10461 = vmatprep.subr.mxu0 0.0
      %10462 = vmatpush1.msra.mxu0 0.0
      %10463 = vmatprep.subr.mxu0 0.0
      %10464 = vmatpush1.msra.mxu0 0.0
      %10465 = vmatprep.subr.mxu0 0.0
      %10466 = vmatpush1.msra.mxu0 0.0
      %10467 = vmatprep.subr.mxu0 0.0
      %10468 = vmatpush1.msra.mxu0 0.0
      %10469 = vmatprep.subr.mxu0 0.0
      %10470 = vmatpush1.msra.mxu0 0.0
      %10471 = vmatprep.subr.mxu0 0.0
      %10472 = vmatpush1.msra.mxu0 0.0
      %10473 = vmatprep.subr.mxu0 0.0
      %10474 = vmatpush1.msra.mxu0 0.0
      %10475 = vmatprep.subr.mxu0 0.0
      %10476 = vmatpush1.msra.mxu0 0.0
      %10477 = vmatprep.subr.mxu0 0.0
      %10478 = vmatpush1.msra.mxu0 0.0
      %10479 = vmatprep.subr.mxu0 0.0
      %10480 = vmatpush1.msra.mxu0 0.0
      %10481 = vmatprep.subr.mxu0 0.0
      %10482 = vmatpush1.msra.mxu0 0.0
      %10483 = vmatprep.subr.mxu0 0.0
      %10484 = vmatpush1.msra.mxu0 0.0
      %10485 = vmatprep.subr.mxu0 0.0
      %10486 = vmatpush1.msra.mxu0 0.0
      %10487 = vmatprep.subr.mxu0 0.0
      %10488 = vmatpush1.msra.mxu0 0.0
      %10489 = vmatprep.subr.mxu0 0.0
      %10490 = vmatpush1.msra.mxu0 0.0
      %10491 = vmatprep.subr.mxu0 0.0
      %10492 = vmatpush1.msra.mxu0 0.0
      %10493 = vmatprep.subr.mxu0 0.0
      %10494 = vmatpush1.msra.mxu0 0.0
      %10495 = vmatprep.subr.mxu0 0.0
      %10496 = vmatpush1.msra.mxu0 0.0
      %10497 = vmatprep.subr.mxu0 0.0
      %10498 = vmatpush1.msra.mxu0 0.0
      %10499 = vmatprep.subr.mxu0 0.0
      %10500 = vmatpush1.msra.mxu0 0.0
      %10501 = vmatprep.subr.mxu0 0.0
      %10502 = vmatpush1.msra.mxu0 0.0
      %10503 = vmatprep.subr.mxu0 0.0
      %10504 = vmatpush1.msra.mxu0 0.0
      %10505 = vmatprep.subr.mxu0 0.0
      %10506 = vmatpush1.msra.mxu0 0.0
      %10507 = vmatprep.subr.mxu0 0.0
      %10508 = vmatpush1.msra.mxu0 0.0
      %10509 = vmatprep.subr.mxu0 0.0
      %10510 = vmatpush1.msra.mxu0 0.0
      %10511 = vmatprep.subr.mxu0 0.0
      %10512 = vmatpush1.msra.mxu0 0.0
      %10513 = vmatprep.subr.mxu0 0.0
      %10514 = vmatpush1.msra.mxu0 0.0
      %10515 = vmatprep.subr.mxu0 0.0
      %10516 = vmatpush1.msra.mxu0 0.0
      %10517 = vmatprep.subr.mxu0 0.0
      %10518 = vmatpush1.msra.mxu0 0.0
      %10519 = vmatprep.mubr.f32.mxu0 0.0
      %10520 = vmatmul.mubr.f32.gmra.mrb[0].mxu0 %v10447
      %v10521 = vpop.f32.mrb[0].mxu0
      %v10522 = vadd.f32 0.0, %v10521
      %v10523 = vpop.f32.mrb[0].mxu0
      %v10524 = vadd.f32 0.0, %v10523
      %10525 = vmatprep.mubr.f32.mxu0 0.0
      %10526 = vmatmul.mubr.f32.gmra.mrb[0].mxu0 %v10449
      %v10527 = vpop.f32.mrb[0].mxu0
      %v10528 = vadd.f32 0.0, %v10527
      %v10529 = vpop.f32.mrb[0].mxu0
      %v10530 = vadd.f32 0.0, %v10529
      %10531 = vmatprep.mubr.f32.mxu0 0.0
      %10532 = vmatmul.mubr.f32.gmra.mrb[0].mxu0 %v10451
      %v10533 = vpop.f32.mrb[0].mxu0
      %v10534 = vadd.f32 0.0, %v10533
      %v10535 = vpop.f32.mrb[0].mxu0
      %v10536 = vadd.f32 0.0, %v10535
      %10537 = vmatprep.mubr.f32.mxu0 0.0
      %10538 = vmatmul.mubr.f32.gmra.mrb[0].mxu0 %v10453
      %v10539 = vpop.f32.mrb[0].mxu0
      %v10540 = vadd.f32 0.0, %v10539
      %v10541 = vpop.f32.mrb[0].mxu0
      %v10542 = vadd.f32 0.0, %v10541
      %10543 = vdwg.mxu0
      %10544 = vmatprep.subr.mxu0 0.0
      %10545 = vmatpush1.msra.mxu0 %v10058
      %10546 = vmatprep.subr.mxu0 0.0
      %10547 = vmatpush1.msra.mxu0 0.0
      %10548 = vmatprep.subr.mxu0 0.0
      %10549 = vmatpush1.msra.mxu0 0.0
      %10550 = vmatprep.subr.mxu0 0.0
      %10551 = vmatpush1.msra.mxu0 0.0
      %10552 = vmatprep.subr.mxu0 0.0
      %10553 = vmatpush1.msra.mxu0 0.0
      %10554 = vmatprep.subr.mxu0 0.0
      %10555 = vmatpush1.msra.mxu0 0.0
      %10556 = vmatprep.subr.mxu0 0.0
      %10557 = vmatpush1.msra.mxu0 0.0
      %10558 = vmatprep.subr.mxu0 0.0
      %10559 = vmatpush1.msra.mxu0 0.0
      %10560 = vmatprep.subr.mxu0 0.0
      %10561 = vmatpush1.msra.mxu0 0.0
      %10562 = vmatprep.subr.mxu0 0.0
      %10563 = vmatpush1.msra.mxu0 0.0
      %10564 = vmatprep.subr.mxu0 0.0
      %10565 = vmatpush1.msra.mxu0 0.0
      %10566 = vmatprep.subr.mxu0 0.0
      %10567 = vmatpush1.msra.mxu0 0.0
      %10568 = vmatprep.subr.mxu0 0.0
      %10569 = vmatpush1.msra.mxu0 0.0
      %10570 = vmatprep.subr.mxu0 0.0
      %10571 = vmatpush1.msra.mxu0 0.0
      %10572 = vmatprep.subr.mxu0 0.0
      %10573 = vmatpush1.msra.mxu0 0.0
      %10574 = vmatprep.subr.mxu0 0.0
      %10575 = vmatpush1.msra.mxu0 0.0
      %10576 = vmatprep.subr.mxu0 0.0
      %10577 = vmatpush1.msra.mxu0 0.0
      %10578 = vmatprep.subr.mxu0 0.0
      %10579 = vmatpush1.msra.mxu0 0.0
      %10580 = vmatprep.subr.mxu0 0.0
      %10581 = vmatpush1.msra.mxu0 0.0
      %10582 = vmatprep.subr.mxu0 0.0
      %10583 = vmatpush1.msra.mxu0 0.0
      %10584 = vmatprep.subr.mxu0 0.0
      %10585 = vmatpush1.msra.mxu0 0.0
      %10586 = vmatprep.subr.mxu0 0.0
      %10587 = vmatpush1.msra.mxu0 0.0
      %10588 = vmatprep.subr.mxu0 0.0
      %10589 = vmatpush1.msra.mxu0 0.0
      %10590 = vmatprep.subr.mxu0 0.0
      %10591 = vmatpush1.msra.mxu0 0.0
      %10592 = vmatprep.subr.mxu0 0.0
      %10593 = vmatpush1.msra.mxu0 0.0
      %10594 = vmatprep.subr.mxu0 0.0
      %10595 = vmatpush1.msra.mxu0 0.0
      %10596 = vmatprep.subr.mxu0 0.0
      %10597 = vmatpush1.msra.mxu0 0.0
      %10598 = vmatprep.subr.mxu0 0.0
      %10599 = vmatpush1.msra.mxu0 0.0
      %10600 = vmatprep.subr.mxu0 0.0
      %10601 = vmatpush1.msra.mxu0 0.0
      %10602 = vmatprep.subr.mxu0 0.0
      %10603 = vmatpush1.msra.mxu0 0.0
      %10604 = vmatprep.subr.mxu0 0.0
      %10605 = vmatpush1.msra.mxu0 0.0
      %10606 = vmatprep.subr.mxu0 0.0
      %10607 = vmatpush1.msra.mxu0 0.0
      %10608 = vmatprep.mubr.f32.mxu0 0.0
      %10609 = vmatmul.mubr.f32.gmra.mrb[0].mxu0 %v10447
      %v10610 = vpop.f32.mrb[0].mxu0
      %v10611 = vadd.f32 0.0, %v10610
      %v10612 = vpop.f32.mrb[0].mxu0
      %10613 = vmatprep.mubr.f32.mxu0 0.0
      %10614 = vmatmul.mubr.f32.gmra.mrb[0].mxu0 %v10449
      %v10615 = vpop.f32.mrb[0].mxu0
      %v10616 = vadd.f32 0.0, %v10615
      %v10617 = vpop.f32.mrb[0].mxu0
      %10618 = vmatprep.mubr.f32.mxu0 0.0
      %10619 = vmatmul.mubr.f32.gmra.mrb[0].mxu0 %v10451
      %v10620 = vpop.f32.mrb[0].mxu0
      %v10621 = vadd.f32 0.0, %v10620
      %v10622 = vpop.f32.mrb[0].mxu0
      %10623 = vmatprep.mubr.f32.mxu0 0.0
      %10624 = vmatmul.mubr.f32.gmra.mrb[0].mxu0 %v10453
      %v10625 = vpop.f32.mrb[0].mxu0
      %v10626 = vadd.f32 0.0, %v10625
      %v10627 = vpop.f32.mrb[0].mxu0
      %10628 = vdwg.mxu0
      %v10629 = vadd.f32 %v10332, %v10522
      %v10630 = vadd.f32 %v10334, %v10524
      %v10631 = vadd.f32 %v10421, %v10611
      %v10632 = vadd.f32 %v10338, %v10528
      %v10633 = vadd.f32 %v10340, %v10530
      %v10634 = vadd.f32 %v10426, %v10616
      %v10635 = vadd.f32 %v10344, %v10534
      %v10636 = vadd.f32 %v10346, %v10536
      %v10637 = vadd.f32 %v10431, %v10621
      %v10638 = vadd.f32 %v10350, %v10540
      %v10639 = vadd.f32 %v10352, %v10542
      %v10640 = vadd.f32 %v10436, %v10626
      %v10641 = vld [vmem:[%s17] sm:$0xff]
      %v10642 = vld [vmem:[%s17 + $0x8] sm:$0xff]
      %v10643 = vld [vmem:[%s17 + $0x10] sm:$0xff]
      %v10644 = vld [vmem:[%s17 + $0x18] sm:$0xff]
      %10646 = vset.pattern.permute.xlu0 0
      %10647 = vperm.xlu0 %10646, %v10641
      %v10648 = vpop.permute.xlu0 %10647
      %10651 = vset.pattern.permute.xlu0 0
      %10652 = vperm.xlu0 %10651, %v10642
      %v10653 = vpop.permute.xlu0 %10652
      %10656 = vset.pattern.permute.xlu0 0
      %10657 = vperm.xlu0 %10656, %v10643
      %v10658 = vpop.permute.xlu0 %10657
      %10661 = vset.pattern.permute.xlu0 0
      %10662 = vperm.xlu0 %10661, %v10644
      %v10663 = vpop.permute.xlu0 %10662
      %v10665 = vadd.f32 %v10629, %v10648
      %v10666 = vadd.f32 %v10630, %v10648
      %v10667 = vadd.f32 %v10631, %v10648
      %v10668 = vadd.f32 %v10632, %v10653
      %v10669 = vadd.f32 %v10633, %v10653
      %v10670 = vadd.f32 %v10634, %v10653
      %v10671 = vadd.f32 %v10635, %v10658
      %v10672 = vadd.f32 %v10636, %v10658
      %v10673 = vadd.f32 %v10637, %v10658
      %v10674 = vadd.f32 %v10638, %v10663
      %v10675 = vadd.f32 %v10639, %v10663
      %v10676 = vadd.f32 %v10640, %v10663
      %v10677 = vmul.f32 %v10665, 0.1
      %v10678 = vmul.f32 %v10666, 0.1
      %v10679 = vmul.f32 %v10667, 0.1
      %v10680 = vmul.f32 %v10668, 0.1
      %v10681 = vmul.f32 %v10669, 0.1
      %v10682 = vmul.f32 %v10670, 0.1
      %v10683 = vmul.f32 %v10671, 0.1
      %v10684 = vmul.f32 %v10672, 0.1
      %v10685 = vmul.f32 %v10673, 0.1
      %v10686 = vmul.f32 %v10674, 0.1
      %v10687 = vmul.f32 %v10675, 0.1
      %v10688 = vmul.f32 %v10676, 0.1
      %v10689 = vadd.f32 %v10677, %v730
      %v10690 = vadd.f32 %v10678, %v732
      %v10691 = vadd.f32 %v10679, %v829
      %v10692 = vadd.f32 %v10680, %v736
      %v10693 = vadd.f32 %v10681, %v738
      %v10694 = vadd.f32 %v10682, %v834
      %v10695 = vadd.f32 %v10683, %v742
      %v10696 = vadd.f32 %v10684, %v744
      %v10697 = vadd.f32 %v10685, %v839
      %v10698 = vadd.f32 %v10686, %v748
      %v10699 = vadd.f32 %v10687, %v750
      %v10700 = vadd.f32 %v10688, %v844
      %v10701 = vmax.f32 %v10689, 0.0
      %v10702 = vmax.f32 %v10690, 0.0
      %v10703 = vmax.f32 %v10691, 0.0
      %v10704 = vmax.f32 %v10692, 0.0
      %v10705 = vmax.f32 %v10693, 0.0
      %v10706 = vmax.f32 %v10694, 0.0
      %v10707 = vmax.f32 %v10695, 0.0
      %v10708 = vmax.f32 %v10696, 0.0
      %v10709 = vmax.f32 %v10697, 0.0
      %v10710 = vmax.f32 %v10698, 0.0
      %v10711 = vmax.f32 %v10699, 0.0
      %v10712 = vmax.f32 %v10700, 0.0
      %10713 = vst [vmem:[%s575] sm:$0xff] %v10701
      %10714 = vst [vmem:[%s575 + $0x8] sm:$0xff] %v10702
      %vm10715 = vcmask 785408
      %10716 = vst.msk [vmem:[%s575 + $0x10] sm:$0xff] %vm10715, %v10703
      %10717 = vst [vmem:[%s575 + $0x18] sm:$0xff] %v10704
      %10718 = vst [vmem:[%s575 + $0x20] sm:$0xff] %v10705
      %10719 = vst.msk [vmem:[%s575 + $0x28] sm:$0xff] %vm10715, %v10706
      %10720 = vst [vmem:[%s575 + $0x30] sm:$0xff] %v10707
      %10721 = vst [vmem:[%s575 + $0x38] sm:$0xff] %v10708
      %10722 = vst.msk [vmem:[%s575 + $0x40] sm:$0xff] %vm10715, %v10709
      %10723 = vst [vmem:[%s575 + $0x48] sm:$0xff] %v10710
      %10724 = vst [vmem:[%s575 + $0x50] sm:$0xff] %v10711
      %10725 = vst.msk [vmem:[%s575 + $0x58] sm:$0xff] %vm10715, %v10712
      %p10726 = scmp.lt.s32.totalorder %s29, 1
      %s10727 = scalar_select %p10726, %s29, 1
      %s10728 = smul.addr %s10727, 12
      %s10729 = smul.addr %s10728, 8
      %s10730 = scalar_lea.vmem %s18, %s10729
      // Predicated region
      $region93: #{basic_rfb_forward.1} parent=91 // pred_check
        %p10731 = pneg %p430
      $region94: #{basic_rfb_forward.1} parent=91 // pred_check_branch
        %10733 = sbr.rel (%p10731) target = $region96
      $region95: #{basic_rfb_forward.1} parent=91 // pred_region
        _
      $region96: #{basic_rfb_forward.1} parent=91 // pred_fallthru
        _
    $region92: #{basic_rfb_forward.1} parent=5 // pred_fallthru
      _
    %p10734 = scmp.le.s32.totalorder 2, %s24
    // Predicated region
    $region97: #{basic_rfb_forward.1} parent=5 // pred_check
      %p10735 = pneg %p10734
    $region98: #{basic_rfb_forward.1} parent=5 // pred_check_branch
      %10737 = sbr.rel (%p10735) target = $region100
    $region99: #{basic_rfb_forward.1} parent=5 // pred_region
      %s10738 = ssub.s32 %s24, 2
      // Predicated region
      $region101: #{basic_rfb_forward.1} parent=99 // pred_check
        %p10739 = pneg %p436
      $region102: #{basic_rfb_forward.1} parent=99 // pred_check_branch
        %10741 = sbr.rel (%p10739) target = $region104
      $region103: #{basic_rfb_forward.1} parent=99 // pred_region
        %p10742 = scmp.lt.s32.totalorder %s30, 1
        %s10743 = scalar_select %p10742, %s30, 1
        %s10744 = smul.addr %s10743, 12
        %s10745 = smul.addr %s10744, 8
        %s10746 = scalar_lea.vmem %s18, %s10745
      $region104: #{basic_rfb_forward.1} parent=99 // pred_fallthru
        _
    $region100: #{basic_rfb_forward.1} parent=5 // pred_fallthru
      _
  $region6: #{basic_rfb_forward.1} parent=0 // loop_footer
    %s28 = sadd.s32 1, %s24
  $region7: #{basic_rfb_forward.1} parent=0 // loop_footer_branch
    %23 = sbr.rel target = $region3
  $region8: #{basic_rfb_forward.1} parent=0 // loop_exit
    _

</llo_original>
